<compile_context>
chip_gen: v6e
topology: v6e:2x2x1
jax: 0.10.0
libtpu: 0.0.40
codegen_flags: <defaults>
</compile_context>

<pallas_src>
import functools

import numpy as np

import jax
import jax.numpy as jnp
from jax import lax
from jax.experimental import pallas as pl
from jax.experimental.pallas import tpu as pltpu


def _round_up(x, m):
    return ((x + m - 1) // m) * m


# ----------------------------- Pallas kernel --------------------------------

def _cross_conv_kernel(
    # inputs (activations + constants)
    s0_ref, s1_ref, s2_ref,
    w00_ref, b00_ref, w10_ref, b10_ref, w20_ref, b20_ref,
    wc0_ref, bc0_ref, wc1_ref, bc1_ref,
    w21_ref, b21_ref, wu10_ref, bu10_ref, wu21_ref, bu21_ref,
    upt1_ref, upt2_ref, dec0_ref, dec1_ref,
    m0_ref, m1_ref, m2_ref, gam_ref,
    # outputs
    o0_ref, o1_ref, o2_ref,
    # scratch
    pad_ref, im_ref,
    *, w0, w1, w2, hw0, hw1, hw2, cout, cpad_in, cpad_h,
    leaky_slope, pad_max, out_pads):
    """Whole CrossConvolutions forward for one batch element."""
    cdt = pad_ref.dtype
    cmax = pad_ref.shape[0]

    # --- once per grid step: zero ONLY the two halo bands (not the full buffer
    # and not once per conv).  Interiors are always freshly written before any
    # read, and right-halos of smaller interiors are re-zeroed per conv below,
    # so the halo reads of the unmasked dx==0 taps always see true zeros.
    zeros_band = jnp.zeros((cmax, pad_max), cdt)
    pad_ref[:, 0:pad_max] = zeros_band
    pad_ref[:, pad_max + hw0:pad_max + hw0 + pad_max] = zeros_band

    def conv3x3(x, mask_ref, wf_ref, b_ref, w_sp, hw, cpad, leaky=False):
        """3x3 'same' conv as a single im2col matmul.

        x:        (c, hw) activation, spatial flattened row-major (lane axis).
        mask_ref: (9, hw) per-tap validity mask (only dx!=0 rows are used).
        wf_ref:   (co, 9*cpad) weights, tap-major im2col layout, zero-padded
                  channel blocks.
        b_ref:    (co, 1) bias (f32).
        Returns (co, hw) float32.
        """
        c = x.shape[0]
        # Stage the interior into the lane-padded halo buffer.
        pad_ref[0:c, pad_max:pad_max + hw] = x.astype(cdt)
        if hw != hw0:
            # Lanes right of this (smaller) interior may hold stale data from a
            # previous larger-scale conv in this step: re-zero one pad_max-wide
            # lane-aligned band so dy=+1 taps read genuine zeros.
            pad_ref[0:c, pad_max + hw:pad_max + hw + pad_max] = (
                jnp.zeros((c, pad_max), cdt))
        # im2col: 9 lane-shifted copies stacked along the contraction dim.
        for ky in range(3):
            for kx in range(3):
                t = ky * 3 + kx
                s = (ky - 1) * w_sp + (kx - 1)
                shifted = pad_ref[0:c, pad_max + s:pad_max + s + hw]
                if kx != 1:
                    # dx != 0 taps wrap across image rows at the left/right
                    # edges -> mask.  dx == 0 taps never wrap; out-of-image
                    # rows land in the zeroed halo -> no mask multiply.
                    shifted = shifted * mask_ref[t:t + 1, :]
                im_ref[t * cpad:t * cpad + c, 0:hw] = shifted
                if cpad != c:
                    # keep the sublane-alignment pad rows zero (their weight
                    # columns are zero too; no-op at production channel counts)
                    im_ref[t * cpad + c:(t + 1) * cpad, 0:hw] = (
                        jnp.zeros((cpad - c, hw), cdt))
        out = jnp.dot(wf_ref[...], im_ref[0:9 * cpad, 0:hw],
                      preferred_element_type=jnp.float32)
        out = out + b_ref[...]                      # (co, 1) broadcasts on lanes
        if leaky:
            out = jnp.where(out >= 0, out, out * leaky_slope)
        return out

    # --- first convs (+ fused leaky ReLU) on the three scales ----------------
    lr0 = conv3x3(s0_ref[0], m0_ref, w00_ref, b00_ref, w0, hw0, cpad_in, leaky=True)
    lr1 = conv3x3(s1_ref[0], m1_ref, w10_ref, b10_ref, w1, hw1, cpad_in, leaky=True)
    lr3 = conv3x3(s2_ref[0], m2_ref, w20_ref, b20_ref, w2, hw2, cpad_in, leaky=True)

    # --- 2x bilinear upsample (align_corners=False) as ONE matmul ------------
    # Operators are in the compute dtype (consistent-dtype MXU op, f32 accum).
    # TODO(synk): at very large spatial sizes replace the dense kron operator
    # with a separable / shift-based upsample so it stays out of v7x's 64 MiB.
    up1 = jnp.dot(lr1.astype(cdt), upt1_ref[...],
                  preferred_element_type=jnp.float32)        # (ch, hw0)
    up2 = jnp.dot(lr3.astype(cdt), upt2_ref[...],
                  preferred_element_type=jnp.float32)        # (ch, hw1)

    # --- second convs; out-conv and down-conv on the same input share one
    #     im2col + one matmul (stacked weights -> higher MXU M-occupancy) -----
    both0 = conv3x3(lr0, m0_ref, wc0_ref, bc0_ref, w0, hw0, cpad_h)  # (2*cout, hw0)
    both1 = conv3x3(lr1, m1_ref, wc1_ref, bc1_ref, w1, hw1, cpad_h)  # (2*cout, hw1)
    out2b = conv3x3(lr3, m2_ref, w21_ref, b21_ref, w2, hw2, cpad_h)  # (cout, hw2)
    y1_up = conv3x3(up1, m0_ref, wu10_ref, bu10_ref, w0, hw0, cpad_h)
    y2_up = conv3x3(up2, m1_ref, wu21_ref, bu21_ref, w1, hw1, cpad_h)

    # stride-2 paths: decimate the shared full-res result (tiny select matmul).
    # TODO(synk): at production spatial sizes build a stride-2 im2col for the
    # down convs instead (4x fewer MACs, no dense selector resident in VMEM).
    y0_dn = jnp.dot(both0[cout:2 * cout, :].astype(cdt), dec0_ref[...],
                    preferred_element_type=jnp.float32)      # (cout, hw1)
    y1_dn = jnp.dot(both1[cout:2 * cout, :].astype(cdt), dec1_ref[...],
                    preferred_element_type=jnp.float32)      # (cout, hw2)

    # --- cross-scale adds + gamma, lane-dense (128-padded) stores ------------
    g = gam_ref[...]                                          # (1, 3) f32
    r0 = (both0[0:cout, :] + y1_up) * g[0:1, 0:1]
    r1 = (both1[0:cout, :] + y0_dn + y2_up) * g[0:1, 1:2]
    r2 = (out2b + y1_dn) * g[0:1, 2:3]

    def store(o_ref, res, hw, padw):
        o_ref[0, :, 0:hw] = res
        if padw > hw:                                         # static condition
            o_ref[0, :, hw:padw] = jnp.zeros((res.shape[0], padw - hw), res.dtype)

    store(o0_ref, r0, hw0, out_pads[0])
    store(o1_ref, r1, hw1, out_pads[1])
    store(o2_ref, r2, hw2, out_pads[2])


# --------------------------- constant operators ------------------------------

def _tap_masks(h, w):
    """(9, h*w) mask: 1 where the shifted tap source is inside the image."""
    yy, xx = np.meshgrid(np.arange(h), np.arange(w), indexing="ij")
    rows = []
    for ky in range(3):
        for kx in range(3):
            dy, dx = ky - 1, kx - 1
            valid = ((yy + dy >= 0) & (yy + dy < h) &
                     (xx + dx >= 0) & (xx + dx < w))
            rows.append(valid.reshape(-1))
    return np.stack(rows, axis=0).astype(np.float32)


def _upsample_1d(n):
    """(2n, n) 1-D 2x bilinear upsample operator (align_corners=False)."""
    a = np.zeros((2 * n, n), np.float32)
    for i in range(n):
        a[2 * i, max(i - 1, 0)] += 0.25
        a[2 * i, i] += 0.75
        a[2 * i + 1, i] += 0.75
        a[2 * i + 1, min(i + 1, n - 1)] += 0.25
    return a


def _upsample_op_t(h, w):
    """(h*w, 4*h*w): x_flat @ op == flat(2x bilinear upsample of x)."""
    return np.kron(_upsample_1d(h), _upsample_1d(w)).T.astype(np.float32)


def _decimation_op(h, w):
    """(h*w, (h//2)*(w//2)) selector for even-row/even-col positions."""
    d = np.zeros((h * w, (h // 2) * (w // 2)), np.float32)
    for y in range(h // 2):
        for x in range(w // 2):
            d[(2 * y) * w + 2 * x, y * (w // 2) + x] = 1.0
    return d


def _flatten_conv_weight(w, cpad, dtype):
    """OIHW (co, ci, 3, 3) -> (co, 9*cpad), tap-major, ci zero-padded to cpad."""
    co, ci, kh, kw = w.shape
    wt = jnp.transpose(w, (0, 2, 3, 1))                 # (co, 3, 3, ci)
    if cpad != ci:
        wt = jnp.pad(wt, ((0, 0), (0, 0), (0, 0), (0, cpad - ci)))
    return wt.reshape(co, kh * kw * cpad).astype(dtype)


def _bias_col(b):
    return b.reshape(-1, 1).astype(jnp.float32)


# ------------------------------ forward wrapper ------------------------------

def cross_convolutions_forward(params, scale0, scale1, scale2, *,
                               leaky_slope=0.1, compute_dtype=jnp.bfloat16):
    """Fused CrossConvolutions forward. NCHW in / NCHW out. One pallas_call."""
    n, cin, h0, w0 = scale0.shape
    _, _, h1, w1 = scale1.shape
    _, _, h2, w2 = scale2.shape
    assert (h0, w0) == (2 * h1, 2 * w1) and (h1, w1) == (2 * h2, 2 * w2)
    ch = params["w0_0"].shape[0]        # hidden channels
    cout = params["w0_1"].shape[0]      # output channels
    hw0, hw1, hw2 = h0 * w0, h1 * w1, h2 * w2
    # lane-dense padded output widths (cropped back after the kernel)
    hw0p, hw1p, hw2p = (_round_up(x, 128) for x in (hw0, hw1, hw2))
    # lane-aligned halo offset (>= w0 + 1, rounded up to a multiple of 128)
    pad_max = _round_up(w0 + 1, 128)
    cd = np.dtype(compute_dtype)
    # sublane-aligned tap channel blocks (no-op when channel counts are already
    # multiples of 8, which they are at production sizes)
    cpad_in = _round_up(cin, 8)
    cpad_h = _round_up(ch, 8)
    cmax = max(cin, ch)

    fw_in = functools.partial(_flatten_conv_weight, cpad=cpad_in, dtype=cd)
    fw_h = functools.partial(_flatten_conv_weight, cpad=cpad_h, dtype=cd)

    # conv0_1/down_conv01 (resp. conv1_1/down_conv12) read the same input, so
    # their weights are stacked: one im2col + one matmul covers both.
    wc0 = jnp.concatenate([fw_h(params["w0_1"]), fw_h(params["wd01"])], axis=0)
    bc0 = jnp.concatenate([_bias_col(params["b0_1"]), _bias_col(params["bd01"])], axis=0)
    wc1 = jnp.concatenate([fw_h(params["w1_1"]), fw_h(params["wd12"])], axis=0)
    bc1 = jnp.concatenate([_bias_col(params["b1_1"]), _bias_col(params["bd12"])], axis=0)

    operands = dict(
        s0=scale0.reshape(n, cin, hw0).astype(cd),
        s1=scale1.reshape(n, cin, hw1).astype(cd),
        s2=scale2.reshape(n, cin, hw2).astype(cd),
        w00=fw_in(params["w0_0"]), b00=_bias_col(params["b0_0"]),
        w10=fw_in(params["w1_0"]), b10=_bias_col(params["b1_0"]),
        w20=fw_in(params["w2_0"]), b20=_bias_col(params["b2_0"]),
        wc0=wc0, bc0=bc0, wc1=wc1, bc1=bc1,
        w21=fw_h(params["w2_1"]), b21=_bias_col(params["b2_1"]),
        wu10=fw_h(params["wu10"]), bu10=_bias_col(params["bu10"]),
        wu21=fw_h(params["wu21"]), bu21=_bias_col(params["bu21"]),
        # all operators / masks live in the compute dtype (consistent dtype)
        upt1=jnp.asarray(_upsample_op_t(h1, w1)).astype(cd),   # (hw1, hw0)
        upt2=jnp.asarray(_upsample_op_t(h2, w2)).astype(cd),   # (hw2, hw1)
        dec0=jnp.asarray(_decimation_op(h0, w0)).astype(cd),   # (hw0, hw1)
        dec1=jnp.asarray(_decimation_op(h1, w1)).astype(cd),   # (hw1, hw2)
        m0=jnp.asarray(_tap_masks(h0, w0)).astype(cd),
        m1=jnp.asarray(_tap_masks(h1, w1)).astype(cd),
        m2=jnp.asarray(_tap_masks(h2, w2)).astype(cd),
        gam=jnp.stack([params["gamma0"], params["gamma1"],
                       params["gamma2"]]).reshape(1, 3).astype(jnp.float32),
    )

    def batch_spec(a):
        nd = a.ndim
        return pl.BlockSpec((1,) + a.shape[1:], lambda i, _nd=nd: (i,) + (0,) * (_nd - 1))

    def const_spec(a):
        nd = a.ndim
        # TODO(synk): single-buffer these grid-invariant blocks via
        # pipeline_mode=pl.Buffered(1) once verified on the target jax version.
        return pl.BlockSpec(a.shape, lambda i, _nd=nd: (0,) * _nd)

    in_specs = [batch_spec(a) if name in ("s0", "s1", "s2") else const_spec(a)
                for name, a in operands.items()]

    out_shape = (jax.ShapeDtypeStruct((n, cout, hw0p), jnp.float32),
                 jax.ShapeDtypeStruct((n, cout, hw1p), jnp.float32),
                 jax.ShapeDtypeStruct((n, cout, hw2p), jnp.float32))
    out_specs = (pl.BlockSpec((1, cout, hw0p), lambda i: (i, 0, 0)),
                 pl.BlockSpec((1, cout, hw1p), lambda i: (i, 0, 0)),
                 pl.BlockSpec((1, cout, hw2p), lambda i: (i, 0, 0)))

    scratch_shapes = [
        pltpu.VMEM((cmax, hw0 + 2 * pad_max), cd),         # halo staging buffer
        pltpu.VMEM((9 * max(cpad_in, cpad_h), hw0), cd),   # im2col buffer (reused)
    ]

    # Derive the VMEM budget from the actual footprint (scratch + conservatively
    # double-buffered inputs/constants/outputs) instead of hard-coding 32 MiB.
    scratch_bytes = (cmax * (hw0 + 2 * pad_max)
                     + 9 * max(cpad_in, cpad_h) * hw0) * cd.itemsize
    io_bytes = sum(int(np.prod(a.shape)) * a.dtype.itemsize for a in operands.values())
    io_bytes += sum(int(np.prod(s.shape)) * np.dtype(s.dtype).itemsize for s in out_shape)
    vmem_limit = int(min(max(scratch_bytes + 2 * io_bytes + (8 << 20), 32 << 20),
                         100 << 20))
    # TODO(synk): on v7x (64 MiB VMEM, 2 TCs) cap this lower and add a spatial
    # tile axis as a second "parallel" grid dim before scaling H, W (also keeps
    # both TensorCores busy when the batch is 1).

    kernel = functools.partial(
        _cross_conv_kernel,
        w0=w0, w1=w1, w2=w2, hw0=hw0, hw1=hw1, hw2=hw2, cout=cout,
        cpad_in=cpad_in, cpad_h=cpad_h, leaky_slope=leaky_slope,
        pad_max=pad_max, out_pads=(hw0p, hw1p, hw2p))

    o0, o1, o2 = pl.pallas_call(
        kernel,
        out_shape=out_shape,
        grid=(n,),
        in_specs=in_specs,
        out_specs=out_specs,
        scratch_shapes=scratch_shapes,
        compiler_params=pltpu.CompilerParams(
            dimension_semantics=("parallel",),          # batch across TCs
            vmem_limit_bytes=vmem_limit),
    )(*operands.values())

    return (o0[:, :, :hw0].reshape(n, cout, h0, w0),
            o1[:, :, :hw1].reshape(n, cout, h1, w1),
            o2[:, :, :hw2].reshape(n, cout, h2, w2))


# ------------------------- pure-JAX reference (check) ------------------------

def _conv_ref(x, w, b, *, stride=1, leaky_slope=None):
    out = lax.conv_general_dilated(
        x, w, window_strides=(stride, stride), padding=((1, 1), (1, 1)),
        dimension_numbers=("NCHW", "OIHW", "NCHW"))
    out = out + b.reshape(1, -1, 1, 1)
    if leaky_slope is not None:
        out = jnp.where(out >= 0, out, out * leaky_slope)
    return out


def _upsample2x_ref(x):
    """2x bilinear upsample (align_corners=False), NCHW, elementwise form."""
    def up_axis(a, axis):
        nsz = a.shape[axis]
        first = lax.slice_in_dim(a, 0, 1, axis=axis)
        last = lax.slice_in_dim(a, nsz - 1, nsz, axis=axis)
        m1 = jnp.concatenate([first, lax.slice_in_dim(a, 0, nsz - 1, axis=axis)], axis=axis)
        p1 = jnp.concatenate([lax.slice_in_dim(a, 1, nsz, axis=axis), last], axis=axis)
        even = 0.25 * m1 + 0.75 * a
        odd = 0.75 * a + 0.25 * p1
        stacked = jnp.stack([even, odd], axis=axis + 1)
        return stacked.reshape(a.shape[:axis] + (2 * nsz,) + a.shape[axis + 1:])
    return up_axis(up_axis(x, 2), 3)


def cross_convolutions_ref(params, scale0, scale1, scale2, *, leaky_slope=0.1):
    p = params
    lr0 = _conv_ref(scale0, p["w0_0"], p["b0_0"], leaky_slope=leaky_slope)
    lr1 = _conv_ref(scale1, p["w1_0"], p["b1_0"], leaky_slope=leaky_slope)
    lr3 = _conv_ref(scale2, p["w2_0"], p["b2_0"], leaky_slope=leaky_slope)
    out0 = _conv_ref(lr0, p["w0_1"], p["b0_1"])
    out1 = _conv_ref(lr1, p["w1_1"], p["b1_1"])
    out2 = _conv_ref(lr3, p["w2_1"], p["b2_1"])
    y1_up = _conv_ref(_upsample2x_ref(lr1), p["wu10"], p["bu10"])
    y2_up = _conv_ref(_upsample2x_ref(lr3), p["wu21"], p["bu21"])
    y0_down = _conv_ref(lr0, p["wd01"], p["bd01"], stride=2)
    y1_down = _conv_ref(lr1, p["wd12"], p["bd12"], stride=2)
    out0 = (out0 + y1_up) * p["gamma0"]
    out1 = (out1 + y0_down + y2_up) * p["gamma1"]
    out2 = (out2 + y1_down) * p["gamma2"]
    return out0, out1, out2


# ----------------------------------- main ------------------------------------

def _init_params(key, in_channels, channels, channels_hidden):
    def conv_init(k, cin, cout, scale=0.1):
        kw, kb = jax.random.split(k)
        w = scale * jax.random.normal(kw, (cout, cin, 3, 3), jnp.float32)
        b = scale * jax.random.normal(kb, (cout,), jnp.float32)
        return w, b

    keys = jax.random.split(key, 10)
    p = {}
    p["w0_0"], p["b0_0"] = conv_init(keys[0], in_channels, channels_hidden)
    p["w1_0"], p["b1_0"] = conv_init(keys[1], in_channels, channels_hidden)
    p["w2_0"], p["b2_0"] = conv_init(keys[2], in_channels, channels_hidden)
    p["w0_1"], p["b0_1"] = conv_init(keys[3], channels_hidden, channels)
    p["w1_1"], p["b1_1"] = conv_init(keys[4], channels_hidden, channels)
    p["w2_1"], p["b2_1"] = conv_init(keys[5], channels_hidden, channels)
    p["wu10"], p["bu10"] = conv_init(keys[6], channels_hidden, channels)
    p["wu21"], p["bu21"] = conv_init(keys[7], channels_hidden, channels)
    p["wd01"], p["bd01"] = conv_init(keys[8], channels_hidden, channels)
    p["wd12"], p["bd12"] = conv_init(keys[9], channels_hidden, channels)
    # Torch __init__ sets the gammas to 0; nonzero values here so the gamma
    # path is actually exercised by the numerical check.
    p["gamma0"] = jnp.float32(0.5)
    p["gamma1"] = jnp.float32(1.0)
    p["gamma2"] = jnp.float32(1.5)
    return p


if __name__ == "__main__":
    in_channels, channels, channels_hidden = 4, 8, 16
    batch, h0 = 2, 16

    key = jax.random.PRNGKey(0)
    k_par, k0, k1, k2 = jax.random.split(key, 4)
    params = _init_params(k_par, in_channels, channels, channels_hidden)

    # NCHW inputs, matching the PyTorch module convention.
    scale0 = jax.random.normal(k0, (batch, in_channels, h0, h0), jnp.float32)
    scale1 = jax.random.normal(k1, (batch, in_channels, h0 // 2, h0 // 2), jnp.float32)
    scale2 = jax.random.normal(k2, (batch, in_channels, h0 // 4, h0 // 4), jnp.float32)

    # Independent lax.conv / elementwise-upsample reference.
    r0, r1, r2 = cross_convolutions_ref(params, scale0, scale1, scale2)

    # --- f32 path: tight check of the kernel structure ------------------------
    fwd_f32 = jax.jit(functools.partial(cross_convolutions_forward,
                                        compute_dtype=jnp.float32))
    f0, f1, f2 = fwd_f32(params, scale0, scale1, scale2)
    jax.block_until_ready((f0, f1, f2))
    for got, ref in ((f0, r0), (f1, r1), (f2, r2)):
        assert got.shape == ref.shape
        assert jnp.allclose(got, ref, atol=2e-3, rtol=2e-3), "f32 mismatch vs reference"

    # --- bf16 path (production default): MXU-native, f32 accumulation --------
    fwd_bf16 = jax.jit(functools.partial(cross_convolutions_forward,
                                         compute_dtype=jnp.bfloat16))
    o0, o1, o2 = fwd_bf16(params, scale0, scale1, scale2)
    jax.block_until_ready((o0, o1, o2))

    assert o0.shape == (batch, channels, h0, h0)
    assert o1.shape == (batch, channels, h0 // 2, h0 // 2)
    assert o2.shape == (batch, channels, h0 // 4, h0 // 4)
    # Looser tolerance: inputs/weights are rounded to bf16 before the MXU.
    for got, ref in ((o0, r0), (o1, r1), (o2, r2)):
        assert jnp.allclose(got, ref, atol=1e-1, rtol=1e-1), "bf16 mismatch vs reference"

    print("KERNEL_OK")
</pallas_src>

<mosaic_0001>
module attributes {stable_mosaic.version = 11 : i64} {
  func.func @_cross_conv_kernel(%arg0: i32, %arg1: memref<1x4x256xf32, #tpu.memory_space<vmem>>, %arg2: memref<1x4x64xf32, #tpu.memory_space<vmem>>, %arg3: memref<1x4x16xf32, #tpu.memory_space<vmem>>, %arg4: memref<16x72xf32, #tpu.memory_space<vmem>>, %arg5: memref<16x1xf32, #tpu.memory_space<vmem>>, %arg6: memref<16x72xf32, #tpu.memory_space<vmem>>, %arg7: memref<16x1xf32, #tpu.memory_space<vmem>>, %arg8: memref<16x72xf32, #tpu.memory_space<vmem>>, %arg9: memref<16x1xf32, #tpu.memory_space<vmem>>, %arg10: memref<16x144xf32, #tpu.memory_space<vmem>>, %arg11: memref<16x1xf32, #tpu.memory_space<vmem>>, %arg12: memref<16x144xf32, #tpu.memory_space<vmem>>, %arg13: memref<16x1xf32, #tpu.memory_space<vmem>>, %arg14: memref<8x144xf32, #tpu.memory_space<vmem>>, %arg15: memref<8x1xf32, #tpu.memory_space<vmem>>, %arg16: memref<8x144xf32, #tpu.memory_space<vmem>>, %arg17: memref<8x1xf32, #tpu.memory_space<vmem>>, %arg18: memref<8x144xf32, #tpu.memory_space<vmem>>, %arg19: memref<8x1xf32, #tpu.memory_space<vmem>>, %arg20: memref<64x256xf32, #tpu.memory_space<vmem>>, %arg21: memref<16x64xf32, #tpu.memory_space<vmem>>, %arg22: memref<256x64xf32, #tpu.memory_space<vmem>>, %arg23: memref<64x16xf32, #tpu.memory_space<vmem>>, %arg24: memref<9x256xf32, #tpu.memory_space<vmem>>, %arg25: memref<9x64xf32, #tpu.memory_space<vmem>>, %arg26: memref<9x16xf32, #tpu.memory_space<vmem>>, %arg27: memref<1x3xf32, #tpu.memory_space<vmem>>, %arg28: memref<1x8x256xf32, #tpu.memory_space<vmem>>, %arg29: memref<1x8x128xf32, #tpu.memory_space<vmem>>, %arg30: memref<1x8x128xf32, #tpu.memory_space<vmem>>, %arg31: memref<16x512xf32, #tpu.memory_space<vmem>>, %arg32: memref<144x256xf32, #tpu.memory_space<vmem>>) attributes {dimension_semantics = [#tpu.dimension_semantics<parallel>], iteration_bounds = array<i64: 2>, scalar_prefetch = 0 : i64, scratch_operands = 2 : i64, tpu.core_type = #tpu.core_type<tc>, window_params = [{transform_indices = @transform_0, window_bounds = array<i64: 1, 4, 256>}, {transform_indices = @transform_1, window_bounds = array<i64: 1, 4, 64>}, {transform_indices = @transform_2, window_bounds = array<i64: 1, 4, 16>}, {pipeline_mode = #tpu.pipeline_mode<synchronous>, transform_indices = @transform_3, window_bounds = array<i64: 16, 72>}, {pipeline_mode = #tpu.pipeline_mode<synchronous>, transform_indices = @transform_4, window_bounds = array<i64: 16, 1>}, {pipeline_mode = #tpu.pipeline_mode<synchronous>, transform_indices = @transform_5, window_bounds = array<i64: 16, 72>}, {pipeline_mode = #tpu.pipeline_mode<synchronous>, transform_indices = @transform_6, window_bounds = array<i64: 16, 1>}, {pipeline_mode = #tpu.pipeline_mode<synchronous>, transform_indices = @transform_7, window_bounds = array<i64: 16, 72>}, {pipeline_mode = #tpu.pipeline_mode<synchronous>, transform_indices = @transform_8, window_bounds = array<i64: 16, 1>}, {pipeline_mode = #tpu.pipeline_mode<synchronous>, transform_indices = @transform_9, window_bounds = array<i64: 16, 144>}, {pipeline_mode = #tpu.pipeline_mode<synchronous>, transform_indices = @transform_10, window_bounds = array<i64: 16, 1>}, {pipeline_mode = #tpu.pipeline_mode<synchronous>, transform_indices = @transform_11, window_bounds = array<i64: 16, 144>}, {pipeline_mode = #tpu.pipeline_mode<synchronous>, transform_indices = @transform_12, window_bounds = array<i64: 16, 1>}, {pipeline_mode = #tpu.pipeline_mode<synchronous>, transform_indices = @transform_13, window_bounds = array<i64: 8, 144>}, {pipeline_mode = #tpu.pipeline_mode<synchronous>, transform_indices = @transform_14, window_bounds = array<i64: 8, 1>}, {pipeline_mode = #tpu.pipeline_mode<synchronous>, transform_indices = @transform_15, window_bounds = array<i64: 8, 144>}, {pipeline_mode = #tpu.pipeline_mode<synchronous>, transform_indices = @transform_16, window_bounds = array<i64: 8, 1>}, {pipeline_mode = #tpu.pipeline_mode<synchronous>, transform_indices = @transform_17, window_bounds = array<i64: 8, 144>}, {pipeline_mode = #tpu.pipeline_mode<synchronous>, transform_indices = @transform_18, window_bounds = array<i64: 8, 1>}, {pipeline_mode = #tpu.pipeline_mode<synchronous>, transform_indices = @transform_19, window_bounds = array<i64: 64, 256>}, {pipeline_mode = #tpu.pipeline_mode<synchronous>, transform_indices = @transform_20, window_bounds = array<i64: 16, 64>}, {pipeline_mode = #tpu.pipeline_mode<synchronous>, transform_indices = @transform_21, window_bounds = array<i64: 256, 64>}, {pipeline_mode = #tpu.pipeline_mode<synchronous>, transform_indices = @transform_22, window_bounds = array<i64: 64, 16>}, {pipeline_mode = #tpu.pipeline_mode<synchronous>, transform_indices = @transform_23, window_bounds = array<i64: 9, 256>}, {pipeline_mode = #tpu.pipeline_mode<synchronous>, transform_indices = @transform_24, window_bounds = array<i64: 9, 64>}, {pipeline_mode = #tpu.pipeline_mode<synchronous>, transform_indices = @transform_25, window_bounds = array<i64: 9, 16>}, {pipeline_mode = #tpu.pipeline_mode<synchronous>, transform_indices = @transform_26, window_bounds = array<i64: 1, 3>}, {transform_indices = @transform_27, window_bounds = array<i64: 1, 8, 256>}, {transform_indices = @transform_28, window_bounds = array<i64: 1, 8, 128>}, {transform_indices = @transform_29, window_bounds = array<i64: 1, 8, 128>}]} {
    %cst = arith.constant 0.000000e+00 : f32
    %0 = vector.broadcast %cst : f32 to vector<16x128xf32>
    %c0 = arith.constant 0 : index
    %c0_0 = arith.constant 0 : index
    %1 = vector.load %arg31[%c0, %c0_0] : memref<16x512xf32, #tpu.memory_space<vmem>>, vector<16x128xf32>
    tpu.vector_store %arg31[%c0, %c0_0], %0 {strides = array<i32>} : memref<16x512xf32, #tpu.memory_space<vmem>>, vector<16x128xf32>,
    %c0_1 = arith.constant 0 : index
    %c384 = arith.constant 384 : index
    %2 = vector.load %arg31[%c0_1, %c384] : memref<16x512xf32, #tpu.memory_space<vmem>>, vector<16x128xf32>
    tpu.vector_store %arg31[%c0_1, %c384], %0 {strides = array<i32>} : memref<16x512xf32, #tpu.memory_space<vmem>>, vector<16x128xf32>,
    %c0_2 = arith.constant 0 : index
    %c0_3 = arith.constant 0 : index
    %c0_4 = arith.constant 0 : index
    %3 = vector.load %arg1[%c0_2, %c0_3, %c0_4] : memref<1x4x256xf32, #tpu.memory_space<vmem>>, vector<1x4x256xf32>
    %4 = vector.shape_cast %3 : vector<1x4x256xf32> to vector<4x256xf32>
    %c0_5 = arith.constant 0 : index
    %c128 = arith.constant 128 : index
    %5 = vector.load %arg31[%c0_5, %c128] : memref<16x512xf32, #tpu.memory_space<vmem>>, vector<4x256xf32>
    tpu.vector_store %arg31[%c0_5, %c128], %4 {strides = array<i32>} : memref<16x512xf32, #tpu.memory_space<vmem>>, vector<4x256xf32>,
    %c0_6 = arith.constant 0 : index
    %c111 = arith.constant 111 : index
    %6 = vector.load %arg31[%c0_6, %c111] : memref<16x512xf32, #tpu.memory_space<vmem>>, vector<4x256xf32>
    %c0_7 = arith.constant 0 : index
    %c0_8 = arith.constant 0 : index
    %7 = vector.load %arg24[%c0_7, %c0_8] : memref<9x256xf32, #tpu.memory_space<vmem>>, vector<1x256xf32>
    %8 = vector.broadcast %7 : vector<1x256xf32> to vector<4x256xf32>
    %9 = arith.mulf %6, %8 : vector<4x256xf32>
    %c0_9 = arith.constant 0 : index
    %c0_10 = arith.constant 0 : index
    %10 = vector.load %arg32[%c0_9, %c0_10] : memref<144x256xf32, #tpu.memory_space<vmem>>, vector<4x256xf32>
    tpu.vector_store %arg32[%c0_9, %c0_10], %9 {strides = array<i32>} : memref<144x256xf32, #tpu.memory_space<vmem>>, vector<4x256xf32>,
    %cst_11 = arith.constant 0.000000e+00 : f32
    %11 = vector.broadcast %cst_11 : f32 to vector<4x256xf32>
    %c4 = arith.constant 4 : index
    %c0_12 = arith.constant 0 : index
    %12 = vector.load %arg32[%c4, %c0_12] : memref<144x256xf32, #tpu.memory_space<vmem>>, vector<4x256xf32>
    tpu.vector_store %arg32[%c4, %c0_12], %11 {strides = array<i32>} : memref<144x256xf32, #tpu.memory_space<vmem>>, vector<4x256xf32>,
    %c0_13 = arith.constant 0 : index
    %c112 = arith.constant 112 : index
    %13 = vector.load %arg31[%c0_13, %c112] : memref<16x512xf32, #tpu.memory_space<vmem>>, vector<4x256xf32>
    %c8 = arith.constant 8 : index
    %c0_14 = arith.constant 0 : index
    %14 = vector.load %arg32[%c8, %c0_14] : memref<144x256xf32, #tpu.memory_space<vmem>>, vector<4x256xf32>
    tpu.vector_store %arg32[%c8, %c0_14], %13 {strides = array<i32>} : memref<144x256xf32, #tpu.memory_space<vmem>>, vector<4x256xf32>,
    %cst_15 = arith.constant 0.000000e+00 : f32
    %15 = vector.broadcast %cst_15 : f32 to vector<4x256xf32>
    %c12 = arith.constant 12 : index
    %c0_16 = arith.constant 0 : index
    %16 = vector.load %arg32[%c12, %c0_16] : memref<144x256xf32, #tpu.memory_space<vmem>>, vector<4x256xf32>
    tpu.vector_store %arg32[%c12, %c0_16], %15 {strides = array<i32>} : memref<144x256xf32, #tpu.memory_space<vmem>>, vector<4x256xf32>,
    %c0_17 = arith.constant 0 : index
    %c113 = arith.constant 113 : index
    %17 = vector.load %arg31[%c0_17, %c113] : memref<16x512xf32, #tpu.memory_space<vmem>>, vector<4x256xf32>
    %c2 = arith.constant 2 : index
    %c0_18 = arith.constant 0 : index
    %18 = vector.load %arg24[%c2, %c0_18] : memref<9x256xf32, #tpu.memory_space<vmem>>, vector<1x256xf32>
    %19 = vector.broadcast %18 : vector<1x256xf32> to vector<4x256xf32>
    %20 = arith.mulf %17, %19 : vector<4x256xf32>
    %c16 = arith.constant 16 : index
    %c0_19 = arith.constant 0 : index
    %21 = vector.load %arg32[%c16, %c0_19] : memref<144x256xf32, #tpu.memory_space<vmem>>, vector<4x256xf32>
    tpu.vector_store %arg32[%c16, %c0_19], %20 {strides = array<i32>} : memref<144x256xf32, #tpu.memory_space<vmem>>, vector<4x256xf32>,
    %cst_20 = arith.constant 0.000000e+00 : f32
    %22 = vector.broadcast %cst_20 : f32 to vector<4x256xf32>
    %c20 = arith.constant 20 : index
    %c0_21 = arith.constant 0 : index
    %23 = vector.load %arg32[%c20, %c0_21] : memref<144x256xf32, #tpu.memory_space<vmem>>, vector<4x256xf32>
    tpu.vector_store %arg32[%c20, %c0_21], %22 {strides = array<i32>} : memref<144x256xf32, #tpu.memory_space<vmem>>, vector<4x256xf32>,
    %c0_22 = arith.constant 0 : index
    %c127 = arith.constant 127 : index
    %24 = vector.load %arg31[%c0_22, %c127] : memref<16x512xf32, #tpu.memory_space<vmem>>, vector<4x256xf32>
    %c3 = arith.constant 3 : index
    %c0_23 = arith.constant 0 : index
    %25 = vector.load %arg24[%c3, %c0_23] : memref<9x256xf32, #tpu.memory_space<vmem>>, vector<1x256xf32>
    %26 = vector.broadcast %25 : vector<1x256xf32> to vector<4x256xf32>
    %27 = arith.mulf %24, %26 : vector<4x256xf32>
    %c24 = arith.constant 24 : index
    %c0_24 = arith.constant 0 : index
    %28 = vector.load %arg32[%c24, %c0_24] : memref<144x256xf32, #tpu.memory_space<vmem>>, vector<4x256xf32>
    tpu.vector_store %arg32[%c24, %c0_24], %27 {strides = array<i32>} : memref<144x256xf32, #tpu.memory_space<vmem>>, vector<4x256xf32>,
    %cst_25 = arith.constant 0.000000e+00 : f32
    %29 = vector.broadcast %cst_25 : f32 to vector<4x256xf32>
    %c28 = arith.constant 28 : index
    %c0_26 = arith.constant 0 : index
    %30 = vector.load %arg32[%c28, %c0_26] : memref<144x256xf32, #tpu.memory_space<vmem>>, vector<4x256xf32>
    tpu.vector_store %arg32[%c28, %c0_26], %29 {strides = array<i32>} : memref<144x256xf32, #tpu.memory_space<vmem>>, vector<4x256xf32>,
    %c0_27 = arith.constant 0 : index
    %c128_28 = arith.constant 128 : index
    %31 = vector.load %arg31[%c0_27, %c128_28] : memref<16x512xf32, #tpu.memory_space<vmem>>, vector<4x256xf32>
    %c32 = arith.constant 32 : index
    %c0_29 = arith.constant 0 : index
    %32 = vector.load %arg32[%c32, %c0_29] : memref<144x256xf32, #tpu.memory_space<vmem>>, vector<4x256xf32>
    tpu.vector_store %arg32[%c32, %c0_29], %31 {strides = array<i32>} : memref<144x256xf32, #tpu.memory_space<vmem>>, vector<4x256xf32>,
    %cst_30 = arith.constant 0.000000e+00 : f32
    %33 = vector.broadcast %cst_30 : f32 to vector<4x256xf32>
    %c36 = arith.constant 36 : index
    %c0_31 = arith.constant 0 : index
    %34 = vector.load %arg32[%c36, %c0_31] : memref<144x256xf32, #tpu.memory_space<vmem>>, vector<4x256xf32>
    tpu.vector_store %arg32[%c36, %c0_31], %33 {strides = array<i32>} : memref<144x256xf32, #tpu.memory_space<vmem>>, vector<4x256xf32>,
    %c0_32 = arith.constant 0 : index
    %c129 = arith.constant 129 : index
    %35 = vector.load %arg31[%c0_32, %c129] : memref<16x512xf32, #tpu.memory_space<vmem>>, vector<4x256xf32>
    %c5 = arith.constant 5 : index
    %c0_33 = arith.constant 0 : index
    %36 = vector.load %arg24[%c5, %c0_33] : memref<9x256xf32, #tpu.memory_space<vmem>>, vector<1x256xf32>
    %37 = vector.broadcast %36 : vector<1x256xf32> to vector<4x256xf32>
    %38 = arith.mulf %35, %37 : vector<4x256xf32>
    %c40 = arith.constant 40 : index
    %c0_34 = arith.constant 0 : index
    %39 = vector.load %arg32[%c40, %c0_34] : memref<144x256xf32, #tpu.memory_space<vmem>>, vector<4x256xf32>
    tpu.vector_store %arg32[%c40, %c0_34], %38 {strides = array<i32>} : memref<144x256xf32, #tpu.memory_space<vmem>>, vector<4x256xf32>,
    %cst_35 = arith.constant 0.000000e+00 : f32
    %40 = vector.broadcast %cst_35 : f32 to vector<4x256xf32>
    %c44 = arith.constant 44 : index
    %c0_36 = arith.constant 0 : index
    %41 = vector.load %arg32[%c44, %c0_36] : memref<144x256xf32, #tpu.memory_space<vmem>>, vector<4x256xf32>
    tpu.vector_store %arg32[%c44, %c0_36], %40 {strides = array<i32>} : memref<144x256xf32, #tpu.memory_space<vmem>>, vector<4x256xf32>,
    %c0_37 = arith.constant 0 : index
    %c143 = arith.constant 143 : index
    %42 = vector.load %arg31[%c0_37, %c143] : memref<16x512xf32, #tpu.memory_space<vmem>>, vector<4x256xf32>
    %c6 = arith.constant 6 : index
    %c0_38 = arith.constant 0 : index
    %43 = vector.load %arg24[%c6, %c0_38] : memref<9x256xf32, #tpu.memory_space<vmem>>, vector<1x256xf32>
    %44 = vector.broadcast %43 : vector<1x256xf32> to vector<4x256xf32>
    %45 = arith.mulf %42, %44 : vector<4x256xf32>
    %c48 = arith.constant 48 : index
    %c0_39 = arith.constant 0 : index
    %46 = vector.load %arg32[%c48, %c0_39] : memref<144x256xf32, #tpu.memory_space<vmem>>, vector<4x256xf32>
    tpu.vector_store %arg32[%c48, %c0_39], %45 {strides = array<i32>} : memref<144x256xf32, #tpu.memory_space<vmem>>, vector<4x256xf32>,
    %cst_40 = arith.constant 0.000000e+00 : f32
    %47 = vector.broadcast %cst_40 : f32 to vector<4x256xf32>
    %c52 = arith.constant 52 : index
    %c0_41 = arith.constant 0 : index
    %48 = vector.load %arg32[%c52, %c0_41] : memref<144x256xf32, #tpu.memory_space<vmem>>, vector<4x256xf32>
    tpu.vector_store %arg32[%c52, %c0_41], %47 {strides = array<i32>} : memref<144x256xf32, #tpu.memory_space<vmem>>, vector<4x256xf32>,
    %c0_42 = arith.constant 0 : index
    %c144 = arith.constant 144 : index
    %49 = vector.load %arg31[%c0_42, %c144] : memref<16x512xf32, #tpu.memory_space<vmem>>, vector<4x256xf32>
    %c56 = arith.constant 56 : index
    %c0_43 = arith.constant 0 : index
    %50 = vector.load %arg32[%c56, %c0_43] : memref<144x256xf32, #tpu.memory_space<vmem>>, vector<4x256xf32>
    tpu.vector_store %arg32[%c56, %c0_43], %49 {strides = array<i32>} : memref<144x256xf32, #tpu.memory_space<vmem>>, vector<4x256xf32>,
    %cst_44 = arith.constant 0.000000e+00 : f32
    %51 = vector.broadcast %cst_44 : f32 to vector<4x256xf32>
    %c60 = arith.constant 60 : index
    %c0_45 = arith.constant 0 : index
    %52 = vector.load %arg32[%c60, %c0_45] : memref<144x256xf32, #tpu.memory_space<vmem>>, vector<4x256xf32>
    tpu.vector_store %arg32[%c60, %c0_45], %51 {strides = array<i32>} : memref<144x256xf32, #tpu.memory_space<vmem>>, vector<4x256xf32>,
    %c0_46 = arith.constant 0 : index
    %c145 = arith.constant 145 : index
    %53 = vector.load %arg31[%c0_46, %c145] : memref<16x512xf32, #tpu.memory_space<vmem>>, vector<4x256xf32>
    %c8_47 = arith.constant 8 : index
    %c0_48 = arith.constant 0 : index
    %54 = vector.load %arg24[%c8_47, %c0_48] : memref<9x256xf32, #tpu.memory_space<vmem>>, vector<1x256xf32>
    %55 = vector.broadcast %54 : vector<1x256xf32> to vector<4x256xf32>
    %56 = arith.mulf %53, %55 : vector<4x256xf32>
    %c64 = arith.constant 64 : index
    %c0_49 = arith.constant 0 : index
    %57 = vector.load %arg32[%c64, %c0_49] : memref<144x256xf32, #tpu.memory_space<vmem>>, vector<4x256xf32>
    tpu.vector_store %arg32[%c64, %c0_49], %56 {strides = array<i32>} : memref<144x256xf32, #tpu.memory_space<vmem>>, vector<4x256xf32>,
    %cst_50 = arith.constant 0.000000e+00 : f32
    %58 = vector.broadcast %cst_50 : f32 to vector<4x256xf32>
    %c68 = arith.constant 68 : index
    %c0_51 = arith.constant 0 : index
    %59 = vector.load %arg32[%c68, %c0_51] : memref<144x256xf32, #tpu.memory_space<vmem>>, vector<4x256xf32>
    tpu.vector_store %arg32[%c68, %c0_51], %58 {strides = array<i32>} : memref<144x256xf32, #tpu.memory_space<vmem>>, vector<4x256xf32>,
    %c0_52 = arith.constant 0 : index
    %c0_53 = arith.constant 0 : index
    %60 = vector.load %arg4[%c0_52, %c0_53] : memref<16x72xf32, #tpu.memory_space<vmem>>, vector<16x72xf32>
    %c0_54 = arith.constant 0 : index
    %c0_55 = arith.constant 0 : index
    %61 = vector.load %arg32[%c0_54, %c0_55] : memref<144x256xf32, #tpu.memory_space<vmem>>, vector<72x256xf32>
    %cst_56 = arith.constant dense<0.000000e+00> : vector<16x256xf32>
    %62 = tpu.matmul %60, %61, %cst_56 {dimension_numbers = #tpu.dot_dimension_numbers<[1], [0], [0], [1], [0, 0, 1, 1], [], []>} : vector<16x72xf32>, vector<72x256xf32>, vector<16x256xf32> -> vector<16x256xf32>
    %c0_57 = arith.constant 0 : index
    %c0_58 = arith.constant 0 : index
    %63 = vector.load %arg5[%c0_57, %c0_58] : memref<16x1xf32, #tpu.memory_space<vmem>>, vector<16x1xf32>
    %64 = vector.broadcast %63 : vector<16x1xf32> to vector<16x256xf32>
    %65 = arith.addf %62, %64 : vector<16x256xf32>
    %cst_59 = arith.constant 0.000000e+00 : f32
    %66 = vector.broadcast %cst_59 : f32 to vector<16x256xf32>
    %67 = arith.cmpf oge, %65, %66 : vector<16x256xf32>
    %cst_60 = arith.constant 1.000000e-01 : f32
    %68 = vector.broadcast %cst_60 : f32 to vector<16x256xf32>
    %69 = arith.mulf %65, %68 : vector<16x256xf32>
    %70 = arith.select %67, %65, %69 : vector<16x256xi1>, vector<16x256xf32>
    %c0_61 = arith.constant 0 : index
    %c0_62 = arith.constant 0 : index
    %c0_63 = arith.constant 0 : index
    %71 = vector.load %arg2[%c0_61, %c0_62, %c0_63] : memref<1x4x64xf32, #tpu.memory_space<vmem>>, vector<1x4x64xf32>
    %72 = vector.shape_cast %71 : vector<1x4x64xf32> to vector<4x64xf32>
    %c0_64 = arith.constant 0 : index
    %c128_65 = arith.constant 128 : index
    %73 = vector.load %arg31[%c0_64, %c128_65] : memref<16x512xf32, #tpu.memory_space<vmem>>, vector<4x64xf32>
    tpu.vector_store %arg31[%c0_64, %c128_65], %72 {strides = array<i32>} : memref<16x512xf32, #tpu.memory_space<vmem>>, vector<4x64xf32>,
    %cst_66 = arith.constant 0.000000e+00 : f32
    %74 = vector.broadcast %cst_66 : f32 to vector<4x128xf32>
    %c0_67 = arith.constant 0 : index
    %c192 = arith.constant 192 : index
    %75 = vector.load %arg31[%c0_67, %c192] : memref<16x512xf32, #tpu.memory_space<vmem>>, vector<4x128xf32>
    tpu.vector_store %arg31[%c0_67, %c192], %74 {strides = array<i32>} : memref<16x512xf32, #tpu.memory_space<vmem>>, vector<4x128xf32>,
    %c0_68 = arith.constant 0 : index
    %c119 = arith.constant 119 : index
    %76 = vector.load %arg31[%c0_68, %c119] : memref<16x512xf32, #tpu.memory_space<vmem>>, vector<4x64xf32>
    %c0_69 = arith.constant 0 : index
    %c0_70 = arith.constant 0 : index
    %77 = vector.load %arg25[%c0_69, %c0_70] : memref<9x64xf32, #tpu.memory_space<vmem>>, vector<1x64xf32>
    %78 = vector.broadcast %77 : vector<1x64xf32> to vector<4x64xf32>
    %79 = arith.mulf %76, %78 : vector<4x64xf32>
    %c0_71 = arith.constant 0 : index
    %c0_72 = arith.constant 0 : index
    %80 = vector.load %arg32[%c0_71, %c0_72] : memref<144x256xf32, #tpu.memory_space<vmem>>, vector<4x64xf32>
    tpu.vector_store %arg32[%c0_71, %c0_72], %79 {strides = array<i32>} : memref<144x256xf32, #tpu.memory_space<vmem>>, vector<4x64xf32>,
    %cst_73 = arith.constant 0.000000e+00 : f32
    %81 = vector.broadcast %cst_73 : f32 to vector<4x64xf32>
    %c4_74 = arith.constant 4 : index
    %c0_75 = arith.constant 0 : index
    %82 = vector.load %arg32[%c4_74, %c0_75] : memref<144x256xf32, #tpu.memory_space<vmem>>, vector<4x64xf32>
    tpu.vector_store %arg32[%c4_74, %c0_75], %81 {strides = array<i32>} : memref<144x256xf32, #tpu.memory_space<vmem>>, vector<4x64xf32>,
    %c0_76 = arith.constant 0 : index
    %c120 = arith.constant 120 : index
    %83 = vector.load %arg31[%c0_76, %c120] : memref<16x512xf32, #tpu.memory_space<vmem>>, vector<4x64xf32>
    %c8_77 = arith.constant 8 : index
    %c0_78 = arith.constant 0 : index
    %84 = vector.load %arg32[%c8_77, %c0_78] : memref<144x256xf32, #tpu.memory_space<vmem>>, vector<4x64xf32>
    tpu.vector_store %arg32[%c8_77, %c0_78], %83 {strides = array<i32>} : memref<144x256xf32, #tpu.memory_space<vmem>>, vector<4x64xf32>,
    %cst_79 = arith.constant 0.000000e+00 : f32
    %85 = vector.broadcast %cst_79 : f32 to vector<4x64xf32>
    %c12_80 = arith.constant 12 : index
    %c0_81 = arith.constant 0 : index
    %86 = vector.load %arg32[%c12_80, %c0_81] : memref<144x256xf32, #tpu.memory_space<vmem>>, vector<4x64xf32>
    tpu.vector_store %arg32[%c12_80, %c0_81], %85 {strides = array<i32>} : memref<144x256xf32, #tpu.memory_space<vmem>>, vector<4x64xf32>,
    %c0_82 = arith.constant 0 : index
    %c121 = arith.constant 121 : index
    %87 = vector.load %arg31[%c0_82, %c121] : memref<16x512xf32, #tpu.memory_space<vmem>>, vector<4x64xf32>
    %c2_83 = arith.constant 2 : index
    %c0_84 = arith.constant 0 : index
    %88 = vector.load %arg25[%c2_83, %c0_84] : memref<9x64xf32, #tpu.memory_space<vmem>>, vector<1x64xf32>
    %89 = vector.broadcast %88 : vector<1x64xf32> to vector<4x64xf32>
    %90 = arith.mulf %87, %89 : vector<4x64xf32>
    %c16_85 = arith.constant 16 : index
    %c0_86 = arith.constant 0 : index
    %91 = vector.load %arg32[%c16_85, %c0_86] : memref<144x256xf32, #tpu.memory_space<vmem>>, vector<4x64xf32>
    tpu.vector_store %arg32[%c16_85, %c0_86], %90 {strides = array<i32>} : memref<144x256xf32, #tpu.memory_space<vmem>>, vector<4x64xf32>,
    %cst_87 = arith.constant 0.000000e+00 : f32
    %92 = vector.broadcast %cst_87 : f32 to vector<4x64xf32>
    %c20_88 = arith.constant 20 : index
    %c0_89 = arith.constant 0 : index
    %93 = vector.load %arg32[%c20_88, %c0_89] : memref<144x256xf32, #tpu.memory_space<vmem>>, vector<4x64xf32>
    tpu.vector_store %arg32[%c20_88, %c0_89], %92 {strides = array<i32>} : memref<144x256xf32, #tpu.memory_space<vmem>>, vector<4x64xf32>,
    %c0_90 = arith.constant 0 : index
    %c127_91 = arith.constant 127 : index
    %94 = vector.load %arg31[%c0_90, %c127_91] : memref<16x512xf32, #tpu.memory_space<vmem>>, vector<4x64xf32>
    %c3_92 = arith.constant 3 : index
    %c0_93 = arith.constant 0 : index
    %95 = vector.load %arg25[%c3_92, %c0_93] : memref<9x64xf32, #tpu.memory_space<vmem>>, vector<1x64xf32>
    %96 = vector.broadcast %95 : vector<1x64xf32> to vector<4x64xf32>
    %97 = arith.mulf %94, %96 : vector<4x64xf32>
    %c24_94 = arith.constant 24 : index
    %c0_95 = arith.constant 0 : index
    %98 = vector.load %arg32[%c24_94, %c0_95] : memref<144x256xf32, #tpu.memory_space<vmem>>, vector<4x64xf32>
    tpu.vector_store %arg32[%c24_94, %c0_95], %97 {strides = array<i32>} : memref<144x256xf32, #tpu.memory_space<vmem>>, vector<4x64xf32>,
    %cst_96 = arith.constant 0.000000e+00 : f32
    %99 = vector.broadcast %cst_96 : f32 to vector<4x64xf32>
    %c28_97 = arith.constant 28 : index
    %c0_98 = arith.constant 0 : index
    %100 = vector.load %arg32[%c28_97, %c0_98] : memref<144x256xf32, #tpu.memory_space<vmem>>, vector<4x64xf32>
    tpu.vector_store %arg32[%c28_97, %c0_98], %99 {strides = array<i32>} : memref<144x256xf32, #tpu.memory_space<vmem>>, vector<4x64xf32>,
    %c0_99 = arith.constant 0 : index
    %c128_100 = arith.constant 128 : index
    %101 = vector.load %arg31[%c0_99, %c128_100] : memref<16x512xf32, #tpu.memory_space<vmem>>, vector<4x64xf32>
    %c32_101 = arith.constant 32 : index
    %c0_102 = arith.constant 0 : index
    %102 = vector.load %arg32[%c32_101, %c0_102] : memref<144x256xf32, #tpu.memory_space<vmem>>, vector<4x64xf32>
    tpu.vector_store %arg32[%c32_101, %c0_102], %101 {strides = array<i32>} : memref<144x256xf32, #tpu.memory_space<vmem>>, vector<4x64xf32>,
    %cst_103 = arith.constant 0.000000e+00 : f32
    %103 = vector.broadcast %cst_103 : f32 to vector<4x64xf32>
    %c36_104 = arith.constant 36 : index
    %c0_105 = arith.constant 0 : index
    %104 = vector.load %arg32[%c36_104, %c0_105] : memref<144x256xf32, #tpu.memory_space<vmem>>, vector<4x64xf32>
    tpu.vector_store %arg32[%c36_104, %c0_105], %103 {strides = array<i32>} : memref<144x256xf32, #tpu.memory_space<vmem>>, vector<4x64xf32>,
    %c0_106 = arith.constant 0 : index
    %c129_107 = arith.constant 129 : index
    %105 = vector.load %arg31[%c0_106, %c129_107] : memref<16x512xf32, #tpu.memory_space<vmem>>, vector<4x64xf32>
    %c5_108 = arith.constant 5 : index
    %c0_109 = arith.constant 0 : index
    %106 = vector.load %arg25[%c5_108, %c0_109] : memref<9x64xf32, #tpu.memory_space<vmem>>, vector<1x64xf32>
    %107 = vector.broadcast %106 : vector<1x64xf32> to vector<4x64xf32>
    %108 = arith.mulf %105, %107 : vector<4x64xf32>
    %c40_110 = arith.constant 40 : index
    %c0_111 = arith.constant 0 : index
    %109 = vector.load %arg32[%c40_110, %c0_111] : memref<144x256xf32, #tpu.memory_space<vmem>>, vector<4x64xf32>
    tpu.vector_store %arg32[%c40_110, %c0_111], %108 {strides = array<i32>} : memref<144x256xf32, #tpu.memory_space<vmem>>, vector<4x64xf32>,
    %cst_112 = arith.constant 0.000000e+00 : f32
    %110 = vector.broadcast %cst_112 : f32 to vector<4x64xf32>
    %c44_113 = arith.constant 44 : index
    %c0_114 = arith.constant 0 : index
    %111 = vector.load %arg32[%c44_113, %c0_114] : memref<144x256xf32, #tpu.memory_space<vmem>>, vector<4x64xf32>
    tpu.vector_store %arg32[%c44_113, %c0_114], %110 {strides = array<i32>} : memref<144x256xf32, #tpu.memory_space<vmem>>, vector<4x64xf32>,
    %c0_115 = arith.constant 0 : index
    %c135 = arith.constant 135 : index
    %112 = vector.load %arg31[%c0_115, %c135] : memref<16x512xf32, #tpu.memory_space<vmem>>, vector<4x64xf32>
    %c6_116 = arith.constant 6 : index
    %c0_117 = arith.constant 0 : index
    %113 = vector.load %arg25[%c6_116, %c0_117] : memref<9x64xf32, #tpu.memory_space<vmem>>, vector<1x64xf32>
    %114 = vector.broadcast %113 : vector<1x64xf32> to vector<4x64xf32>
    %115 = arith.mulf %112, %114 : vector<4x64xf32>
    %c48_118 = arith.constant 48 : index
    %c0_119 = arith.constant 0 : index
    %116 = vector.load %arg32[%c48_118, %c0_119] : memref<144x256xf32, #tpu.memory_space<vmem>>, vector<4x64xf32>
    tpu.vector_store %arg32[%c48_118, %c0_119], %115 {strides = array<i32>} : memref<144x256xf32, #tpu.memory_space<vmem>>, vector<4x64xf32>,
    %cst_120 = arith.constant 0.000000e+00 : f32
    %117 = vector.broadcast %cst_120 : f32 to vector<4x64xf32>
    %c52_121 = arith.constant 52 : index
    %c0_122 = arith.constant 0 : index
    %118 = vector.load %arg32[%c52_121, %c0_122] : memref<144x256xf32, #tpu.memory_space<vmem>>, vector<4x64xf32>
    tpu.vector_store %arg32[%c52_121, %c0_122], %117 {strides = array<i32>} : memref<144x256xf32, #tpu.memory_space<vmem>>, vector<4x64xf32>,
    %c0_123 = arith.constant 0 : index
    %c136 = arith.constant 136 : index
    %119 = vector.load %arg31[%c0_123, %c136] : memref<16x512xf32, #tpu.memory_space<vmem>>, vector<4x64xf32>
    %c56_124 = arith.constant 56 : index
    %c0_125 = arith.constant 0 : index
    %120 = vector.load %arg32[%c56_124, %c0_125] : memref<144x256xf32, #tpu.memory_space<vmem>>, vector<4x64xf32>
    tpu.vector_store %arg32[%c56_124, %c0_125], %119 {strides = array<i32>} : memref<144x256xf32, #tpu.memory_space<vmem>>, vector<4x64xf32>,
    %cst_126 = arith.constant 0.000000e+00 : f32
    %121 = vector.broadcast %cst_126 : f32 to vector<4x64xf32>
    %c60_127 = arith.constant 60 : index
    %c0_128 = arith.constant 0 : index
    %122 = vector.load %arg32[%c60_127, %c0_128] : memref<144x256xf32, #tpu.memory_space<vmem>>, vector<4x64xf32>
    tpu.vector_store %arg32[%c60_127, %c0_128], %121 {strides = array<i32>} : memref<144x256xf32, #tpu.memory_space<vmem>>, vector<4x64xf32>,
    %c0_129 = arith.constant 0 : index
    %c137 = arith.constant 137 : index
    %123 = vector.load %arg31[%c0_129, %c137] : memref<16x512xf32, #tpu.memory_space<vmem>>, vector<4x64xf32>
    %c8_130 = arith.constant 8 : index
    %c0_131 = arith.constant 0 : index
    %124 = vector.load %arg25[%c8_130, %c0_131] : memref<9x64xf32, #tpu.memory_space<vmem>>, vector<1x64xf32>
    %125 = vector.broadcast %124 : vector<1x64xf32> to vector<4x64xf32>
    %126 = arith.mulf %123, %125 : vector<4x64xf32>
    %c64_132 = arith.constant 64 : index
    %c0_133 = arith.constant 0 : index
    %127 = vector.load %arg32[%c64_132, %c0_133] : memref<144x256xf32, #tpu.memory_space<vmem>>, vector<4x64xf32>
    tpu.vector_store %arg32[%c64_132, %c0_133], %126 {strides = array<i32>} : memref<144x256xf32, #tpu.memory_space<vmem>>, vector<4x64xf32>,
    %cst_134 = arith.constant 0.000000e+00 : f32
    %128 = vector.broadcast %cst_134 : f32 to vector<4x64xf32>
    %c68_135 = arith.constant 68 : index
    %c0_136 = arith.constant 0 : index
    %129 = vector.load %arg32[%c68_135, %c0_136] : memref<144x256xf32, #tpu.memory_space<vmem>>, vector<4x64xf32>
    tpu.vector_store %arg32[%c68_135, %c0_136], %128 {strides = array<i32>} : memref<144x256xf32, #tpu.memory_space<vmem>>, vector<4x64xf32>,
    %c0_137 = arith.constant 0 : index
    %c0_138 = arith.constant 0 : index
    %130 = vector.load %arg6[%c0_137, %c0_138] : memref<16x72xf32, #tpu.memory_space<vmem>>, vector<16x72xf32>
    %c0_139 = arith.constant 0 : index
    %c0_140 = arith.constant 0 : index
    %131 = vector.load %arg32[%c0_139, %c0_140] : memref<144x256xf32, #tpu.memory_space<vmem>>, vector<72x64xf32>
    %cst_141 = arith.constant dense<0.000000e+00> : vector<16x64xf32>
    %132 = tpu.matmul %130, %131, %cst_141 {dimension_numbers = #tpu.dot_dimension_numbers<[1], [0], [0], [1], [0, 0, 1, 1], [], []>} : vector<16x72xf32>, vector<72x64xf32>, vector<16x64xf32> -> vector<16x64xf32>
    %c0_142 = arith.constant 0 : index
    %c0_143 = arith.constant 0 : index
    %133 = vector.load %arg7[%c0_142, %c0_143] : memref<16x1xf32, #tpu.memory_space<vmem>>, vector<16x1xf32>
    %134 = vector.broadcast %133 : vector<16x1xf32> to vector<16x64xf32>
    %135 = arith.addf %132, %134 : vector<16x64xf32>
    %cst_144 = arith.constant 0.000000e+00 : f32
    %136 = vector.broadcast %cst_144 : f32 to vector<16x64xf32>
    %137 = arith.cmpf oge, %135, %136 : vector<16x64xf32>
    %cst_145 = arith.constant 1.000000e-01 : f32
    %138 = vector.broadcast %cst_145 : f32 to vector<16x64xf32>
    %139 = arith.mulf %135, %138 : vector<16x64xf32>
    %140 = arith.select %137, %135, %139 : vector<16x64xi1>, vector<16x64xf32>
    %c0_146 = arith.constant 0 : index
    %c0_147 = arith.constant 0 : index
    %c0_148 = arith.constant 0 : index
    %141 = vector.load %arg3[%c0_146, %c0_147, %c0_148] : memref<1x4x16xf32, #tpu.memory_space<vmem>>, vector<1x4x16xf32>
    %142 = vector.shape_cast %141 : vector<1x4x16xf32> to vector<4x16xf32>
    %c0_149 = arith.constant 0 : index
    %c128_150 = arith.constant 128 : index
    %143 = vector.load %arg31[%c0_149, %c128_150] : memref<16x512xf32, #tpu.memory_space<vmem>>, vector<4x16xf32>
    tpu.vector_store %arg31[%c0_149, %c128_150], %142 {strides = array<i32>} : memref<16x512xf32, #tpu.memory_space<vmem>>, vector<4x16xf32>,
    %cst_151 = arith.constant 0.000000e+00 : f32
    %144 = vector.broadcast %cst_151 : f32 to vector<4x128xf32>
    %c0_152 = arith.constant 0 : index
    %c144_153 = arith.constant 144 : index
    %145 = vector.load %arg31[%c0_152, %c144_153] : memref<16x512xf32, #tpu.memory_space<vmem>>, vector<4x128xf32>
    tpu.vector_store %arg31[%c0_152, %c144_153], %144 {strides = array<i32>} : memref<16x512xf32, #tpu.memory_space<vmem>>, vector<4x128xf32>,
    %c0_154 = arith.constant 0 : index
    %c123 = arith.constant 123 : index
    %146 = vector.load %arg31[%c0_154, %c123] : memref<16x512xf32, #tpu.memory_space<vmem>>, vector<4x16xf32>
    %c0_155 = arith.constant 0 : index
    %c0_156 = arith.constant 0 : index
    %147 = vector.load %arg26[%c0_155, %c0_156] : memref<9x16xf32, #tpu.memory_space<vmem>>, vector<1x16xf32>
    %148 = vector.broadcast %147 : vector<1x16xf32> to vector<4x16xf32>
    %149 = arith.mulf %146, %148 : vector<4x16xf32>
    %c0_157 = arith.constant 0 : index
    %c0_158 = arith.constant 0 : index
    %150 = vector.load %arg32[%c0_157, %c0_158] : memref<144x256xf32, #tpu.memory_space<vmem>>, vector<4x16xf32>
    tpu.vector_store %arg32[%c0_157, %c0_158], %149 {strides = array<i32>} : memref<144x256xf32, #tpu.memory_space<vmem>>, vector<4x16xf32>,
    %cst_159 = arith.constant 0.000000e+00 : f32
    %151 = vector.broadcast %cst_159 : f32 to vector<4x16xf32>
    %c4_160 = arith.constant 4 : index
    %c0_161 = arith.constant 0 : index
    %152 = vector.load %arg32[%c4_160, %c0_161] : memref<144x256xf32, #tpu.memory_space<vmem>>, vector<4x16xf32>
    tpu.vector_store %arg32[%c4_160, %c0_161], %151 {strides = array<i32>} : memref<144x256xf32, #tpu.memory_space<vmem>>, vector<4x16xf32>,
    %c0_162 = arith.constant 0 : index
    %c124 = arith.constant 124 : index
    %153 = vector.load %arg31[%c0_162, %c124] : memref<16x512xf32, #tpu.memory_space<vmem>>, vector<4x16xf32>
    %c8_163 = arith.constant 8 : index
    %c0_164 = arith.constant 0 : index
    %154 = vector.load %arg32[%c8_163, %c0_164] : memref<144x256xf32, #tpu.memory_space<vmem>>, vector<4x16xf32>
    tpu.vector_store %arg32[%c8_163, %c0_164], %153 {strides = array<i32>} : memref<144x256xf32, #tpu.memory_space<vmem>>, vector<4x16xf32>,
    %cst_165 = arith.constant 0.000000e+00 : f32
    %155 = vector.broadcast %cst_165 : f32 to vector<4x16xf32>
    %c12_166 = arith.constant 12 : index
    %c0_167 = arith.constant 0 : index
    %156 = vector.load %arg32[%c12_166, %c0_167] : memref<144x256xf32, #tpu.memory_space<vmem>>, vector<4x16xf32>
    tpu.vector_store %arg32[%c12_166, %c0_167], %155 {strides = array<i32>} : memref<144x256xf32, #tpu.memory_space<vmem>>, vector<4x16xf32>,
    %c0_168 = arith.constant 0 : index
    %c125 = arith.constant 125 : index
    %157 = vector.load %arg31[%c0_168, %c125] : memref<16x512xf32, #tpu.memory_space<vmem>>, vector<4x16xf32>
    %c2_169 = arith.constant 2 : index
    %c0_170 = arith.constant 0 : index
    %158 = vector.load %arg26[%c2_169, %c0_170] : memref<9x16xf32, #tpu.memory_space<vmem>>, vector<1x16xf32>
    %159 = vector.broadcast %158 : vector<1x16xf32> to vector<4x16xf32>
    %160 = arith.mulf %157, %159 : vector<4x16xf32>
    %c16_171 = arith.constant 16 : index
    %c0_172 = arith.constant 0 : index
    %161 = vector.load %arg32[%c16_171, %c0_172] : memref<144x256xf32, #tpu.memory_space<vmem>>, vector<4x16xf32>
    tpu.vector_store %arg32[%c16_171, %c0_172], %160 {strides = array<i32>} : memref<144x256xf32, #tpu.memory_space<vmem>>, vector<4x16xf32>,
    %cst_173 = arith.constant 0.000000e+00 : f32
    %162 = vector.broadcast %cst_173 : f32 to vector<4x16xf32>
    %c20_174 = arith.constant 20 : index
    %c0_175 = arith.constant 0 : index
    %163 = vector.load %arg32[%c20_174, %c0_175] : memref<144x256xf32, #tpu.memory_space<vmem>>, vector<4x16xf32>
    tpu.vector_store %arg32[%c20_174, %c0_175], %162 {strides = array<i32>} : memref<144x256xf32, #tpu.memory_space<vmem>>, vector<4x16xf32>,
    %c0_176 = arith.constant 0 : index
    %c127_177 = arith.constant 127 : index
    %164 = vector.load %arg31[%c0_176, %c127_177] : memref<16x512xf32, #tpu.memory_space<vmem>>, vector<4x16xf32>
    %c3_178 = arith.constant 3 : index
    %c0_179 = arith.constant 0 : index
    %165 = vector.load %arg26[%c3_178, %c0_179] : memref<9x16xf32, #tpu.memory_space<vmem>>, vector<1x16xf32>
    %166 = vector.broadcast %165 : vector<1x16xf32> to vector<4x16xf32>
    %167 = arith.mulf %164, %166 : vector<4x16xf32>
    %c24_180 = arith.constant 24 : index
    %c0_181 = arith.constant 0 : index
    %168 = vector.load %arg32[%c24_180, %c0_181] : memref<144x256xf32, #tpu.memory_space<vmem>>, vector<4x16xf32>
    tpu.vector_store %arg32[%c24_180, %c0_181], %167 {strides = array<i32>} : memref<144x256xf32, #tpu.memory_space<vmem>>, vector<4x16xf32>,
    %cst_182 = arith.constant 0.000000e+00 : f32
    %169 = vector.broadcast %cst_182 : f32 to vector<4x16xf32>
    %c28_183 = arith.constant 28 : index
    %c0_184 = arith.constant 0 : index
    %170 = vector.load %arg32[%c28_183, %c0_184] : memref<144x256xf32, #tpu.memory_space<vmem>>, vector<4x16xf32>
    tpu.vector_store %arg32[%c28_183, %c0_184], %169 {strides = array<i32>} : memref<144x256xf32, #tpu.memory_space<vmem>>, vector<4x16xf32>,
    %c0_185 = arith.constant 0 : index
    %c128_186 = arith.constant 128 : index
    %171 = vector.load %arg31[%c0_185, %c128_186] : memref<16x512xf32, #tpu.memory_space<vmem>>, vector<4x16xf32>
    %c32_187 = arith.constant 32 : index
    %c0_188 = arith.constant 0 : index
    %172 = vector.load %arg32[%c32_187, %c0_188] : memref<144x256xf32, #tpu.memory_space<vmem>>, vector<4x16xf32>
    tpu.vector_store %arg32[%c32_187, %c0_188], %171 {strides = array<i32>} : memref<144x256xf32, #tpu.memory_space<vmem>>, vector<4x16xf32>,
    %cst_189 = arith.constant 0.000000e+00 : f32
    %173 = vector.broadcast %cst_189 : f32 to vector<4x16xf32>
    %c36_190 = arith.constant 36 : index
    %c0_191 = arith.constant 0 : index
    %174 = vector.load %arg32[%c36_190, %c0_191] : memref<144x256xf32, #tpu.memory_space<vmem>>, vector<4x16xf32>
    tpu.vector_store %arg32[%c36_190, %c0_191], %173 {strides = array<i32>} : memref<144x256xf32, #tpu.memory_space<vmem>>, vector<4x16xf32>,
    %c0_192 = arith.constant 0 : index
    %c129_193 = arith.constant 129 : index
    %175 = vector.load %arg31[%c0_192, %c129_193] : memref<16x512xf32, #tpu.memory_space<vmem>>, vector<4x16xf32>
    %c5_194 = arith.constant 5 : index
    %c0_195 = arith.constant 0 : index
    %176 = vector.load %arg26[%c5_194, %c0_195] : memref<9x16xf32, #tpu.memory_space<vmem>>, vector<1x16xf32>
    %177 = vector.broadcast %176 : vector<1x16xf32> to vector<4x16xf32>
    %178 = arith.mulf %175, %177 : vector<4x16xf32>
    %c40_196 = arith.constant 40 : index
    %c0_197 = arith.constant 0 : index
    %179 = vector.load %arg32[%c40_196, %c0_197] : memref<144x256xf32, #tpu.memory_space<vmem>>, vector<4x16xf32>
    tpu.vector_store %arg32[%c40_196, %c0_197], %178 {strides = array<i32>} : memref<144x256xf32, #tpu.memory_space<vmem>>, vector<4x16xf32>,
    %cst_198 = arith.constant 0.000000e+00 : f32
    %180 = vector.broadcast %cst_198 : f32 to vector<4x16xf32>
    %c44_199 = arith.constant 44 : index
    %c0_200 = arith.constant 0 : index
    %181 = vector.load %arg32[%c44_199, %c0_200] : memref<144x256xf32, #tpu.memory_space<vmem>>, vector<4x16xf32>
    tpu.vector_store %arg32[%c44_199, %c0_200], %180 {strides = array<i32>} : memref<144x256xf32, #tpu.memory_space<vmem>>, vector<4x16xf32>,
    %c0_201 = arith.constant 0 : index
    %c131 = arith.constant 131 : index
    %182 = vector.load %arg31[%c0_201, %c131] : memref<16x512xf32, #tpu.memory_space<vmem>>, vector<4x16xf32>
    %c6_202 = arith.constant 6 : index
    %c0_203 = arith.constant 0 : index
    %183 = vector.load %arg26[%c6_202, %c0_203] : memref<9x16xf32, #tpu.memory_space<vmem>>, vector<1x16xf32>
    %184 = vector.broadcast %183 : vector<1x16xf32> to vector<4x16xf32>
    %185 = arith.mulf %182, %184 : vector<4x16xf32>
    %c48_204 = arith.constant 48 : index
    %c0_205 = arith.constant 0 : index
    %186 = vector.load %arg32[%c48_204, %c0_205] : memref<144x256xf32, #tpu.memory_space<vmem>>, vector<4x16xf32>
    tpu.vector_store %arg32[%c48_204, %c0_205], %185 {strides = array<i32>} : memref<144x256xf32, #tpu.memory_space<vmem>>, vector<4x16xf32>,
    %cst_206 = arith.constant 0.000000e+00 : f32
    %187 = vector.broadcast %cst_206 : f32 to vector<4x16xf32>
    %c52_207 = arith.constant 52 : index
    %c0_208 = arith.constant 0 : index
    %188 = vector.load %arg32[%c52_207, %c0_208] : memref<144x256xf32, #tpu.memory_space<vmem>>, vector<4x16xf32>
    tpu.vector_store %arg32[%c52_207, %c0_208], %187 {strides = array<i32>} : memref<144x256xf32, #tpu.memory_space<vmem>>, vector<4x16xf32>,
    %c0_209 = arith.constant 0 : index
    %c132 = arith.constant 132 : index
    %189 = vector.load %arg31[%c0_209, %c132] : memref<16x512xf32, #tpu.memory_space<vmem>>, vector<4x16xf32>
    %c56_210 = arith.constant 56 : index
    %c0_211 = arith.constant 0 : index
    %190 = vector.load %arg32[%c56_210, %c0_211] : memref<144x256xf32, #tpu.memory_space<vmem>>, vector<4x16xf32>
    tpu.vector_store %arg32[%c56_210, %c0_211], %189 {strides = array<i32>} : memref<144x256xf32, #tpu.memory_space<vmem>>, vector<4x16xf32>,
    %cst_212 = arith.constant 0.000000e+00 : f32
    %191 = vector.broadcast %cst_212 : f32 to vector<4x16xf32>
    %c60_213 = arith.constant 60 : index
    %c0_214 = arith.constant 0 : index
    %192 = vector.load %arg32[%c60_213, %c0_214] : memref<144x256xf32, #tpu.memory_space<vmem>>, vector<4x16xf32>
    tpu.vector_store %arg32[%c60_213, %c0_214], %191 {strides = array<i32>} : memref<144x256xf32, #tpu.memory_space<vmem>>, vector<4x16xf32>,
    %c0_215 = arith.constant 0 : index
    %c133 = arith.constant 133 : index
    %193 = vector.load %arg31[%c0_215, %c133] : memref<16x512xf32, #tpu.memory_space<vmem>>, vector<4x16xf32>
    %c8_216 = arith.constant 8 : index
    %c0_217 = arith.constant 0 : index
    %194 = vector.load %arg26[%c8_216, %c0_217] : memref<9x16xf32, #tpu.memory_space<vmem>>, vector<1x16xf32>
    %195 = vector.broadcast %194 : vector<1x16xf32> to vector<4x16xf32>
    %196 = arith.mulf %193, %195 : vector<4x16xf32>
    %c64_218 = arith.constant 64 : index
    %c0_219 = arith.constant 0 : index
    %197 = vector.load %arg32[%c64_218, %c0_219] : memref<144x256xf32, #tpu.memory_space<vmem>>, vector<4x16xf32>
    tpu.vector_store %arg32[%c64_218, %c0_219], %196 {strides = array<i32>} : memref<144x256xf32, #tpu.memory_space<vmem>>, vector<4x16xf32>,
    %cst_220 = arith.constant 0.000000e+00 : f32
    %198 = vector.broadcast %cst_220 : f32 to vector<4x16xf32>
    %c68_221 = arith.constant 68 : index
    %c0_222 = arith.constant 0 : index
    %199 = vector.load %arg32[%c68_221, %c0_222] : memref<144x256xf32, #tpu.memory_space<vmem>>, vector<4x16xf32>
    tpu.vector_store %arg32[%c68_221, %c0_222], %198 {strides = array<i32>} : memref<144x256xf32, #tpu.memory_space<vmem>>, vector<4x16xf32>,
    %c0_223 = arith.constant 0 : index
    %c0_224 = arith.constant 0 : index
    %200 = vector.load %arg8[%c0_223, %c0_224] : memref<16x72xf32, #tpu.memory_space<vmem>>, vector<16x72xf32>
    %c0_225 = arith.constant 0 : index
    %c0_226 = arith.constant 0 : index
    %201 = vector.load %arg32[%c0_225, %c0_226] : memref<144x256xf32, #tpu.memory_space<vmem>>, vector<72x16xf32>
    %cst_227 = arith.constant dense<0.000000e+00> : vector<16x16xf32>
    %202 = tpu.matmul %200, %201, %cst_227 {dimension_numbers = #tpu.dot_dimension_numbers<[1], [0], [0], [1], [0, 0, 1, 1], [], []>} : vector<16x72xf32>, vector<72x16xf32>, vector<16x16xf32> -> vector<16x16xf32>
    %c0_228 = arith.constant 0 : index
    %c0_229 = arith.constant 0 : index
    %203 = vector.load %arg9[%c0_228, %c0_229] : memref<16x1xf32, #tpu.memory_space<vmem>>, vector<16x1xf32>
    %204 = vector.broadcast %203 : vector<16x1xf32> to vector<16x16xf32>
    %205 = arith.addf %202, %204 : vector<16x16xf32>
    %cst_230 = arith.constant 0.000000e+00 : f32
    %206 = vector.broadcast %cst_230 : f32 to vector<16x16xf32>
    %207 = arith.cmpf oge, %205, %206 : vector<16x16xf32>
    %cst_231 = arith.constant 1.000000e-01 : f32
    %208 = vector.broadcast %cst_231 : f32 to vector<16x16xf32>
    %209 = arith.mulf %205, %208 : vector<16x16xf32>
    %210 = arith.select %207, %205, %209 : vector<16x16xi1>, vector<16x16xf32>
    %c0_232 = arith.constant 0 : index
    %c0_233 = arith.constant 0 : index
    %211 = vector.load %arg20[%c0_232, %c0_233] : memref<64x256xf32, #tpu.memory_space<vmem>>, vector<64x256xf32>
    %cst_234 = arith.constant dense<0.000000e+00> : vector<16x256xf32>
    %212 = tpu.matmul %140, %211, %cst_234 {dimension_numbers = #tpu.dot_dimension_numbers<[1], [0], [0], [1], [0, 0, 1, 1], [], []>} : vector<16x64xf32>, vector<64x256xf32>, vector<16x256xf32> -> vector<16x256xf32>
    %c0_235 = arith.constant 0 : index
    %c0_236 = arith.constant 0 : index
    %213 = vector.load %arg21[%c0_235, %c0_236] : memref<16x64xf32, #tpu.memory_space<vmem>>, vector<16x64xf32>
    %cst_237 = arith.constant dense<0.000000e+00> : vector<16x64xf32>
    %214 = tpu.matmul %210, %213, %cst_237 {dimension_numbers = #tpu.dot_dimension_numbers<[1], [0], [0], [1], [0, 0, 1, 1], [], []>} : vector<16x16xf32>, vector<16x64xf32>, vector<16x64xf32> -> vector<16x64xf32>
    %c0_238 = arith.constant 0 : index
    %c128_239 = arith.constant 128 : index
    %215 = vector.load %arg31[%c0_238, %c128_239] : memref<16x512xf32, #tpu.memory_space<vmem>>, vector<16x256xf32>
    tpu.vector_store %arg31[%c0_238, %c128_239], %70 {strides = array<i32>} : memref<16x512xf32, #tpu.memory_space<vmem>>, vector<16x256xf32>,
    %c0_240 = arith.constant 0 : index
    %c111_241 = arith.constant 111 : index
    %216 = vector.load %arg31[%c0_240, %c111_241] : memref<16x512xf32, #tpu.memory_space<vmem>>, vector<16x256xf32>
    %c0_242 = arith.constant 0 : index
    %c0_243 = arith.constant 0 : index
    %217 = vector.load %arg24[%c0_242, %c0_243] : memref<9x256xf32, #tpu.memory_space<vmem>>, vector<1x256xf32>
    %218 = vector.broadcast %217 : vector<1x256xf32> to vector<16x256xf32>
    %219 = arith.mulf %216, %218 : vector<16x256xf32>
    %c0_244 = arith.constant 0 : index
    %c0_245 = arith.constant 0 : index
    %220 = vector.load %arg32[%c0_244, %c0_245] : memref<144x256xf32, #tpu.memory_space<vmem>>, vector<16x256xf32>
    tpu.vector_store %arg32[%c0_244, %c0_245], %219 {strides = array<i32>} : memref<144x256xf32, #tpu.memory_space<vmem>>, vector<16x256xf32>,
    %c0_246 = arith.constant 0 : index
    %c112_247 = arith.constant 112 : index
    %221 = vector.load %arg31[%c0_246, %c112_247] : memref<16x512xf32, #tpu.memory_space<vmem>>, vector<16x256xf32>
    %c16_248 = arith.constant 16 : index
    %c0_249 = arith.constant 0 : index
    %222 = vector.load %arg32[%c16_248, %c0_249] : memref<144x256xf32, #tpu.memory_space<vmem>>, vector<16x256xf32>
    tpu.vector_store %arg32[%c16_248, %c0_249], %221 {strides = array<i32>} : memref<144x256xf32, #tpu.memory_space<vmem>>, vector<16x256xf32>,
    %c0_250 = arith.constant 0 : index
    %c113_251 = arith.constant 113 : index
    %223 = vector.load %arg31[%c0_250, %c113_251] : memref<16x512xf32, #tpu.memory_space<vmem>>, vector<16x256xf32>
    %c2_252 = arith.constant 2 : index
    %c0_253 = arith.constant 0 : index
    %224 = vector.load %arg24[%c2_252, %c0_253] : memref<9x256xf32, #tpu.memory_space<vmem>>, vector<1x256xf32>
    %225 = vector.broadcast %224 : vector<1x256xf32> to vector<16x256xf32>
    %226 = arith.mulf %223, %225 : vector<16x256xf32>
    %c32_254 = arith.constant 32 : index
    %c0_255 = arith.constant 0 : index
    %227 = vector.load %arg32[%c32_254, %c0_255] : memref<144x256xf32, #tpu.memory_space<vmem>>, vector<16x256xf32>
    tpu.vector_store %arg32[%c32_254, %c0_255], %226 {strides = array<i32>} : memref<144x256xf32, #tpu.memory_space<vmem>>, vector<16x256xf32>,
    %c0_256 = arith.constant 0 : index
    %c127_257 = arith.constant 127 : index
    %228 = vector.load %arg31[%c0_256, %c127_257] : memref<16x512xf32, #tpu.memory_space<vmem>>, vector<16x256xf32>
    %c3_258 = arith.constant 3 : index
    %c0_259 = arith.constant 0 : index
    %229 = vector.load %arg24[%c3_258, %c0_259] : memref<9x256xf32, #tpu.memory_space<vmem>>, vector<1x256xf32>
    %230 = vector.broadcast %229 : vector<1x256xf32> to vector<16x256xf32>
    %231 = arith.mulf %228, %230 : vector<16x256xf32>
    %c48_260 = arith.constant 48 : index
    %c0_261 = arith.constant 0 : index
    %232 = vector.load %arg32[%c48_260, %c0_261] : memref<144x256xf32, #tpu.memory_space<vmem>>, vector<16x256xf32>
    tpu.vector_store %arg32[%c48_260, %c0_261], %231 {strides = array<i32>} : memref<144x256xf32, #tpu.memory_space<vmem>>, vector<16x256xf32>,
    %c0_262 = arith.constant 0 : index
    %c128_263 = arith.constant 128 : index
    %233 = vector.load %arg31[%c0_262, %c128_263] : memref<16x512xf32, #tpu.memory_space<vmem>>, vector<16x256xf32>
    %c64_264 = arith.constant 64 : index
    %c0_265 = arith.constant 0 : index
    %234 = vector.load %arg32[%c64_264, %c0_265] : memref<144x256xf32, #tpu.memory_space<vmem>>, vector<16x256xf32>
    tpu.vector_store %arg32[%c64_264, %c0_265], %233 {strides = array<i32>} : memref<144x256xf32, #tpu.memory_space<vmem>>, vector<16x256xf32>,
    %c0_266 = arith.constant 0 : index
    %c129_267 = arith.constant 129 : index
    %235 = vector.load %arg31[%c0_266, %c129_267] : memref<16x512xf32, #tpu.memory_space<vmem>>, vector<16x256xf32>
    %c5_268 = arith.constant 5 : index
    %c0_269 = arith.constant 0 : index
    %236 = vector.load %arg24[%c5_268, %c0_269] : memref<9x256xf32, #tpu.memory_space<vmem>>, vector<1x256xf32>
    %237 = vector.broadcast %236 : vector<1x256xf32> to vector<16x256xf32>
    %238 = arith.mulf %235, %237 : vector<16x256xf32>
    %c80 = arith.constant 80 : index
    %c0_270 = arith.constant 0 : index
    %239 = vector.load %arg32[%c80, %c0_270] : memref<144x256xf32, #tpu.memory_space<vmem>>, vector<16x256xf32>
    tpu.vector_store %arg32[%c80, %c0_270], %238 {strides = array<i32>} : memref<144x256xf32, #tpu.memory_space<vmem>>, vector<16x256xf32>,
    %c0_271 = arith.constant 0 : index
    %c143_272 = arith.constant 143 : index
    %240 = vector.load %arg31[%c0_271, %c143_272] : memref<16x512xf32, #tpu.memory_space<vmem>>, vector<16x256xf32>
    %c6_273 = arith.constant 6 : index
    %c0_274 = arith.constant 0 : index
    %241 = vector.load %arg24[%c6_273, %c0_274] : memref<9x256xf32, #tpu.memory_space<vmem>>, vector<1x256xf32>
    %242 = vector.broadcast %241 : vector<1x256xf32> to vector<16x256xf32>
    %243 = arith.mulf %240, %242 : vector<16x256xf32>
    %c96 = arith.constant 96 : index
    %c0_275 = arith.constant 0 : index
    %244 = vector.load %arg32[%c96, %c0_275] : memref<144x256xf32, #tpu.memory_space<vmem>>, vector<16x256xf32>
    tpu.vector_store %arg32[%c96, %c0_275], %243 {strides = array<i32>} : memref<144x256xf32, #tpu.memory_space<vmem>>, vector<16x256xf32>,
    %c0_276 = arith.constant 0 : index
    %c144_277 = arith.constant 144 : index
    %245 = vector.load %arg31[%c0_276, %c144_277] : memref<16x512xf32, #tpu.memory_space<vmem>>, vector<16x256xf32>
    %c112_278 = arith.constant 112 : index
    %c0_279 = arith.constant 0 : index
    %246 = vector.load %arg32[%c112_278, %c0_279] : memref<144x256xf32, #tpu.memory_space<vmem>>, vector<16x256xf32>
    tpu.vector_store %arg32[%c112_278, %c0_279], %245 {strides = array<i32>} : memref<144x256xf32, #tpu.memory_space<vmem>>, vector<16x256xf32>,
    %c0_280 = arith.constant 0 : index
    %c145_281 = arith.constant 145 : index
    %247 = vector.load %arg31[%c0_280, %c145_281] : memref<16x512xf32, #tpu.memory_space<vmem>>, vector<16x256xf32>
    %c8_282 = arith.constant 8 : index
    %c0_283 = arith.constant 0 : index
    %248 = vector.load %arg24[%c8_282, %c0_283] : memref<9x256xf32, #tpu.memory_space<vmem>>, vector<1x256xf32>
    %249 = vector.broadcast %248 : vector<1x256xf32> to vector<16x256xf32>
    %250 = arith.mulf %247, %249 : vector<16x256xf32>
    %c128_284 = arith.constant 128 : index
    %c0_285 = arith.constant 0 : index
    %251 = vector.load %arg32[%c128_284, %c0_285] : memref<144x256xf32, #tpu.memory_space<vmem>>, vector<16x256xf32>
    tpu.vector_store %arg32[%c128_284, %c0_285], %250 {strides = array<i32>} : memref<144x256xf32, #tpu.memory_space<vmem>>, vector<16x256xf32>,
    %c0_286 = arith.constant 0 : index
    %c0_287 = arith.constant 0 : index
    %252 = vector.load %arg10[%c0_286, %c0_287] : memref<16x144xf32, #tpu.memory_space<vmem>>, vector<16x144xf32>
    %c0_288 = arith.constant 0 : index
    %c0_289 = arith.constant 0 : index
    %253 = vector.load %arg32[%c0_288, %c0_289] : memref<144x256xf32, #tpu.memory_space<vmem>>, vector<144x256xf32>
    %cst_290 = arith.constant dense<0.000000e+00> : vector<16x256xf32>
    %254 = tpu.matmul %252, %253, %cst_290 {dimension_numbers = #tpu.dot_dimension_numbers<[1], [0], [0], [1], [0, 0, 1, 1], [], []>} : vector<16x144xf32>, vector<144x256xf32>, vector<16x256xf32> -> vector<16x256xf32>
    %c0_291 = arith.constant 0 : index
    %c0_292 = arith.constant 0 : index
    %255 = vector.load %arg11[%c0_291, %c0_292] : memref<16x1xf32, #tpu.memory_space<vmem>>, vector<16x1xf32>
    %256 = vector.broadcast %255 : vector<16x1xf32> to vector<16x256xf32>
    %257 = arith.addf %254, %256 : vector<16x256xf32>
    %c0_293 = arith.constant 0 : index
    %c128_294 = arith.constant 128 : index
    %258 = vector.load %arg31[%c0_293, %c128_294] : memref<16x512xf32, #tpu.memory_space<vmem>>, vector<16x64xf32>
    tpu.vector_store %arg31[%c0_293, %c128_294], %140 {strides = array<i32>} : memref<16x512xf32, #tpu.memory_space<vmem>>, vector<16x64xf32>,
    %cst_295 = arith.constant 0.000000e+00 : f32
    %259 = vector.broadcast %cst_295 : f32 to vector<16x128xf32>
    %c0_296 = arith.constant 0 : index
    %c192_297 = arith.constant 192 : index
    %260 = vector.load %arg31[%c0_296, %c192_297] : memref<16x512xf32, #tpu.memory_space<vmem>>, vector<16x128xf32>
    tpu.vector_store %arg31[%c0_296, %c192_297], %259 {strides = array<i32>} : memref<16x512xf32, #tpu.memory_space<vmem>>, vector<16x128xf32>,
    %c0_298 = arith.constant 0 : index
    %c119_299 = arith.constant 119 : index
    %261 = vector.load %arg31[%c0_298, %c119_299] : memref<16x512xf32, #tpu.memory_space<vmem>>, vector<16x64xf32>
    %c0_300 = arith.constant 0 : index
    %c0_301 = arith.constant 0 : index
    %262 = vector.load %arg25[%c0_300, %c0_301] : memref<9x64xf32, #tpu.memory_space<vmem>>, vector<1x64xf32>
    %263 = vector.broadcast %262 : vector<1x64xf32> to vector<16x64xf32>
    %264 = arith.mulf %261, %263 : vector<16x64xf32>
    %c0_302 = arith.constant 0 : index
    %c0_303 = arith.constant 0 : index
    %265 = vector.load %arg32[%c0_302, %c0_303] : memref<144x256xf32, #tpu.memory_space<vmem>>, vector<16x64xf32>
    tpu.vector_store %arg32[%c0_302, %c0_303], %264 {strides = array<i32>} : memref<144x256xf32, #tpu.memory_space<vmem>>, vector<16x64xf32>,
    %c0_304 = arith.constant 0 : index
    %c120_305 = arith.constant 120 : index
    %266 = vector.load %arg31[%c0_304, %c120_305] : memref<16x512xf32, #tpu.memory_space<vmem>>, vector<16x64xf32>
    %c16_306 = arith.constant 16 : index
    %c0_307 = arith.constant 0 : index
    %267 = vector.load %arg32[%c16_306, %c0_307] : memref<144x256xf32, #tpu.memory_space<vmem>>, vector<16x64xf32>
    tpu.vector_store %arg32[%c16_306, %c0_307], %266 {strides = array<i32>} : memref<144x256xf32, #tpu.memory_space<vmem>>, vector<16x64xf32>,
    %c0_308 = arith.constant 0 : index
    %c121_309 = arith.constant 121 : index
    %268 = vector.load %arg31[%c0_308, %c121_309] : memref<16x512xf32, #tpu.memory_space<vmem>>, vector<16x64xf32>
    %c2_310 = arith.constant 2 : index
    %c0_311 = arith.constant 0 : index
    %269 = vector.load %arg25[%c2_310, %c0_311] : memref<9x64xf32, #tpu.memory_space<vmem>>, vector<1x64xf32>
    %270 = vector.broadcast %269 : vector<1x64xf32> to vector<16x64xf32>
    %271 = arith.mulf %268, %270 : vector<16x64xf32>
    %c32_312 = arith.constant 32 : index
    %c0_313 = arith.constant 0 : index
    %272 = vector.load %arg32[%c32_312, %c0_313] : memref<144x256xf32, #tpu.memory_space<vmem>>, vector<16x64xf32>
    tpu.vector_store %arg32[%c32_312, %c0_313], %271 {strides = array<i32>} : memref<144x256xf32, #tpu.memory_space<vmem>>, vector<16x64xf32>,
    %c0_314 = arith.constant 0 : index
    %c127_315 = arith.constant 127 : index
    %273 = vector.load %arg31[%c0_314, %c127_315] : memref<16x512xf32, #tpu.memory_space<vmem>>, vector<16x64xf32>
    %c3_316 = arith.constant 3 : index
    %c0_317 = arith.constant 0 : index
    %274 = vector.load %arg25[%c3_316, %c0_317] : memref<9x64xf32, #tpu.memory_space<vmem>>, vector<1x64xf32>
    %275 = vector.broadcast %274 : vector<1x64xf32> to vector<16x64xf32>
    %276 = arith.mulf %273, %275 : vector<16x64xf32>
    %c48_318 = arith.constant 48 : index
    %c0_319 = arith.constant 0 : index
    %277 = vector.load %arg32[%c48_318, %c0_319] : memref<144x256xf32, #tpu.memory_space<vmem>>, vector<16x64xf32>
    tpu.vector_store %arg32[%c48_318, %c0_319], %276 {strides = array<i32>} : memref<144x256xf32, #tpu.memory_space<vmem>>, vector<16x64xf32>,
    %c0_320 = arith.constant 0 : index
    %c128_321 = arith.constant 128 : index
    %278 = vector.load %arg31[%c0_320, %c128_321] : memref<16x512xf32, #tpu.memory_space<vmem>>, vector<16x64xf32>
    %c64_322 = arith.constant 64 : index
    %c0_323 = arith.constant 0 : index
    %279 = vector.load %arg32[%c64_322, %c0_323] : memref<144x256xf32, #tpu.memory_space<vmem>>, vector<16x64xf32>
    tpu.vector_store %arg32[%c64_322, %c0_323], %278 {strides = array<i32>} : memref<144x256xf32, #tpu.memory_space<vmem>>, vector<16x64xf32>,
    %c0_324 = arith.constant 0 : index
    %c129_325 = arith.constant 129 : index
    %280 = vector.load %arg31[%c0_324, %c129_325] : memref<16x512xf32, #tpu.memory_space<vmem>>, vector<16x64xf32>
    %c5_326 = arith.constant 5 : index
    %c0_327 = arith.constant 0 : index
    %281 = vector.load %arg25[%c5_326, %c0_327] : memref<9x64xf32, #tpu.memory_space<vmem>>, vector<1x64xf32>
    %282 = vector.broadcast %281 : vector<1x64xf32> to vector<16x64xf32>
    %283 = arith.mulf %280, %282 : vector<16x64xf32>
    %c80_328 = arith.constant 80 : index
    %c0_329 = arith.constant 0 : index
    %284 = vector.load %arg32[%c80_328, %c0_329] : memref<144x256xf32, #tpu.memory_space<vmem>>, vector<16x64xf32>
    tpu.vector_store %arg32[%c80_328, %c0_329], %283 {strides = array<i32>} : memref<144x256xf32, #tpu.memory_space<vmem>>, vector<16x64xf32>,
    %c0_330 = arith.constant 0 : index
    %c135_331 = arith.constant 135 : index
    %285 = vector.load %arg31[%c0_330, %c135_331] : memref<16x512xf32, #tpu.memory_space<vmem>>, vector<16x64xf32>
    %c6_332 = arith.constant 6 : index
    %c0_333 = arith.constant 0 : index
    %286 = vector.load %arg25[%c6_332, %c0_333] : memref<9x64xf32, #tpu.memory_space<vmem>>, vector<1x64xf32>
    %287 = vector.broadcast %286 : vector<1x64xf32> to vector<16x64xf32>
    %288 = arith.mulf %285, %287 : vector<16x64xf32>
    %c96_334 = arith.constant 96 : index
    %c0_335 = arith.constant 0 : index
    %289 = vector.load %arg32[%c96_334, %c0_335] : memref<144x256xf32, #tpu.memory_space<vmem>>, vector<16x64xf32>
    tpu.vector_store %arg32[%c96_334, %c0_335], %288 {strides = array<i32>} : memref<144x256xf32, #tpu.memory_space<vmem>>, vector<16x64xf32>,
    %c0_336 = arith.constant 0 : index
    %c136_337 = arith.constant 136 : index
    %290 = vector.load %arg31[%c0_336, %c136_337] : memref<16x512xf32, #tpu.memory_space<vmem>>, vector<16x64xf32>
    %c112_338 = arith.constant 112 : index
    %c0_339 = arith.constant 0 : index
    %291 = vector.load %arg32[%c112_338, %c0_339] : memref<144x256xf32, #tpu.memory_space<vmem>>, vector<16x64xf32>
    tpu.vector_store %arg32[%c112_338, %c0_339], %290 {strides = array<i32>} : memref<144x256xf32, #tpu.memory_space<vmem>>, vector<16x64xf32>,
    %c0_340 = arith.constant 0 : index
    %c137_341 = arith.constant 137 : index
    %292 = vector.load %arg31[%c0_340, %c137_341] : memref<16x512xf32, #tpu.memory_space<vmem>>, vector<16x64xf32>
    %c8_342 = arith.constant 8 : index
    %c0_343 = arith.constant 0 : index
    %293 = vector.load %arg25[%c8_342, %c0_343] : memref<9x64xf32, #tpu.memory_space<vmem>>, vector<1x64xf32>
    %294 = vector.broadcast %293 : vector<1x64xf32> to vector<16x64xf32>
    %295 = arith.mulf %292, %294 : vector<16x64xf32>
    %c128_344 = arith.constant 128 : index
    %c0_345 = arith.constant 0 : index
    %296 = vector.load %arg32[%c128_344, %c0_345] : memref<144x256xf32, #tpu.memory_space<vmem>>, vector<16x64xf32>
    tpu.vector_store %arg32[%c128_344, %c0_345], %295 {strides = array<i32>} : memref<144x256xf32, #tpu.memory_space<vmem>>, vector<16x64xf32>,
    %c0_346 = arith.constant 0 : index
    %c0_347 = arith.constant 0 : index
    %297 = vector.load %arg12[%c0_346, %c0_347] : memref<16x144xf32, #tpu.memory_space<vmem>>, vector<16x144xf32>
    %c0_348 = arith.constant 0 : index
    %c0_349 = arith.constant 0 : index
    %298 = vector.load %arg32[%c0_348, %c0_349] : memref<144x256xf32, #tpu.memory_space<vmem>>, vector<144x64xf32>
    %cst_350 = arith.constant dense<0.000000e+00> : vector<16x64xf32>
    %299 = tpu.matmul %297, %298, %cst_350 {dimension_numbers = #tpu.dot_dimension_numbers<[1], [0], [0], [1], [0, 0, 1, 1], [], []>} : vector<16x144xf32>, vector<144x64xf32>, vector<16x64xf32> -> vector<16x64xf32>
    %c0_351 = arith.constant 0 : index
    %c0_352 = arith.constant 0 : index
    %300 = vector.load %arg13[%c0_351, %c0_352] : memref<16x1xf32, #tpu.memory_space<vmem>>, vector<16x1xf32>
    %301 = vector.broadcast %300 : vector<16x1xf32> to vector<16x64xf32>
    %302 = arith.addf %299, %301 : vector<16x64xf32>
    %c0_353 = arith.constant 0 : index
    %c128_354 = arith.constant 128 : index
    %303 = vector.load %arg31[%c0_353, %c128_354] : memref<16x512xf32, #tpu.memory_space<vmem>>, vector<16x16xf32>
    tpu.vector_store %arg31[%c0_353, %c128_354], %210 {strides = array<i32>} : memref<16x512xf32, #tpu.memory_space<vmem>>, vector<16x16xf32>,
    %cst_355 = arith.constant 0.000000e+00 : f32
    %304 = vector.broadcast %cst_355 : f32 to vector<16x128xf32>
    %c0_356 = arith.constant 0 : index
    %c144_357 = arith.constant 144 : index
    %305 = vector.load %arg31[%c0_356, %c144_357] : memref<16x512xf32, #tpu.memory_space<vmem>>, vector<16x128xf32>
    tpu.vector_store %arg31[%c0_356, %c144_357], %304 {strides = array<i32>} : memref<16x512xf32, #tpu.memory_space<vmem>>, vector<16x128xf32>,
    %c0_358 = arith.constant 0 : index
    %c123_359 = arith.constant 123 : index
    %306 = vector.load %arg31[%c0_358, %c123_359] : memref<16x512xf32, #tpu.memory_space<vmem>>, vector<16x16xf32>
    %c0_360 = arith.constant 0 : index
    %c0_361 = arith.constant 0 : index
    %307 = vector.load %arg26[%c0_360, %c0_361] : memref<9x16xf32, #tpu.memory_space<vmem>>, vector<1x16xf32>
    %308 = vector.broadcast %307 : vector<1x16xf32> to vector<16x16xf32>
    %309 = arith.mulf %306, %308 : vector<16x16xf32>
    %c0_362 = arith.constant 0 : index
    %c0_363 = arith.constant 0 : index
    %310 = vector.load %arg32[%c0_362, %c0_363] : memref<144x256xf32, #tpu.memory_space<vmem>>, vector<16x16xf32>
    tpu.vector_store %arg32[%c0_362, %c0_363], %309 {strides = array<i32>} : memref<144x256xf32, #tpu.memory_space<vmem>>, vector<16x16xf32>,
    %c0_364 = arith.constant 0 : index
    %c124_365 = arith.constant 124 : index
    %311 = vector.load %arg31[%c0_364, %c124_365] : memref<16x512xf32, #tpu.memory_space<vmem>>, vector<16x16xf32>
    %c16_366 = arith.constant 16 : index
    %c0_367 = arith.constant 0 : index
    %312 = vector.load %arg32[%c16_366, %c0_367] : memref<144x256xf32, #tpu.memory_space<vmem>>, vector<16x16xf32>
    tpu.vector_store %arg32[%c16_366, %c0_367], %311 {strides = array<i32>} : memref<144x256xf32, #tpu.memory_space<vmem>>, vector<16x16xf32>,
    %c0_368 = arith.constant 0 : index
    %c125_369 = arith.constant 125 : index
    %313 = vector.load %arg31[%c0_368, %c125_369] : memref<16x512xf32, #tpu.memory_space<vmem>>, vector<16x16xf32>
    %c2_370 = arith.constant 2 : index
    %c0_371 = arith.constant 0 : index
    %314 = vector.load %arg26[%c2_370, %c0_371] : memref<9x16xf32, #tpu.memory_space<vmem>>, vector<1x16xf32>
    %315 = vector.broadcast %314 : vector<1x16xf32> to vector<16x16xf32>
    %316 = arith.mulf %313, %315 : vector<16x16xf32>
    %c32_372 = arith.constant 32 : index
    %c0_373 = arith.constant 0 : index
    %317 = vector.load %arg32[%c32_372, %c0_373] : memref<144x256xf32, #tpu.memory_space<vmem>>, vector<16x16xf32>
    tpu.vector_store %arg32[%c32_372, %c0_373], %316 {strides = array<i32>} : memref<144x256xf32, #tpu.memory_space<vmem>>, vector<16x16xf32>,
    %c0_374 = arith.constant 0 : index
    %c127_375 = arith.constant 127 : index
    %318 = vector.load %arg31[%c0_374, %c127_375] : memref<16x512xf32, #tpu.memory_space<vmem>>, vector<16x16xf32>
    %c3_376 = arith.constant 3 : index
    %c0_377 = arith.constant 0 : index
    %319 = vector.load %arg26[%c3_376, %c0_377] : memref<9x16xf32, #tpu.memory_space<vmem>>, vector<1x16xf32>
    %320 = vector.broadcast %319 : vector<1x16xf32> to vector<16x16xf32>
    %321 = arith.mulf %318, %320 : vector<16x16xf32>
    %c48_378 = arith.constant 48 : index
    %c0_379 = arith.constant 0 : index
    %322 = vector.load %arg32[%c48_378, %c0_379] : memref<144x256xf32, #tpu.memory_space<vmem>>, vector<16x16xf32>
    tpu.vector_store %arg32[%c48_378, %c0_379], %321 {strides = array<i32>} : memref<144x256xf32, #tpu.memory_space<vmem>>, vector<16x16xf32>,
    %c0_380 = arith.constant 0 : index
    %c128_381 = arith.constant 128 : index
    %323 = vector.load %arg31[%c0_380, %c128_381] : memref<16x512xf32, #tpu.memory_space<vmem>>, vector<16x16xf32>
    %c64_382 = arith.constant 64 : index
    %c0_383 = arith.constant 0 : index
    %324 = vector.load %arg32[%c64_382, %c0_383] : memref<144x256xf32, #tpu.memory_space<vmem>>, vector<16x16xf32>
    tpu.vector_store %arg32[%c64_382, %c0_383], %323 {strides = array<i32>} : memref<144x256xf32, #tpu.memory_space<vmem>>, vector<16x16xf32>,
    %c0_384 = arith.constant 0 : index
    %c129_385 = arith.constant 129 : index
    %325 = vector.load %arg31[%c0_384, %c129_385] : memref<16x512xf32, #tpu.memory_space<vmem>>, vector<16x16xf32>
    %c5_386 = arith.constant 5 : index
    %c0_387 = arith.constant 0 : index
    %326 = vector.load %arg26[%c5_386, %c0_387] : memref<9x16xf32, #tpu.memory_space<vmem>>, vector<1x16xf32>
    %327 = vector.broadcast %326 : vector<1x16xf32> to vector<16x16xf32>
    %328 = arith.mulf %325, %327 : vector<16x16xf32>
    %c80_388 = arith.constant 80 : index
    %c0_389 = arith.constant 0 : index
    %329 = vector.load %arg32[%c80_388, %c0_389] : memref<144x256xf32, #tpu.memory_space<vmem>>, vector<16x16xf32>
    tpu.vector_store %arg32[%c80_388, %c0_389], %328 {strides = array<i32>} : memref<144x256xf32, #tpu.memory_space<vmem>>, vector<16x16xf32>,
    %c0_390 = arith.constant 0 : index
    %c131_391 = arith.constant 131 : index
    %330 = vector.load %arg31[%c0_390, %c131_391] : memref<16x512xf32, #tpu.memory_space<vmem>>, vector<16x16xf32>
    %c6_392 = arith.constant 6 : index
    %c0_393 = arith.constant 0 : index
    %331 = vector.load %arg26[%c6_392, %c0_393] : memref<9x16xf32, #tpu.memory_space<vmem>>, vector<1x16xf32>
    %332 = vector.broadcast %331 : vector<1x16xf32> to vector<16x16xf32>
    %333 = arith.mulf %330, %332 : vector<16x16xf32>
    %c96_394 = arith.constant 96 : index
    %c0_395 = arith.constant 0 : index
    %334 = vector.load %arg32[%c96_394, %c0_395] : memref<144x256xf32, #tpu.memory_space<vmem>>, vector<16x16xf32>
    tpu.vector_store %arg32[%c96_394, %c0_395], %333 {strides = array<i32>} : memref<144x256xf32, #tpu.memory_space<vmem>>, vector<16x16xf32>,
    %c0_396 = arith.constant 0 : index
    %c132_397 = arith.constant 132 : index
    %335 = vector.load %arg31[%c0_396, %c132_397] : memref<16x512xf32, #tpu.memory_space<vmem>>, vector<16x16xf32>
    %c112_398 = arith.constant 112 : index
    %c0_399 = arith.constant 0 : index
    %336 = vector.load %arg32[%c112_398, %c0_399] : memref<144x256xf32, #tpu.memory_space<vmem>>, vector<16x16xf32>
    tpu.vector_store %arg32[%c112_398, %c0_399], %335 {strides = array<i32>} : memref<144x256xf32, #tpu.memory_space<vmem>>, vector<16x16xf32>,
    %c0_400 = arith.constant 0 : index
    %c133_401 = arith.constant 133 : index
    %337 = vector.load %arg31[%c0_400, %c133_401] : memref<16x512xf32, #tpu.memory_space<vmem>>, vector<16x16xf32>
    %c8_402 = arith.constant 8 : index
    %c0_403 = arith.constant 0 : index
    %338 = vector.load %arg26[%c8_402, %c0_403] : memref<9x16xf32, #tpu.memory_space<vmem>>, vector<1x16xf32>
    %339 = vector.broadcast %338 : vector<1x16xf32> to vector<16x16xf32>
    %340 = arith.mulf %337, %339 : vector<16x16xf32>
    %c128_404 = arith.constant 128 : index
    %c0_405 = arith.constant 0 : index
    %341 = vector.load %arg32[%c128_404, %c0_405] : memref<144x256xf32, #tpu.memory_space<vmem>>, vector<16x16xf32>
    tpu.vector_store %arg32[%c128_404, %c0_405], %340 {strides = array<i32>} : memref<144x256xf32, #tpu.memory_space<vmem>>, vector<16x16xf32>,
    %c0_406 = arith.constant 0 : index
    %c0_407 = arith.constant 0 : index
    %342 = vector.load %arg14[%c0_406, %c0_407] : memref<8x144xf32, #tpu.memory_space<vmem>>, vector<8x144xf32>
    %c0_408 = arith.constant 0 : index
    %c0_409 = arith.constant 0 : index
    %343 = vector.load %arg32[%c0_408, %c0_409] : memref<144x256xf32, #tpu.memory_space<vmem>>, vector<144x16xf32>
    %cst_410 = arith.constant dense<0.000000e+00> : vector<8x16xf32>
    %344 = tpu.matmul %342, %343, %cst_410 {dimension_numbers = #tpu.dot_dimension_numbers<[1], [0], [0], [1], [0, 0, 1, 1], [], []>} : vector<8x144xf32>, vector<144x16xf32>, vector<8x16xf32> -> vector<8x16xf32>
    %c0_411 = arith.constant 0 : index
    %c0_412 = arith.constant 0 : index
    %345 = vector.load %arg15[%c0_411, %c0_412] : memref<8x1xf32, #tpu.memory_space<vmem>>, vector<8x1xf32>
    %346 = vector.broadcast %345 : vector<8x1xf32> to vector<8x16xf32>
    %347 = arith.addf %344, %346 : vector<8x16xf32>
    %c0_413 = arith.constant 0 : index
    %c128_414 = arith.constant 128 : index
    %348 = vector.load %arg31[%c0_413, %c128_414] : memref<16x512xf32, #tpu.memory_space<vmem>>, vector<16x256xf32>
    tpu.vector_store %arg31[%c0_413, %c128_414], %212 {strides = array<i32>} : memref<16x512xf32, #tpu.memory_space<vmem>>, vector<16x256xf32>,
    %c0_415 = arith.constant 0 : index
    %c111_416 = arith.constant 111 : index
    %349 = vector.load %arg31[%c0_415, %c111_416] : memref<16x512xf32, #tpu.memory_space<vmem>>, vector<16x256xf32>
    %c0_417 = arith.constant 0 : index
    %c0_418 = arith.constant 0 : index
    %350 = vector.load %arg24[%c0_417, %c0_418] : memref<9x256xf32, #tpu.memory_space<vmem>>, vector<1x256xf32>
    %351 = vector.broadcast %350 : vector<1x256xf32> to vector<16x256xf32>
    %352 = arith.mulf %349, %351 : vector<16x256xf32>
    %c0_419 = arith.constant 0 : index
    %c0_420 = arith.constant 0 : index
    %353 = vector.load %arg32[%c0_419, %c0_420] : memref<144x256xf32, #tpu.memory_space<vmem>>, vector<16x256xf32>
    tpu.vector_store %arg32[%c0_419, %c0_420], %352 {strides = array<i32>} : memref<144x256xf32, #tpu.memory_space<vmem>>, vector<16x256xf32>,
    %c0_421 = arith.constant 0 : index
    %c112_422 = arith.constant 112 : index
    %354 = vector.load %arg31[%c0_421, %c112_422] : memref<16x512xf32, #tpu.memory_space<vmem>>, vector<16x256xf32>
    %c16_423 = arith.constant 16 : index
    %c0_424 = arith.constant 0 : index
    %355 = vector.load %arg32[%c16_423, %c0_424] : memref<144x256xf32, #tpu.memory_space<vmem>>, vector<16x256xf32>
    tpu.vector_store %arg32[%c16_423, %c0_424], %354 {strides = array<i32>} : memref<144x256xf32, #tpu.memory_space<vmem>>, vector<16x256xf32>,
    %c0_425 = arith.constant 0 : index
    %c113_426 = arith.constant 113 : index
    %356 = vector.load %arg31[%c0_425, %c113_426] : memref<16x512xf32, #tpu.memory_space<vmem>>, vector<16x256xf32>
    %c2_427 = arith.constant 2 : index
    %c0_428 = arith.constant 0 : index
    %357 = vector.load %arg24[%c2_427, %c0_428] : memref<9x256xf32, #tpu.memory_space<vmem>>, vector<1x256xf32>
    %358 = vector.broadcast %357 : vector<1x256xf32> to vector<16x256xf32>
    %359 = arith.mulf %356, %358 : vector<16x256xf32>
    %c32_429 = arith.constant 32 : index
    %c0_430 = arith.constant 0 : index
    %360 = vector.load %arg32[%c32_429, %c0_430] : memref<144x256xf32, #tpu.memory_space<vmem>>, vector<16x256xf32>
    tpu.vector_store %arg32[%c32_429, %c0_430], %359 {strides = array<i32>} : memref<144x256xf32, #tpu.memory_space<vmem>>, vector<16x256xf32>,
    %c0_431 = arith.constant 0 : index
    %c127_432 = arith.constant 127 : index
    %361 = vector.load %arg31[%c0_431, %c127_432] : memref<16x512xf32, #tpu.memory_space<vmem>>, vector<16x256xf32>
    %c3_433 = arith.constant 3 : index
    %c0_434 = arith.constant 0 : index
    %362 = vector.load %arg24[%c3_433, %c0_434] : memref<9x256xf32, #tpu.memory_space<vmem>>, vector<1x256xf32>
    %363 = vector.broadcast %362 : vector<1x256xf32> to vector<16x256xf32>
    %364 = arith.mulf %361, %363 : vector<16x256xf32>
    %c48_435 = arith.constant 48 : index
    %c0_436 = arith.constant 0 : index
    %365 = vector.load %arg32[%c48_435, %c0_436] : memref<144x256xf32, #tpu.memory_space<vmem>>, vector<16x256xf32>
    tpu.vector_store %arg32[%c48_435, %c0_436], %364 {strides = array<i32>} : memref<144x256xf32, #tpu.memory_space<vmem>>, vector<16x256xf32>,
    %c0_437 = arith.constant 0 : index
    %c128_438 = arith.constant 128 : index
    %366 = vector.load %arg31[%c0_437, %c128_438] : memref<16x512xf32, #tpu.memory_space<vmem>>, vector<16x256xf32>
    %c64_439 = arith.constant 64 : index
    %c0_440 = arith.constant 0 : index
    %367 = vector.load %arg32[%c64_439, %c0_440] : memref<144x256xf32, #tpu.memory_space<vmem>>, vector<16x256xf32>
    tpu.vector_store %arg32[%c64_439, %c0_440], %366 {strides = array<i32>} : memref<144x256xf32, #tpu.memory_space<vmem>>, vector<16x256xf32>,
    %c0_441 = arith.constant 0 : index
    %c129_442 = arith.constant 129 : index
    %368 = vector.load %arg31[%c0_441, %c129_442] : memref<16x512xf32, #tpu.memory_space<vmem>>, vector<16x256xf32>
    %c5_443 = arith.constant 5 : index
    %c0_444 = arith.constant 0 : index
    %369 = vector.load %arg24[%c5_443, %c0_444] : memref<9x256xf32, #tpu.memory_space<vmem>>, vector<1x256xf32>
    %370 = vector.broadcast %369 : vector<1x256xf32> to vector<16x256xf32>
    %371 = arith.mulf %368, %370 : vector<16x256xf32>
    %c80_445 = arith.constant 80 : index
    %c0_446 = arith.constant 0 : index
    %372 = vector.load %arg32[%c80_445, %c0_446] : memref<144x256xf32, #tpu.memory_space<vmem>>, vector<16x256xf32>
    tpu.vector_store %arg32[%c80_445, %c0_446], %371 {strides = array<i32>} : memref<144x256xf32, #tpu.memory_space<vmem>>, vector<16x256xf32>,
    %c0_447 = arith.constant 0 : index
    %c143_448 = arith.constant 143 : index
    %373 = vector.load %arg31[%c0_447, %c143_448] : memref<16x512xf32, #tpu.memory_space<vmem>>, vector<16x256xf32>
    %c6_449 = arith.constant 6 : index
    %c0_450 = arith.constant 0 : index
    %374 = vector.load %arg24[%c6_449, %c0_450] : memref<9x256xf32, #tpu.memory_space<vmem>>, vector<1x256xf32>
    %375 = vector.broadcast %374 : vector<1x256xf32> to vector<16x256xf32>
    %376 = arith.mulf %373, %375 : vector<16x256xf32>
    %c96_451 = arith.constant 96 : index
    %c0_452 = arith.constant 0 : index
    %377 = vector.load %arg32[%c96_451, %c0_452] : memref<144x256xf32, #tpu.memory_space<vmem>>, vector<16x256xf32>
    tpu.vector_store %arg32[%c96_451, %c0_452], %376 {strides = array<i32>} : memref<144x256xf32, #tpu.memory_space<vmem>>, vector<16x256xf32>,
    %c0_453 = arith.constant 0 : index
    %c144_454 = arith.constant 144 : index
    %378 = vector.load %arg31[%c0_453, %c144_454] : memref<16x512xf32, #tpu.memory_space<vmem>>, vector<16x256xf32>
    %c112_455 = arith.constant 112 : index
    %c0_456 = arith.constant 0 : index
    %379 = vector.load %arg32[%c112_455, %c0_456] : memref<144x256xf32, #tpu.memory_space<vmem>>, vector<16x256xf32>
    tpu.vector_store %arg32[%c112_455, %c0_456], %378 {strides = array<i32>} : memref<144x256xf32, #tpu.memory_space<vmem>>, vector<16x256xf32>,
    %c0_457 = arith.constant 0 : index
    %c145_458 = arith.constant 145 : index
    %380 = vector.load %arg31[%c0_457, %c145_458] : memref<16x512xf32, #tpu.memory_space<vmem>>, vector<16x256xf32>
    %c8_459 = arith.constant 8 : index
    %c0_460 = arith.constant 0 : index
    %381 = vector.load %arg24[%c8_459, %c0_460] : memref<9x256xf32, #tpu.memory_space<vmem>>, vector<1x256xf32>
    %382 = vector.broadcast %381 : vector<1x256xf32> to vector<16x256xf32>
    %383 = arith.mulf %380, %382 : vector<16x256xf32>
    %c128_461 = arith.constant 128 : index
    %c0_462 = arith.constant 0 : index
    %384 = vector.load %arg32[%c128_461, %c0_462] : memref<144x256xf32, #tpu.memory_space<vmem>>, vector<16x256xf32>
    tpu.vector_store %arg32[%c128_461, %c0_462], %383 {strides = array<i32>} : memref<144x256xf32, #tpu.memory_space<vmem>>, vector<16x256xf32>,
    %c0_463 = arith.constant 0 : index
    %c0_464 = arith.constant 0 : index
    %385 = vector.load %arg16[%c0_463, %c0_464] : memref<8x144xf32, #tpu.memory_space<vmem>>, vector<8x144xf32>
    %c0_465 = arith.constant 0 : index
    %c0_466 = arith.constant 0 : index
    %386 = vector.load %arg32[%c0_465, %c0_466] : memref<144x256xf32, #tpu.memory_space<vmem>>, vector<144x256xf32>
    %cst_467 = arith.constant dense<0.000000e+00> : vector<8x256xf32>
    %387 = tpu.matmul %385, %386, %cst_467 {dimension_numbers = #tpu.dot_dimension_numbers<[1], [0], [0], [1], [0, 0, 1, 1], [], []>} : vector<8x144xf32>, vector<144x256xf32>, vector<8x256xf32> -> vector<8x256xf32>
    %c0_468 = arith.constant 0 : index
    %c0_469 = arith.constant 0 : index
    %388 = vector.load %arg17[%c0_468, %c0_469] : memref<8x1xf32, #tpu.memory_space<vmem>>, vector<8x1xf32>
    %389 = vector.broadcast %388 : vector<8x1xf32> to vector<8x256xf32>
    %390 = arith.addf %387, %389 : vector<8x256xf32>
    %c0_470 = arith.constant 0 : index
    %c128_471 = arith.constant 128 : index
    %391 = vector.load %arg31[%c0_470, %c128_471] : memref<16x512xf32, #tpu.memory_space<vmem>>, vector<16x64xf32>
    tpu.vector_store %arg31[%c0_470, %c128_471], %214 {strides = array<i32>} : memref<16x512xf32, #tpu.memory_space<vmem>>, vector<16x64xf32>,
    %cst_472 = arith.constant 0.000000e+00 : f32
    %392 = vector.broadcast %cst_472 : f32 to vector<16x128xf32>
    %c0_473 = arith.constant 0 : index
    %c192_474 = arith.constant 192 : index
    %393 = vector.load %arg31[%c0_473, %c192_474] : memref<16x512xf32, #tpu.memory_space<vmem>>, vector<16x128xf32>
    tpu.vector_store %arg31[%c0_473, %c192_474], %392 {strides = array<i32>} : memref<16x512xf32, #tpu.memory_space<vmem>>, vector<16x128xf32>,
    %c0_475 = arith.constant 0 : index
    %c119_476 = arith.constant 119 : index
    %394 = vector.load %arg31[%c0_475, %c119_476] : memref<16x512xf32, #tpu.memory_space<vmem>>, vector<16x64xf32>
    %c0_477 = arith.constant 0 : index
    %c0_478 = arith.constant 0 : index
    %395 = vector.load %arg25[%c0_477, %c0_478] : memref<9x64xf32, #tpu.memory_space<vmem>>, vector<1x64xf32>
    %396 = vector.broadcast %395 : vector<1x64xf32> to vector<16x64xf32>
    %397 = arith.mulf %394, %396 : vector<16x64xf32>
    %c0_479 = arith.constant 0 : index
    %c0_480 = arith.constant 0 : index
    %398 = vector.load %arg32[%c0_479, %c0_480] : memref<144x256xf32, #tpu.memory_space<vmem>>, vector<16x64xf32>
    tpu.vector_store %arg32[%c0_479, %c0_480], %397 {strides = array<i32>} : memref<144x256xf32, #tpu.memory_space<vmem>>, vector<16x64xf32>,
    %c0_481 = arith.constant 0 : index
    %c120_482 = arith.constant 120 : index
    %399 = vector.load %arg31[%c0_481, %c120_482] : memref<16x512xf32, #tpu.memory_space<vmem>>, vector<16x64xf32>
    %c16_483 = arith.constant 16 : index
    %c0_484 = arith.constant 0 : index
    %400 = vector.load %arg32[%c16_483, %c0_484] : memref<144x256xf32, #tpu.memory_space<vmem>>, vector<16x64xf32>
    tpu.vector_store %arg32[%c16_483, %c0_484], %399 {strides = array<i32>} : memref<144x256xf32, #tpu.memory_space<vmem>>, vector<16x64xf32>,
    %c0_485 = arith.constant 0 : index
    %c121_486 = arith.constant 121 : index
    %401 = vector.load %arg31[%c0_485, %c121_486] : memref<16x512xf32, #tpu.memory_space<vmem>>, vector<16x64xf32>
    %c2_487 = arith.constant 2 : index
    %c0_488 = arith.constant 0 : index
    %402 = vector.load %arg25[%c2_487, %c0_488] : memref<9x64xf32, #tpu.memory_space<vmem>>, vector<1x64xf32>
    %403 = vector.broadcast %402 : vector<1x64xf32> to vector<16x64xf32>
    %404 = arith.mulf %401, %403 : vector<16x64xf32>
    %c32_489 = arith.constant 32 : index
    %c0_490 = arith.constant 0 : index
    %405 = vector.load %arg32[%c32_489, %c0_490] : memref<144x256xf32, #tpu.memory_space<vmem>>, vector<16x64xf32>
    tpu.vector_store %arg32[%c32_489, %c0_490], %404 {strides = array<i32>} : memref<144x256xf32, #tpu.memory_space<vmem>>, vector<16x64xf32>,
    %c0_491 = arith.constant 0 : index
    %c127_492 = arith.constant 127 : index
    %406 = vector.load %arg31[%c0_491, %c127_492] : memref<16x512xf32, #tpu.memory_space<vmem>>, vector<16x64xf32>
    %c3_493 = arith.constant 3 : index
    %c0_494 = arith.constant 0 : index
    %407 = vector.load %arg25[%c3_493, %c0_494] : memref<9x64xf32, #tpu.memory_space<vmem>>, vector<1x64xf32>
    %408 = vector.broadcast %407 : vector<1x64xf32> to vector<16x64xf32>
    %409 = arith.mulf %406, %408 : vector<16x64xf32>
    %c48_495 = arith.constant 48 : index
    %c0_496 = arith.constant 0 : index
    %410 = vector.load %arg32[%c48_495, %c0_496] : memref<144x256xf32, #tpu.memory_space<vmem>>, vector<16x64xf32>
    tpu.vector_store %arg32[%c48_495, %c0_496], %409 {strides = array<i32>} : memref<144x256xf32, #tpu.memory_space<vmem>>, vector<16x64xf32>,
    %c0_497 = arith.constant 0 : index
    %c128_498 = arith.constant 128 : index
    %411 = vector.load %arg31[%c0_497, %c128_498] : memref<16x512xf32, #tpu.memory_space<vmem>>, vector<16x64xf32>
    %c64_499 = arith.constant 64 : index
    %c0_500 = arith.constant 0 : index
    %412 = vector.load %arg32[%c64_499, %c0_500] : memref<144x256xf32, #tpu.memory_space<vmem>>, vector<16x64xf32>
    tpu.vector_store %arg32[%c64_499, %c0_500], %411 {strides = array<i32>} : memref<144x256xf32, #tpu.memory_space<vmem>>, vector<16x64xf32>,
    %c0_501 = arith.constant 0 : index
    %c129_502 = arith.constant 129 : index
    %413 = vector.load %arg31[%c0_501, %c129_502] : memref<16x512xf32, #tpu.memory_space<vmem>>, vector<16x64xf32>
    %c5_503 = arith.constant 5 : index
    %c0_504 = arith.constant 0 : index
    %414 = vector.load %arg25[%c5_503, %c0_504] : memref<9x64xf32, #tpu.memory_space<vmem>>, vector<1x64xf32>
    %415 = vector.broadcast %414 : vector<1x64xf32> to vector<16x64xf32>
    %416 = arith.mulf %413, %415 : vector<16x64xf32>
    %c80_505 = arith.constant 80 : index
    %c0_506 = arith.constant 0 : index
    %417 = vector.load %arg32[%c80_505, %c0_506] : memref<144x256xf32, #tpu.memory_space<vmem>>, vector<16x64xf32>
    tpu.vector_store %arg32[%c80_505, %c0_506], %416 {strides = array<i32>} : memref<144x256xf32, #tpu.memory_space<vmem>>, vector<16x64xf32>,
    %c0_507 = arith.constant 0 : index
    %c135_508 = arith.constant 135 : index
    %418 = vector.load %arg31[%c0_507, %c135_508] : memref<16x512xf32, #tpu.memory_space<vmem>>, vector<16x64xf32>
    %c6_509 = arith.constant 6 : index
    %c0_510 = arith.constant 0 : index
    %419 = vector.load %arg25[%c6_509, %c0_510] : memref<9x64xf32, #tpu.memory_space<vmem>>, vector<1x64xf32>
    %420 = vector.broadcast %419 : vector<1x64xf32> to vector<16x64xf32>
    %421 = arith.mulf %418, %420 : vector<16x64xf32>
    %c96_511 = arith.constant 96 : index
    %c0_512 = arith.constant 0 : index
    %422 = vector.load %arg32[%c96_511, %c0_512] : memref<144x256xf32, #tpu.memory_space<vmem>>, vector<16x64xf32>
    tpu.vector_store %arg32[%c96_511, %c0_512], %421 {strides = array<i32>} : memref<144x256xf32, #tpu.memory_space<vmem>>, vector<16x64xf32>,
    %c0_513 = arith.constant 0 : index
    %c136_514 = arith.constant 136 : index
    %423 = vector.load %arg31[%c0_513, %c136_514] : memref<16x512xf32, #tpu.memory_space<vmem>>, vector<16x64xf32>
    %c112_515 = arith.constant 112 : index
    %c0_516 = arith.constant 0 : index
    %424 = vector.load %arg32[%c112_515, %c0_516] : memref<144x256xf32, #tpu.memory_space<vmem>>, vector<16x64xf32>
    tpu.vector_store %arg32[%c112_515, %c0_516], %423 {strides = array<i32>} : memref<144x256xf32, #tpu.memory_space<vmem>>, vector<16x64xf32>,
    %c0_517 = arith.constant 0 : index
    %c137_518 = arith.constant 137 : index
    %425 = vector.load %arg31[%c0_517, %c137_518] : memref<16x512xf32, #tpu.memory_space<vmem>>, vector<16x64xf32>
    %c8_519 = arith.constant 8 : index
    %c0_520 = arith.constant 0 : index
    %426 = vector.load %arg25[%c8_519, %c0_520] : memref<9x64xf32, #tpu.memory_space<vmem>>, vector<1x64xf32>
    %427 = vector.broadcast %426 : vector<1x64xf32> to vector<16x64xf32>
    %428 = arith.mulf %425, %427 : vector<16x64xf32>
    %c128_521 = arith.constant 128 : index
    %c0_522 = arith.constant 0 : index
    %429 = vector.load %arg32[%c128_521, %c0_522] : memref<144x256xf32, #tpu.memory_space<vmem>>, vector<16x64xf32>
    tpu.vector_store %arg32[%c128_521, %c0_522], %428 {strides = array<i32>} : memref<144x256xf32, #tpu.memory_space<vmem>>, vector<16x64xf32>,
    %c0_523 = arith.constant 0 : index
    %c0_524 = arith.constant 0 : index
    %430 = vector.load %arg18[%c0_523, %c0_524] : memref<8x144xf32, #tpu.memory_space<vmem>>, vector<8x144xf32>
    %c0_525 = arith.constant 0 : index
    %c0_526 = arith.constant 0 : index
    %431 = vector.load %arg32[%c0_525, %c0_526] : memref<144x256xf32, #tpu.memory_space<vmem>>, vector<144x64xf32>
    %cst_527 = arith.constant dense<0.000000e+00> : vector<8x64xf32>
    %432 = tpu.matmul %430, %431, %cst_527 {dimension_numbers = #tpu.dot_dimension_numbers<[1], [0], [0], [1], [0, 0, 1, 1], [], []>} : vector<8x144xf32>, vector<144x64xf32>, vector<8x64xf32> -> vector<8x64xf32>
    %c0_528 = arith.constant 0 : index
    %c0_529 = arith.constant 0 : index
    %433 = vector.load %arg19[%c0_528, %c0_529] : memref<8x1xf32, #tpu.memory_space<vmem>>, vector<8x1xf32>
    %434 = vector.broadcast %433 : vector<8x1xf32> to vector<8x64xf32>
    %435 = arith.addf %432, %434 : vector<8x64xf32>
    %436 = vector.extract_strided_slice %257 {offsets = [8, 0], sizes = [8, 256], strides = [1, 1]} : vector<16x256xf32> to vector<8x256xf32>
    %c0_530 = arith.constant 0 : index
    %c0_531 = arith.constant 0 : index
    %437 = vector.load %arg22[%c0_530, %c0_531] : memref<256x64xf32, #tpu.memory_space<vmem>>, vector<256x64xf32>
    %cst_532 = arith.constant dense<0.000000e+00> : vector<8x64xf32>
    %438 = tpu.matmul %436, %437, %cst_532 {dimension_numbers = #tpu.dot_dimension_numbers<[1], [0], [0], [1], [0, 0, 1, 1], [], []>} : vector<8x256xf32>, vector<256x64xf32>, vector<8x64xf32> -> vector<8x64xf32>
    %439 = vector.extract_strided_slice %302 {offsets = [8, 0], sizes = [8, 64], strides = [1, 1]} : vector<16x64xf32> to vector<8x64xf32>
    %c0_533 = arith.constant 0 : index
    %c0_534 = arith.constant 0 : index
    %440 = vector.load %arg23[%c0_533, %c0_534] : memref<64x16xf32, #tpu.memory_space<vmem>>, vector<64x16xf32>
    %cst_535 = arith.constant dense<0.000000e+00> : vector<8x16xf32>
    %441 = tpu.matmul %439, %440, %cst_535 {dimension_numbers = #tpu.dot_dimension_numbers<[1], [0], [0], [1], [0, 0, 1, 1], [], []>} : vector<8x64xf32>, vector<64x16xf32>, vector<8x16xf32> -> vector<8x16xf32>
    %c0_536 = arith.constant 0 : index
    %c0_537 = arith.constant 0 : index
    %442 = vector.load %arg27[%c0_536, %c0_537] : memref<1x3xf32, #tpu.memory_space<vmem>>, vector<1x3xf32>
    %443 = vector.extract_strided_slice %257 {offsets = [0, 0], sizes = [8, 256], strides = [1, 1]} : vector<16x256xf32> to vector<8x256xf32>
    %444 = arith.addf %443, %390 : vector<8x256xf32>
    %445 = vector.extract_strided_slice %442 {offsets = [0, 0], sizes = [1, 1], strides = [1, 1]} : vector<1x3xf32> to vector<1x1xf32>
    %446 = vector.broadcast %445 : vector<1x1xf32> to vector<8x256xf32>
    %447 = arith.mulf %444, %446 : vector<8x256xf32>
    %448 = vector.extract_strided_slice %302 {offsets = [0, 0], sizes = [8, 64], strides = [1, 1]} : vector<16x64xf32> to vector<8x64xf32>
    %449 = arith.addf %448, %438 : vector<8x64xf32>
    %450 = arith.addf %449, %435 : vector<8x64xf32>
    %451 = vector.extract_strided_slice %442 {offsets = [0, 1], sizes = [1, 1], strides = [1, 1]} : vector<1x3xf32> to vector<1x1xf32>
    %452 = vector.broadcast %451 : vector<1x1xf32> to vector<8x64xf32>
    %453 = arith.mulf %450, %452 : vector<8x64xf32>
    %454 = arith.addf %347, %441 : vector<8x16xf32>
    %455 = vector.extract_strided_slice %442 {offsets = [0, 2], sizes = [1, 1], strides = [1, 1]} : vector<1x3xf32> to vector<1x1xf32>
    %456 = vector.broadcast %455 : vector<1x1xf32> to vector<8x16xf32>
    %457 = arith.mulf %454, %456 : vector<8x16xf32>
    %c0_538 = arith.constant 0 : index
    %c0_539 = arith.constant 0 : index
    %c0_540 = arith.constant 0 : index
    %458 = vector.load %arg28[%c0_538, %c0_539, %c0_540] : memref<1x8x256xf32, #tpu.memory_space<vmem>>, vector<1x8x256xf32>
    %459 = vector.shape_cast %458 : vector<1x8x256xf32> to vector<8x256xf32>
    %460 = vector.shape_cast %447 : vector<8x256xf32> to vector<1x8x256xf32>
    tpu.vector_store %arg28[%c0_538, %c0_539, %c0_540], %460 {strides = array<i32>} : memref<1x8x256xf32, #tpu.memory_space<vmem>>, vector<1x8x256xf32>,
    %c0_541 = arith.constant 0 : index
    %c0_542 = arith.constant 0 : index
    %c0_543 = arith.constant 0 : index
    %461 = vector.load %arg29[%c0_541, %c0_542, %c0_543] : memref<1x8x128xf32, #tpu.memory_space<vmem>>, vector<1x8x64xf32>
    %462 = vector.shape_cast %461 : vector<1x8x64xf32> to vector<8x64xf32>
    %463 = vector.shape_cast %453 : vector<8x64xf32> to vector<1x8x64xf32>
    tpu.vector_store %arg29[%c0_541, %c0_542, %c0_543], %463 {strides = array<i32>} : memref<1x8x128xf32, #tpu.memory_space<vmem>>, vector<1x8x64xf32>,
    %cst_544 = arith.constant 0.000000e+00 : f32
    %464 = vector.broadcast %cst_544 : f32 to vector<8x64xf32>
    %c0_545 = arith.constant 0 : index
    %c0_546 = arith.constant 0 : index
    %c64_547 = arith.constant 64 : index
    %465 = vector.load %arg29[%c0_545, %c0_546, %c64_547] : memref<1x8x128xf32, #tpu.memory_space<vmem>>, vector<1x8x64xf32>
    %466 = vector.shape_cast %465 : vector<1x8x64xf32> to vector<8x64xf32>
    %467 = vector.shape_cast %464 : vector<8x64xf32> to vector<1x8x64xf32>
    tpu.vector_store %arg29[%c0_545, %c0_546, %c64_547], %467 {strides = array<i32>} : memref<1x8x128xf32, #tpu.memory_space<vmem>>, vector<1x8x64xf32>,
    %c0_548 = arith.constant 0 : index
    %c0_549 = arith.constant 0 : index
    %c0_550 = arith.constant 0 : index
    %468 = vector.load %arg30[%c0_548, %c0_549, %c0_550] : memref<1x8x128xf32, #tpu.memory_space<vmem>>, vector<1x8x16xf32>
    %469 = vector.shape_cast %468 : vector<1x8x16xf32> to vector<8x16xf32>
    %470 = vector.shape_cast %457 : vector<8x16xf32> to vector<1x8x16xf32>
    tpu.vector_store %arg30[%c0_548, %c0_549, %c0_550], %470 {strides = array<i32>} : memref<1x8x128xf32, #tpu.memory_space<vmem>>, vector<1x8x16xf32>,
    %cst_551 = arith.constant 0.000000e+00 : f32
    %471 = vector.broadcast %cst_551 : f32 to vector<8x112xf32>
    %c0_552 = arith.constant 0 : index
    %c0_553 = arith.constant 0 : index
    %c16_554 = arith.constant 16 : index
    %472 = vector.load %arg30[%c0_552, %c0_553, %c16_554] : memref<1x8x128xf32, #tpu.memory_space<vmem>>, vector<1x8x112xf32>
    %473 = vector.shape_cast %472 : vector<1x8x112xf32> to vector<8x112xf32>
    %474 = vector.shape_cast %471 : vector<8x112xf32> to vector<1x8x112xf32>
    tpu.vector_store %arg30[%c0_552, %c0_553, %c16_554], %474 {strides = array<i32>} : memref<1x8x128xf32, #tpu.memory_space<vmem>>, vector<1x8x112xf32>,
    return
  }
  func.func @transform_0(%arg0: i32) -> (i32, i32, i32) {
    %c0_i32 = arith.constant 0 : i32
    %c0_i32_0 = arith.constant 0 : i32
    %c0_i32_1 = arith.constant 0 : i32
    return %arg0, %c0_i32, %c0_i32_0 : i32, i32, i32
  }
  func.func @transform_1(%arg0: i32) -> (i32, i32, i32) {
    %c0_i32 = arith.constant 0 : i32
    %c0_i32_0 = arith.constant 0 : i32
    %c0_i32_1 = arith.constant 0 : i32
    return %arg0, %c0_i32, %c0_i32_0 : i32, i32, i32
  }
  func.func @transform_2(%arg0: i32) -> (i32, i32, i32) {
    %c0_i32 = arith.constant 0 : i32
    %c0_i32_0 = arith.constant 0 : i32
    %c0_i32_1 = arith.constant 0 : i32
    return %arg0, %c0_i32, %c0_i32_0 : i32, i32, i32
  }
  func.func @transform_3(%arg0: i32) -> (i32, i32) {
    %c0_i32 = arith.constant 0 : i32
    %c0_i32_0 = arith.constant 0 : i32
    %c0_i32_1 = arith.constant 0 : i32
    return %c0_i32, %c0_i32_0 : i32, i32
  }
  func.func @transform_4(%arg0: i32) -> (i32, i32) {
    %c0_i32 = arith.constant 0 : i32
    %c0_i32_0 = arith.constant 0 : i32
    %c0_i32_1 = arith.constant 0 : i32
    return %c0_i32, %c0_i32_0 : i32, i32
  }
  func.func @transform_5(%arg0: i32) -> (i32, i32) {
    %c0_i32 = arith.constant 0 : i32
    %c0_i32_0 = arith.constant 0 : i32
    %c0_i32_1 = arith.constant 0 : i32
    return %c0_i32, %c0_i32_0 : i32, i32
  }
  func.func @transform_6(%arg0: i32) -> (i32, i32) {
    %c0_i32 = arith.constant 0 : i32
    %c0_i32_0 = arith.constant 0 : i32
    %c0_i32_1 = arith.constant 0 : i32
    return %c0_i32, %c0_i32_0 : i32, i32
  }
  func.func @transform_7(%arg0: i32) -> (i32, i32) {
    %c0_i32 = arith.constant 0 : i32
    %c0_i32_0 = arith.constant 0 : i32
    %c0_i32_1 = arith.constant 0 : i32
    return %c0_i32, %c0_i32_0 : i32, i32
  }
  func.func @transform_8(%arg0: i32) -> (i32, i32) {
    %c0_i32 = arith.constant 0 : i32
    %c0_i32_0 = arith.constant 0 : i32
    %c0_i32_1 = arith.constant 0 : i32
    return %c0_i32, %c0_i32_0 : i32, i32
  }
  func.func @transform_9(%arg0: i32) -> (i32, i32) {
    %c0_i32 = arith.constant 0 : i32
    %c0_i32_0 = arith.constant 0 : i32
    %c0_i32_1 = arith.constant 0 : i32
    return %c0_i32, %c0_i32_0 : i32, i32
  }
  func.func @transform_10(%arg0: i32) -> (i32, i32) {
    %c0_i32 = arith.constant 0 : i32
    %c0_i32_0 = arith.constant 0 : i32
    %c0_i32_1 = arith.constant 0 : i32
    return %c0_i32, %c0_i32_0 : i32, i32
  }
  func.func @transform_11(%arg0: i32) -> (i32, i32) {
    %c0_i32 = arith.constant 0 : i32
    %c0_i32_0 = arith.constant 0 : i32
    %c0_i32_1 = arith.constant 0 : i32
    return %c0_i32, %c0_i32_0 : i32, i32
  }
  func.func @transform_12(%arg0: i32) -> (i32, i32) {
    %c0_i32 = arith.constant 0 : i32
    %c0_i32_0 = arith.constant 0 : i32
    %c0_i32_1 = arith.constant 0 : i32
    return %c0_i32, %c0_i32_0 : i32, i32
  }
  func.func @transform_13(%arg0: i32) -> (i32, i32) {
    %c0_i32 = arith.constant 0 : i32
    %c0_i32_0 = arith.constant 0 : i32
    %c0_i32_1 = arith.constant 0 : i32
    return %c0_i32, %c0_i32_0 : i32, i32
  }
  func.func @transform_14(%arg0: i32) -> (i32, i32) {
    %c0_i32 = arith.constant 0 : i32
    %c0_i32_0 = arith.constant 0 : i32
    %c0_i32_1 = arith.constant 0 : i32
    return %c0_i32, %c0_i32_0 : i32, i32
  }
  func.func @transform_15(%arg0: i32) -> (i32, i32) {
    %c0_i32 = arith.constant 0 : i32
    %c0_i32_0 = arith.constant 0 : i32
    %c0_i32_1 = arith.constant 0 : i32
    return %c0_i32, %c0_i32_0 : i32, i32
  }
  func.func @transform_16(%arg0: i32) -> (i32, i32) {
    %c0_i32 = arith.constant 0 : i32
    %c0_i32_0 = arith.constant 0 : i32
    %c0_i32_1 = arith.constant 0 : i32
    return %c0_i32, %c0_i32_0 : i32, i32
  }
  func.func @transform_17(%arg0: i32) -> (i32, i32) {
    %c0_i32 = arith.constant 0 : i32
    %c0_i32_0 = arith.constant 0 : i32
    %c0_i32_1 = arith.constant 0 : i32
    return %c0_i32, %c0_i32_0 : i32, i32
  }
  func.func @transform_18(%arg0: i32) -> (i32, i32) {
    %c0_i32 = arith.constant 0 : i32
    %c0_i32_0 = arith.constant 0 : i32
    %c0_i32_1 = arith.constant 0 : i32
    return %c0_i32, %c0_i32_0 : i32, i32
  }
  func.func @transform_19(%arg0: i32) -> (i32, i32) {
    %c0_i32 = arith.constant 0 : i32
    %c0_i32_0 = arith.constant 0 : i32
    %c0_i32_1 = arith.constant 0 : i32
    return %c0_i32, %c0_i32_0 : i32, i32
  }
  func.func @transform_20(%arg0: i32) -> (i32, i32) {
    %c0_i32 = arith.constant 0 : i32
    %c0_i32_0 = arith.constant 0 : i32
    %c0_i32_1 = arith.constant 0 : i32
    return %c0_i32, %c0_i32_0 : i32, i32
  }
  func.func @transform_21(%arg0: i32) -> (i32, i32) {
    %c0_i32 = arith.constant 0 : i32
    %c0_i32_0 = arith.constant 0 : i32
    %c0_i32_1 = arith.constant 0 : i32
    return %c0_i32, %c0_i32_0 : i32, i32
  }
  func.func @transform_22(%arg0: i32) -> (i32, i32) {
    %c0_i32 = arith.constant 0 : i32
    %c0_i32_0 = arith.constant 0 : i32
    %c0_i32_1 = arith.constant 0 : i32
    return %c0_i32, %c0_i32_0 : i32, i32
  }
  func.func @transform_23(%arg0: i32) -> (i32, i32) {
    %c0_i32 = arith.constant 0 : i32
    %c0_i32_0 = arith.constant 0 : i32
    %c0_i32_1 = arith.constant 0 : i32
    return %c0_i32, %c0_i32_0 : i32, i32
  }
  func.func @transform_24(%arg0: i32) -> (i32, i32) {
    %c0_i32 = arith.constant 0 : i32
    %c0_i32_0 = arith.constant 0 : i32
    %c0_i32_1 = arith.constant 0 : i32
    return %c0_i32, %c0_i32_0 : i32, i32
  }
  func.func @transform_25(%arg0: i32) -> (i32, i32) {
    %c0_i32 = arith.constant 0 : i32
    %c0_i32_0 = arith.constant 0 : i32
    %c0_i32_1 = arith.constant 0 : i32
    return %c0_i32, %c0_i32_0 : i32, i32
  }
  func.func @transform_26(%arg0: i32) -> (i32, i32) {
    %c0_i32 = arith.constant 0 : i32
    %c0_i32_0 = arith.constant 0 : i32
    %c0_i32_1 = arith.constant 0 : i32
    return %c0_i32, %c0_i32_0 : i32, i32
  }
  func.func @transform_27(%arg0: i32) -> (i32, i32, i32) {
    %c0_i32 = arith.constant 0 : i32
    %c0_i32_0 = arith.constant 0 : i32
    %c0_i32_1 = arith.constant 0 : i32
    return %arg0, %c0_i32, %c0_i32_0 : i32, i32, i32
  }
  func.func @transform_28(%arg0: i32) -> (i32, i32, i32) {
    %c0_i32 = arith.constant 0 : i32
    %c0_i32_0 = arith.constant 0 : i32
    %c0_i32_1 = arith.constant 0 : i32
    return %arg0, %c0_i32, %c0_i32_0 : i32, i32, i32
  }
  func.func @transform_29(%arg0: i32) -> (i32, i32, i32) {
    %c0_i32 = arith.constant 0 : i32
    %c0_i32_0 = arith.constant 0 : i32
    %c0_i32_1 = arith.constant 0 : i32
    return %arg0, %c0_i32, %c0_i32_0 : i32, i32, i32
  }
}

</mosaic_0001>

<llo_original>
// kernel: cross_convolutions_forward.1
$region0: #{cross_convolutions_forward.1}
  #allocation0 [shape = 'u32[]', space=smem, size = 0x4, offset = 0x4, fixed_abs, tag = 'smem constant byte address 0x4 - core index']
  #allocation1 [shape = 'u32[144,128]{1,0:T(1,128)}', space=vmem, size = 0x12000, scoped, tag = 'internal scratch']
  #allocation2 [shape = 'f32[16,512]{1,0:T(8,128)}', space=vmem, size = 0x8000, scoped, tag = 'scratch operand']
  #allocation3 [shape = 'f32[144,256]{1,0:T(8,128)}', space=vmem, size = 0x24000, scoped, tag = 'scratch operand']
  %s0 = inlined_call_operand.smem [shape: u32[30], index: -1, kind: input, shape index: {}]
  %s1 = sld [smem:[%s0]]
  %s2 = scalar_lea.smem %s0, 1
  %s3 = sld [smem:[%s2]]
  %s4 = scalar_lea.smem %s0, 2
  %s5 = sld [smem:[%s4]]
  %s6 = scalar_lea.smem %s0, 3
  %s7 = sld [smem:[%s6]]
  %s8 = scalar_lea.smem %s0, 4
  %s9 = sld [smem:[%s8]]
  %s10 = scalar_lea.smem %s0, 5
  %s11 = sld [smem:[%s10]]
  %s12 = scalar_lea.smem %s0, 6
  %s13 = sld [smem:[%s12]]
  %s14 = scalar_lea.smem %s0, 7
  %s15 = sld [smem:[%s14]]
  %s16 = scalar_lea.smem %s0, 8
  %s17 = sld [smem:[%s16]]
  %s18 = scalar_lea.smem %s0, 9
  %s19 = sld [smem:[%s18]]
  %s20 = scalar_lea.smem %s0, 10
  %s21 = sld [smem:[%s20]]
  %s22 = scalar_lea.smem %s0, 11
  %s23 = sld [smem:[%s22]]
  %s24 = scalar_lea.smem %s0, 12
  %s25 = sld [smem:[%s24]]
  %s26 = scalar_lea.smem %s0, 13
  %s27 = sld [smem:[%s26]]
  %s28 = scalar_lea.smem %s0, 14
  %s29 = sld [smem:[%s28]]
  %s30 = scalar_lea.smem %s0, 15
  %s31 = sld [smem:[%s30]]
  %s32 = scalar_lea.smem %s0, 16
  %s33 = sld [smem:[%s32]]
  %s34 = scalar_lea.smem %s0, 17
  %s35 = sld [smem:[%s34]]
  %s36 = scalar_lea.smem %s0, 18
  %s37 = sld [smem:[%s36]]
  %s38 = scalar_lea.smem %s0, 19
  %s39 = sld [smem:[%s38]]
  %s40 = scalar_lea.smem %s0, 20
  %s41 = sld [smem:[%s40]]
  %s42 = scalar_lea.smem %s0, 21
  %s43 = sld [smem:[%s42]]
  %s44 = scalar_lea.smem %s0, 22
  %s45 = sld [smem:[%s44]]
  %s46 = scalar_lea.smem %s0, 23
  %s47 = sld [smem:[%s46]]
  %s48 = scalar_lea.smem %s0, 24
  %s49 = sld [smem:[%s48]]
  %s50 = scalar_lea.smem %s0, 25
  %s51 = sld [smem:[%s50]]
  %s52 = scalar_lea.smem %s0, 26
  %s53 = sld [smem:[%s52]]
  %s54 = scalar_lea.smem %s0, 27
  %s55 = sld [smem:[%s54]]
  %s56 = scalar_lea.smem %s0, 28
  %s57 = sld [smem:[%s56]]
  %s58 = scalar_lea.smem %s0, 29
  %s59 = sld [smem:[%s58]]
  %60 = xla_tuple %s55, %s57, %s59
  %s61 = sld [smem:[#allocation0]]
  $region157: #{cross_convolutions_forward.1} parent=0
    _
  %s63 = ssub.s32 1, %s61
  %s64 = scalar_select 0, %s63, %s61
  loop: start=0, step=1, limit=4
  $region2: #{cross_convolutions_forward.1} parent=0 // loop_pre_header
    _
  $region3: #{cross_convolutions_forward.1} parent=0 // loop_header
    %s66 = sphi 0, %s70
    %p67 = scmp.ge.s32.totalorder %s66, 4
    %s76 = sphi 0, %s78
    %s79 = sphi 0, %s76
    %s80 = sphi 0, %s79
    %s96 = sphi 0, %s80
    %s102 = sphi 0, %s104
    %s105 = sphi 0, %s102
    %s106 = sphi 0, %s105
    %s122 = sphi 0, %s106
    %s128 = sphi 0, %s130
    %s131 = sphi 0, %s128
    %s132 = sphi 0, %s131
    %s148 = sphi 0, %s132
    %s152 = sphi 0, %s152
    %s154 = sphi 0, %s152
    %s155 = sphi 0, %s154
    %s169 = sphi 0, %s155
    %s173 = sphi 0, %s173
    %s175 = sphi 0, %s173
    %s176 = sphi 0, %s175
    %s190 = sphi 0, %s176
    %s194 = sphi 0, %s194
    %s196 = sphi 0, %s194
    %s197 = sphi 0, %s196
    %s211 = sphi 0, %s197
    %s215 = sphi 0, %s215
    %s217 = sphi 0, %s215
    %s218 = sphi 0, %s217
    %s232 = sphi 0, %s218
    %s236 = sphi 0, %s236
    %s238 = sphi 0, %s236
    %s239 = sphi 0, %s238
    %s253 = sphi 0, %s239
    %s257 = sphi 0, %s257
    %s259 = sphi 0, %s257
    %s260 = sphi 0, %s259
    %s274 = sphi 0, %s260
    %s278 = sphi 0, %s278
    %s280 = sphi 0, %s278
    %s281 = sphi 0, %s280
    %s295 = sphi 0, %s281
    %s299 = sphi 0, %s299
    %s301 = sphi 0, %s299
    %s302 = sphi 0, %s301
    %s316 = sphi 0, %s302
    %s320 = sphi 0, %s320
    %s322 = sphi 0, %s320
    %s323 = sphi 0, %s322
    %s337 = sphi 0, %s323
    %s341 = sphi 0, %s341
    %s343 = sphi 0, %s341
    %s344 = sphi 0, %s343
    %s358 = sphi 0, %s344
    %s362 = sphi 0, %s362
    %s364 = sphi 0, %s362
    %s365 = sphi 0, %s364
    %s379 = sphi 0, %s365
    %s383 = sphi 0, %s383
    %s385 = sphi 0, %s383
    %s386 = sphi 0, %s385
    %s400 = sphi 0, %s386
    %s404 = sphi 0, %s404
    %s406 = sphi 0, %s404
    %s407 = sphi 0, %s406
    %s421 = sphi 0, %s407
    %s425 = sphi 0, %s425
    %s427 = sphi 0, %s425
    %s428 = sphi 0, %s427
    %s442 = sphi 0, %s428
    %s446 = sphi 0, %s446
    %s448 = sphi 0, %s446
    %s449 = sphi 0, %s448
    %s463 = sphi 0, %s449
    %s467 = sphi 0, %s467
    %s469 = sphi 0, %s467
    %s470 = sphi 0, %s469
    %s484 = sphi 0, %s470
    %s488 = sphi 0, %s488
    %s490 = sphi 0, %s488
    %s491 = sphi 0, %s490
    %s505 = sphi 0, %s491
    %s509 = sphi 0, %s509
    %s511 = sphi 0, %s509
    %s512 = sphi 0, %s511
    %s526 = sphi 0, %s512
    %s530 = sphi 0, %s530
    %s532 = sphi 0, %s530
    %s533 = sphi 0, %s532
    %s547 = sphi 0, %s533
    %s551 = sphi 0, %s551
    %s553 = sphi 0, %s551
    %s554 = sphi 0, %s553
    %s568 = sphi 0, %s554
    %s572 = sphi 0, %s572
    %s574 = sphi 0, %s572
    %s575 = sphi 0, %s574
    %s589 = sphi 0, %s575
    %s593 = sphi 0, %s593
    %s595 = sphi 0, %s593
    %s596 = sphi 0, %s595
    %s610 = sphi 0, %s596
    %s614 = sphi 0, %s614
    %s616 = sphi 0, %s614
    %s617 = sphi 0, %s616
    %s631 = sphi 0, %s617
    %s635 = sphi 0, %s635
    %s637 = sphi 0, %s635
    %s638 = sphi 0, %s637
    %s652 = sphi 0, %s638
    %s658 = sphi 0, %s660
    %s661 = sphi 0, %s658
    %s662 = sphi 0, %s661
    %s678 = sphi 0, %s662
    %s684 = sphi 0, %s686
    %s687 = sphi 0, %s684
    %s688 = sphi 0, %s687
    %s704 = sphi 0, %s688
    %s710 = sphi 0, %s712
    %s713 = sphi 0, %s710
    %s714 = sphi 0, %s713
    %s730 = sphi 0, %s714
  $region4: #{cross_convolutions_forward.1} parent=0 // loop_header_branch
    %69 = sbr.rel (%p67) target = $region8
  $region5: #{cross_convolutions_forward.1} parent=0 // loop_body
    %s71 = ssub.s32 %s66, 1
    %s72 = ssub.s32 %s66, 2
    %s73 = sadd.s32 %s66, 1
    %s74 = ssub.s32 %s66, %s73
    %p75 = scmp.eq.s32.totalorder %s74, 0
    %s77 = sadd.s32 %s76, 1
    %s78 = scalar_select %p75, %s76, %s77
    %p81 = pneg %p75
    %p82 = scmp.eq.s32.totalorder %s66, 1
    %p83 = por %p81, %p82
    %p84 = scmp.ne.s32.totalorder %s76, %s79
    %p85 = scmp.eq.s32.totalorder %s66, 0
    %p86 = por %p84, %p85
    %p87 = scmp.ne.s32.totalorder %s76, %s79
    %p88 = scmp.eq.s32.totalorder %s71, 1
    %p89 = por %p87, %p88
    %p90 = scmp.ne.s32.totalorder %s79, %s80
    %p91 = scmp.eq.s32.totalorder %s71, 0
    %p92 = por %p90, %p91
    %p93 = scmp.ne.s32.totalorder %s79, %s80
    %p94 = scmp.eq.s32.totalorder %s72, 1
    %p95 = por %p93, %p94
    %p97 = scmp.ne.s32.totalorder %s80, %s96
    %p98 = scmp.eq.s32.totalorder %s72, 0
    %p99 = por %p97, %p98
    %s100 = ssub.s32 %s66, %s73
    %p101 = scmp.eq.s32.totalorder %s100, 0
    %s103 = sadd.s32 %s102, 1
    %s104 = scalar_select %p101, %s102, %s103
    %p107 = pneg %p101
    %p108 = scmp.eq.s32.totalorder %s66, 1
    %p109 = por %p107, %p108
    %p110 = scmp.ne.s32.totalorder %s102, %s105
    %p111 = scmp.eq.s32.totalorder %s66, 0
    %p112 = por %p110, %p111
    %p113 = scmp.ne.s32.totalorder %s102, %s105
    %p114 = scmp.eq.s32.totalorder %s71, 1
    %p115 = por %p113, %p114
    %p116 = scmp.ne.s32.totalorder %s105, %s106
    %p117 = scmp.eq.s32.totalorder %s71, 0
    %p118 = por %p116, %p117
    %p119 = scmp.ne.s32.totalorder %s105, %s106
    %p120 = scmp.eq.s32.totalorder %s72, 1
    %p121 = por %p119, %p120
    %p123 = scmp.ne.s32.totalorder %s106, %s122
    %p124 = scmp.eq.s32.totalorder %s72, 0
    %p125 = por %p123, %p124
    %s126 = ssub.s32 %s66, %s73
    %p127 = scmp.eq.s32.totalorder %s126, 0
    %s129 = sadd.s32 %s128, 1
    %s130 = scalar_select %p127, %s128, %s129
    %p133 = pneg %p127
    %p134 = scmp.eq.s32.totalorder %s66, 1
    %p135 = por %p133, %p134
    %p136 = scmp.ne.s32.totalorder %s128, %s131
    %p137 = scmp.eq.s32.totalorder %s66, 0
    %p138 = por %p136, %p137
    %p139 = scmp.ne.s32.totalorder %s128, %s131
    %p140 = scmp.eq.s32.totalorder %s71, 1
    %p141 = por %p139, %p140
    %p142 = scmp.ne.s32.totalorder %s131, %s132
    %p143 = scmp.eq.s32.totalorder %s71, 0
    %p144 = por %p142, %p143
    %p145 = scmp.ne.s32.totalorder %s131, %s132
    %p146 = scmp.eq.s32.totalorder %s72, 1
    %p147 = por %p145, %p146
    %p149 = scmp.ne.s32.totalorder %s132, %s148
    %p150 = scmp.eq.s32.totalorder %s72, 0
    %p151 = por %p149, %p150
    %s153 = sadd.s32 %s152, 1
    %p156 = scmp.eq.s32.totalorder %s66, 1
    %p157 = scmp.ne.s32.totalorder %s152, %s154
    %p158 = scmp.eq.s32.totalorder %s66, 0
    %p159 = por %p157, %p158
    %p160 = scmp.ne.s32.totalorder %s152, %s154
    %p161 = scmp.eq.s32.totalorder %s71, 1
    %p162 = por %p160, %p161
    %p163 = scmp.ne.s32.totalorder %s154, %s155
    %p164 = scmp.eq.s32.totalorder %s71, 0
    %p165 = por %p163, %p164
    %p166 = scmp.ne.s32.totalorder %s154, %s155
    %p167 = scmp.eq.s32.totalorder %s72, 1
    %p168 = por %p166, %p167
    %p170 = scmp.ne.s32.totalorder %s155, %s169
    %p171 = scmp.eq.s32.totalorder %s72, 0
    %p172 = por %p170, %p171
    %s174 = sadd.s32 %s173, 1
    %p177 = scmp.eq.s32.totalorder %s66, 1
    %p178 = scmp.ne.s32.totalorder %s173, %s175
    %p179 = scmp.eq.s32.totalorder %s66, 0
    %p180 = por %p178, %p179
    %p181 = scmp.ne.s32.totalorder %s173, %s175
    %p182 = scmp.eq.s32.totalorder %s71, 1
    %p183 = por %p181, %p182
    %p184 = scmp.ne.s32.totalorder %s175, %s176
    %p185 = scmp.eq.s32.totalorder %s71, 0
    %p186 = por %p184, %p185
    %p187 = scmp.ne.s32.totalorder %s175, %s176
    %p188 = scmp.eq.s32.totalorder %s72, 1
    %p189 = por %p187, %p188
    %p191 = scmp.ne.s32.totalorder %s176, %s190
    %p192 = scmp.eq.s32.totalorder %s72, 0
    %p193 = por %p191, %p192
    %s195 = sadd.s32 %s194, 1
    %p198 = scmp.eq.s32.totalorder %s66, 1
    %p199 = scmp.ne.s32.totalorder %s194, %s196
    %p200 = scmp.eq.s32.totalorder %s66, 0
    %p201 = por %p199, %p200
    %p202 = scmp.ne.s32.totalorder %s194, %s196
    %p203 = scmp.eq.s32.totalorder %s71, 1
    %p204 = por %p202, %p203
    %p205 = scmp.ne.s32.totalorder %s196, %s197
    %p206 = scmp.eq.s32.totalorder %s71, 0
    %p207 = por %p205, %p206
    %p208 = scmp.ne.s32.totalorder %s196, %s197
    %p209 = scmp.eq.s32.totalorder %s72, 1
    %p210 = por %p208, %p209
    %p212 = scmp.ne.s32.totalorder %s197, %s211
    %p213 = scmp.eq.s32.totalorder %s72, 0
    %p214 = por %p212, %p213
    %s216 = sadd.s32 %s215, 1
    %p219 = scmp.eq.s32.totalorder %s66, 1
    %p220 = scmp.ne.s32.totalorder %s215, %s217
    %p221 = scmp.eq.s32.totalorder %s66, 0
    %p222 = por %p220, %p221
    %p223 = scmp.ne.s32.totalorder %s215, %s217
    %p224 = scmp.eq.s32.totalorder %s71, 1
    %p225 = por %p223, %p224
    %p226 = scmp.ne.s32.totalorder %s217, %s218
    %p227 = scmp.eq.s32.totalorder %s71, 0
    %p228 = por %p226, %p227
    %p229 = scmp.ne.s32.totalorder %s217, %s218
    %p230 = scmp.eq.s32.totalorder %s72, 1
    %p231 = por %p229, %p230
    %p233 = scmp.ne.s32.totalorder %s218, %s232
    %p234 = scmp.eq.s32.totalorder %s72, 0
    %p235 = por %p233, %p234
    %s237 = sadd.s32 %s236, 1
    %p240 = scmp.eq.s32.totalorder %s66, 1
    %p241 = scmp.ne.s32.totalorder %s236, %s238
    %p242 = scmp.eq.s32.totalorder %s66, 0
    %p243 = por %p241, %p242
    %p244 = scmp.ne.s32.totalorder %s236, %s238
    %p245 = scmp.eq.s32.totalorder %s71, 1
    %p246 = por %p244, %p245
    %p247 = scmp.ne.s32.totalorder %s238, %s239
    %p248 = scmp.eq.s32.totalorder %s71, 0
    %p249 = por %p247, %p248
    %p250 = scmp.ne.s32.totalorder %s238, %s239
    %p251 = scmp.eq.s32.totalorder %s72, 1
    %p252 = por %p250, %p251
    %p254 = scmp.ne.s32.totalorder %s239, %s253
    %p255 = scmp.eq.s32.totalorder %s72, 0
    %p256 = por %p254, %p255
    %s258 = sadd.s32 %s257, 1
    %p261 = scmp.eq.s32.totalorder %s66, 1
    %p262 = scmp.ne.s32.totalorder %s257, %s259
    %p263 = scmp.eq.s32.totalorder %s66, 0
    %p264 = por %p262, %p263
    %p265 = scmp.ne.s32.totalorder %s257, %s259
    %p266 = scmp.eq.s32.totalorder %s71, 1
    %p267 = por %p265, %p266
    %p268 = scmp.ne.s32.totalorder %s259, %s260
    %p269 = scmp.eq.s32.totalorder %s71, 0
    %p270 = por %p268, %p269
    %p271 = scmp.ne.s32.totalorder %s259, %s260
    %p272 = scmp.eq.s32.totalorder %s72, 1
    %p273 = por %p271, %p272
    %p275 = scmp.ne.s32.totalorder %s260, %s274
    %p276 = scmp.eq.s32.totalorder %s72, 0
    %p277 = por %p275, %p276
    %s279 = sadd.s32 %s278, 1
    %p282 = scmp.eq.s32.totalorder %s66, 1
    %p283 = scmp.ne.s32.totalorder %s278, %s280
    %p284 = scmp.eq.s32.totalorder %s66, 0
    %p285 = por %p283, %p284
    %p286 = scmp.ne.s32.totalorder %s278, %s280
    %p287 = scmp.eq.s32.totalorder %s71, 1
    %p288 = por %p286, %p287
    %p289 = scmp.ne.s32.totalorder %s280, %s281
    %p290 = scmp.eq.s32.totalorder %s71, 0
    %p291 = por %p289, %p290
    %p292 = scmp.ne.s32.totalorder %s280, %s281
    %p293 = scmp.eq.s32.totalorder %s72, 1
    %p294 = por %p292, %p293
    %p296 = scmp.ne.s32.totalorder %s281, %s295
    %p297 = scmp.eq.s32.totalorder %s72, 0
    %p298 = por %p296, %p297
    %s300 = sadd.s32 %s299, 1
    %p303 = scmp.eq.s32.totalorder %s66, 1
    %p304 = scmp.ne.s32.totalorder %s299, %s301
    %p305 = scmp.eq.s32.totalorder %s66, 0
    %p306 = por %p304, %p305
    %p307 = scmp.ne.s32.totalorder %s299, %s301
    %p308 = scmp.eq.s32.totalorder %s71, 1
    %p309 = por %p307, %p308
    %p310 = scmp.ne.s32.totalorder %s301, %s302
    %p311 = scmp.eq.s32.totalorder %s71, 0
    %p312 = por %p310, %p311
    %p313 = scmp.ne.s32.totalorder %s301, %s302
    %p314 = scmp.eq.s32.totalorder %s72, 1
    %p315 = por %p313, %p314
    %p317 = scmp.ne.s32.totalorder %s302, %s316
    %p318 = scmp.eq.s32.totalorder %s72, 0
    %p319 = por %p317, %p318
    %s321 = sadd.s32 %s320, 1
    %p324 = scmp.eq.s32.totalorder %s66, 1
    %p325 = scmp.ne.s32.totalorder %s320, %s322
    %p326 = scmp.eq.s32.totalorder %s66, 0
    %p327 = por %p325, %p326
    %p328 = scmp.ne.s32.totalorder %s320, %s322
    %p329 = scmp.eq.s32.totalorder %s71, 1
    %p330 = por %p328, %p329
    %p331 = scmp.ne.s32.totalorder %s322, %s323
    %p332 = scmp.eq.s32.totalorder %s71, 0
    %p333 = por %p331, %p332
    %p334 = scmp.ne.s32.totalorder %s322, %s323
    %p335 = scmp.eq.s32.totalorder %s72, 1
    %p336 = por %p334, %p335
    %p338 = scmp.ne.s32.totalorder %s323, %s337
    %p339 = scmp.eq.s32.totalorder %s72, 0
    %p340 = por %p338, %p339
    %s342 = sadd.s32 %s341, 1
    %p345 = scmp.eq.s32.totalorder %s66, 1
    %p346 = scmp.ne.s32.totalorder %s341, %s343
    %p347 = scmp.eq.s32.totalorder %s66, 0
    %p348 = por %p346, %p347
    %p349 = scmp.ne.s32.totalorder %s341, %s343
    %p350 = scmp.eq.s32.totalorder %s71, 1
    %p351 = por %p349, %p350
    %p352 = scmp.ne.s32.totalorder %s343, %s344
    %p353 = scmp.eq.s32.totalorder %s71, 0
    %p354 = por %p352, %p353
    %p355 = scmp.ne.s32.totalorder %s343, %s344
    %p356 = scmp.eq.s32.totalorder %s72, 1
    %p357 = por %p355, %p356
    %p359 = scmp.ne.s32.totalorder %s344, %s358
    %p360 = scmp.eq.s32.totalorder %s72, 0
    %p361 = por %p359, %p360
    %s363 = sadd.s32 %s362, 1
    %p366 = scmp.eq.s32.totalorder %s66, 1
    %p367 = scmp.ne.s32.totalorder %s362, %s364
    %p368 = scmp.eq.s32.totalorder %s66, 0
    %p369 = por %p367, %p368
    %p370 = scmp.ne.s32.totalorder %s362, %s364
    %p371 = scmp.eq.s32.totalorder %s71, 1
    %p372 = por %p370, %p371
    %p373 = scmp.ne.s32.totalorder %s364, %s365
    %p374 = scmp.eq.s32.totalorder %s71, 0
    %p375 = por %p373, %p374
    %p376 = scmp.ne.s32.totalorder %s364, %s365
    %p377 = scmp.eq.s32.totalorder %s72, 1
    %p378 = por %p376, %p377
    %p380 = scmp.ne.s32.totalorder %s365, %s379
    %p381 = scmp.eq.s32.totalorder %s72, 0
    %p382 = por %p380, %p381
    %s384 = sadd.s32 %s383, 1
    %p387 = scmp.eq.s32.totalorder %s66, 1
    %p388 = scmp.ne.s32.totalorder %s383, %s385
    %p389 = scmp.eq.s32.totalorder %s66, 0
    %p390 = por %p388, %p389
    %p391 = scmp.ne.s32.totalorder %s383, %s385
    %p392 = scmp.eq.s32.totalorder %s71, 1
    %p393 = por %p391, %p392
    %p394 = scmp.ne.s32.totalorder %s385, %s386
    %p395 = scmp.eq.s32.totalorder %s71, 0
    %p396 = por %p394, %p395
    %p397 = scmp.ne.s32.totalorder %s385, %s386
    %p398 = scmp.eq.s32.totalorder %s72, 1
    %p399 = por %p397, %p398
    %p401 = scmp.ne.s32.totalorder %s386, %s400
    %p402 = scmp.eq.s32.totalorder %s72, 0
    %p403 = por %p401, %p402
    %s405 = sadd.s32 %s404, 1
    %p408 = scmp.eq.s32.totalorder %s66, 1
    %p409 = scmp.ne.s32.totalorder %s404, %s406
    %p410 = scmp.eq.s32.totalorder %s66, 0
    %p411 = por %p409, %p410
    %p412 = scmp.ne.s32.totalorder %s404, %s406
    %p413 = scmp.eq.s32.totalorder %s71, 1
    %p414 = por %p412, %p413
    %p415 = scmp.ne.s32.totalorder %s406, %s407
    %p416 = scmp.eq.s32.totalorder %s71, 0
    %p417 = por %p415, %p416
    %p418 = scmp.ne.s32.totalorder %s406, %s407
    %p419 = scmp.eq.s32.totalorder %s72, 1
    %p420 = por %p418, %p419
    %p422 = scmp.ne.s32.totalorder %s407, %s421
    %p423 = scmp.eq.s32.totalorder %s72, 0
    %p424 = por %p422, %p423
    %s426 = sadd.s32 %s425, 1
    %p429 = scmp.eq.s32.totalorder %s66, 1
    %p430 = scmp.ne.s32.totalorder %s425, %s427
    %p431 = scmp.eq.s32.totalorder %s66, 0
    %p432 = por %p430, %p431
    %p433 = scmp.ne.s32.totalorder %s425, %s427
    %p434 = scmp.eq.s32.totalorder %s71, 1
    %p435 = por %p433, %p434
    %p436 = scmp.ne.s32.totalorder %s427, %s428
    %p437 = scmp.eq.s32.totalorder %s71, 0
    %p438 = por %p436, %p437
    %p439 = scmp.ne.s32.totalorder %s427, %s428
    %p440 = scmp.eq.s32.totalorder %s72, 1
    %p441 = por %p439, %p440
    %p443 = scmp.ne.s32.totalorder %s428, %s442
    %p444 = scmp.eq.s32.totalorder %s72, 0
    %p445 = por %p443, %p444
    %s447 = sadd.s32 %s446, 1
    %p450 = scmp.eq.s32.totalorder %s66, 1
    %p451 = scmp.ne.s32.totalorder %s446, %s448
    %p452 = scmp.eq.s32.totalorder %s66, 0
    %p453 = por %p451, %p452
    %p454 = scmp.ne.s32.totalorder %s446, %s448
    %p455 = scmp.eq.s32.totalorder %s71, 1
    %p456 = por %p454, %p455
    %p457 = scmp.ne.s32.totalorder %s448, %s449
    %p458 = scmp.eq.s32.totalorder %s71, 0
    %p459 = por %p457, %p458
    %p460 = scmp.ne.s32.totalorder %s448, %s449
    %p461 = scmp.eq.s32.totalorder %s72, 1
    %p462 = por %p460, %p461
    %p464 = scmp.ne.s32.totalorder %s449, %s463
    %p465 = scmp.eq.s32.totalorder %s72, 0
    %p466 = por %p464, %p465
    %s468 = sadd.s32 %s467, 1
    %p471 = scmp.eq.s32.totalorder %s66, 1
    %p472 = scmp.ne.s32.totalorder %s467, %s469
    %p473 = scmp.eq.s32.totalorder %s66, 0
    %p474 = por %p472, %p473
    %p475 = scmp.ne.s32.totalorder %s467, %s469
    %p476 = scmp.eq.s32.totalorder %s71, 1
    %p477 = por %p475, %p476
    %p478 = scmp.ne.s32.totalorder %s469, %s470
    %p479 = scmp.eq.s32.totalorder %s71, 0
    %p480 = por %p478, %p479
    %p481 = scmp.ne.s32.totalorder %s469, %s470
    %p482 = scmp.eq.s32.totalorder %s72, 1
    %p483 = por %p481, %p482
    %p485 = scmp.ne.s32.totalorder %s470, %s484
    %p486 = scmp.eq.s32.totalorder %s72, 0
    %p487 = por %p485, %p486
    %s489 = sadd.s32 %s488, 1
    %p492 = scmp.eq.s32.totalorder %s66, 1
    %p493 = scmp.ne.s32.totalorder %s488, %s490
    %p494 = scmp.eq.s32.totalorder %s66, 0
    %p495 = por %p493, %p494
    %p496 = scmp.ne.s32.totalorder %s488, %s490
    %p497 = scmp.eq.s32.totalorder %s71, 1
    %p498 = por %p496, %p497
    %p499 = scmp.ne.s32.totalorder %s490, %s491
    %p500 = scmp.eq.s32.totalorder %s71, 0
    %p501 = por %p499, %p500
    %p502 = scmp.ne.s32.totalorder %s490, %s491
    %p503 = scmp.eq.s32.totalorder %s72, 1
    %p504 = por %p502, %p503
    %p506 = scmp.ne.s32.totalorder %s491, %s505
    %p507 = scmp.eq.s32.totalorder %s72, 0
    %p508 = por %p506, %p507
    %s510 = sadd.s32 %s509, 1
    %p513 = scmp.eq.s32.totalorder %s66, 1
    %p514 = scmp.ne.s32.totalorder %s509, %s511
    %p515 = scmp.eq.s32.totalorder %s66, 0
    %p516 = por %p514, %p515
    %p517 = scmp.ne.s32.totalorder %s509, %s511
    %p518 = scmp.eq.s32.totalorder %s71, 1
    %p519 = por %p517, %p518
    %p520 = scmp.ne.s32.totalorder %s511, %s512
    %p521 = scmp.eq.s32.totalorder %s71, 0
    %p522 = por %p520, %p521
    %p523 = scmp.ne.s32.totalorder %s511, %s512
    %p524 = scmp.eq.s32.totalorder %s72, 1
    %p525 = por %p523, %p524
    %p527 = scmp.ne.s32.totalorder %s512, %s526
    %p528 = scmp.eq.s32.totalorder %s72, 0
    %p529 = por %p527, %p528
    %s531 = sadd.s32 %s530, 1
    %p534 = scmp.eq.s32.totalorder %s66, 1
    %p535 = scmp.ne.s32.totalorder %s530, %s532
    %p536 = scmp.eq.s32.totalorder %s66, 0
    %p537 = por %p535, %p536
    %p538 = scmp.ne.s32.totalorder %s530, %s532
    %p539 = scmp.eq.s32.totalorder %s71, 1
    %p540 = por %p538, %p539
    %p541 = scmp.ne.s32.totalorder %s532, %s533
    %p542 = scmp.eq.s32.totalorder %s71, 0
    %p543 = por %p541, %p542
    %p544 = scmp.ne.s32.totalorder %s532, %s533
    %p545 = scmp.eq.s32.totalorder %s72, 1
    %p546 = por %p544, %p545
    %p548 = scmp.ne.s32.totalorder %s533, %s547
    %p549 = scmp.eq.s32.totalorder %s72, 0
    %p550 = por %p548, %p549
    %s552 = sadd.s32 %s551, 1
    %p555 = scmp.eq.s32.totalorder %s66, 1
    %p556 = scmp.ne.s32.totalorder %s551, %s553
    %p557 = scmp.eq.s32.totalorder %s66, 0
    %p558 = por %p556, %p557
    %p559 = scmp.ne.s32.totalorder %s551, %s553
    %p560 = scmp.eq.s32.totalorder %s71, 1
    %p561 = por %p559, %p560
    %p562 = scmp.ne.s32.totalorder %s553, %s554
    %p563 = scmp.eq.s32.totalorder %s71, 0
    %p564 = por %p562, %p563
    %p565 = scmp.ne.s32.totalorder %s553, %s554
    %p566 = scmp.eq.s32.totalorder %s72, 1
    %p567 = por %p565, %p566
    %p569 = scmp.ne.s32.totalorder %s554, %s568
    %p570 = scmp.eq.s32.totalorder %s72, 0
    %p571 = por %p569, %p570
    %s573 = sadd.s32 %s572, 1
    %p576 = scmp.eq.s32.totalorder %s66, 1
    %p577 = scmp.ne.s32.totalorder %s572, %s574
    %p578 = scmp.eq.s32.totalorder %s66, 0
    %p579 = por %p577, %p578
    %p580 = scmp.ne.s32.totalorder %s572, %s574
    %p581 = scmp.eq.s32.totalorder %s71, 1
    %p582 = por %p580, %p581
    %p583 = scmp.ne.s32.totalorder %s574, %s575
    %p584 = scmp.eq.s32.totalorder %s71, 0
    %p585 = por %p583, %p584
    %p586 = scmp.ne.s32.totalorder %s574, %s575
    %p587 = scmp.eq.s32.totalorder %s72, 1
    %p588 = por %p586, %p587
    %p590 = scmp.ne.s32.totalorder %s575, %s589
    %p591 = scmp.eq.s32.totalorder %s72, 0
    %p592 = por %p590, %p591
    %s594 = sadd.s32 %s593, 1
    %p597 = scmp.eq.s32.totalorder %s66, 1
    %p598 = scmp.ne.s32.totalorder %s593, %s595
    %p599 = scmp.eq.s32.totalorder %s66, 0
    %p600 = por %p598, %p599
    %p601 = scmp.ne.s32.totalorder %s593, %s595
    %p602 = scmp.eq.s32.totalorder %s71, 1
    %p603 = por %p601, %p602
    %p604 = scmp.ne.s32.totalorder %s595, %s596
    %p605 = scmp.eq.s32.totalorder %s71, 0
    %p606 = por %p604, %p605
    %p607 = scmp.ne.s32.totalorder %s595, %s596
    %p608 = scmp.eq.s32.totalorder %s72, 1
    %p609 = por %p607, %p608
    %p611 = scmp.ne.s32.totalorder %s596, %s610
    %p612 = scmp.eq.s32.totalorder %s72, 0
    %p613 = por %p611, %p612
    %s615 = sadd.s32 %s614, 1
    %p618 = scmp.eq.s32.totalorder %s66, 1
    %p619 = scmp.ne.s32.totalorder %s614, %s616
    %p620 = scmp.eq.s32.totalorder %s66, 0
    %p621 = por %p619, %p620
    %p622 = scmp.ne.s32.totalorder %s614, %s616
    %p623 = scmp.eq.s32.totalorder %s71, 1
    %p624 = por %p622, %p623
    %p625 = scmp.ne.s32.totalorder %s616, %s617
    %p626 = scmp.eq.s32.totalorder %s71, 0
    %p627 = por %p625, %p626
    %p628 = scmp.ne.s32.totalorder %s616, %s617
    %p629 = scmp.eq.s32.totalorder %s72, 1
    %p630 = por %p628, %p629
    %p632 = scmp.ne.s32.totalorder %s617, %s631
    %p633 = scmp.eq.s32.totalorder %s72, 0
    %p634 = por %p632, %p633
    %s636 = sadd.s32 %s635, 1
    %p639 = scmp.eq.s32.totalorder %s66, 1
    %p640 = scmp.ne.s32.totalorder %s635, %s637
    %p641 = scmp.eq.s32.totalorder %s66, 0
    %p642 = por %p640, %p641
    %p643 = scmp.ne.s32.totalorder %s635, %s637
    %p644 = scmp.eq.s32.totalorder %s71, 1
    %p645 = por %p643, %p644
    %p646 = scmp.ne.s32.totalorder %s637, %s638
    %p647 = scmp.eq.s32.totalorder %s71, 0
    %p648 = por %p646, %p647
    %p649 = scmp.ne.s32.totalorder %s637, %s638
    %p650 = scmp.eq.s32.totalorder %s72, 1
    %p651 = por %p649, %p650
    %p653 = scmp.ne.s32.totalorder %s638, %s652
    %p654 = scmp.eq.s32.totalorder %s72, 0
    %p655 = por %p653, %p654
    %s656 = ssub.s32 %s66, %s73
    %p657 = scmp.eq.s32.totalorder %s656, 0
    %s659 = sadd.s32 %s658, 1
    %s660 = scalar_select %p657, %s658, %s659
    %p663 = pneg %p657
    %p664 = scmp.eq.s32.totalorder %s66, 1
    %p665 = por %p663, %p664
    %p666 = scmp.ne.s32.totalorder %s658, %s661
    %p667 = scmp.eq.s32.totalorder %s66, 0
    %p668 = por %p666, %p667
    %p669 = scmp.ne.s32.totalorder %s658, %s661
    %p670 = scmp.eq.s32.totalorder %s71, 1
    %p671 = por %p669, %p670
    %p672 = scmp.ne.s32.totalorder %s661, %s662
    %p673 = scmp.eq.s32.totalorder %s71, 0
    %p674 = por %p672, %p673
    %p675 = scmp.ne.s32.totalorder %s661, %s662
    %p676 = scmp.eq.s32.totalorder %s72, 1
    %p677 = por %p675, %p676
    %p679 = scmp.ne.s32.totalorder %s662, %s678
    %p680 = scmp.eq.s32.totalorder %s72, 0
    %p681 = por %p679, %p680
    %s682 = ssub.s32 %s66, %s73
    %p683 = scmp.eq.s32.totalorder %s682, 0
    %s685 = sadd.s32 %s684, 1
    %s686 = scalar_select %p683, %s684, %s685
    %p689 = pneg %p683
    %p690 = scmp.eq.s32.totalorder %s66, 1
    %p691 = por %p689, %p690
    %p692 = scmp.ne.s32.totalorder %s684, %s687
    %p693 = scmp.eq.s32.totalorder %s66, 0
    %p694 = por %p692, %p693
    %p695 = scmp.ne.s32.totalorder %s684, %s687
    %p696 = scmp.eq.s32.totalorder %s71, 1
    %p697 = por %p695, %p696
    %p698 = scmp.ne.s32.totalorder %s687, %s688
    %p699 = scmp.eq.s32.totalorder %s71, 0
    %p700 = por %p698, %p699
    %p701 = scmp.ne.s32.totalorder %s687, %s688
    %p702 = scmp.eq.s32.totalorder %s72, 1
    %p703 = por %p701, %p702
    %p705 = scmp.ne.s32.totalorder %s688, %s704
    %p706 = scmp.eq.s32.totalorder %s72, 0
    %p707 = por %p705, %p706
    %s708 = ssub.s32 %s66, %s73
    %p709 = scmp.eq.s32.totalorder %s708, 0
    %s711 = sadd.s32 %s710, 1
    %s712 = scalar_select %p709, %s710, %s711
    %p715 = pneg %p709
    %p716 = scmp.eq.s32.totalorder %s66, 1
    %p717 = por %p715, %p716
    %p718 = scmp.ne.s32.totalorder %s710, %s713
    %p719 = scmp.eq.s32.totalorder %s66, 0
    %p720 = por %p718, %p719
    %p721 = scmp.ne.s32.totalorder %s710, %s713
    %p722 = scmp.eq.s32.totalorder %s71, 1
    %p723 = por %p721, %p722
    %p724 = scmp.ne.s32.totalorder %s713, %s714
    %p725 = scmp.eq.s32.totalorder %s71, 0
    %p726 = por %p724, %p725
    %p727 = scmp.ne.s32.totalorder %s713, %s714
    %p728 = scmp.eq.s32.totalorder %s72, 1
    %p729 = por %p727, %p728
    %p731 = scmp.ne.s32.totalorder %s714, %s730
    %p732 = scmp.eq.s32.totalorder %s72, 0
    %p733 = por %p731, %p732
    %p734 = scmp.le.s32.totalorder 1, %s66
    %p735 = scmp.lt.s32.totalorder %s66, 3
    %p736 = pnand %p734, %p735
    %p737 = pneg %p736
    // Predicated region
    $region9: #{cross_convolutions_forward.1} parent=5 // pred_check
      _
    $region10: #{cross_convolutions_forward.1} parent=5 // pred_check_branch
      %739 = sbr.rel (%p736) target = $region12
    $region11: #{cross_convolutions_forward.1} parent=5 // pred_region
      %s740 = ssub.s32 %s66, 1
      // Predicated region
      $region13: #{cross_convolutions_forward.1} parent=11 // pred_check
        %p741 = pneg %p165
      $region14: #{cross_convolutions_forward.1} parent=11 // pred_check_branch
        %743 = sbr.rel (%p741) target = $region16
      $region15: #{cross_convolutions_forward.1} parent=11 // pred_region
        _
      $region16: #{cross_convolutions_forward.1} parent=11 // pred_fallthru
        _
      // Predicated region
      $region17: #{cross_convolutions_forward.1} parent=11 // pred_check
        %p744 = pneg %p186
      $region18: #{cross_convolutions_forward.1} parent=11 // pred_check_branch
        %746 = sbr.rel (%p744) target = $region20
      $region19: #{cross_convolutions_forward.1} parent=11 // pred_region
        _
      $region20: #{cross_convolutions_forward.1} parent=11 // pred_fallthru
        _
      // Predicated region
      $region21: #{cross_convolutions_forward.1} parent=11 // pred_check
        %p747 = pneg %p207
      $region22: #{cross_convolutions_forward.1} parent=11 // pred_check_branch
        %749 = sbr.rel (%p747) target = $region24
      $region23: #{cross_convolutions_forward.1} parent=11 // pred_region
        _
      $region24: #{cross_convolutions_forward.1} parent=11 // pred_fallthru
        _
      // Predicated region
      $region25: #{cross_convolutions_forward.1} parent=11 // pred_check
        %p750 = pneg %p228
      $region26: #{cross_convolutions_forward.1} parent=11 // pred_check_branch
        %752 = sbr.rel (%p750) target = $region28
      $region27: #{cross_convolutions_forward.1} parent=11 // pred_region
        _
      $region28: #{cross_convolutions_forward.1} parent=11 // pred_fallthru
        _
      // Predicated region
      $region29: #{cross_convolutions_forward.1} parent=11 // pred_check
        %p753 = pneg %p249
      $region30: #{cross_convolutions_forward.1} parent=11 // pred_check_branch
        %755 = sbr.rel (%p753) target = $region32
      $region31: #{cross_convolutions_forward.1} parent=11 // pred_region
        _
      $region32: #{cross_convolutions_forward.1} parent=11 // pred_fallthru
        _
      // Predicated region
      $region33: #{cross_convolutions_forward.1} parent=11 // pred_check
        %p756 = pneg %p270
      $region34: #{cross_convolutions_forward.1} parent=11 // pred_check_branch
        %758 = sbr.rel (%p756) target = $region36
      $region35: #{cross_convolutions_forward.1} parent=11 // pred_region
        _
      $region36: #{cross_convolutions_forward.1} parent=11 // pred_fallthru
        _
      // Predicated region
      $region37: #{cross_convolutions_forward.1} parent=11 // pred_check
        %p759 = pneg %p291
      $region38: #{cross_convolutions_forward.1} parent=11 // pred_check_branch
        %761 = sbr.rel (%p759) target = $region40
      $region39: #{cross_convolutions_forward.1} parent=11 // pred_region
        _
      $region40: #{cross_convolutions_forward.1} parent=11 // pred_fallthru
        _
      // Predicated region
      $region41: #{cross_convolutions_forward.1} parent=11 // pred_check
        %p762 = pneg %p312
      $region42: #{cross_convolutions_forward.1} parent=11 // pred_check_branch
        %764 = sbr.rel (%p762) target = $region44
      $region43: #{cross_convolutions_forward.1} parent=11 // pred_region
        _
      $region44: #{cross_convolutions_forward.1} parent=11 // pred_fallthru
        _
      // Predicated region
      $region45: #{cross_convolutions_forward.1} parent=11 // pred_check
        %p765 = pneg %p333
      $region46: #{cross_convolutions_forward.1} parent=11 // pred_check_branch
        %767 = sbr.rel (%p765) target = $region48
      $region47: #{cross_convolutions_forward.1} parent=11 // pred_region
        _
      $region48: #{cross_convolutions_forward.1} parent=11 // pred_fallthru
        _
      // Predicated region
      $region49: #{cross_convolutions_forward.1} parent=11 // pred_check
        %p768 = pneg %p354
      $region50: #{cross_convolutions_forward.1} parent=11 // pred_check_branch
        %770 = sbr.rel (%p768) target = $region52
      $region51: #{cross_convolutions_forward.1} parent=11 // pred_region
        _
      $region52: #{cross_convolutions_forward.1} parent=11 // pred_fallthru
        _
      // Predicated region
      $region53: #{cross_convolutions_forward.1} parent=11 // pred_check
        %p771 = pneg %p375
      $region54: #{cross_convolutions_forward.1} parent=11 // pred_check_branch
        %773 = sbr.rel (%p771) target = $region56
      $region55: #{cross_convolutions_forward.1} parent=11 // pred_region
        _
      $region56: #{cross_convolutions_forward.1} parent=11 // pred_fallthru
        _
      // Predicated region
      $region57: #{cross_convolutions_forward.1} parent=11 // pred_check
        %p774 = pneg %p396
      $region58: #{cross_convolutions_forward.1} parent=11 // pred_check_branch
        %776 = sbr.rel (%p774) target = $region60
      $region59: #{cross_convolutions_forward.1} parent=11 // pred_region
        _
      $region60: #{cross_convolutions_forward.1} parent=11 // pred_fallthru
        _
      // Predicated region
      $region61: #{cross_convolutions_forward.1} parent=11 // pred_check
        %p777 = pneg %p417
      $region62: #{cross_convolutions_forward.1} parent=11 // pred_check_branch
        %779 = sbr.rel (%p777) target = $region64
      $region63: #{cross_convolutions_forward.1} parent=11 // pred_region
        _
      $region64: #{cross_convolutions_forward.1} parent=11 // pred_fallthru
        _
      // Predicated region
      $region65: #{cross_convolutions_forward.1} parent=11 // pred_check
        %p780 = pneg %p438
      $region66: #{cross_convolutions_forward.1} parent=11 // pred_check_branch
        %782 = sbr.rel (%p780) target = $region68
      $region67: #{cross_convolutions_forward.1} parent=11 // pred_region
        _
      $region68: #{cross_convolutions_forward.1} parent=11 // pred_fallthru
        _
      // Predicated region
      $region69: #{cross_convolutions_forward.1} parent=11 // pred_check
        %p783 = pneg %p459
      $region70: #{cross_convolutions_forward.1} parent=11 // pred_check_branch
        %785 = sbr.rel (%p783) target = $region72
      $region71: #{cross_convolutions_forward.1} parent=11 // pred_region
        _
      $region72: #{cross_convolutions_forward.1} parent=11 // pred_fallthru
        _
      // Predicated region
      $region73: #{cross_convolutions_forward.1} parent=11 // pred_check
        %p786 = pneg %p480
      $region74: #{cross_convolutions_forward.1} parent=11 // pred_check_branch
        %788 = sbr.rel (%p786) target = $region76
      $region75: #{cross_convolutions_forward.1} parent=11 // pred_region
        _
      $region76: #{cross_convolutions_forward.1} parent=11 // pred_fallthru
        _
      // Predicated region
      $region77: #{cross_convolutions_forward.1} parent=11 // pred_check
        %p789 = pneg %p501
      $region78: #{cross_convolutions_forward.1} parent=11 // pred_check_branch
        %791 = sbr.rel (%p789) target = $region80
      $region79: #{cross_convolutions_forward.1} parent=11 // pred_region
        _
      $region80: #{cross_convolutions_forward.1} parent=11 // pred_fallthru
        _
      // Predicated region
      $region81: #{cross_convolutions_forward.1} parent=11 // pred_check
        %p792 = pneg %p522
      $region82: #{cross_convolutions_forward.1} parent=11 // pred_check_branch
        %794 = sbr.rel (%p792) target = $region84
      $region83: #{cross_convolutions_forward.1} parent=11 // pred_region
        _
      $region84: #{cross_convolutions_forward.1} parent=11 // pred_fallthru
        _
      // Predicated region
      $region85: #{cross_convolutions_forward.1} parent=11 // pred_check
        %p795 = pneg %p543
      $region86: #{cross_convolutions_forward.1} parent=11 // pred_check_branch
        %797 = sbr.rel (%p795) target = $region88
      $region87: #{cross_convolutions_forward.1} parent=11 // pred_region
        _
      $region88: #{cross_convolutions_forward.1} parent=11 // pred_fallthru
        _
      // Predicated region
      $region89: #{cross_convolutions_forward.1} parent=11 // pred_check
        %p798 = pneg %p564
      $region90: #{cross_convolutions_forward.1} parent=11 // pred_check_branch
        %800 = sbr.rel (%p798) target = $region92
      $region91: #{cross_convolutions_forward.1} parent=11 // pred_region
        _
      $region92: #{cross_convolutions_forward.1} parent=11 // pred_fallthru
        _
      // Predicated region
      $region93: #{cross_convolutions_forward.1} parent=11 // pred_check
        %p801 = pneg %p585
      $region94: #{cross_convolutions_forward.1} parent=11 // pred_check_branch
        %803 = sbr.rel (%p801) target = $region96
      $region95: #{cross_convolutions_forward.1} parent=11 // pred_region
        _
      $region96: #{cross_convolutions_forward.1} parent=11 // pred_fallthru
        _
      // Predicated region
      $region97: #{cross_convolutions_forward.1} parent=11 // pred_check
        %p804 = pneg %p606
      $region98: #{cross_convolutions_forward.1} parent=11 // pred_check_branch
        %806 = sbr.rel (%p804) target = $region100
      $region99: #{cross_convolutions_forward.1} parent=11 // pred_region
        _
      $region100: #{cross_convolutions_forward.1} parent=11 // pred_fallthru
        _
      // Predicated region
      $region101: #{cross_convolutions_forward.1} parent=11 // pred_check
        %p807 = pneg %p627
      $region102: #{cross_convolutions_forward.1} parent=11 // pred_check_branch
        %809 = sbr.rel (%p807) target = $region104
      $region103: #{cross_convolutions_forward.1} parent=11 // pred_region
        _
      $region104: #{cross_convolutions_forward.1} parent=11 // pred_fallthru
        _
      // Predicated region
      $region105: #{cross_convolutions_forward.1} parent=11 // pred_check
        %p810 = pneg %p648
      $region106: #{cross_convolutions_forward.1} parent=11 // pred_check_branch
        %812 = sbr.rel (%p810) target = $region108
      $region107: #{cross_convolutions_forward.1} parent=11 // pred_region
        _
      $region108: #{cross_convolutions_forward.1} parent=11 // pred_fallthru
        _
    $region12: #{cross_convolutions_forward.1} parent=5 // pred_fallthru
      _
    %p813 = scmp.lt.s32.totalorder %s66, 2
    // Predicated region
    $region109: #{cross_convolutions_forward.1} parent=5 // pred_check
      %p814 = pneg %p813
    $region110: #{cross_convolutions_forward.1} parent=5 // pred_check_branch
      %816 = sbr.rel (%p814) target = $region112
    $region111: #{cross_convolutions_forward.1} parent=5 // pred_region
      // Predicated region
      $region113: #{cross_convolutions_forward.1} parent=111 // pred_check
        %p817 = pneg %p86
      $region114: #{cross_convolutions_forward.1} parent=111 // pred_check_branch
        %819 = sbr.rel (%p817) target = $region116
      $region115: #{cross_convolutions_forward.1} parent=111 // pred_region
        %p820 = scmp.lt.s32.totalorder %s66, 1
        %s821 = scalar_select %p820, %s66, 1
        %s822 = smul.addr %s821, 2
        %s823 = smul.addr %s822, 4
        %s824 = scalar_lea.vmem %s1, %s823
      $region116: #{cross_convolutions_forward.1} parent=111 // pred_fallthru
        _
      // Predicated region
      $region117: #{cross_convolutions_forward.1} parent=111 // pred_check
        %p825 = pneg %p112
      $region118: #{cross_convolutions_forward.1} parent=111 // pred_check_branch
        %827 = sbr.rel (%p825) target = $region120
      $region119: #{cross_convolutions_forward.1} parent=111 // pred_region
        %p828 = scmp.lt.s32.totalorder %s66, 1
        %s829 = scalar_select %p828, %s66, 1
        %s830 = smul.addr %s829, 4
        %s831 = scalar_lea.vmem %s3, %s830
      $region120: #{cross_convolutions_forward.1} parent=111 // pred_fallthru
        _
      // Predicated region
      $region121: #{cross_convolutions_forward.1} parent=111 // pred_check
        %p832 = pneg %p138
      $region122: #{cross_convolutions_forward.1} parent=111 // pred_check_branch
        %834 = sbr.rel (%p832) target = $region124
      $region123: #{cross_convolutions_forward.1} parent=111 // pred_region
        %p835 = scmp.lt.s32.totalorder %s66, 1
        %s836 = scalar_select %p835, %s66, 1
        %s837 = smul.addr %s836, 4
        %s838 = scalar_lea.vmem %s5, %s837
      $region124: #{cross_convolutions_forward.1} parent=111 // pred_fallthru
        _
    $region112: #{cross_convolutions_forward.1} parent=5 // pred_fallthru
      _
    %p839 = scmp.le.s32.totalorder 1, %s66
    %p840 = scmp.lt.s32.totalorder %s66, 3
    %p841 = pnand %p839, %p840
    %p842 = pneg %p841
    // Predicated region
    $region125: #{cross_convolutions_forward.1} parent=5 // pred_check
      _
    $region126: #{cross_convolutions_forward.1} parent=5 // pred_check_branch
      %844 = sbr.rel (%p841) target = $region128
    $region127: #{cross_convolutions_forward.1} parent=5 // pred_region
      %s845 = ssub.s32 %s66, 1
      %p846 = scmp.lt.s32.totalorder %s71, 1
      %s847 = scalar_select %p846, %s71, 1
      %s848 = smul.addr %s847, 2
      %s849 = smul.addr %s848, 4
      %s850 = scalar_lea.vmem %s1, %s849
      %p851 = pneg %p92
      %p852 = pneg %p89
      %p853 = scmp.lt.s32.totalorder %s71, 1
      %s854 = scalar_select %p853, %s71, 1
      %s855 = smul.addr %s854, 4
      %s856 = scalar_lea.vmem %s3, %s855
      %p857 = pneg %p118
      %p858 = pneg %p115
      %p859 = scmp.lt.s32.totalorder %s71, 1
      %s860 = scalar_select %p859, %s71, 1
      %s861 = smul.addr %s860, 4
      %s862 = scalar_lea.vmem %s5, %s861
      %p863 = pneg %p144
      %p864 = pneg %p141
      %p865 = pneg %p165
      %p866 = pneg %p162
      %p867 = pneg %p186
      %p868 = pneg %p183
      %p869 = pneg %p207
      %p870 = pneg %p204
      %p871 = pneg %p228
      %p872 = pneg %p225
      %p873 = pneg %p249
      %p874 = pneg %p246
      %p875 = pneg %p270
      %p876 = pneg %p267
      %p877 = pneg %p291
      %p878 = pneg %p288
      %p879 = pneg %p312
      %p880 = pneg %p309
      %p881 = pneg %p333
      %p882 = pneg %p330
      %p883 = pneg %p354
      %p884 = pneg %p351
      %p885 = pneg %p375
      %p886 = pneg %p372
      %p887 = pneg %p396
      %p888 = pneg %p393
      %p889 = pneg %p417
      %p890 = pneg %p414
      %p891 = pneg %p438
      %p892 = pneg %p435
      %p893 = pneg %p459
      %p894 = pneg %p456
      %p895 = pneg %p480
      %p896 = pneg %p477
      %p897 = pneg %p501
      %p898 = pneg %p498
      %p899 = pneg %p522
      %p900 = pneg %p519
      %p901 = pneg %p543
      %p902 = pneg %p540
      %p903 = pneg %p564
      %p904 = pneg %p561
      %p905 = pneg %p585
      %p906 = pneg %p582
      %p907 = pneg %p606
      %p908 = pneg %p603
      %p909 = pneg %p627
      %p910 = pneg %p624
      %p911 = pneg %p648
      %p912 = pneg %p645
      %p913 = pneg %p674
      %p914 = pneg %p671
      %p915 = scmp.lt.s32.totalorder %s71, 1
      %s916 = scalar_select %p915, %s71, 1
      %s917 = smul.addr %s916, 2
      %s918 = smul.addr %s917, 8
      %s919 = scalar_lea.vmem %s55, %s918
      %p920 = pneg %p700
      %p921 = pneg %p697
      %p922 = scmp.lt.s32.totalorder %s71, 1
      %s923 = scalar_select %p922, %s71, 1
      %s924 = smul.addr %s923, 8
      %s925 = scalar_lea.vmem %s57, %s924
      %p926 = pneg %p726
      %p927 = pneg %p723
      %p928 = scmp.lt.s32.totalorder %s71, 1
      %s929 = scalar_select %p928, %s71, 1
      %s930 = smul.addr %s929, 8
      %s931 = scalar_lea.vmem %s59, %s930
      %p932 = scmp.lt.s32.totalorder %s71, 1
      %s933 = scalar_select %p932, %s71, 1
      %s934 = smul.addr %s933, 2
      %s935 = smul.addr %s934, 4
      %s936 = scalar_lea.vmem %s1, %s935
      %p937 = scmp.lt.s32.totalorder %s71, 1
      %s938 = scalar_select %p937, %s71, 1
      %s939 = smul.addr %s938, 4
      %s940 = scalar_lea.vmem %s3, %s939
      %p941 = scmp.lt.s32.totalorder %s71, 1
      %s942 = scalar_select %p941, %s71, 1
      %s943 = smul.addr %s942, 4
      %s944 = scalar_lea.vmem %s5, %s943
      %p945 = scmp.lt.s32.totalorder %s71, 1
      %s946 = scalar_select %p945, %s71, 1
      %s947 = smul.addr %s946, 2
      %s948 = smul.addr %s947, 8
      %s949 = scalar_lea.vmem %s55, %s948
      %p950 = scmp.lt.s32.totalorder %s71, 1
      %s951 = scalar_select %p950, %s71, 1
      %s952 = smul.addr %s951, 8
      %s953 = scalar_lea.vmem %s57, %s952
      %p954 = scmp.lt.s32.totalorder %s71, 1
      %s955 = scalar_select %p954, %s71, 1
      %s956 = smul.addr %s955, 8
      %s957 = scalar_lea.vmem %s59, %s956
      %958 = vst [vmem:[#allocation2] sm:$0xff] 0.0
      %959 = vst [vmem:[#allocation2 + $0x20] sm:$0xff] 0.0
      %960 = vst [vmem:[#allocation2 + $0x18] sm:$0xff] 0.0
      %961 = vst [vmem:[#allocation2 + $0x38] sm:$0xff] 0.0
      %v962 = vld [vmem:[%s936] sm:$0xff]
      %v964 = vcombine.high %v962, %v962
      %966 = vst [vmem:[#allocation2 + $0x8] sm:$0xf] %v962
      %967 = vst [vmem:[#allocation2 + $0x10] sm:$0xf] %v964
      %v968 = vld [vmem:[#allocation2] sm:$0xf]
      %v969 = vld [vmem:[#allocation2 + $0x8] sm:$0xf]
      %v970 = vld [vmem:[#allocation2 + $0x10] sm:$0xf]
      %v971 = vld [vmem:[%s47] ss:$8 sm:$0x3]
      %v973 = vlaneseq
      %v974 = vshrl.u32 %v973, 7
      %v975 = vsub.s32 0, %v974
      %v976 = vrot.slane %v971, %v975
      %v977 = vlaneseq
      %v978 = vshrl.u32 %v977, 7
      %v979 = vsub.s32 1, %v978
      %v980 = vrot.slane %v971, %v979
      %981 = vrot.lane.b32.xlu0 %v976, 111
      %v982 = vpop.permute.xlu0 %981
      %983 = vrot.lane.b32.xlu0 %v980, 111
      %v984 = vpop.permute.xlu0 %983
      %vm985 = vcmask 908288
      %v986 = vsel %vm985, %v982, %v984
      %v990 = vmul.f32 %v968, %v982
      %v991 = vmul.f32 %v969, %v986
      %v992 = vmul.f32 %v970, %v984
      %996 = vrot.lane.b32.xlu0 %v990, 17
      %v997 = vpop.permute.xlu0 %996
      %998 = vrot.lane.b32.xlu0 %v991, 17
      %v999 = vpop.permute.xlu0 %998
      %1000 = vrot.lane.b32.xlu0 %v992, 17
      %v1001 = vpop.permute.xlu0 %1000
      %vm1002 = vcmask 138240
      %v1003 = vsel %vm1002, %v997, %v999
      %v1004 = vsel %vm1002, %v999, %v1001
      %1007 = vst [vmem:[#allocation3] sm:$0xf] %v1003
      %1008 = vst [vmem:[#allocation3 + $0x8] sm:$0xf] %v1004
      %1009 = vst [vmem:[#allocation3] sm:$0xf0] 0.0
      %1010 = vst [vmem:[#allocation3 + $0x8] sm:$0xf0] 0.0
      %v1011 = vld [vmem:[#allocation2] sm:$0xf]
      %v1012 = vld [vmem:[#allocation2 + $0x8] sm:$0xf]
      %v1013 = vld [vmem:[#allocation2 + $0x10] sm:$0xf]
      %1017 = vrot.lane.b32.xlu0 %v1011, 16
      %v1018 = vpop.permute.xlu0 %1017
      %1019 = vrot.lane.b32.xlu0 %v1012, 16
      %v1020 = vpop.permute.xlu0 %1019
      %1021 = vrot.lane.b32.xlu0 %v1013, 16
      %v1022 = vpop.permute.xlu0 %1021
      %vm1023 = vcmask 130048
      %v1024 = vsel %vm1023, %v1018, %v1020
      %v1025 = vsel %vm1023, %v1020, %v1022
      %1028 = vst [vmem:[#allocation3 + $0x10] sm:$0xf] %v1024
      %1029 = vst [vmem:[#allocation3 + $0x18] sm:$0xf] %v1025
      %1030 = vst [vmem:[#allocation3 + $0x10] sm:$0xf0] 0.0
      %1031 = vst [vmem:[#allocation3 + $0x18] sm:$0xf0] 0.0
      %v1032 = vld [vmem:[#allocation2] sm:$0xf]
      %v1033 = vld [vmem:[#allocation2 + $0x8] sm:$0xf]
      %v1034 = vld [vmem:[#allocation2 + $0x10] sm:$0xf]
      %s1035 = scalar_lea.vmem %s47, 2
      %v1036 = vld [vmem:[%s1035] ss:$8 sm:$0x3]
      %v1038 = vlaneseq
      %v1039 = vshrl.u32 %v1038, 7
      %v1040 = vsub.s32 0, %v1039
      %v1041 = vrot.slane %v1036, %v1040
      %v1042 = vlaneseq
      %v1043 = vshrl.u32 %v1042, 7
      %v1044 = vsub.s32 1, %v1043
      %v1045 = vrot.slane %v1036, %v1044
      %1046 = vrot.lane.b32.xlu0 %v1041, 113
      %v1047 = vpop.permute.xlu0 %1046
      %1048 = vrot.lane.b32.xlu0 %v1045, 113
      %v1049 = vpop.permute.xlu0 %1048
      %vm1050 = vcmask 924672
      %v1051 = vsel %vm1050, %v1047, %v1049
      %v1055 = vmul.f32 %v1032, %v1047
      %v1056 = vmul.f32 %v1033, %v1051
      %v1057 = vmul.f32 %v1034, %v1049
      %1061 = vrot.lane.b32.xlu0 %v1055, 15
      %v1062 = vpop.permute.xlu0 %1061
      %1063 = vrot.lane.b32.xlu0 %v1056, 15
      %v1064 = vpop.permute.xlu0 %1063
      %1065 = vrot.lane.b32.xlu0 %v1057, 15
      %v1066 = vpop.permute.xlu0 %1065
      %vm1067 = vcmask 121856
      %v1068 = vsel %vm1067, %v1062, %v1064
      %v1069 = vsel %vm1067, %v1064, %v1066
      %1072 = vst [vmem:[#allocation3 + $0x20] sm:$0xf] %v1068
      %1073 = vst [vmem:[#allocation3 + $0x28] sm:$0xf] %v1069
      %1074 = vst [vmem:[#allocation3 + $0x20] sm:$0xf0] 0.0
      %1075 = vst [vmem:[#allocation3 + $0x28] sm:$0xf0] 0.0
      %v1076 = vld [vmem:[#allocation2] sm:$0xf]
      %v1077 = vld [vmem:[#allocation2 + $0x8] sm:$0xf]
      %v1078 = vld [vmem:[#allocation2 + $0x10] sm:$0xf]
      %s1079 = scalar_lea.vmem %s47, 3
      %v1080 = vld [vmem:[%s1079] ss:$8 sm:$0x3]
      %v1082 = vlaneseq
      %v1083 = vshrl.u32 %v1082, 7
      %v1084 = vsub.s32 0, %v1083
      %v1085 = vrot.slane %v1080, %v1084
      %v1086 = vlaneseq
      %v1087 = vshrl.u32 %v1086, 7
      %v1088 = vsub.s32 1, %v1087
      %v1089 = vrot.slane %v1080, %v1088
      %1090 = vrot.lane.b32.xlu0 %v1085, 127
      %v1091 = vpop.permute.xlu0 %1090
      %1092 = vrot.lane.b32.xlu0 %v1089, 127
      %v1093 = vpop.permute.xlu0 %1092
      %vm1094 = vcmask 1039360
      %v1095 = vsel %vm1094, %v1091, %v1093
      %v1099 = vmul.f32 %v1076, %v1091
      %v1100 = vmul.f32 %v1077, %v1095
      %v1101 = vmul.f32 %v1078, %v1093
      %1105 = vrot.lane.b32.xlu0 %v1099, 1
      %v1106 = vpop.permute.xlu0 %1105
      %1107 = vrot.lane.b32.xlu0 %v1100, 1
      %v1108 = vpop.permute.xlu0 %1107
      %1109 = vrot.lane.b32.xlu0 %v1101, 1
      %v1110 = vpop.permute.xlu0 %1109
      %vm1111 = vcmask 7168
      %v1112 = vsel %vm1111, %v1106, %v1108
      %v1113 = vsel %vm1111, %v1108, %v1110
      %1116 = vst [vmem:[#allocation3 + $0x30] sm:$0xf] %v1112
      %1117 = vst [vmem:[#allocation3 + $0x38] sm:$0xf] %v1113
      %1118 = vst [vmem:[#allocation3 + $0x30] sm:$0xf0] 0.0
      %1119 = vst [vmem:[#allocation3 + $0x38] sm:$0xf0] 0.0
      %v1120 = vld [vmem:[#allocation2 + $0x8] sm:$0xf]
      %v1121 = vld [vmem:[#allocation2 + $0x10] sm:$0xf]
      %1122 = vst [vmem:[#allocation3 + $0x40] sm:$0xf] %v1120
      %1123 = vst [vmem:[#allocation3 + $0x48] sm:$0xf] %v1121
      %1124 = vst [vmem:[#allocation3 + $0x40] sm:$0xf0] 0.0
      %1125 = vst [vmem:[#allocation3 + $0x48] sm:$0xf0] 0.0
      %v1126 = vld [vmem:[#allocation2 + $0x8] sm:$0xf]
      %v1127 = vld [vmem:[#allocation2 + $0x10] sm:$0xf]
      %v1128 = vld [vmem:[#allocation2 + $0x18] sm:$0xf]
      %s1129 = scalar_lea.vmem %s47, 5
      %v1130 = vld [vmem:[%s1129] ss:$8 sm:$0x3]
      %v1132 = vlaneseq
      %v1133 = vshrl.u32 %v1132, 7
      %v1134 = vsub.s32 0, %v1133
      %v1135 = vrot.slane %v1130, %v1134
      %v1136 = vlaneseq
      %v1137 = vshrl.u32 %v1136, 7
      %v1138 = vsub.s32 1, %v1137
      %v1139 = vrot.slane %v1130, %v1138
      %1140 = vrot.lane.b32.xlu0 %v1135, 1
      %v1141 = vpop.permute.xlu0 %1140
      %1142 = vrot.lane.b32.xlu0 %v1139, 1
      %v1143 = vpop.permute.xlu0 %1142
      %v1144 = vsel %vm1111, %v1141, %v1143
      %v1148 = vmul.f32 %v1126, %v1141
      %v1149 = vmul.f32 %v1127, %v1144
      %v1150 = vmul.f32 %v1128, %v1143
      %1154 = vrot.lane.b32.xlu0 %v1148, 127
      %v1155 = vpop.permute.xlu0 %1154
      %1156 = vrot.lane.b32.xlu0 %v1149, 127
      %v1157 = vpop.permute.xlu0 %1156
      %1158 = vrot.lane.b32.xlu0 %v1150, 127
      %v1159 = vpop.permute.xlu0 %1158
      %v1160 = vsel %vm1094, %v1155, %v1157
      %v1161 = vsel %vm1094, %v1157, %v1159
      %1164 = vst [vmem:[#allocation3 + $0x50] sm:$0xf] %v1160
      %1165 = vst [vmem:[#allocation3 + $0x58] sm:$0xf] %v1161
      %1166 = vst [vmem:[#allocation3 + $0x50] sm:$0xf0] 0.0
      %1167 = vst [vmem:[#allocation3 + $0x58] sm:$0xf0] 0.0
      %v1168 = vld [vmem:[#allocation2 + $0x8] sm:$0xf]
      %v1169 = vld [vmem:[#allocation2 + $0x10] sm:$0xf]
      %v1170 = vld [vmem:[#allocation2 + $0x18] sm:$0xf]
      %s1171 = scalar_lea.vmem %s47, 6
      %v1172 = vld [vmem:[%s1171] ss:$8 sm:$0x3]
      %v1174 = vlaneseq
      %v1175 = vshrl.u32 %v1174, 7
      %v1176 = vsub.s32 0, %v1175
      %v1177 = vrot.slane %v1172, %v1176
      %v1178 = vlaneseq
      %v1179 = vshrl.u32 %v1178, 7
      %v1180 = vsub.s32 1, %v1179
      %v1181 = vrot.slane %v1172, %v1180
      %1182 = vrot.lane.b32.xlu0 %v1177, 15
      %v1183 = vpop.permute.xlu0 %1182
      %1184 = vrot.lane.b32.xlu0 %v1181, 15
      %v1185 = vpop.permute.xlu0 %1184
      %v1186 = vsel %vm1067, %v1183, %v1185
      %v1190 = vmul.f32 %v1168, %v1183
      %v1191 = vmul.f32 %v1169, %v1186
      %v1192 = vmul.f32 %v1170, %v1185
      %1196 = vrot.lane.b32.xlu0 %v1190, 113
      %v1197 = vpop.permute.xlu0 %1196
      %1198 = vrot.lane.b32.xlu0 %v1191, 113
      %v1199 = vpop.permute.xlu0 %1198
      %1200 = vrot.lane.b32.xlu0 %v1192, 113
      %v1201 = vpop.permute.xlu0 %1200
      %v1202 = vsel %vm1050, %v1197, %v1199
      %v1203 = vsel %vm1050, %v1199, %v1201
      %1206 = vst [vmem:[#allocation3 + $0x60] sm:$0xf] %v1202
      %1207 = vst [vmem:[#allocation3 + $0x68] sm:$0xf] %v1203
      %1208 = vst [vmem:[#allocation3 + $0x60] sm:$0xf0] 0.0
      %1209 = vst [vmem:[#allocation3 + $0x68] sm:$0xf0] 0.0
      %v1210 = vld [vmem:[#allocation2 + $0x8] sm:$0xf]
      %v1211 = vld [vmem:[#allocation2 + $0x10] sm:$0xf]
      %v1212 = vld [vmem:[#allocation2 + $0x18] sm:$0xf]
      %1216 = vrot.lane.b32.xlu0 %v1210, 112
      %v1217 = vpop.permute.xlu0 %1216
      %1218 = vrot.lane.b32.xlu0 %v1211, 112
      %v1219 = vpop.permute.xlu0 %1218
      %1220 = vrot.lane.b32.xlu0 %v1212, 112
      %v1221 = vpop.permute.xlu0 %1220
      %vm1222 = vcmask 916480
      %v1223 = vsel %vm1222, %v1217, %v1219
      %v1224 = vsel %vm1222, %v1219, %v1221
      %1227 = vst [vmem:[#allocation3 + $0x70] sm:$0xf] %v1223
      %1228 = vst [vmem:[#allocation3 + $0x78] sm:$0xf] %v1224
      %1229 = vst [vmem:[#allocation3 + $0x70] sm:$0xf0] 0.0
      %1230 = vst [vmem:[#allocation3 + $0x78] sm:$0xf0] 0.0
      %v1231 = vld [vmem:[#allocation2 + $0x8] sm:$0xf]
      %v1232 = vld [vmem:[#allocation2 + $0x10] sm:$0xf]
      %v1233 = vld [vmem:[#allocation2 + $0x18] sm:$0xf]
      %s1234 = scalar_lea.vmem %s47, 16
      %v1235 = vld [vmem:[%s1234] ss:$8 sm:$0x3]
      %v1237 = vlaneseq
      %v1238 = vshrl.u32 %v1237, 7
      %v1239 = vsub.s32 0, %v1238
      %v1240 = vrot.slane %v1235, %v1239
      %v1241 = vlaneseq
      %v1242 = vshrl.u32 %v1241, 7
      %v1243 = vsub.s32 1, %v1242
      %v1244 = vrot.slane %v1235, %v1243
      %1245 = vrot.lane.b32.xlu0 %v1240, 17
      %v1246 = vpop.permute.xlu0 %1245
      %1247 = vrot.lane.b32.xlu0 %v1244, 17
      %v1248 = vpop.permute.xlu0 %1247
      %v1249 = vsel %vm1002, %v1246, %v1248
      %v1253 = vmul.f32 %v1231, %v1246
      %v1254 = vmul.f32 %v1232, %v1249
      %v1255 = vmul.f32 %v1233, %v1248
      %1259 = vrot.lane.b32.xlu0 %v1253, 111
      %v1260 = vpop.permute.xlu0 %1259
      %1261 = vrot.lane.b32.xlu0 %v1254, 111
      %v1262 = vpop.permute.xlu0 %1261
      %1263 = vrot.lane.b32.xlu0 %v1255, 111
      %v1264 = vpop.permute.xlu0 %1263
      %v1265 = vsel %vm985, %v1260, %v1262
      %v1266 = vsel %vm985, %v1262, %v1264
      %1269 = vst [vmem:[#allocation3 + $0x80] sm:$0xf] %v1265
      %1270 = vst [vmem:[#allocation3 + $0x88] sm:$0xf] %v1266
      %1271 = vst [vmem:[#allocation3 + $0x80] sm:$0xf0] 0.0
      %1272 = vst [vmem:[#allocation3 + $0x88] sm:$0xf0] 0.0
      %v1273 = vld [vmem:[%s7] sm:$0xff]
      %v1274 = vld [vmem:[%s7 + $0x8] sm:$0xff]
      %v1275 = vld [vmem:[#allocation3] sm:$0xff]
      %v1276 = vld [vmem:[#allocation3 + $0x8] sm:$0xff]
      %v1277 = vld [vmem:[#allocation3 + $0x10] sm:$0xff]
      %v1278 = vld [vmem:[#allocation3 + $0x18] sm:$0xff]
      %v1279 = vld [vmem:[#allocation3 + $0x20] sm:$0xff]
      %v1280 = vld [vmem:[#allocation3 + $0x28] sm:$0xff]
      %v1281 = vld [vmem:[#allocation3 + $0x30] sm:$0xff]
      %v1282 = vld [vmem:[#allocation3 + $0x38] sm:$0xff]
      %v1283 = vld [vmem:[#allocation3 + $0x40] sm:$0xff]
      %v1284 = vld [vmem:[#allocation3 + $0x48] sm:$0xff]
      %v1285 = vld [vmem:[#allocation3 + $0x50] sm:$0xff]
      %v1286 = vld [vmem:[#allocation3 + $0x58] sm:$0xff]
      %v1287 = vld [vmem:[#allocation3 + $0x60] sm:$0xff]
      %v1288 = vld [vmem:[#allocation3 + $0x68] sm:$0xff]
      %v1289 = vld [vmem:[#allocation3 + $0x70] sm:$0xff]
      %v1290 = vld [vmem:[#allocation3 + $0x78] sm:$0xff]
      %v1291 = vld [vmem:[#allocation3 + $0x80] sm:$0xff]
      %v1292 = vld [vmem:[#allocation3 + $0x88] sm:$0xff]
      %v1293 = vld [vmem:[%s9] sm:$0xff]
      %v1294 = vld [vmem:[%s9 + $0x8] sm:$0xff]
      %1296 = vset.pattern.permute.xlu0 0
      %1297 = vperm.xlu0 %1296, %v1293
      %v1298 = vpop.permute.xlu0 %1297
      %1301 = vset.pattern.permute.xlu0 0
      %1302 = vperm.xlu0 %1301, %v1294
      %v1303 = vpop.permute.xlu0 %1302
      %vm1305 = vcmask 588800
      %v1307 = vsel %vm1305, %v1273, 0
      %v1310 = vsel %vm1305, %v1274, 0
      %1312 = vmatprep.subr.mxu0 0.0
      %1313 = vmatpush1.msra.mxu0 0.0
      %1314 = vmatprep.subr.mxu0 0.0
      %1315 = vmatpush1.msra.mxu0 0.0
      %1316 = vmatprep.subr.mxu0 0.0
      %1317 = vmatpush1.msra.mxu0 0.0
      %1318 = vmatprep.subr.mxu0 0.0
      %1319 = vmatpush1.msra.mxu0 0.0
      %1320 = vmatprep.subr.mxu0 0.0
      %1321 = vmatpush1.msra.mxu0 0.0
      %1322 = vmatprep.subr.mxu0 0.0
      %1323 = vmatpush1.msra.mxu0 0.0
      %1324 = vmatprep.subr.mxu0 0.0
      %1325 = vmatpush1.msra.mxu0 0.0
      %1326 = vmatprep.subr.mxu0 %v1292
      %1327 = vmatpush1.msra.mxu0 %v1291
      %1328 = vmatprep.subr.mxu0 %v1290
      %1329 = vmatpush1.msra.mxu0 %v1289
      %1330 = vmatprep.subr.mxu0 %v1288
      %1331 = vmatpush1.msra.mxu0 %v1287
      %1332 = vmatprep.subr.mxu0 %v1286
      %1333 = vmatpush1.msra.mxu0 %v1285
      %1334 = vmatprep.subr.mxu0 %v1284
      %1335 = vmatpush1.msra.mxu0 %v1283
      %1336 = vmatprep.subr.mxu0 %v1282
      %1337 = vmatpush1.msra.mxu0 %v1281
      %1338 = vmatprep.subr.mxu0 %v1280
      %1339 = vmatpush1.msra.mxu0 %v1279
      %1340 = vmatprep.subr.mxu0 %v1278
      %1341 = vmatpush1.msra.mxu0 %v1277
      %1342 = vmatprep.subr.mxu0 %v1276
      %1343 = vmatpush1.msra.mxu0 %v1275
      %1344 = vmatprep.subr.mxu0 0.0
      %1345 = vmatpush2.msra.mxu0 0.0
      %1346 = vmatprep.subr.mxu0 0.0
      %1347 = vmatpush2.msra.mxu0 0.0
      %1348 = vmatprep.subr.mxu0 0.0
      %1349 = vmatpush2.msra.mxu0 0.0
      %1350 = vmatprep.subr.mxu0 0.0
      %1351 = vmatpush2.msra.mxu0 0.0
      %1352 = vmatprep.subr.mxu0 0.0
      %1353 = vmatpush2.msra.mxu0 0.0
      %1354 = vmatprep.subr.mxu0 0.0
      %1355 = vmatpush2.msra.mxu0 0.0
      %1356 = vmatprep.subr.mxu0 0.0
      %1357 = vmatpush2.msra.mxu0 0.0
      %1358 = vmatprep.subr.mxu0 0.0
      %1359 = vmatpush2.msra.mxu0 0.0
      %1360 = vmatprep.subr.mxu0 0.0
      %1361 = vmatpush2.msra.mxu0 0.0
      %1362 = vmatprep.subr.mxu0 0.0
      %1363 = vmatpush2.msra.mxu0 0.0
      %1364 = vmatprep.subr.mxu0 0.0
      %1365 = vmatpush2.msra.mxu0 0.0
      %1366 = vmatprep.subr.mxu0 0.0
      %1367 = vmatpush2.msra.mxu0 0.0
      %1368 = vmatprep.subr.mxu0 0.0
      %1369 = vmatpush2.msra.mxu0 0.0
      %1370 = vmatprep.subr.mxu0 0.0
      %1371 = vmatpush2.msra.mxu0 0.0
      %1372 = vmatprep.subr.mxu0 0.0
      %1373 = vmatpush2.msra.mxu0 0.0
      %1374 = vmatprep.subr.mxu0 0.0
      %1375 = vmatpush2.msra.mxu0 0.0
      %1376 = vmatprep.mubr.f32.mxu0 0.0
      %1377 = vmatmul.mubr.f32.gmra.mxu0 %v1307
      %v1378 = vpop.f32.mrf.mxu0
      %v1379 = vadd.f32 %v1298, %v1378
      %v1380 = vpop.f32.mrf.mxu0
      %v1381 = vadd.f32 %v1298, %v1380
      %1382 = vmatprep.mubr.f32.mxu0 0.0
      %1383 = vmatmul.mubr.f32.gmra.mxu0 %v1310
      %v1384 = vpop.f32.mrf.mxu0
      %v1385 = vadd.f32 %v1303, %v1384
      %v1386 = vpop.f32.mrf.mxu0
      %v1387 = vadd.f32 %v1303, %v1386
      %1388 = vdwg.mxu0
      %vm1389 = vcmp.ge.f32.partialorder %v1379, 0.0
      %vm1390 = vcmp.ge.f32.partialorder %v1381, 0.0
      %vm1391 = vcmp.ge.f32.partialorder %v1385, 0.0
      %vm1392 = vcmp.ge.f32.partialorder %v1387, 0.0
      %v1393 = vmul.f32 %v1379, 0.1
      %v1394 = vmul.f32 %v1381, 0.1
      %v1395 = vmul.f32 %v1385, 0.1
      %v1396 = vmul.f32 %v1387, 0.1
      %v1397 = vsel %vm1389, %v1379, %v1393
      %v1398 = vsel %vm1390, %v1381, %v1394
      %v1399 = vsel %vm1391, %v1385, %v1395
      %v1400 = vsel %vm1392, %v1387, %v1396
      %v1401 = vld [vmem:[%s940] sm:$0xf]
      %vm1402 = vcmask 519168
      %1403 = vst.msk [vmem:[#allocation2 + $0x8] sm:$0xf] %vm1402, %v1401
      %vm1404 = vcmask 1043968
      %1405 = vst.msk [vmem:[#allocation2 + $0x8] sm:$0xf] %vm1404, 0.0
      %1406 = vst.msk [vmem:[#allocation2 + $0x10] sm:$0xf] %vm1402, 0.0
      %v1407 = vld [vmem:[#allocation2] sm:$0xf]
      %v1408 = vld [vmem:[#allocation2 + $0x8] sm:$0xf]
      %v1409 = vld [vmem:[%s49] sm:$0x1]
      %v1410 = vlaneseq
      %v1411 = vshrl.u32 %v1410, 7
      %v1412 = vsub.s32 0, %v1411
      %v1413 = vrot.slane %v1409, %v1412
      %1415 = vrot.lane.b32.xlu0 %v1413, 119
      %v1416 = vpop.permute.xlu0 %1415
      %v1418 = vmul.f32 %v1407, %v1416
      %v1419 = vmul.f32 %v1408, %v1416
      %1422 = vrot.lane.b32.xlu0 %v1418, 9
      %v1423 = vpop.permute.xlu0 %1422
      %1424 = vrot.lane.b32.xlu0 %v1419, 9
      %v1425 = vpop.permute.xlu0 %1424
      %vm1426 = vcmask 72704
      %v1427 = vsel %vm1426, %v1423, %v1425
      %1429 = vst.msk [vmem:[#allocation3] sm:$0xf] %vm1402, %v1427
      %vm1430 = vcmask 523268
      %1431 = vst.msk [vmem:[#allocation3] sm:$0xf0] %vm1430, 0.0
      %v1432 = vld [vmem:[#allocation2] sm:$0xf]
      %v1433 = vld [vmem:[#allocation2 + $0x8] sm:$0xf]
      %1436 = vrot.lane.b32.xlu0 %v1432, 8
      %v1437 = vpop.permute.xlu0 %1436
      %1438 = vrot.lane.b32.xlu0 %v1433, 8
      %v1439 = vpop.permute.xlu0 %1438
      %vm1440 = vcmask 64512
      %v1441 = vsel %vm1440, %v1437, %v1439
      %1443 = vst.msk [vmem:[#allocation3 + $0x10] sm:$0xf] %vm1402, %v1441
      %1444 = vst.msk [vmem:[#allocation3 + $0x10] sm:$0xf0] %vm1430, 0.0
      %v1445 = vld [vmem:[#allocation2] sm:$0xf]
      %v1446 = vld [vmem:[#allocation2 + $0x8] sm:$0xf]
      %v1447 = vld [vmem:[%s49 + $0x2] sm:$0x1]
      %v1448 = vlaneseq
      %v1449 = vshrl.u32 %v1448, 7
      %v1450 = vsub.s32 0, %v1449
      %v1451 = vrot.slane %v1447, %v1450
      %1453 = vrot.lane.b32.xlu0 %v1451, 121
      %v1454 = vpop.permute.xlu0 %1453
      %v1456 = vmul.f32 %v1445, %v1454
      %v1457 = vmul.f32 %v1446, %v1454
      %1460 = vrot.lane.b32.xlu0 %v1456, 7
      %v1461 = vpop.permute.xlu0 %1460
      %1462 = vrot.lane.b32.xlu0 %v1457, 7
      %v1463 = vpop.permute.xlu0 %1462
      %vm1464 = vcmask 56320
      %v1465 = vsel %vm1464, %v1461, %v1463
      %1467 = vst.msk [vmem:[#allocation3 + $0x20] sm:$0xf] %vm1402, %v1465
      %1468 = vst.msk [vmem:[#allocation3 + $0x20] sm:$0xf0] %vm1430, 0.0
      %v1469 = vld [vmem:[#allocation2] sm:$0xf]
      %v1470 = vld [vmem:[#allocation2 + $0x8] sm:$0xf]
      %v1471 = vld [vmem:[%s49 + $0x3] sm:$0x1]
      %v1472 = vlaneseq
      %v1473 = vshrl.u32 %v1472, 7
      %v1474 = vsub.s32 0, %v1473
      %v1475 = vrot.slane %v1471, %v1474
      %1477 = vrot.lane.b32.xlu0 %v1475, 127
      %v1478 = vpop.permute.xlu0 %1477
      %v1480 = vmul.f32 %v1469, %v1478
      %v1481 = vmul.f32 %v1470, %v1478
      %1484 = vrot.lane.b32.xlu0 %v1480, 1
      %v1485 = vpop.permute.xlu0 %1484
      %1486 = vrot.lane.b32.xlu0 %v1481, 1
      %v1487 = vpop.permute.xlu0 %1486
      %v1488 = vsel %vm1111, %v1485, %v1487
      %1490 = vst.msk [vmem:[#allocation3 + $0x30] sm:$0xf] %vm1402, %v1488
      %1491 = vst.msk [vmem:[#allocation3 + $0x30] sm:$0xf0] %vm1430, 0.0
      %v1492 = vld [vmem:[#allocation2 + $0x8] sm:$0xf]
      %1493 = vst.msk [vmem:[#allocation3 + $0x40] sm:$0xf] %vm1402, %v1492
      %1494 = vst.msk [vmem:[#allocation3 + $0x40] sm:$0xf0] %vm1430, 0.0
      %v1495 = vld [vmem:[#allocation2 + $0x8] sm:$0xf]
      %v1496 = vld [vmem:[%s49 + $0x5] sm:$0x1]
      %v1497 = vlaneseq
      %v1498 = vshrl.u32 %v1497, 7
      %v1499 = vsub.s32 0, %v1498
      %v1500 = vrot.slane %v1496, %v1499
      %1502 = vrot.lane.b32.xlu0 %v1500, 1
      %v1503 = vpop.permute.xlu0 %1502
      %v1505 = vmul.f32 %v1495, %v1503
      %1507 = vrot.lane.b32.xlu0 %v1505, 127
      %v1508 = vpop.permute.xlu0 %1507
      %1510 = vst.msk [vmem:[#allocation3 + $0x50] sm:$0xf] %vm1402, %v1508
      %1511 = vst.msk [vmem:[#allocation3 + $0x50] sm:$0xf0] %vm1430, 0.0
      %v1512 = vld [vmem:[#allocation2 + $0x8] sm:$0xf]
      %v1513 = vld [vmem:[%s49 + $0x6] sm:$0x1]
      %v1514 = vlaneseq
      %v1515 = vshrl.u32 %v1514, 7
      %v1516 = vsub.s32 0, %v1515
      %v1517 = vrot.slane %v1513, %v1516
      %1519 = vrot.lane.b32.xlu0 %v1517, 7
      %v1520 = vpop.permute.xlu0 %1519
      %v1522 = vmul.f32 %v1512, %v1520
      %1524 = vrot.lane.b32.xlu0 %v1522, 121
      %v1525 = vpop.permute.xlu0 %1524
      %1527 = vst.msk [vmem:[#allocation3 + $0x60] sm:$0xf] %vm1402, %v1525
      %1528 = vst.msk [vmem:[#allocation3 + $0x60] sm:$0xf0] %vm1430, 0.0
      %v1529 = vld [vmem:[#allocation2 + $0x8] sm:$0xf]
      %1531 = vrot.lane.b32.xlu0 %v1529, 120
      %v1532 = vpop.permute.xlu0 %1531
      %1534 = vst.msk [vmem:[#allocation3 + $0x70] sm:$0xf] %vm1402, %v1532
      %1535 = vst.msk [vmem:[#allocation3 + $0x70] sm:$0xf0] %vm1430, 0.0
      %v1536 = vld [vmem:[#allocation2 + $0x8] sm:$0xf]
      %v1537 = vld [vmem:[%s49 + $0x8] sm:$0x1]
      %v1538 = vlaneseq
      %v1539 = vshrl.u32 %v1538, 7
      %v1540 = vsub.s32 0, %v1539
      %v1541 = vrot.slane %v1537, %v1540
      %1543 = vrot.lane.b32.xlu0 %v1541, 9
      %v1544 = vpop.permute.xlu0 %1543
      %v1546 = vmul.f32 %v1536, %v1544
      %1548 = vrot.lane.b32.xlu0 %v1546, 119
      %v1549 = vpop.permute.xlu0 %1548
      %1551 = vst.msk [vmem:[#allocation3 + $0x80] sm:$0xf] %vm1402, %v1549
      %1552 = vst.msk [vmem:[#allocation3 + $0x80] sm:$0xf0] %vm1430, 0.0
      %v1553 = vld [vmem:[%s11] sm:$0xff]
      %v1554 = vld [vmem:[%s11 + $0x8] sm:$0xff]
      %v1555 = vld [vmem:[#allocation3] sm:$0xff]
      %v1556 = vld [vmem:[#allocation3 + $0x10] sm:$0xff]
      %v1557 = vld [vmem:[#allocation3 + $0x20] sm:$0xff]
      %v1558 = vld [vmem:[#allocation3 + $0x30] sm:$0xff]
      %v1559 = vld [vmem:[#allocation3 + $0x40] sm:$0xff]
      %v1560 = vld [vmem:[#allocation3 + $0x50] sm:$0xff]
      %v1561 = vld [vmem:[#allocation3 + $0x60] sm:$0xff]
      %v1562 = vld [vmem:[#allocation3 + $0x70] sm:$0xff]
      %v1563 = vld [vmem:[#allocation3 + $0x80] sm:$0xff]
      %v1564 = vld [vmem:[%s13] sm:$0xff]
      %v1565 = vld [vmem:[%s13 + $0x8] sm:$0xff]
      %1567 = vset.pattern.permute.xlu0 0
      %1568 = vperm.xlu0 %1567, %v1564
      %v1569 = vpop.permute.xlu0 %1568
      %1572 = vset.pattern.permute.xlu0 0
      %1573 = vperm.xlu0 %1572, %v1565
      %v1574 = vpop.permute.xlu0 %1573
      %v1577 = vsel %vm1305, %v1553, 0
      %v1580 = vsel %vm1305, %v1554, 0
      %1582 = vmatprep.subr.mxu0 0.0
      %1583 = vmatpush1.msra.mxu0 0.0
      %1584 = vmatprep.subr.mxu0 0.0
      %1585 = vmatpush1.msra.mxu0 0.0
      %1586 = vmatprep.subr.mxu0 0.0
      %1587 = vmatpush1.msra.mxu0 0.0
      %1588 = vmatprep.subr.mxu0 0.0
      %1589 = vmatpush1.msra.mxu0 0.0
      %1590 = vmatprep.subr.mxu0 0.0
      %1591 = vmatpush1.msra.mxu0 0.0
      %1592 = vmatprep.subr.mxu0 0.0
      %1593 = vmatpush1.msra.mxu0 0.0
      %1594 = vmatprep.subr.mxu0 0.0
      %1595 = vmatpush1.msra.mxu0 0.0
      %1596 = vmatprep.subr.mxu0 0.0
      %1597 = vmatpush1.msra.mxu0 %v1563
      %1598 = vmatprep.subr.mxu0 0.0
      %1599 = vmatpush1.msra.mxu0 %v1562
      %1600 = vmatprep.subr.mxu0 0.0
      %1601 = vmatpush1.msra.mxu0 %v1561
      %1602 = vmatprep.subr.mxu0 0.0
      %1603 = vmatpush1.msra.mxu0 %v1560
      %1604 = vmatprep.subr.mxu0 0.0
      %1605 = vmatpush1.msra.mxu0 %v1559
      %1606 = vmatprep.subr.mxu0 0.0
      %1607 = vmatpush1.msra.mxu0 %v1558
      %1608 = vmatprep.subr.mxu0 0.0
      %1609 = vmatpush1.msra.mxu0 %v1557
      %1610 = vmatprep.subr.mxu0 0.0
      %1611 = vmatpush1.msra.mxu0 %v1556
      %1612 = vmatprep.subr.mxu0 0.0
      %1613 = vmatpush1.msra.mxu0 %v1555
      %1614 = vmatprep.subr.mxu0 0.0
      %1615 = vmatpush2.msra.mxu0 0.0
      %1616 = vmatprep.subr.mxu0 0.0
      %1617 = vmatpush2.msra.mxu0 0.0
      %1618 = vmatprep.subr.mxu0 0.0
      %1619 = vmatpush2.msra.mxu0 0.0
      %1620 = vmatprep.subr.mxu0 0.0
      %1621 = vmatpush2.msra.mxu0 0.0
      %1622 = vmatprep.subr.mxu0 0.0
      %1623 = vmatpush2.msra.mxu0 0.0
      %1624 = vmatprep.subr.mxu0 0.0
      %1625 = vmatpush2.msra.mxu0 0.0
      %1626 = vmatprep.subr.mxu0 0.0
      %1627 = vmatpush2.msra.mxu0 0.0
      %1628 = vmatprep.subr.mxu0 0.0
      %1629 = vmatpush2.msra.mxu0 0.0
      %1630 = vmatprep.subr.mxu0 0.0
      %1631 = vmatpush2.msra.mxu0 0.0
      %1632 = vmatprep.subr.mxu0 0.0
      %1633 = vmatpush2.msra.mxu0 0.0
      %1634 = vmatprep.subr.mxu0 0.0
      %1635 = vmatpush2.msra.mxu0 0.0
      %1636 = vmatprep.subr.mxu0 0.0
      %1637 = vmatpush2.msra.mxu0 0.0
      %1638 = vmatprep.subr.mxu0 0.0
      %1639 = vmatpush2.msra.mxu0 0.0
      %1640 = vmatprep.subr.mxu0 0.0
      %1641 = vmatpush2.msra.mxu0 0.0
      %1642 = vmatprep.subr.mxu0 0.0
      %1643 = vmatpush2.msra.mxu0 0.0
      %1644 = vmatprep.subr.mxu0 0.0
      %1645 = vmatpush2.msra.mxu0 0.0
      %1646 = vmatprep.mubr.f32.mxu0 0.0
      %1647 = vmatmul.mubr.f32.gmra.mxu0 %v1577
      %v1648 = vpop.f32.mrf.mxu0
      %v1649 = vadd.f32 %v1569, %v1648
      %v1650 = vpop.f32.mrf.mxu0
      %1651 = vmatprep.mubr.f32.mxu0 0.0
      %1652 = vmatmul.mubr.f32.gmra.mxu0 %v1580
      %v1653 = vpop.f32.mrf.mxu0
      %v1654 = vadd.f32 %v1574, %v1653
      %v1655 = vpop.f32.mrf.mxu0
      %1656 = vdwg.mxu0
      %vm1657 = vcmp.ge.f32.partialorder %v1649, 0.0
      %vm1658 = vcmp.ge.f32.partialorder %v1654, 0.0
      %v1659 = vmul.f32 %v1649, 0.1
      %v1660 = vmul.f32 %v1654, 0.1
      %v1661 = vsel %vm1657, %v1649, %v1659
      %v1662 = vsel %vm1658, %v1654, %v1660
      %v1663 = vld [vmem:[%s944] sm:$0xf]
      %vm1664 = vcmask 125952
      %1665 = vst.msk [vmem:[#allocation2 + $0x8] sm:$0xf] %vm1664, %v1663
      %vm1666 = vcmask 1043584
      %1667 = vst.msk [vmem:[#allocation2 + $0x8] sm:$0xf] %vm1666, 0.0
      %1668 = vst.msk [vmem:[#allocation2 + $0x10] sm:$0xf] %vm1664, 0.0
      %v1669 = vld [vmem:[#allocation2] sm:$0xf]
      %v1670 = vld [vmem:[#allocation2 + $0x8] sm:$0xf]
      %v1671 = vld [vmem:[%s51] sm:$0x1]
      %v1672 = vlaneseq
      %v1673 = vshrl.u32 %v1672, 7
      %v1674 = vsub.s32 0, %v1673
      %v1675 = vrot.slane %v1671, %v1674
      %1677 = vrot.lane.b32.xlu0 %v1675, 123
      %v1678 = vpop.permute.xlu0 %1677
      %v1680 = vmul.f32 %v1669, %v1678
      %v1681 = vmul.f32 %v1670, %v1678
      %1684 = vrot.lane.b32.xlu0 %v1680, 5
      %v1685 = vpop.permute.xlu0 %1684
      %1686 = vrot.lane.b32.xlu0 %v1681, 5
      %v1687 = vpop.permute.xlu0 %1686
      %vm1688 = vcmask 39936
      %v1689 = vsel %vm1688, %v1685, %v1687
      %1691 = vst.msk [vmem:[#allocation3] sm:$0xf] %vm1664, %v1689
      %vm1692 = vcmask 130052
      %1693 = vst.msk [vmem:[#allocation3] sm:$0xf0] %vm1692, 0.0
      %v1694 = vld [vmem:[#allocation2] sm:$0xf]
      %v1695 = vld [vmem:[#allocation2 + $0x8] sm:$0xf]
      %1698 = vrot.lane.b32.xlu0 %v1694, 4
      %v1699 = vpop.permute.xlu0 %1698
      %1700 = vrot.lane.b32.xlu0 %v1695, 4
      %v1701 = vpop.permute.xlu0 %1700
      %vm1702 = vcmask 31744
      %v1703 = vsel %vm1702, %v1699, %v1701
      %1705 = vst.msk [vmem:[#allocation3 + $0x10] sm:$0xf] %vm1664, %v1703
      %1706 = vst.msk [vmem:[#allocation3 + $0x10] sm:$0xf0] %vm1692, 0.0
      %v1707 = vld [vmem:[#allocation2] sm:$0xf]
      %v1708 = vld [vmem:[#allocation2 + $0x8] sm:$0xf]
      %v1709 = vld [vmem:[%s51 + $0x2] sm:$0x1]
      %v1710 = vlaneseq
      %v1711 = vshrl.u32 %v1710, 7
      %v1712 = vsub.s32 0, %v1711
      %v1713 = vrot.slane %v1709, %v1712
      %1715 = vrot.lane.b32.xlu0 %v1713, 125
      %v1716 = vpop.permute.xlu0 %1715
      %v1718 = vmul.f32 %v1707, %v1716
      %v1719 = vmul.f32 %v1708, %v1716
      %1722 = vrot.lane.b32.xlu0 %v1718, 3
      %v1723 = vpop.permute.xlu0 %1722
      %1724 = vrot.lane.b32.xlu0 %v1719, 3
      %v1725 = vpop.permute.xlu0 %1724
      %vm1726 = vcmask 23552
      %v1727 = vsel %vm1726, %v1723, %v1725
      %1729 = vst.msk [vmem:[#allocation3 + $0x20] sm:$0xf] %vm1664, %v1727
      %1730 = vst.msk [vmem:[#allocation3 + $0x20] sm:$0xf0] %vm1692, 0.0
      %v1731 = vld [vmem:[#allocation2] sm:$0xf]
      %v1732 = vld [vmem:[#allocation2 + $0x8] sm:$0xf]
      %v1733 = vld [vmem:[%s51 + $0x3] sm:$0x1]
      %v1734 = vlaneseq
      %v1735 = vshrl.u32 %v1734, 7
      %v1736 = vsub.s32 0, %v1735
      %v1737 = vrot.slane %v1733, %v1736
      %1739 = vrot.lane.b32.xlu0 %v1737, 127
      %v1740 = vpop.permute.xlu0 %1739
      %v1742 = vmul.f32 %v1731, %v1740
      %v1743 = vmul.f32 %v1732, %v1740
      %1746 = vrot.lane.b32.xlu0 %v1742, 1
      %v1747 = vpop.permute.xlu0 %1746
      %1748 = vrot.lane.b32.xlu0 %v1743, 1
      %v1749 = vpop.permute.xlu0 %1748
      %v1750 = vsel %vm1111, %v1747, %v1749
      %1752 = vst.msk [vmem:[#allocation3 + $0x30] sm:$0xf] %vm1664, %v1750
      %1753 = vst.msk [vmem:[#allocation3 + $0x30] sm:$0xf0] %vm1692, 0.0
      %v1754 = vld [vmem:[#allocation2 + $0x8] sm:$0xf]
      %1755 = vst.msk [vmem:[#allocation3 + $0x40] sm:$0xf] %vm1664, %v1754
      %1756 = vst.msk [vmem:[#allocation3 + $0x40] sm:$0xf0] %vm1692, 0.0
      %v1757 = vld [vmem:[#allocation2 + $0x8] sm:$0xf]
      %v1758 = vld [vmem:[%s51 + $0x5] sm:$0x1]
      %v1759 = vlaneseq
      %v1760 = vshrl.u32 %v1759, 7
      %v1761 = vsub.s32 0, %v1760
      %v1762 = vrot.slane %v1758, %v1761
      %1764 = vrot.lane.b32.xlu0 %v1762, 1
      %v1765 = vpop.permute.xlu0 %1764
      %v1767 = vmul.f32 %v1757, %v1765
      %1769 = vrot.lane.b32.xlu0 %v1767, 127
      %v1770 = vpop.permute.xlu0 %1769
      %1772 = vst.msk [vmem:[#allocation3 + $0x50] sm:$0xf] %vm1664, %v1770
      %1773 = vst.msk [vmem:[#allocation3 + $0x50] sm:$0xf0] %vm1692, 0.0
      %v1774 = vld [vmem:[#allocation2 + $0x8] sm:$0xf]
      %v1775 = vld [vmem:[%s51 + $0x6] sm:$0x1]
      %v1776 = vlaneseq
      %v1777 = vshrl.u32 %v1776, 7
      %v1778 = vsub.s32 0, %v1777
      %v1779 = vrot.slane %v1775, %v1778
      %1781 = vrot.lane.b32.xlu0 %v1779, 3
      %v1782 = vpop.permute.xlu0 %1781
      %v1784 = vmul.f32 %v1774, %v1782
      %1786 = vrot.lane.b32.xlu0 %v1784, 125
      %v1787 = vpop.permute.xlu0 %1786
      %1789 = vst.msk [vmem:[#allocation3 + $0x60] sm:$0xf] %vm1664, %v1787
      %1790 = vst.msk [vmem:[#allocation3 + $0x60] sm:$0xf0] %vm1692, 0.0
      %v1791 = vld [vmem:[#allocation2 + $0x8] sm:$0xf]
      %1793 = vrot.lane.b32.xlu0 %v1791, 124
      %v1794 = vpop.permute.xlu0 %1793
      %1796 = vst.msk [vmem:[#allocation3 + $0x70] sm:$0xf] %vm1664, %v1794
      %1797 = vst.msk [vmem:[#allocation3 + $0x70] sm:$0xf0] %vm1692, 0.0
      %v1798 = vld [vmem:[#allocation2 + $0x8] sm:$0xf]
      %v1799 = vld [vmem:[%s51 + $0x8] sm:$0x1]
      %v1800 = vlaneseq
      %v1801 = vshrl.u32 %v1800, 7
      %v1802 = vsub.s32 0, %v1801
      %v1803 = vrot.slane %v1799, %v1802
      %1805 = vrot.lane.b32.xlu0 %v1803, 5
      %v1806 = vpop.permute.xlu0 %1805
      %v1808 = vmul.f32 %v1798, %v1806
      %1810 = vrot.lane.b32.xlu0 %v1808, 123
      %v1811 = vpop.permute.xlu0 %1810
      %1813 = vst.msk [vmem:[#allocation3 + $0x80] sm:$0xf] %vm1664, %v1811
      %1814 = vst.msk [vmem:[#allocation3 + $0x80] sm:$0xf0] %vm1692, 0.0
      %v1815 = vld [vmem:[%s15] sm:$0xff]
      %v1816 = vld [vmem:[%s15 + $0x8] sm:$0xff]
      %v1817 = vld [vmem:[#allocation3] sm:$0xff]
      %v1818 = vld [vmem:[#allocation3 + $0x10] sm:$0xff]
      %v1819 = vld [vmem:[#allocation3 + $0x20] sm:$0xff]
      %v1820 = vld [vmem:[#allocation3 + $0x30] sm:$0xff]
      %v1821 = vld [vmem:[#allocation3 + $0x40] sm:$0xff]
      %v1822 = vld [vmem:[#allocation3 + $0x50] sm:$0xff]
      %v1823 = vld [vmem:[#allocation3 + $0x60] sm:$0xff]
      %v1824 = vld [vmem:[#allocation3 + $0x70] sm:$0xff]
      %v1825 = vld [vmem:[#allocation3 + $0x80] sm:$0xff]
      %v1826 = vld [vmem:[%s17] sm:$0xff]
      %v1827 = vld [vmem:[%s17 + $0x8] sm:$0xff]
      %1829 = vset.pattern.permute.xlu0 0
      %1830 = vperm.xlu0 %1829, %v1826
      %v1831 = vpop.permute.xlu0 %1830
      %1834 = vset.pattern.permute.xlu0 0
      %1835 = vperm.xlu0 %1834, %v1827
      %v1836 = vpop.permute.xlu0 %1835
      %v1839 = vsel %vm1305, %v1815, 0
      %v1842 = vsel %vm1305, %v1816, 0
      %1844 = vmatprep.subr.mxu0 0.0
      %1845 = vmatpush1.msra.mxu0 0.0
      %1846 = vmatprep.subr.mxu0 0.0
      %1847 = vmatpush1.msra.mxu0 0.0
      %1848 = vmatprep.subr.mxu0 0.0
      %1849 = vmatpush1.msra.mxu0 0.0
      %1850 = vmatprep.subr.mxu0 0.0
      %1851 = vmatpush1.msra.mxu0 0.0
      %1852 = vmatprep.subr.mxu0 0.0
      %1853 = vmatpush1.msra.mxu0 0.0
      %1854 = vmatprep.subr.mxu0 0.0
      %1855 = vmatpush1.msra.mxu0 0.0
      %1856 = vmatprep.subr.mxu0 0.0
      %1857 = vmatpush1.msra.mxu0 0.0
      %1858 = vmatprep.subr.mxu0 0.0
      %1859 = vmatpush1.msra.mxu0 %v1825
      %1860 = vmatprep.subr.mxu0 0.0
      %1861 = vmatpush1.msra.mxu0 %v1824
      %1862 = vmatprep.subr.mxu0 0.0
      %1863 = vmatpush1.msra.mxu0 %v1823
      %1864 = vmatprep.subr.mxu0 0.0
      %1865 = vmatpush1.msra.mxu0 %v1822
      %1866 = vmatprep.subr.mxu0 0.0
      %1867 = vmatpush1.msra.mxu0 %v1821
      %1868 = vmatprep.subr.mxu0 0.0
      %1869 = vmatpush1.msra.mxu0 %v1820
      %1870 = vmatprep.subr.mxu0 0.0
      %1871 = vmatpush1.msra.mxu0 %v1819
      %1872 = vmatprep.subr.mxu0 0.0
      %1873 = vmatpush1.msra.mxu0 %v1818
      %1874 = vmatprep.subr.mxu0 0.0
      %1875 = vmatpush1.msra.mxu0 %v1817
      %1876 = vmatprep.subr.mxu0 0.0
      %1877 = vmatpush2.msra.mxu0 0.0
      %1878 = vmatprep.subr.mxu0 0.0
      %1879 = vmatpush2.msra.mxu0 0.0
      %1880 = vmatprep.subr.mxu0 0.0
      %1881 = vmatpush2.msra.mxu0 0.0
      %1882 = vmatprep.subr.mxu0 0.0
      %1883 = vmatpush2.msra.mxu0 0.0
      %1884 = vmatprep.subr.mxu0 0.0
      %1885 = vmatpush2.msra.mxu0 0.0
      %1886 = vmatprep.subr.mxu0 0.0
      %1887 = vmatpush2.msra.mxu0 0.0
      %1888 = vmatprep.subr.mxu0 0.0
      %1889 = vmatpush2.msra.mxu0 0.0
      %1890 = vmatprep.subr.mxu0 0.0
      %1891 = vmatpush2.msra.mxu0 0.0
      %1892 = vmatprep.subr.mxu0 0.0
      %1893 = vmatpush2.msra.mxu0 0.0
      %1894 = vmatprep.subr.mxu0 0.0
      %1895 = vmatpush2.msra.mxu0 0.0
      %1896 = vmatprep.subr.mxu0 0.0
      %1897 = vmatpush2.msra.mxu0 0.0
      %1898 = vmatprep.subr.mxu0 0.0
      %1899 = vmatpush2.msra.mxu0 0.0
      %1900 = vmatprep.subr.mxu0 0.0
      %1901 = vmatpush2.msra.mxu0 0.0
      %1902 = vmatprep.subr.mxu0 0.0
      %1903 = vmatpush2.msra.mxu0 0.0
      %1904 = vmatprep.subr.mxu0 0.0
      %1905 = vmatpush2.msra.mxu0 0.0
      %1906 = vmatprep.subr.mxu0 0.0
      %1907 = vmatpush2.msra.mxu0 0.0
      %1908 = vmatprep.mubr.f32.mxu0 0.0
      %1909 = vmatmul.mubr.f32.gmra.mxu0 %v1839
      %v1910 = vpop.f32.mrf.mxu0
      %v1911 = vadd.f32 %v1831, %v1910
      %v1912 = vpop.f32.mrf.mxu0
      %1913 = vmatprep.mubr.f32.mxu0 0.0
      %1914 = vmatmul.mubr.f32.gmra.mxu0 %v1842
      %v1915 = vpop.f32.mrf.mxu0
      %v1916 = vadd.f32 %v1836, %v1915
      %v1917 = vpop.f32.mrf.mxu0
      %1918 = vdwg.mxu0
      %vm1919 = vcmp.ge.f32.partialorder %v1911, 0.0
      %vm1920 = vcmp.ge.f32.partialorder %v1916, 0.0
      %v1921 = vmul.f32 %v1911, 0.1
      %v1922 = vmul.f32 %v1916, 0.1
      %v1923 = vsel %vm1919, %v1911, %v1921
      %v1924 = vsel %vm1920, %v1916, %v1922
      %v1925 = vld [vmem:[%s39] sm:$0xff]
      %v1926 = vld [vmem:[%s39 + $0x8] sm:$0xff]
      %v1927 = vld [vmem:[%s39 + $0x10] sm:$0xff]
      %v1928 = vld [vmem:[%s39 + $0x18] sm:$0xff]
      %v1929 = vld [vmem:[%s39 + $0x20] sm:$0xff]
      %v1930 = vld [vmem:[%s39 + $0x28] sm:$0xff]
      %v1931 = vld [vmem:[%s39 + $0x30] sm:$0xff]
      %v1932 = vld [vmem:[%s39 + $0x38] sm:$0xff]
      %v1933 = vld [vmem:[%s39 + $0x40] sm:$0xff]
      %v1934 = vld [vmem:[%s39 + $0x48] sm:$0xff]
      %v1935 = vld [vmem:[%s39 + $0x50] sm:$0xff]
      %v1936 = vld [vmem:[%s39 + $0x58] sm:$0xff]
      %v1937 = vld [vmem:[%s39 + $0x60] sm:$0xff]
      %v1938 = vld [vmem:[%s39 + $0x68] sm:$0xff]
      %v1939 = vld [vmem:[%s39 + $0x70] sm:$0xff]
      %v1940 = vld [vmem:[%s39 + $0x78] sm:$0xff]
      %vm1941 = vcmask 523264
      %v1943 = vsel %vm1941, %v1661, 0
      %v1946 = vsel %vm1941, %v1662, 0
      %1948 = vmatprep.subr.mxu0 0.0
      %1949 = vmatpush1.msra.mxu0 0.0
      %1950 = vmatprep.subr.mxu0 0.0
      %1951 = vmatpush1.msra.mxu0 0.0
      %1952 = vmatprep.subr.mxu0 0.0
      %1953 = vmatpush1.msra.mxu0 0.0
      %1954 = vmatprep.subr.mxu0 0.0
      %1955 = vmatpush1.msra.mxu0 0.0
      %1956 = vmatprep.subr.mxu0 0.0
      %1957 = vmatpush1.msra.mxu0 0.0
      %1958 = vmatprep.subr.mxu0 0.0
      %1959 = vmatpush1.msra.mxu0 0.0
      %1960 = vmatprep.subr.mxu0 0.0
      %1961 = vmatpush1.msra.mxu0 0.0
      %1962 = vmatprep.subr.mxu0 0.0
      %1963 = vmatpush1.msra.mxu0 0.0
      %1964 = vmatprep.subr.mxu0 %v1940
      %1965 = vmatpush1.msra.mxu0 %v1939
      %1966 = vmatprep.subr.mxu0 %v1938
      %1967 = vmatpush1.msra.mxu0 %v1937
      %1968 = vmatprep.subr.mxu0 %v1936
      %1969 = vmatpush1.msra.mxu0 %v1935
      %1970 = vmatprep.subr.mxu0 %v1934
      %1971 = vmatpush1.msra.mxu0 %v1933
      %1972 = vmatprep.subr.mxu0 %v1932
      %1973 = vmatpush1.msra.mxu0 %v1931
      %1974 = vmatprep.subr.mxu0 %v1930
      %1975 = vmatpush1.msra.mxu0 %v1929
      %1976 = vmatprep.subr.mxu0 %v1928
      %1977 = vmatpush1.msra.mxu0 %v1927
      %1978 = vmatprep.subr.mxu0 %v1926
      %1979 = vmatpush1.msra.mxu0 %v1925
      %1980 = vmatprep.subr.mxu0 0.0
      %1981 = vmatpush2.msra.mxu0 0.0
      %1982 = vmatprep.subr.mxu0 0.0
      %1983 = vmatpush2.msra.mxu0 0.0
      %1984 = vmatprep.subr.mxu0 0.0
      %1985 = vmatpush2.msra.mxu0 0.0
      %1986 = vmatprep.subr.mxu0 0.0
      %1987 = vmatpush2.msra.mxu0 0.0
      %1988 = vmatprep.subr.mxu0 0.0
      %1989 = vmatpush2.msra.mxu0 0.0
      %1990 = vmatprep.subr.mxu0 0.0
      %1991 = vmatpush2.msra.mxu0 0.0
      %1992 = vmatprep.subr.mxu0 0.0
      %1993 = vmatpush2.msra.mxu0 0.0
      %1994 = vmatprep.subr.mxu0 0.0
      %1995 = vmatpush2.msra.mxu0 0.0
      %1996 = vmatprep.subr.mxu0 0.0
      %1997 = vmatpush2.msra.mxu0 0.0
      %1998 = vmatprep.subr.mxu0 0.0
      %1999 = vmatpush2.msra.mxu0 0.0
      %2000 = vmatprep.subr.mxu0 0.0
      %2001 = vmatpush2.msra.mxu0 0.0
      %2002 = vmatprep.subr.mxu0 0.0
      %2003 = vmatpush2.msra.mxu0 0.0
      %2004 = vmatprep.subr.mxu0 0.0
      %2005 = vmatpush2.msra.mxu0 0.0
      %2006 = vmatprep.subr.mxu0 0.0
      %2007 = vmatpush2.msra.mxu0 0.0
      %2008 = vmatprep.subr.mxu0 0.0
      %2009 = vmatpush2.msra.mxu0 0.0
      %2010 = vmatprep.subr.mxu0 0.0
      %2011 = vmatpush2.msra.mxu0 0.0
      %2012 = vmatprep.mubr.f32.mxu0 0.0
      %2013 = vmatmul.mubr.f32.gmra.mxu0 %v1943
      %v2014 = vpop.f32.mrf.mxu0
      %v2015 = vadd.f32 0.0, %v2014
      %v2016 = vpop.f32.mrf.mxu0
      %v2017 = vadd.f32 0.0, %v2016
      %2018 = vmatprep.mubr.f32.mxu0 0.0
      %2019 = vmatmul.mubr.f32.gmra.mxu0 %v1946
      %v2020 = vpop.f32.mrf.mxu0
      %v2021 = vadd.f32 0.0, %v2020
      %v2022 = vpop.f32.mrf.mxu0
      %v2023 = vadd.f32 0.0, %v2022
      %2024 = vdwg.mxu0
      %v2025 = vld [vmem:[%s41] sm:$0xff]
      %v2026 = vld [vmem:[%s41 + $0x8] sm:$0xff]
      %v2028 = vsel %vm1023, %v1923, 0
      %v2031 = vsel %vm1023, %v1924, 0
      %2033 = vmatprep.subr.mxu0 0.0
      %2034 = vmatpush1.msra.mxu0 0.0
      %2035 = vmatprep.subr.mxu0 0.0
      %2036 = vmatpush1.msra.mxu0 0.0
      %2037 = vmatprep.subr.mxu0 0.0
      %2038 = vmatpush1.msra.mxu0 0.0
      %2039 = vmatprep.subr.mxu0 0.0
      %2040 = vmatpush1.msra.mxu0 0.0
      %2041 = vmatprep.subr.mxu0 0.0
      %2042 = vmatpush1.msra.mxu0 0.0
      %2043 = vmatprep.subr.mxu0 0.0
      %2044 = vmatpush1.msra.mxu0 0.0
      %2045 = vmatprep.subr.mxu0 0.0
      %2046 = vmatpush1.msra.mxu0 0.0
      %2047 = vmatprep.subr.mxu0 0.0
      %2048 = vmatpush1.msra.mxu0 0.0
      %2049 = vmatprep.subr.mxu0 0.0
      %2050 = vmatpush1.msra.mxu0 0.0
      %2051 = vmatprep.subr.mxu0 0.0
      %2052 = vmatpush1.msra.mxu0 0.0
      %2053 = vmatprep.subr.mxu0 0.0
      %2054 = vmatpush1.msra.mxu0 0.0
      %2055 = vmatprep.subr.mxu0 0.0
      %2056 = vmatpush1.msra.mxu0 0.0
      %2057 = vmatprep.subr.mxu0 0.0
      %2058 = vmatpush1.msra.mxu0 0.0
      %2059 = vmatprep.subr.mxu0 0.0
      %2060 = vmatpush1.msra.mxu0 0.0
      %2061 = vmatprep.subr.mxu0 0.0
      %2062 = vmatpush1.msra.mxu0 %v2026
      %2063 = vmatprep.subr.mxu0 0.0
      %2064 = vmatpush1.msra.mxu0 %v2025
      %2065 = vmatprep.subr.mxu0 0.0
      %2066 = vmatpush2.msra.mxu0 0.0
      %2067 = vmatprep.subr.mxu0 0.0
      %2068 = vmatpush2.msra.mxu0 0.0
      %2069 = vmatprep.subr.mxu0 0.0
      %2070 = vmatpush2.msra.mxu0 0.0
      %2071 = vmatprep.subr.mxu0 0.0
      %2072 = vmatpush2.msra.mxu0 0.0
      %2073 = vmatprep.subr.mxu0 0.0
      %2074 = vmatpush2.msra.mxu0 0.0
      %2075 = vmatprep.subr.mxu0 0.0
      %2076 = vmatpush2.msra.mxu0 0.0
      %2077 = vmatprep.subr.mxu0 0.0
      %2078 = vmatpush2.msra.mxu0 0.0
      %2079 = vmatprep.subr.mxu0 0.0
      %2080 = vmatpush2.msra.mxu0 0.0
      %2081 = vmatprep.subr.mxu0 0.0
      %2082 = vmatpush2.msra.mxu0 0.0
      %2083 = vmatprep.subr.mxu0 0.0
      %2084 = vmatpush2.msra.mxu0 0.0
      %2085 = vmatprep.subr.mxu0 0.0
      %2086 = vmatpush2.msra.mxu0 0.0
      %2087 = vmatprep.subr.mxu0 0.0
      %2088 = vmatpush2.msra.mxu0 0.0
      %2089 = vmatprep.subr.mxu0 0.0
      %2090 = vmatpush2.msra.mxu0 0.0
      %2091 = vmatprep.subr.mxu0 0.0
      %2092 = vmatpush2.msra.mxu0 0.0
      %2093 = vmatprep.subr.mxu0 0.0
      %2094 = vmatpush2.msra.mxu0 0.0
      %2095 = vmatprep.subr.mxu0 0.0
      %2096 = vmatpush2.msra.mxu0 0.0
      %2097 = vmatprep.mubr.f32.mxu0 0.0
      %2098 = vmatmul.mubr.f32.gmra.mxu0 %v2028
      %v2099 = vpop.f32.mrf.mxu0
      %v2100 = vadd.f32 0.0, %v2099
      %v2101 = vpop.f32.mrf.mxu0
      %2102 = vmatprep.mubr.f32.mxu0 0.0
      %2103 = vmatmul.mubr.f32.gmra.mxu0 %v2031
      %v2104 = vpop.f32.mrf.mxu0
      %v2105 = vadd.f32 0.0, %v2104
      %v2106 = vpop.f32.mrf.mxu0
      %2107 = vdwg.mxu0
      %2108 = vst [vmem:[#allocation2 + $0x8] sm:$0xff] %v1397
      %2109 = vst [vmem:[#allocation2 + $0x10] sm:$0xff] %v1398
      %2110 = vst [vmem:[#allocation2 + $0x28] sm:$0xff] %v1399
      %2111 = vst [vmem:[#allocation2 + $0x30] sm:$0xff] %v1400
      %v2112 = vld [vmem:[#allocation2] sm:$0xff]
      %v2113 = vld [vmem:[#allocation2 + $0x8] sm:$0xff]
      %v2114 = vld [vmem:[#allocation2 + $0x10] sm:$0xff]
      %v2115 = vld [vmem:[#allocation2 + $0x20] sm:$0xff]
      %v2116 = vld [vmem:[#allocation2 + $0x28] sm:$0xff]
      %v2117 = vld [vmem:[#allocation2 + $0x30] sm:$0xff]
      %v2118 = vld [vmem:[%s47] ss:$8 sm:$0x3]
      %v2120 = vlaneseq
      %v2121 = vshrl.u32 %v2120, 7
      %v2122 = vsub.s32 0, %v2121
      %v2123 = vrot.slane %v2118, %v2122
      %v2124 = vlaneseq
      %v2125 = vshrl.u32 %v2124, 7
      %v2126 = vsub.s32 1, %v2125
      %v2127 = vrot.slane %v2118, %v2126
      %2128 = vrot.lane.b32.xlu0 %v2123, 111
      %v2129 = vpop.permute.xlu0 %2128
      %2130 = vrot.lane.b32.xlu0 %v2127, 111
      %v2131 = vpop.permute.xlu0 %2130
      %v2132 = vsel %vm985, %v2129, %v2131
      %v2136 = vmul.f32 %v2112, %v2129
      %v2137 = vmul.f32 %v2113, %v2132
      %v2138 = vmul.f32 %v2114, %v2131
      %v2139 = vmul.f32 %v2115, %v2129
      %v2140 = vmul.f32 %v2116, %v2132
      %v2141 = vmul.f32 %v2117, %v2131
      %2148 = vrot.lane.b32.xlu0 %v2136, 17
      %v2149 = vpop.permute.xlu0 %2148
      %2150 = vrot.lane.b32.xlu0 %v2137, 17
      %v2151 = vpop.permute.xlu0 %2150
      %2152 = vrot.lane.b32.xlu0 %v2138, 17
      %v2153 = vpop.permute.xlu0 %2152
      %2154 = vrot.lane.b32.xlu0 %v2139, 17
      %v2155 = vpop.permute.xlu0 %2154
      %2156 = vrot.lane.b32.xlu0 %v2140, 17
      %v2157 = vpop.permute.xlu0 %2156
      %2158 = vrot.lane.b32.xlu0 %v2141, 17
      %v2159 = vpop.permute.xlu0 %2158
      %v2160 = vsel %vm1002, %v2149, %v2151
      %v2161 = vsel %vm1002, %v2151, %v2153
      %v2162 = vsel %vm1002, %v2155, %v2157
      %v2163 = vsel %vm1002, %v2157, %v2159
      %2168 = vst [vmem:[#allocation3] sm:$0xff] %v2160
      %2169 = vst [vmem:[#allocation3 + $0x8] sm:$0xff] %v2161
      %2170 = vst [vmem:[#allocation3 + $0x10] sm:$0xff] %v2162
      %2171 = vst [vmem:[#allocation3 + $0x18] sm:$0xff] %v2163
      %v2172 = vld [vmem:[#allocation2] sm:$0xff]
      %v2173 = vld [vmem:[#allocation2 + $0x8] sm:$0xff]
      %v2174 = vld [vmem:[#allocation2 + $0x10] sm:$0xff]
      %v2175 = vld [vmem:[#allocation2 + $0x20] sm:$0xff]
      %v2176 = vld [vmem:[#allocation2 + $0x28] sm:$0xff]
      %v2177 = vld [vmem:[#allocation2 + $0x30] sm:$0xff]
      %2184 = vrot.lane.b32.xlu0 %v2172, 16
      %v2185 = vpop.permute.xlu0 %2184
      %2186 = vrot.lane.b32.xlu0 %v2173, 16
      %v2187 = vpop.permute.xlu0 %2186
      %2188 = vrot.lane.b32.xlu0 %v2174, 16
      %v2189 = vpop.permute.xlu0 %2188
      %2190 = vrot.lane.b32.xlu0 %v2175, 16
      %v2191 = vpop.permute.xlu0 %2190
      %2192 = vrot.lane.b32.xlu0 %v2176, 16
      %v2193 = vpop.permute.xlu0 %2192
      %2194 = vrot.lane.b32.xlu0 %v2177, 16
      %v2195 = vpop.permute.xlu0 %2194
      %v2196 = vsel %vm1023, %v2185, %v2187
      %v2197 = vsel %vm1023, %v2187, %v2189
      %v2198 = vsel %vm1023, %v2191, %v2193
      %v2199 = vsel %vm1023, %v2193, %v2195
      %2204 = vst [vmem:[#allocation3 + $0x20] sm:$0xff] %v2196
      %2205 = vst [vmem:[#allocation3 + $0x28] sm:$0xff] %v2197
      %2206 = vst [vmem:[#allocation3 + $0x30] sm:$0xff] %v2198
      %2207 = vst [vmem:[#allocation3 + $0x38] sm:$0xff] %v2199
      %v2208 = vld [vmem:[#allocation2] sm:$0xff]
      %v2209 = vld [vmem:[#allocation2 + $0x8] sm:$0xff]
      %v2210 = vld [vmem:[#allocation2 + $0x10] sm:$0xff]
      %v2211 = vld [vmem:[#allocation2 + $0x20] sm:$0xff]
      %v2212 = vld [vmem:[#allocation2 + $0x28] sm:$0xff]
      %v2213 = vld [vmem:[#allocation2 + $0x30] sm:$0xff]
      %v2214 = vld [vmem:[%s1035] ss:$8 sm:$0x3]
      %v2216 = vlaneseq
      %v2217 = vshrl.u32 %v2216, 7
      %v2218 = vsub.s32 0, %v2217
      %v2219 = vrot.slane %v2214, %v2218
      %v2220 = vlaneseq
      %v2221 = vshrl.u32 %v2220, 7
      %v2222 = vsub.s32 1, %v2221
      %v2223 = vrot.slane %v2214, %v2222
      %2224 = vrot.lane.b32.xlu0 %v2219, 113
      %v2225 = vpop.permute.xlu0 %2224
      %2226 = vrot.lane.b32.xlu0 %v2223, 113
      %v2227 = vpop.permute.xlu0 %2226
      %v2228 = vsel %vm1050, %v2225, %v2227
      %v2232 = vmul.f32 %v2208, %v2225
      %v2233 = vmul.f32 %v2209, %v2228
      %v2234 = vmul.f32 %v2210, %v2227
      %v2235 = vmul.f32 %v2211, %v2225
      %v2236 = vmul.f32 %v2212, %v2228
      %v2237 = vmul.f32 %v2213, %v2227
      %2244 = vrot.lane.b32.xlu0 %v2232, 15
      %v2245 = vpop.permute.xlu0 %2244
      %2246 = vrot.lane.b32.xlu0 %v2233, 15
      %v2247 = vpop.permute.xlu0 %2246
      %2248 = vrot.lane.b32.xlu0 %v2234, 15
      %v2249 = vpop.permute.xlu0 %2248
      %2250 = vrot.lane.b32.xlu0 %v2235, 15
      %v2251 = vpop.permute.xlu0 %2250
      %2252 = vrot.lane.b32.xlu0 %v2236, 15
      %v2253 = vpop.permute.xlu0 %2252
      %2254 = vrot.lane.b32.xlu0 %v2237, 15
      %v2255 = vpop.permute.xlu0 %2254
      %v2256 = vsel %vm1067, %v2245, %v2247
      %v2257 = vsel %vm1067, %v2247, %v2249
      %v2258 = vsel %vm1067, %v2251, %v2253
      %v2259 = vsel %vm1067, %v2253, %v2255
      %2264 = vst [vmem:[#allocation3 + $0x40] sm:$0xff] %v2256
      %2265 = vst [vmem:[#allocation3 + $0x48] sm:$0xff] %v2257
      %2266 = vst [vmem:[#allocation3 + $0x50] sm:$0xff] %v2258
      %2267 = vst [vmem:[#allocation3 + $0x58] sm:$0xff] %v2259
      %v2268 = vld [vmem:[#allocation2] sm:$0xff]
      %v2269 = vld [vmem:[#allocation2 + $0x8] sm:$0xff]
      %v2270 = vld [vmem:[#allocation2 + $0x10] sm:$0xff]
      %v2271 = vld [vmem:[#allocation2 + $0x20] sm:$0xff]
      %v2272 = vld [vmem:[#allocation2 + $0x28] sm:$0xff]
      %v2273 = vld [vmem:[#allocation2 + $0x30] sm:$0xff]
      %v2274 = vld [vmem:[%s1079] ss:$8 sm:$0x3]
      %v2276 = vlaneseq
      %v2277 = vshrl.u32 %v2276, 7
      %v2278 = vsub.s32 0, %v2277
      %v2279 = vrot.slane %v2274, %v2278
      %v2280 = vlaneseq
      %v2281 = vshrl.u32 %v2280, 7
      %v2282 = vsub.s32 1, %v2281
      %v2283 = vrot.slane %v2274, %v2282
      %2284 = vrot.lane.b32.xlu0 %v2279, 127
      %v2285 = vpop.permute.xlu0 %2284
      %2286 = vrot.lane.b32.xlu0 %v2283, 127
      %v2287 = vpop.permute.xlu0 %2286
      %v2288 = vsel %vm1094, %v2285, %v2287
      %v2292 = vmul.f32 %v2268, %v2285
      %v2293 = vmul.f32 %v2269, %v2288
      %v2294 = vmul.f32 %v2270, %v2287
      %v2295 = vmul.f32 %v2271, %v2285
      %v2296 = vmul.f32 %v2272, %v2288
      %v2297 = vmul.f32 %v2273, %v2287
      %2304 = vrot.lane.b32.xlu0 %v2292, 1
      %v2305 = vpop.permute.xlu0 %2304
      %2306 = vrot.lane.b32.xlu0 %v2293, 1
      %v2307 = vpop.permute.xlu0 %2306
      %2308 = vrot.lane.b32.xlu0 %v2294, 1
      %v2309 = vpop.permute.xlu0 %2308
      %2310 = vrot.lane.b32.xlu0 %v2295, 1
      %v2311 = vpop.permute.xlu0 %2310
      %2312 = vrot.lane.b32.xlu0 %v2296, 1
      %v2313 = vpop.permute.xlu0 %2312
      %2314 = vrot.lane.b32.xlu0 %v2297, 1
      %v2315 = vpop.permute.xlu0 %2314
      %v2316 = vsel %vm1111, %v2305, %v2307
      %v2317 = vsel %vm1111, %v2307, %v2309
      %v2318 = vsel %vm1111, %v2311, %v2313
      %v2319 = vsel %vm1111, %v2313, %v2315
      %2324 = vst [vmem:[#allocation3 + $0x60] sm:$0xff] %v2316
      %2325 = vst [vmem:[#allocation3 + $0x68] sm:$0xff] %v2317
      %2326 = vst [vmem:[#allocation3 + $0x70] sm:$0xff] %v2318
      %2327 = vst [vmem:[#allocation3 + $0x78] sm:$0xff] %v2319
      %v2328 = vld [vmem:[#allocation2 + $0x8] sm:$0xff]
      %v2329 = vld [vmem:[#allocation2 + $0x10] sm:$0xff]
      %v2330 = vld [vmem:[#allocation2 + $0x28] sm:$0xff]
      %v2331 = vld [vmem:[#allocation2 + $0x30] sm:$0xff]
      %2332 = vst [vmem:[#allocation3 + $0x80] sm:$0xff] %v2328
      %2333 = vst [vmem:[#allocation3 + $0x88] sm:$0xff] %v2329
      %2334 = vst [vmem:[#allocation3 + $0x90] sm:$0xff] %v2330
      %2335 = vst [vmem:[#allocation3 + $0x98] sm:$0xff] %v2331
      %v2336 = vld [vmem:[#allocation2 + $0x8] sm:$0xff]
      %v2337 = vld [vmem:[#allocation2 + $0x10] sm:$0xff]
      %v2338 = vld [vmem:[#allocation2 + $0x18] sm:$0xff]
      %v2339 = vld [vmem:[#allocation2 + $0x28] sm:$0xff]
      %v2340 = vld [vmem:[#allocation2 + $0x30] sm:$0xff]
      %v2341 = vld [vmem:[#allocation2 + $0x38] sm:$0xff]
      %v2342 = vld [vmem:[%s1129] ss:$8 sm:$0x3]
      %v2344 = vlaneseq
      %v2345 = vshrl.u32 %v2344, 7
      %v2346 = vsub.s32 0, %v2345
      %v2347 = vrot.slane %v2342, %v2346
      %v2348 = vlaneseq
      %v2349 = vshrl.u32 %v2348, 7
      %v2350 = vsub.s32 1, %v2349
      %v2351 = vrot.slane %v2342, %v2350
      %2352 = vrot.lane.b32.xlu0 %v2347, 1
      %v2353 = vpop.permute.xlu0 %2352
      %2354 = vrot.lane.b32.xlu0 %v2351, 1
      %v2355 = vpop.permute.xlu0 %2354
      %v2356 = vsel %vm1111, %v2353, %v2355
      %v2360 = vmul.f32 %v2336, %v2353
      %v2361 = vmul.f32 %v2337, %v2356
      %v2362 = vmul.f32 %v2338, %v2355
      %v2363 = vmul.f32 %v2339, %v2353
      %v2364 = vmul.f32 %v2340, %v2356
      %v2365 = vmul.f32 %v2341, %v2355
      %2372 = vrot.lane.b32.xlu0 %v2360, 127
      %v2373 = vpop.permute.xlu0 %2372
      %2374 = vrot.lane.b32.xlu0 %v2361, 127
      %v2375 = vpop.permute.xlu0 %2374
      %2376 = vrot.lane.b32.xlu0 %v2362, 127
      %v2377 = vpop.permute.xlu0 %2376
      %2378 = vrot.lane.b32.xlu0 %v2363, 127
      %v2379 = vpop.permute.xlu0 %2378
      %2380 = vrot.lane.b32.xlu0 %v2364, 127
      %v2381 = vpop.permute.xlu0 %2380
      %2382 = vrot.lane.b32.xlu0 %v2365, 127
      %v2383 = vpop.permute.xlu0 %2382
      %v2384 = vsel %vm1094, %v2373, %v2375
      %v2385 = vsel %vm1094, %v2375, %v2377
      %v2386 = vsel %vm1094, %v2379, %v2381
      %v2387 = vsel %vm1094, %v2381, %v2383
      %2392 = vst [vmem:[#allocation3 + $0xa0] sm:$0xff] %v2384
      %2393 = vst [vmem:[#allocation3 + $0xa8] sm:$0xff] %v2385
      %2394 = vst [vmem:[#allocation3 + $0xb0] sm:$0xff] %v2386
      %2395 = vst [vmem:[#allocation3 + $0xb8] sm:$0xff] %v2387
      %v2396 = vld [vmem:[#allocation2 + $0x8] sm:$0xff]
      %v2397 = vld [vmem:[#allocation2 + $0x10] sm:$0xff]
      %v2398 = vld [vmem:[#allocation2 + $0x18] sm:$0xff]
      %v2399 = vld [vmem:[#allocation2 + $0x28] sm:$0xff]
      %v2400 = vld [vmem:[#allocation2 + $0x30] sm:$0xff]
      %v2401 = vld [vmem:[#allocation2 + $0x38] sm:$0xff]
      %v2402 = vld [vmem:[%s1171] ss:$8 sm:$0x3]
      %v2404 = vlaneseq
      %v2405 = vshrl.u32 %v2404, 7
      %v2406 = vsub.s32 0, %v2405
      %v2407 = vrot.slane %v2402, %v2406
      %v2408 = vlaneseq
      %v2409 = vshrl.u32 %v2408, 7
      %v2410 = vsub.s32 1, %v2409
      %v2411 = vrot.slane %v2402, %v2410
      %2412 = vrot.lane.b32.xlu0 %v2407, 15
      %v2413 = vpop.permute.xlu0 %2412
      %2414 = vrot.lane.b32.xlu0 %v2411, 15
      %v2415 = vpop.permute.xlu0 %2414
      %v2416 = vsel %vm1067, %v2413, %v2415
      %v2420 = vmul.f32 %v2396, %v2413
      %v2421 = vmul.f32 %v2397, %v2416
      %v2422 = vmul.f32 %v2398, %v2415
      %v2423 = vmul.f32 %v2399, %v2413
      %v2424 = vmul.f32 %v2400, %v2416
      %v2425 = vmul.f32 %v2401, %v2415
      %2432 = vrot.lane.b32.xlu0 %v2420, 113
      %v2433 = vpop.permute.xlu0 %2432
      %2434 = vrot.lane.b32.xlu0 %v2421, 113
      %v2435 = vpop.permute.xlu0 %2434
      %2436 = vrot.lane.b32.xlu0 %v2422, 113
      %v2437 = vpop.permute.xlu0 %2436
      %2438 = vrot.lane.b32.xlu0 %v2423, 113
      %v2439 = vpop.permute.xlu0 %2438
      %2440 = vrot.lane.b32.xlu0 %v2424, 113
      %v2441 = vpop.permute.xlu0 %2440
      %2442 = vrot.lane.b32.xlu0 %v2425, 113
      %v2443 = vpop.permute.xlu0 %2442
      %v2444 = vsel %vm1050, %v2433, %v2435
      %v2445 = vsel %vm1050, %v2435, %v2437
      %v2446 = vsel %vm1050, %v2439, %v2441
      %v2447 = vsel %vm1050, %v2441, %v2443
      %2452 = vst [vmem:[#allocation3 + $0xc0] sm:$0xff] %v2444
      %2453 = vst [vmem:[#allocation3 + $0xc8] sm:$0xff] %v2445
      %2454 = vst [vmem:[#allocation3 + $0xd0] sm:$0xff] %v2446
      %2455 = vst [vmem:[#allocation3 + $0xd8] sm:$0xff] %v2447
      %v2456 = vld [vmem:[#allocation2 + $0x8] sm:$0xff]
      %v2457 = vld [vmem:[#allocation2 + $0x10] sm:$0xff]
      %v2458 = vld [vmem:[#allocation2 + $0x18] sm:$0xff]
      %v2459 = vld [vmem:[#allocation2 + $0x28] sm:$0xff]
      %v2460 = vld [vmem:[#allocation2 + $0x30] sm:$0xff]
      %v2461 = vld [vmem:[#allocation2 + $0x38] sm:$0xff]
      %2468 = vrot.lane.b32.xlu0 %v2456, 112
      %v2469 = vpop.permute.xlu0 %2468
      %2470 = vrot.lane.b32.xlu0 %v2457, 112
      %v2471 = vpop.permute.xlu0 %2470
      %2472 = vrot.lane.b32.xlu0 %v2458, 112
      %v2473 = vpop.permute.xlu0 %2472
      %2474 = vrot.lane.b32.xlu0 %v2459, 112
      %v2475 = vpop.permute.xlu0 %2474
      %2476 = vrot.lane.b32.xlu0 %v2460, 112
      %v2477 = vpop.permute.xlu0 %2476
      %2478 = vrot.lane.b32.xlu0 %v2461, 112
      %v2479 = vpop.permute.xlu0 %2478
      %v2480 = vsel %vm1222, %v2469, %v2471
      %v2481 = vsel %vm1222, %v2471, %v2473
      %v2482 = vsel %vm1222, %v2475, %v2477
      %v2483 = vsel %vm1222, %v2477, %v2479
      %2488 = vst [vmem:[#allocation3 + $0xe0] sm:$0xff] %v2480
      %2489 = vst [vmem:[#allocation3 + $0xe8] sm:$0xff] %v2481
      %2490 = vst [vmem:[#allocation3 + $0xf0] sm:$0xff] %v2482
      %2491 = vst [vmem:[#allocation3 + $0xf8] sm:$0xff] %v2483
      %v2492 = vld [vmem:[#allocation2 + $0x8] sm:$0xff]
      %v2493 = vld [vmem:[#allocation2 + $0x10] sm:$0xff]
      %v2494 = vld [vmem:[#allocation2 + $0x18] sm:$0xff]
      %v2495 = vld [vmem:[#allocation2 + $0x28] sm:$0xff]
      %v2496 = vld [vmem:[#allocation2 + $0x30] sm:$0xff]
      %v2497 = vld [vmem:[#allocation2 + $0x38] sm:$0xff]
      %v2498 = vld [vmem:[%s1234] ss:$8 sm:$0x3]
      %v2500 = vlaneseq
      %v2501 = vshrl.u32 %v2500, 7
      %v2502 = vsub.s32 0, %v2501
      %v2503 = vrot.slane %v2498, %v2502
      %v2504 = vlaneseq
      %v2505 = vshrl.u32 %v2504, 7
      %v2506 = vsub.s32 1, %v2505
      %v2507 = vrot.slane %v2498, %v2506
      %2508 = vrot.lane.b32.xlu0 %v2503, 17
      %v2509 = vpop.permute.xlu0 %2508
      %2510 = vrot.lane.b32.xlu0 %v2507, 17
      %v2511 = vpop.permute.xlu0 %2510
      %v2512 = vsel %vm1002, %v2509, %v2511
      %v2516 = vmul.f32 %v2492, %v2509
      %v2517 = vmul.f32 %v2493, %v2512
      %v2518 = vmul.f32 %v2494, %v2511
      %v2519 = vmul.f32 %v2495, %v2509
      %v2520 = vmul.f32 %v2496, %v2512
      %v2521 = vmul.f32 %v2497, %v2511
      %2528 = vrot.lane.b32.xlu0 %v2516, 111
      %v2529 = vpop.permute.xlu0 %2528
      %2530 = vrot.lane.b32.xlu0 %v2517, 111
      %v2531 = vpop.permute.xlu0 %2530
      %2532 = vrot.lane.b32.xlu0 %v2518, 111
      %v2533 = vpop.permute.xlu0 %2532
      %2534 = vrot.lane.b32.xlu0 %v2519, 111
      %v2535 = vpop.permute.xlu0 %2534
      %2536 = vrot.lane.b32.xlu0 %v2520, 111
      %v2537 = vpop.permute.xlu0 %2536
      %2538 = vrot.lane.b32.xlu0 %v2521, 111
      %v2539 = vpop.permute.xlu0 %2538
      %v2540 = vsel %vm985, %v2529, %v2531
      %v2541 = vsel %vm985, %v2531, %v2533
      %v2542 = vsel %vm985, %v2535, %v2537
      %v2543 = vsel %vm985, %v2537, %v2539
      %2548 = vst [vmem:[#allocation3 + $0x100] sm:$0xff] %v2540
      %2549 = vst [vmem:[#allocation3 + $0x108] sm:$0xff] %v2541
      %2550 = vst [vmem:[#allocation3 + $0x110] sm:$0xff] %v2542
      %2551 = vst [vmem:[#allocation3 + $0x118] sm:$0xff] %v2543
      %v2552 = vld [vmem:[%s19] sm:$0xff]
      %v2553 = vld [vmem:[%s19 + $0x8] sm:$0xff]
      %v2554 = vld [vmem:[%s19 + $0x10] sm:$0xff]
      %v2555 = vld [vmem:[%s19 + $0x18] sm:$0xff]
      %v2556 = vld [vmem:[#allocation3] sm:$0xff]
      %v2557 = vld [vmem:[#allocation3 + $0x8] sm:$0xff]
      %v2558 = vld [vmem:[#allocation3 + $0x10] sm:$0xff]
      %v2559 = vld [vmem:[#allocation3 + $0x18] sm:$0xff]
      %v2560 = vld [vmem:[#allocation3 + $0x20] sm:$0xff]
      %v2561 = vld [vmem:[#allocation3 + $0x28] sm:$0xff]
      %v2562 = vld [vmem:[#allocation3 + $0x30] sm:$0xff]
      %v2563 = vld [vmem:[#allocation3 + $0x38] sm:$0xff]
      %v2564 = vld [vmem:[#allocation3 + $0x40] sm:$0xff]
      %v2565 = vld [vmem:[#allocation3 + $0x48] sm:$0xff]
      %v2566 = vld [vmem:[#allocation3 + $0x50] sm:$0xff]
      %v2567 = vld [vmem:[#allocation3 + $0x58] sm:$0xff]
      %v2568 = vld [vmem:[#allocation3 + $0x60] sm:$0xff]
      %v2569 = vld [vmem:[#allocation3 + $0x68] sm:$0xff]
      %v2570 = vld [vmem:[#allocation3 + $0x70] sm:$0xff]
      %v2571 = vld [vmem:[#allocation3 + $0x78] sm:$0xff]
      %v2572 = vld [vmem:[#allocation3 + $0x80] sm:$0xff]
      %v2573 = vld [vmem:[#allocation3 + $0x88] sm:$0xff]
      %v2574 = vld [vmem:[#allocation3 + $0x90] sm:$0xff]
      %v2575 = vld [vmem:[#allocation3 + $0x98] sm:$0xff]
      %v2576 = vld [vmem:[#allocation3 + $0xa0] sm:$0xff]
      %v2577 = vld [vmem:[#allocation3 + $0xa8] sm:$0xff]
      %v2578 = vld [vmem:[#allocation3 + $0xb0] sm:$0xff]
      %v2579 = vld [vmem:[#allocation3 + $0xb8] sm:$0xff]
      %v2580 = vld [vmem:[#allocation3 + $0xc0] sm:$0xff]
      %v2581 = vld [vmem:[#allocation3 + $0xc8] sm:$0xff]
      %v2582 = vld [vmem:[#allocation3 + $0xd0] sm:$0xff]
      %v2583 = vld [vmem:[#allocation3 + $0xd8] sm:$0xff]
      %v2584 = vld [vmem:[#allocation3 + $0xe0] sm:$0xff]
      %v2585 = vld [vmem:[#allocation3 + $0xe8] sm:$0xff]
      %v2586 = vld [vmem:[#allocation3 + $0xf0] sm:$0xff]
      %v2587 = vld [vmem:[#allocation3 + $0xf8] sm:$0xff]
      %v2588 = vld [vmem:[#allocation3 + $0x100] sm:$0xff]
      %v2589 = vld [vmem:[#allocation3 + $0x108] sm:$0xff]
      %v2590 = vld [vmem:[#allocation3 + $0x110] sm:$0xff]
      %v2591 = vld [vmem:[#allocation3 + $0x118] sm:$0xff]
      %v2592 = vld [vmem:[%s21] sm:$0xff]
      %v2593 = vld [vmem:[%s21 + $0x8] sm:$0xff]
      %2595 = vset.pattern.permute.xlu0 0
      %2596 = vperm.xlu0 %2595, %v2592
      %v2597 = vpop.permute.xlu0 %2596
      %2600 = vset.pattern.permute.xlu0 0
      %2601 = vperm.xlu0 %2600, %v2593
      %v2602 = vpop.permute.xlu0 %2601
      %v2605 = vsel %vm1023, %v2553, 0
      %v2608 = vsel %vm1023, %v2555, 0
      %2610 = vmatprep.subr.mxu0 %v2587
      %2611 = vmatpush1.msra.mxu0 %v2586
      %2612 = vmatprep.subr.mxu0 %v2585
      %2613 = vmatpush1.msra.mxu0 %v2584
      %2614 = vmatprep.subr.mxu0 %v2583
      %2615 = vmatpush1.msra.mxu0 %v2582
      %2616 = vmatprep.subr.mxu0 %v2581
      %2617 = vmatpush1.msra.mxu0 %v2580
      %2618 = vmatprep.subr.mxu0 %v2579
      %2619 = vmatpush1.msra.mxu0 %v2578
      %2620 = vmatprep.subr.mxu0 %v2577
      %2621 = vmatpush1.msra.mxu0 %v2576
      %2622 = vmatprep.subr.mxu0 %v2575
      %2623 = vmatpush1.msra.mxu0 %v2574
      %2624 = vmatprep.subr.mxu0 %v2573
      %2625 = vmatpush1.msra.mxu0 %v2572
      %2626 = vmatprep.subr.mxu0 %v2571
      %2627 = vmatpush1.msra.mxu0 %v2570
      %2628 = vmatprep.subr.mxu0 %v2569
      %2629 = vmatpush1.msra.mxu0 %v2568
      %2630 = vmatprep.subr.mxu0 %v2567
      %2631 = vmatpush1.msra.mxu0 %v2566
      %2632 = vmatprep.subr.mxu0 %v2565
      %2633 = vmatpush1.msra.mxu0 %v2564
      %2634 = vmatprep.subr.mxu0 %v2563
      %2635 = vmatpush1.msra.mxu0 %v2562
      %2636 = vmatprep.subr.mxu0 %v2561
      %2637 = vmatpush1.msra.mxu0 %v2560
      %2638 = vmatprep.subr.mxu0 %v2559
      %2639 = vmatpush1.msra.mxu0 %v2558
      %2640 = vmatprep.subr.mxu0 %v2557
      %2641 = vmatpush1.msra.mxu0 %v2556
      %2642 = vmatprep.subr.mxu0 0.0
      %2643 = vmatpush2.msra.mxu0 0.0
      %2644 = vmatprep.subr.mxu0 0.0
      %2645 = vmatpush2.msra.mxu0 0.0
      %2646 = vmatprep.subr.mxu0 0.0
      %2647 = vmatpush2.msra.mxu0 0.0
      %2648 = vmatprep.subr.mxu0 0.0
      %2649 = vmatpush2.msra.mxu0 0.0
      %2650 = vmatprep.subr.mxu0 0.0
      %2651 = vmatpush2.msra.mxu0 0.0
      %2652 = vmatprep.subr.mxu0 0.0
      %2653 = vmatpush2.msra.mxu0 0.0
      %2654 = vmatprep.subr.mxu0 0.0
      %2655 = vmatpush2.msra.mxu0 0.0
      %2656 = vmatprep.subr.mxu0 0.0
      %2657 = vmatpush2.msra.mxu0 0.0
      %2658 = vmatprep.subr.mxu0 0.0
      %2659 = vmatpush2.msra.mxu0 0.0
      %2660 = vmatprep.subr.mxu0 0.0
      %2661 = vmatpush2.msra.mxu0 0.0
      %2662 = vmatprep.subr.mxu0 0.0
      %2663 = vmatpush2.msra.mxu0 0.0
      %2664 = vmatprep.subr.mxu0 0.0
      %2665 = vmatpush2.msra.mxu0 0.0
      %2666 = vmatprep.subr.mxu0 0.0
      %2667 = vmatpush2.msra.mxu0 0.0
      %2668 = vmatprep.subr.mxu0 0.0
      %2669 = vmatpush2.msra.mxu0 0.0
      %2670 = vmatprep.subr.mxu0 %v2591
      %2671 = vmatpush2.msra.mxu0 %v2590
      %2672 = vmatprep.subr.mxu0 %v2589
      %2673 = vmatpush2.msra.mxu0 %v2588
      %2674 = vmatprep.mubr.f32.mxu0 %v2605
      %2675 = vmatmul.mubr.f32.gmra.mxu0 %v2552
      %v2676 = vpop.f32.mrf.mxu0
      %v2677 = vadd.f32 %v2597, %v2676
      %v2678 = vpop.f32.mrf.mxu0
      %v2679 = vadd.f32 %v2597, %v2678
      %2680 = vmatprep.mubr.f32.mxu0 %v2608
      %2681 = vmatmul.mubr.f32.gmra.mxu0 %v2554
      %v2682 = vpop.f32.mrf.mxu0
      %v2683 = vadd.f32 %v2602, %v2682
      %v2684 = vpop.f32.mrf.mxu0
      %v2685 = vadd.f32 %v2602, %v2684
      %2686 = vdwg.mxu0
      %2687 = vst.msk [vmem:[#allocation2 + $0x8] sm:$0xff] %vm1941, %v1661
      %2688 = vst.msk [vmem:[#allocation2 + $0x28] sm:$0xff] %vm1941, %v1662
      %vm2689 = vcmask 1048064
      %2690 = vst.msk [vmem:[#allocation2 + $0x8] sm:$0xff] %vm2689, 0.0
      %2691 = vst.msk [vmem:[#allocation2 + $0x10] sm:$0xff] %vm1941, 0.0
      %2692 = vst.msk [vmem:[#allocation2 + $0x28] sm:$0xff] %vm2689, 0.0
      %2693 = vst.msk [vmem:[#allocation2 + $0x30] sm:$0xff] %vm1941, 0.0
      %v2694 = vld [vmem:[#allocation2] sm:$0xff]
      %v2695 = vld [vmem:[#allocation2 + $0x8] sm:$0xff]
      %v2696 = vld [vmem:[#allocation2 + $0x20] sm:$0xff]
      %v2697 = vld [vmem:[#allocation2 + $0x28] sm:$0xff]
      %v2698 = vld [vmem:[%s49] sm:$0x1]
      %v2699 = vlaneseq
      %v2700 = vshrl.u32 %v2699, 7
      %v2701 = vsub.s32 0, %v2700
      %v2702 = vrot.slane %v2698, %v2701
      %2704 = vrot.lane.b32.xlu0 %v2702, 119
      %v2705 = vpop.permute.xlu0 %2704
      %v2707 = vmul.f32 %v2694, %v2705
      %v2708 = vmul.f32 %v2695, %v2705
      %v2709 = vmul.f32 %v2696, %v2705
      %v2710 = vmul.f32 %v2697, %v2705
      %2715 = vrot.lane.b32.xlu0 %v2707, 9
      %v2716 = vpop.permute.xlu0 %2715
      %2717 = vrot.lane.b32.xlu0 %v2708, 9
      %v2718 = vpop.permute.xlu0 %2717
      %2719 = vrot.lane.b32.xlu0 %v2709, 9
      %v2720 = vpop.permute.xlu0 %2719
      %2721 = vrot.lane.b32.xlu0 %v2710, 9
      %v2722 = vpop.permute.xlu0 %2721
      %v2723 = vsel %vm1426, %v2716, %v2718
      %v2724 = vsel %vm1426, %v2720, %v2722
      %2727 = vst.msk [vmem:[#allocation3] sm:$0xff] %vm1941, %v2723
      %2728 = vst.msk [vmem:[#allocation3 + $0x10] sm:$0xff] %vm1941, %v2724
      %v2729 = vld [vmem:[#allocation2] sm:$0xff]
      %v2730 = vld [vmem:[#allocation2 + $0x8] sm:$0xff]
      %v2731 = vld [vmem:[#allocation2 + $0x20] sm:$0xff]
      %v2732 = vld [vmem:[#allocation2 + $0x28] sm:$0xff]
      %2737 = vrot.lane.b32.xlu0 %v2729, 8
      %v2738 = vpop.permute.xlu0 %2737
      %2739 = vrot.lane.b32.xlu0 %v2730, 8
      %v2740 = vpop.permute.xlu0 %2739
      %2741 = vrot.lane.b32.xlu0 %v2731, 8
      %v2742 = vpop.permute.xlu0 %2741
      %2743 = vrot.lane.b32.xlu0 %v2732, 8
      %v2744 = vpop.permute.xlu0 %2743
      %v2745 = vsel %vm1440, %v2738, %v2740
      %v2746 = vsel %vm1440, %v2742, %v2744
      %2749 = vst.msk [vmem:[#allocation3 + $0x20] sm:$0xff] %vm1941, %v2745
      %2750 = vst.msk [vmem:[#allocation3 + $0x30] sm:$0xff] %vm1941, %v2746
      %v2751 = vld [vmem:[#allocation2] sm:$0xff]
      %v2752 = vld [vmem:[#allocation2 + $0x8] sm:$0xff]
      %v2753 = vld [vmem:[#allocation2 + $0x20] sm:$0xff]
      %v2754 = vld [vmem:[#allocation2 + $0x28] sm:$0xff]
      %v2755 = vld [vmem:[%s49 + $0x2] sm:$0x1]
      %v2756 = vlaneseq
      %v2757 = vshrl.u32 %v2756, 7
      %v2758 = vsub.s32 0, %v2757
      %v2759 = vrot.slane %v2755, %v2758
      %2761 = vrot.lane.b32.xlu0 %v2759, 121
      %v2762 = vpop.permute.xlu0 %2761
      %v2764 = vmul.f32 %v2751, %v2762
      %v2765 = vmul.f32 %v2752, %v2762
      %v2766 = vmul.f32 %v2753, %v2762
      %v2767 = vmul.f32 %v2754, %v2762
      %2772 = vrot.lane.b32.xlu0 %v2764, 7
      %v2773 = vpop.permute.xlu0 %2772
      %2774 = vrot.lane.b32.xlu0 %v2765, 7
      %v2775 = vpop.permute.xlu0 %2774
      %2776 = vrot.lane.b32.xlu0 %v2766, 7
      %v2777 = vpop.permute.xlu0 %2776
      %2778 = vrot.lane.b32.xlu0 %v2767, 7
      %v2779 = vpop.permute.xlu0 %2778
      %v2780 = vsel %vm1464, %v2773, %v2775
      %v2781 = vsel %vm1464, %v2777, %v2779
      %2784 = vst.msk [vmem:[#allocation3 + $0x40] sm:$0xff] %vm1941, %v2780
      %2785 = vst.msk [vmem:[#allocation3 + $0x50] sm:$0xff] %vm1941, %v2781
      %v2786 = vld [vmem:[#allocation2] sm:$0xff]
      %v2787 = vld [vmem:[#allocation2 + $0x8] sm:$0xff]
      %v2788 = vld [vmem:[#allocation2 + $0x20] sm:$0xff]
      %v2789 = vld [vmem:[#allocation2 + $0x28] sm:$0xff]
      %v2790 = vld [vmem:[%s49 + $0x3] sm:$0x1]
      %v2791 = vlaneseq
      %v2792 = vshrl.u32 %v2791, 7
      %v2793 = vsub.s32 0, %v2792
      %v2794 = vrot.slane %v2790, %v2793
      %2796 = vrot.lane.b32.xlu0 %v2794, 127
      %v2797 = vpop.permute.xlu0 %2796
      %v2799 = vmul.f32 %v2786, %v2797
      %v2800 = vmul.f32 %v2787, %v2797
      %v2801 = vmul.f32 %v2788, %v2797
      %v2802 = vmul.f32 %v2789, %v2797
      %2807 = vrot.lane.b32.xlu0 %v2799, 1
      %v2808 = vpop.permute.xlu0 %2807
      %2809 = vrot.lane.b32.xlu0 %v2800, 1
      %v2810 = vpop.permute.xlu0 %2809
      %2811 = vrot.lane.b32.xlu0 %v2801, 1
      %v2812 = vpop.permute.xlu0 %2811
      %2813 = vrot.lane.b32.xlu0 %v2802, 1
      %v2814 = vpop.permute.xlu0 %2813
      %v2815 = vsel %vm1111, %v2808, %v2810
      %v2816 = vsel %vm1111, %v2812, %v2814
      %2819 = vst.msk [vmem:[#allocation3 + $0x60] sm:$0xff] %vm1941, %v2815
      %2820 = vst.msk [vmem:[#allocation3 + $0x70] sm:$0xff] %vm1941, %v2816
      %v2821 = vld [vmem:[#allocation2 + $0x8] sm:$0xff]
      %v2822 = vld [vmem:[#allocation2 + $0x28] sm:$0xff]
      %2823 = vst.msk [vmem:[#allocation3 + $0x80] sm:$0xff] %vm1941, %v2821
      %2824 = vst.msk [vmem:[#allocation3 + $0x90] sm:$0xff] %vm1941, %v2822
      %v2825 = vld [vmem:[#allocation2 + $0x8] sm:$0xff]
      %v2826 = vld [vmem:[#allocation2 + $0x28] sm:$0xff]
      %v2827 = vld [vmem:[%s49 + $0x5] sm:$0x1]
      %v2828 = vlaneseq
      %v2829 = vshrl.u32 %v2828, 7
      %v2830 = vsub.s32 0, %v2829
      %v2831 = vrot.slane %v2827, %v2830
      %2833 = vrot.lane.b32.xlu0 %v2831, 1
      %v2834 = vpop.permute.xlu0 %2833
      %v2836 = vmul.f32 %v2825, %v2834
      %v2837 = vmul.f32 %v2826, %v2834
      %2840 = vrot.lane.b32.xlu0 %v2836, 127
      %v2841 = vpop.permute.xlu0 %2840
      %2842 = vrot.lane.b32.xlu0 %v2837, 127
      %v2843 = vpop.permute.xlu0 %2842
      %2846 = vst.msk [vmem:[#allocation3 + $0xa0] sm:$0xff] %vm1941, %v2841
      %2847 = vst.msk [vmem:[#allocation3 + $0xb0] sm:$0xff] %vm1941, %v2843
      %v2848 = vld [vmem:[#allocation2 + $0x8] sm:$0xff]
      %v2849 = vld [vmem:[#allocation2 + $0x28] sm:$0xff]
      %v2850 = vld [vmem:[%s49 + $0x6] sm:$0x1]
      %v2851 = vlaneseq
      %v2852 = vshrl.u32 %v2851, 7
      %v2853 = vsub.s32 0, %v2852
      %v2854 = vrot.slane %v2850, %v2853
      %2856 = vrot.lane.b32.xlu0 %v2854, 7
      %v2857 = vpop.permute.xlu0 %2856
      %v2859 = vmul.f32 %v2848, %v2857
      %v2860 = vmul.f32 %v2849, %v2857
      %2863 = vrot.lane.b32.xlu0 %v2859, 121
      %v2864 = vpop.permute.xlu0 %2863
      %2865 = vrot.lane.b32.xlu0 %v2860, 121
      %v2866 = vpop.permute.xlu0 %2865
      %2869 = vst.msk [vmem:[#allocation3 + $0xc0] sm:$0xff] %vm1941, %v2864
      %2870 = vst.msk [vmem:[#allocation3 + $0xd0] sm:$0xff] %vm1941, %v2866
      %v2871 = vld [vmem:[#allocation2 + $0x8] sm:$0xff]
      %v2872 = vld [vmem:[#allocation2 + $0x28] sm:$0xff]
      %2875 = vrot.lane.b32.xlu0 %v2871, 120
      %v2876 = vpop.permute.xlu0 %2875
      %2877 = vrot.lane.b32.xlu0 %v2872, 120
      %v2878 = vpop.permute.xlu0 %2877
      %2881 = vst.msk [vmem:[#allocation3 + $0xe0] sm:$0xff] %vm1941, %v2876
      %2882 = vst.msk [vmem:[#allocation3 + $0xf0] sm:$0xff] %vm1941, %v2878
      %v2883 = vld [vmem:[#allocation2 + $0x8] sm:$0xff]
      %v2884 = vld [vmem:[#allocation2 + $0x28] sm:$0xff]
      %v2885 = vld [vmem:[%s49 + $0x8] sm:$0x1]
      %v2886 = vlaneseq
      %v2887 = vshrl.u32 %v2886, 7
      %v2888 = vsub.s32 0, %v2887
      %v2889 = vrot.slane %v2885, %v2888
      %2891 = vrot.lane.b32.xlu0 %v2889, 9
      %v2892 = vpop.permute.xlu0 %2891
      %v2894 = vmul.f32 %v2883, %v2892
      %v2895 = vmul.f32 %v2884, %v2892
      %2898 = vrot.lane.b32.xlu0 %v2894, 119
      %v2899 = vpop.permute.xlu0 %2898
      %2900 = vrot.lane.b32.xlu0 %v2895, 119
      %v2901 = vpop.permute.xlu0 %2900
      %2904 = vst.msk [vmem:[#allocation3 + $0x100] sm:$0xff] %vm1941, %v2899
      %2905 = vst.msk [vmem:[#allocation3 + $0x110] sm:$0xff] %vm1941, %v2901
      %v2906 = vld [vmem:[%s23] sm:$0xff]
      %v2907 = vld [vmem:[%s23 + $0x8] sm:$0xff]
      %v2908 = vld [vmem:[%s23 + $0x10] sm:$0xff]
      %v2909 = vld [vmem:[%s23 + $0x18] sm:$0xff]
      %v2910 = vld [vmem:[#allocation3] sm:$0xff]
      %v2911 = vld [vmem:[#allocation3 + $0x10] sm:$0xff]
      %v2912 = vld [vmem:[#allocation3 + $0x20] sm:$0xff]
      %v2913 = vld [vmem:[#allocation3 + $0x30] sm:$0xff]
      %v2914 = vld [vmem:[#allocation3 + $0x40] sm:$0xff]
      %v2915 = vld [vmem:[#allocation3 + $0x50] sm:$0xff]
      %v2916 = vld [vmem:[#allocation3 + $0x60] sm:$0xff]
      %v2917 = vld [vmem:[#allocation3 + $0x70] sm:$0xff]
      %v2918 = vld [vmem:[#allocation3 + $0x80] sm:$0xff]
      %v2919 = vld [vmem:[#allocation3 + $0x90] sm:$0xff]
      %v2920 = vld [vmem:[#allocation3 + $0xa0] sm:$0xff]
      %v2921 = vld [vmem:[#allocation3 + $0xb0] sm:$0xff]
      %v2922 = vld [vmem:[#allocation3 + $0xc0] sm:$0xff]
      %v2923 = vld [vmem:[#allocation3 + $0xd0] sm:$0xff]
      %v2924 = vld [vmem:[#allocation3 + $0xe0] sm:$0xff]
      %v2925 = vld [vmem:[#allocation3 + $0xf0] sm:$0xff]
      %v2926 = vld [vmem:[#allocation3 + $0x100] sm:$0xff]
      %v2927 = vld [vmem:[#allocation3 + $0x110] sm:$0xff]
      %v2928 = vld [vmem:[%s25] sm:$0xff]
      %v2929 = vld [vmem:[%s25 + $0x8] sm:$0xff]
      %2931 = vset.pattern.permute.xlu0 0
      %2932 = vperm.xlu0 %2931, %v2928
      %v2933 = vpop.permute.xlu0 %2932
      %2936 = vset.pattern.permute.xlu0 0
      %2937 = vperm.xlu0 %2936, %v2929
      %v2938 = vpop.permute.xlu0 %2937
      %v2941 = vsel %vm1023, %v2907, 0
      %v2944 = vsel %vm1023, %v2909, 0
      %2946 = vmatprep.subr.mxu0 0.0
      %2947 = vmatpush1.msra.mxu0 %v2925
      %2948 = vmatprep.subr.mxu0 0.0
      %2949 = vmatpush1.msra.mxu0 %v2924
      %2950 = vmatprep.subr.mxu0 0.0
      %2951 = vmatpush1.msra.mxu0 %v2923
      %2952 = vmatprep.subr.mxu0 0.0
      %2953 = vmatpush1.msra.mxu0 %v2922
      %2954 = vmatprep.subr.mxu0 0.0
      %2955 = vmatpush1.msra.mxu0 %v2921
      %2956 = vmatprep.subr.mxu0 0.0
      %2957 = vmatpush1.msra.mxu0 %v2920
      %2958 = vmatprep.subr.mxu0 0.0
      %2959 = vmatpush1.msra.mxu0 %v2919
      %2960 = vmatprep.subr.mxu0 0.0
      %2961 = vmatpush1.msra.mxu0 %v2918
      %2962 = vmatprep.subr.mxu0 0.0
      %2963 = vmatpush1.msra.mxu0 %v2917
      %2964 = vmatprep.subr.mxu0 0.0
      %2965 = vmatpush1.msra.mxu0 %v2916
      %2966 = vmatprep.subr.mxu0 0.0
      %2967 = vmatpush1.msra.mxu0 %v2915
      %2968 = vmatprep.subr.mxu0 0.0
      %2969 = vmatpush1.msra.mxu0 %v2914
      %2970 = vmatprep.subr.mxu0 0.0
      %2971 = vmatpush1.msra.mxu0 %v2913
      %2972 = vmatprep.subr.mxu0 0.0
      %2973 = vmatpush1.msra.mxu0 %v2912
      %2974 = vmatprep.subr.mxu0 0.0
      %2975 = vmatpush1.msra.mxu0 %v2911
      %2976 = vmatprep.subr.mxu0 0.0
      %2977 = vmatpush1.msra.mxu0 %v2910
      %2978 = vmatprep.subr.mxu0 0.0
      %2979 = vmatpush2.msra.mxu0 0.0
      %2980 = vmatprep.subr.mxu0 0.0
      %2981 = vmatpush2.msra.mxu0 0.0
      %2982 = vmatprep.subr.mxu0 0.0
      %2983 = vmatpush2.msra.mxu0 0.0
      %2984 = vmatprep.subr.mxu0 0.0
      %2985 = vmatpush2.msra.mxu0 0.0
      %2986 = vmatprep.subr.mxu0 0.0
      %2987 = vmatpush2.msra.mxu0 0.0
      %2988 = vmatprep.subr.mxu0 0.0
      %2989 = vmatpush2.msra.mxu0 0.0
      %2990 = vmatprep.subr.mxu0 0.0
      %2991 = vmatpush2.msra.mxu0 0.0
      %2992 = vmatprep.subr.mxu0 0.0
      %2993 = vmatpush2.msra.mxu0 0.0
      %2994 = vmatprep.subr.mxu0 0.0
      %2995 = vmatpush2.msra.mxu0 0.0
      %2996 = vmatprep.subr.mxu0 0.0
      %2997 = vmatpush2.msra.mxu0 0.0
      %2998 = vmatprep.subr.mxu0 0.0
      %2999 = vmatpush2.msra.mxu0 0.0
      %3000 = vmatprep.subr.mxu0 0.0
      %3001 = vmatpush2.msra.mxu0 0.0
      %3002 = vmatprep.subr.mxu0 0.0
      %3003 = vmatpush2.msra.mxu0 0.0
      %3004 = vmatprep.subr.mxu0 0.0
      %3005 = vmatpush2.msra.mxu0 0.0
      %3006 = vmatprep.subr.mxu0 0.0
      %3007 = vmatpush2.msra.mxu0 %v2927
      %3008 = vmatprep.subr.mxu0 0.0
      %3009 = vmatpush2.msra.mxu0 %v2926
      %3010 = vmatprep.mubr.f32.mxu0 %v2941
      %3011 = vmatmul.mubr.f32.gmra.mxu0 %v2906
      %v3012 = vpop.f32.mrf.mxu0
      %v3013 = vadd.f32 %v2933, %v3012
      %v3014 = vpop.f32.mrf.mxu0
      %3015 = vmatprep.mubr.f32.mxu0 %v2944
      %3016 = vmatmul.mubr.f32.gmra.mxu0 %v2908
      %v3017 = vpop.f32.mrf.mxu0
      %v3018 = vadd.f32 %v2938, %v3017
      %v3019 = vpop.f32.mrf.mxu0
      %3020 = vdwg.mxu0
      %3021 = vst.msk [vmem:[#allocation2 + $0x8] sm:$0xff] %vm1023, %v1923
      %3022 = vst.msk [vmem:[#allocation2 + $0x28] sm:$0xff] %vm1023, %v1924
      %vm3023 = vcmask 1047680
      %3024 = vst.msk [vmem:[#allocation2 + $0x8] sm:$0xff] %vm3023, 0.0
      %3025 = vst.msk [vmem:[#allocation2 + $0x10] sm:$0xff] %vm1023, 0.0
      %3026 = vst.msk [vmem:[#allocation2 + $0x28] sm:$0xff] %vm3023, 0.0
      %3027 = vst.msk [vmem:[#allocation2 + $0x30] sm:$0xff] %vm1023, 0.0
      %v3028 = vld [vmem:[#allocation2] sm:$0xff]
      %v3029 = vld [vmem:[#allocation2 + $0x8] sm:$0xff]
      %v3030 = vld [vmem:[#allocation2 + $0x20] sm:$0xff]
      %v3031 = vld [vmem:[#allocation2 + $0x28] sm:$0xff]
      %v3032 = vld [vmem:[%s51] sm:$0x1]
      %v3033 = vlaneseq
      %v3034 = vshrl.u32 %v3033, 7
      %v3035 = vsub.s32 0, %v3034
      %v3036 = vrot.slane %v3032, %v3035
      %3038 = vrot.lane.b32.xlu0 %v3036, 123
      %v3039 = vpop.permute.xlu0 %3038
      %v3041 = vmul.f32 %v3028, %v3039
      %v3042 = vmul.f32 %v3029, %v3039
      %v3043 = vmul.f32 %v3030, %v3039
      %v3044 = vmul.f32 %v3031, %v3039
      %3049 = vrot.lane.b32.xlu0 %v3041, 5
      %v3050 = vpop.permute.xlu0 %3049
      %3051 = vrot.lane.b32.xlu0 %v3042, 5
      %v3052 = vpop.permute.xlu0 %3051
      %3053 = vrot.lane.b32.xlu0 %v3043, 5
      %v3054 = vpop.permute.xlu0 %3053
      %3055 = vrot.lane.b32.xlu0 %v3044, 5
      %v3056 = vpop.permute.xlu0 %3055
      %v3057 = vsel %vm1688, %v3050, %v3052
      %v3058 = vsel %vm1688, %v3054, %v3056
      %3061 = vst.msk [vmem:[#allocation3] sm:$0xff] %vm1023, %v3057
      %3062 = vst.msk [vmem:[#allocation3 + $0x10] sm:$0xff] %vm1023, %v3058
      %v3063 = vld [vmem:[#allocation2] sm:$0xff]
      %v3064 = vld [vmem:[#allocation2 + $0x8] sm:$0xff]
      %v3065 = vld [vmem:[#allocation2 + $0x20] sm:$0xff]
      %v3066 = vld [vmem:[#allocation2 + $0x28] sm:$0xff]
      %3071 = vrot.lane.b32.xlu0 %v3063, 4
      %v3072 = vpop.permute.xlu0 %3071
      %3073 = vrot.lane.b32.xlu0 %v3064, 4
      %v3074 = vpop.permute.xlu0 %3073
      %3075 = vrot.lane.b32.xlu0 %v3065, 4
      %v3076 = vpop.permute.xlu0 %3075
      %3077 = vrot.lane.b32.xlu0 %v3066, 4
      %v3078 = vpop.permute.xlu0 %3077
      %v3079 = vsel %vm1702, %v3072, %v3074
      %v3080 = vsel %vm1702, %v3076, %v3078
      %3083 = vst.msk [vmem:[#allocation3 + $0x20] sm:$0xff] %vm1023, %v3079
      %3084 = vst.msk [vmem:[#allocation3 + $0x30] sm:$0xff] %vm1023, %v3080
      %v3085 = vld [vmem:[#allocation2] sm:$0xff]
      %v3086 = vld [vmem:[#allocation2 + $0x8] sm:$0xff]
      %v3087 = vld [vmem:[#allocation2 + $0x20] sm:$0xff]
      %v3088 = vld [vmem:[#allocation2 + $0x28] sm:$0xff]
      %v3089 = vld [vmem:[%s51 + $0x2] sm:$0x1]
      %v3090 = vlaneseq
      %v3091 = vshrl.u32 %v3090, 7
      %v3092 = vsub.s32 0, %v3091
      %v3093 = vrot.slane %v3089, %v3092
      %3095 = vrot.lane.b32.xlu0 %v3093, 125
      %v3096 = vpop.permute.xlu0 %3095
      %v3098 = vmul.f32 %v3085, %v3096
      %v3099 = vmul.f32 %v3086, %v3096
      %v3100 = vmul.f32 %v3087, %v3096
      %v3101 = vmul.f32 %v3088, %v3096
      %3106 = vrot.lane.b32.xlu0 %v3098, 3
      %v3107 = vpop.permute.xlu0 %3106
      %3108 = vrot.lane.b32.xlu0 %v3099, 3
      %v3109 = vpop.permute.xlu0 %3108
      %3110 = vrot.lane.b32.xlu0 %v3100, 3
      %v3111 = vpop.permute.xlu0 %3110
      %3112 = vrot.lane.b32.xlu0 %v3101, 3
      %v3113 = vpop.permute.xlu0 %3112
      %v3114 = vsel %vm1726, %v3107, %v3109
      %v3115 = vsel %vm1726, %v3111, %v3113
      %3118 = vst.msk [vmem:[#allocation3 + $0x40] sm:$0xff] %vm1023, %v3114
      %3119 = vst.msk [vmem:[#allocation3 + $0x50] sm:$0xff] %vm1023, %v3115
      %v3120 = vld [vmem:[#allocation2] sm:$0xff]
      %v3121 = vld [vmem:[#allocation2 + $0x8] sm:$0xff]
      %v3122 = vld [vmem:[#allocation2 + $0x20] sm:$0xff]
      %v3123 = vld [vmem:[#allocation2 + $0x28] sm:$0xff]
      %v3124 = vld [vmem:[%s51 + $0x3] sm:$0x1]
      %v3125 = vlaneseq
      %v3126 = vshrl.u32 %v3125, 7
      %v3127 = vsub.s32 0, %v3126
      %v3128 = vrot.slane %v3124, %v3127
      %3130 = vrot.lane.b32.xlu0 %v3128, 127
      %v3131 = vpop.permute.xlu0 %3130
      %v3133 = vmul.f32 %v3120, %v3131
      %v3134 = vmul.f32 %v3121, %v3131
      %v3135 = vmul.f32 %v3122, %v3131
      %v3136 = vmul.f32 %v3123, %v3131
      %3141 = vrot.lane.b32.xlu0 %v3133, 1
      %v3142 = vpop.permute.xlu0 %3141
      %3143 = vrot.lane.b32.xlu0 %v3134, 1
      %v3144 = vpop.permute.xlu0 %3143
      %3145 = vrot.lane.b32.xlu0 %v3135, 1
      %v3146 = vpop.permute.xlu0 %3145
      %3147 = vrot.lane.b32.xlu0 %v3136, 1
      %v3148 = vpop.permute.xlu0 %3147
      %v3149 = vsel %vm1111, %v3142, %v3144
      %v3150 = vsel %vm1111, %v3146, %v3148
      %3153 = vst.msk [vmem:[#allocation3 + $0x60] sm:$0xff] %vm1023, %v3149
      %3154 = vst.msk [vmem:[#allocation3 + $0x70] sm:$0xff] %vm1023, %v3150
      %v3155 = vld [vmem:[#allocation2 + $0x8] sm:$0xff]
      %v3156 = vld [vmem:[#allocation2 + $0x28] sm:$0xff]
      %3157 = vst.msk [vmem:[#allocation3 + $0x80] sm:$0xff] %vm1023, %v3155
      %3158 = vst.msk [vmem:[#allocation3 + $0x90] sm:$0xff] %vm1023, %v3156
      %v3159 = vld [vmem:[#allocation2 + $0x8] sm:$0xff]
      %v3160 = vld [vmem:[#allocation2 + $0x28] sm:$0xff]
      %v3161 = vld [vmem:[%s51 + $0x5] sm:$0x1]
      %v3162 = vlaneseq
      %v3163 = vshrl.u32 %v3162, 7
      %v3164 = vsub.s32 0, %v3163
      %v3165 = vrot.slane %v3161, %v3164
      %3167 = vrot.lane.b32.xlu0 %v3165, 1
      %v3168 = vpop.permute.xlu0 %3167
      %v3170 = vmul.f32 %v3159, %v3168
      %v3171 = vmul.f32 %v3160, %v3168
      %3174 = vrot.lane.b32.xlu0 %v3170, 127
      %v3175 = vpop.permute.xlu0 %3174
      %3176 = vrot.lane.b32.xlu0 %v3171, 127
      %v3177 = vpop.permute.xlu0 %3176
      %3180 = vst.msk [vmem:[#allocation3 + $0xa0] sm:$0xff] %vm1023, %v3175
      %3181 = vst.msk [vmem:[#allocation3 + $0xb0] sm:$0xff] %vm1023, %v3177
      %v3182 = vld [vmem:[#allocation2 + $0x8] sm:$0xff]
      %v3183 = vld [vmem:[#allocation2 + $0x28] sm:$0xff]
      %v3184 = vld [vmem:[%s51 + $0x6] sm:$0x1]
      %v3185 = vlaneseq
      %v3186 = vshrl.u32 %v3185, 7
      %v3187 = vsub.s32 0, %v3186
      %v3188 = vrot.slane %v3184, %v3187
      %3190 = vrot.lane.b32.xlu0 %v3188, 3
      %v3191 = vpop.permute.xlu0 %3190
      %v3193 = vmul.f32 %v3182, %v3191
      %v3194 = vmul.f32 %v3183, %v3191
      %3197 = vrot.lane.b32.xlu0 %v3193, 125
      %v3198 = vpop.permute.xlu0 %3197
      %3199 = vrot.lane.b32.xlu0 %v3194, 125
      %v3200 = vpop.permute.xlu0 %3199
      %3203 = vst.msk [vmem:[#allocation3 + $0xc0] sm:$0xff] %vm1023, %v3198
      %3204 = vst.msk [vmem:[#allocation3 + $0xd0] sm:$0xff] %vm1023, %v3200
      %v3205 = vld [vmem:[#allocation2 + $0x8] sm:$0xff]
      %v3206 = vld [vmem:[#allocation2 + $0x28] sm:$0xff]
      %3209 = vrot.lane.b32.xlu0 %v3205, 124
      %v3210 = vpop.permute.xlu0 %3209
      %3211 = vrot.lane.b32.xlu0 %v3206, 124
      %v3212 = vpop.permute.xlu0 %3211
      %3215 = vst.msk [vmem:[#allocation3 + $0xe0] sm:$0xff] %vm1023, %v3210
      %3216 = vst.msk [vmem:[#allocation3 + $0xf0] sm:$0xff] %vm1023, %v3212
      %v3217 = vld [vmem:[#allocation2 + $0x8] sm:$0xff]
      %v3218 = vld [vmem:[#allocation2 + $0x28] sm:$0xff]
      %v3219 = vld [vmem:[%s51 + $0x8] sm:$0x1]
      %v3220 = vlaneseq
      %v3221 = vshrl.u32 %v3220, 7
      %v3222 = vsub.s32 0, %v3221
      %v3223 = vrot.slane %v3219, %v3222
      %3225 = vrot.lane.b32.xlu0 %v3223, 5
      %v3226 = vpop.permute.xlu0 %3225
      %v3228 = vmul.f32 %v3217, %v3226
      %v3229 = vmul.f32 %v3218, %v3226
      %3232 = vrot.lane.b32.xlu0 %v3228, 123
      %v3233 = vpop.permute.xlu0 %3232
      %3234 = vrot.lane.b32.xlu0 %v3229, 123
      %v3235 = vpop.permute.xlu0 %3234
      %3238 = vst.msk [vmem:[#allocation3 + $0x100] sm:$0xff] %vm1023, %v3233
      %3239 = vst.msk [vmem:[#allocation3 + $0x110] sm:$0xff] %vm1023, %v3235
      %v3240 = vld [vmem:[%s27] sm:$0xff]
      %v3241 = vld [vmem:[%s27 + $0x8] sm:$0xff]
      %v3242 = vld [vmem:[#allocation3] sm:$0xff]
      %v3243 = vld [vmem:[#allocation3 + $0x10] sm:$0xff]
      %v3244 = vld [vmem:[#allocation3 + $0x20] sm:$0xff]
      %v3245 = vld [vmem:[#allocation3 + $0x30] sm:$0xff]
      %v3246 = vld [vmem:[#allocation3 + $0x40] sm:$0xff]
      %v3247 = vld [vmem:[#allocation3 + $0x50] sm:$0xff]
      %v3248 = vld [vmem:[#allocation3 + $0x60] sm:$0xff]
      %v3249 = vld [vmem:[#allocation3 + $0x70] sm:$0xff]
      %v3250 = vld [vmem:[#allocation3 + $0x80] sm:$0xff]
      %v3251 = vld [vmem:[#allocation3 + $0x90] sm:$0xff]
      %v3252 = vld [vmem:[#allocation3 + $0xa0] sm:$0xff]
      %v3253 = vld [vmem:[#allocation3 + $0xb0] sm:$0xff]
      %v3254 = vld [vmem:[#allocation3 + $0xc0] sm:$0xff]
      %v3255 = vld [vmem:[#allocation3 + $0xd0] sm:$0xff]
      %v3256 = vld [vmem:[#allocation3 + $0xe0] sm:$0xff]
      %v3257 = vld [vmem:[#allocation3 + $0xf0] sm:$0xff]
      %v3258 = vld [vmem:[#allocation3 + $0x100] sm:$0xff]
      %v3259 = vld [vmem:[#allocation3 + $0x110] sm:$0xff]
      %v3260 = vld [vmem:[%s29] sm:$0xff]
      %3262 = vset.pattern.permute.xlu0 0
      %3263 = vperm.xlu0 %3262, %v3260
      %v3264 = vpop.permute.xlu0 %3263
      %v3267 = vsel %vm1023, %v3241, 0
      %3269 = vmatprep.subr.mxu0 0.0
      %3270 = vmatpush1.msra.mxu0 %v3257
      %3271 = vmatprep.subr.mxu0 0.0
      %3272 = vmatpush1.msra.mxu0 %v3256
      %3273 = vmatprep.subr.mxu0 0.0
      %3274 = vmatpush1.msra.mxu0 %v3255
      %3275 = vmatprep.subr.mxu0 0.0
      %3276 = vmatpush1.msra.mxu0 %v3254
      %3277 = vmatprep.subr.mxu0 0.0
      %3278 = vmatpush1.msra.mxu0 %v3253
      %3279 = vmatprep.subr.mxu0 0.0
      %3280 = vmatpush1.msra.mxu0 %v3252
      %3281 = vmatprep.subr.mxu0 0.0
      %3282 = vmatpush1.msra.mxu0 %v3251
      %3283 = vmatprep.subr.mxu0 0.0
      %3284 = vmatpush1.msra.mxu0 %v3250
      %3285 = vmatprep.subr.mxu0 0.0
      %3286 = vmatpush1.msra.mxu0 %v3249
      %3287 = vmatprep.subr.mxu0 0.0
      %3288 = vmatpush1.msra.mxu0 %v3248
      %3289 = vmatprep.subr.mxu0 0.0
      %3290 = vmatpush1.msra.mxu0 %v3247
      %3291 = vmatprep.subr.mxu0 0.0
      %3292 = vmatpush1.msra.mxu0 %v3246
      %3293 = vmatprep.subr.mxu0 0.0
      %3294 = vmatpush1.msra.mxu0 %v3245
      %3295 = vmatprep.subr.mxu0 0.0
      %3296 = vmatpush1.msra.mxu0 %v3244
      %3297 = vmatprep.subr.mxu0 0.0
      %3298 = vmatpush1.msra.mxu0 %v3243
      %3299 = vmatprep.subr.mxu0 0.0
      %3300 = vmatpush1.msra.mxu0 %v3242
      %3301 = vmatprep.subr.mxu0 0.0
      %3302 = vmatpush2.msra.mxu0 0.0
      %3303 = vmatprep.subr.mxu0 0.0
      %3304 = vmatpush2.msra.mxu0 0.0
      %3305 = vmatprep.subr.mxu0 0.0
      %3306 = vmatpush2.msra.mxu0 0.0
      %3307 = vmatprep.subr.mxu0 0.0
      %3308 = vmatpush2.msra.mxu0 0.0
      %3309 = vmatprep.subr.mxu0 0.0
      %3310 = vmatpush2.msra.mxu0 0.0
      %3311 = vmatprep.subr.mxu0 0.0
      %3312 = vmatpush2.msra.mxu0 0.0
      %3313 = vmatprep.subr.mxu0 0.0
      %3314 = vmatpush2.msra.mxu0 0.0
      %3315 = vmatprep.subr.mxu0 0.0
      %3316 = vmatpush2.msra.mxu0 0.0
      %3317 = vmatprep.subr.mxu0 0.0
      %3318 = vmatpush2.msra.mxu0 0.0
      %3319 = vmatprep.subr.mxu0 0.0
      %3320 = vmatpush2.msra.mxu0 0.0
      %3321 = vmatprep.subr.mxu0 0.0
      %3322 = vmatpush2.msra.mxu0 0.0
      %3323 = vmatprep.subr.mxu0 0.0
      %3324 = vmatpush2.msra.mxu0 0.0
      %3325 = vmatprep.subr.mxu0 0.0
      %3326 = vmatpush2.msra.mxu0 0.0
      %3327 = vmatprep.subr.mxu0 0.0
      %3328 = vmatpush2.msra.mxu0 0.0
      %3329 = vmatprep.subr.mxu0 0.0
      %3330 = vmatpush2.msra.mxu0 %v3259
      %3331 = vmatprep.subr.mxu0 0.0
      %3332 = vmatpush2.msra.mxu0 %v3258
      %3333 = vmatprep.mubr.f32.mxu0 %v3267
      %3334 = vmatmul.mubr.f32.gmra.mxu0 %v3240
      %v3335 = vpop.f32.mrf.mxu0
      %v3336 = vadd.f32 %v3264, %v3335
      %v3337 = vpop.f32.mrf.mxu0
      %3338 = vdwg.mxu0
      %3339 = vst [vmem:[#allocation2 + $0x8] sm:$0xff] %v2015
      %3340 = vst [vmem:[#allocation2 + $0x10] sm:$0xff] %v2017
      %3341 = vst [vmem:[#allocation2 + $0x28] sm:$0xff] %v2021
      %3342 = vst [vmem:[#allocation2 + $0x30] sm:$0xff] %v2023
      %v3343 = vld [vmem:[#allocation2] sm:$0xff]
      %v3344 = vld [vmem:[#allocation2 + $0x8] sm:$0xff]
      %v3345 = vld [vmem:[#allocation2 + $0x10] sm:$0xff]
      %v3346 = vld [vmem:[#allocation2 + $0x20] sm:$0xff]
      %v3347 = vld [vmem:[#allocation2 + $0x28] sm:$0xff]
      %v3348 = vld [vmem:[#allocation2 + $0x30] sm:$0xff]
      %v3349 = vld [vmem:[%s47] ss:$8 sm:$0x3]
      %v3351 = vlaneseq
      %v3352 = vshrl.u32 %v3351, 7
      %v3353 = vsub.s32 0, %v3352
      %v3354 = vrot.slane %v3349, %v3353
      %v3355 = vlaneseq
      %v3356 = vshrl.u32 %v3355, 7
      %v3357 = vsub.s32 1, %v3356
      %v3358 = vrot.slane %v3349, %v3357
      %3359 = vrot.lane.b32.xlu0 %v3354, 111
      %v3360 = vpop.permute.xlu0 %3359
      %3361 = vrot.lane.b32.xlu0 %v3358, 111
      %v3362 = vpop.permute.xlu0 %3361
      %v3363 = vsel %vm985, %v3360, %v3362
      %v3367 = vmul.f32 %v3343, %v3360
      %v3368 = vmul.f32 %v3344, %v3363
      %v3369 = vmul.f32 %v3345, %v3362
      %v3370 = vmul.f32 %v3346, %v3360
      %v3371 = vmul.f32 %v3347, %v3363
      %v3372 = vmul.f32 %v3348, %v3362
      %3379 = vrot.lane.b32.xlu0 %v3367, 17
      %v3380 = vpop.permute.xlu0 %3379
      %3381 = vrot.lane.b32.xlu0 %v3368, 17
      %v3382 = vpop.permute.xlu0 %3381
      %3383 = vrot.lane.b32.xlu0 %v3369, 17
      %v3384 = vpop.permute.xlu0 %3383
      %3385 = vrot.lane.b32.xlu0 %v3370, 17
      %v3386 = vpop.permute.xlu0 %3385
      %3387 = vrot.lane.b32.xlu0 %v3371, 17
      %v3388 = vpop.permute.xlu0 %3387
      %3389 = vrot.lane.b32.xlu0 %v3372, 17
      %v3390 = vpop.permute.xlu0 %3389
      %v3391 = vsel %vm1002, %v3380, %v3382
      %v3392 = vsel %vm1002, %v3382, %v3384
      %v3393 = vsel %vm1002, %v3386, %v3388
      %v3394 = vsel %vm1002, %v3388, %v3390
      %3399 = vst [vmem:[#allocation3] sm:$0xff] %v3391
      %3400 = vst [vmem:[#allocation3 + $0x8] sm:$0xff] %v3392
      %3401 = vst [vmem:[#allocation3 + $0x10] sm:$0xff] %v3393
      %3402 = vst [vmem:[#allocation3 + $0x18] sm:$0xff] %v3394
      %v3403 = vld [vmem:[#allocation2] sm:$0xff]
      %v3404 = vld [vmem:[#allocation2 + $0x8] sm:$0xff]
      %v3405 = vld [vmem:[#allocation2 + $0x10] sm:$0xff]
      %v3406 = vld [vmem:[#allocation2 + $0x20] sm:$0xff]
      %v3407 = vld [vmem:[#allocation2 + $0x28] sm:$0xff]
      %v3408 = vld [vmem:[#allocation2 + $0x30] sm:$0xff]
      %3415 = vrot.lane.b32.xlu0 %v3403, 16
      %v3416 = vpop.permute.xlu0 %3415
      %3417 = vrot.lane.b32.xlu0 %v3404, 16
      %v3418 = vpop.permute.xlu0 %3417
      %3419 = vrot.lane.b32.xlu0 %v3405, 16
      %v3420 = vpop.permute.xlu0 %3419
      %3421 = vrot.lane.b32.xlu0 %v3406, 16
      %v3422 = vpop.permute.xlu0 %3421
      %3423 = vrot.lane.b32.xlu0 %v3407, 16
      %v3424 = vpop.permute.xlu0 %3423
      %3425 = vrot.lane.b32.xlu0 %v3408, 16
      %v3426 = vpop.permute.xlu0 %3425
      %v3427 = vsel %vm1023, %v3416, %v3418
      %v3428 = vsel %vm1023, %v3418, %v3420
      %v3429 = vsel %vm1023, %v3422, %v3424
      %v3430 = vsel %vm1023, %v3424, %v3426
      %3435 = vst [vmem:[#allocation3 + $0x20] sm:$0xff] %v3427
      %3436 = vst [vmem:[#allocation3 + $0x28] sm:$0xff] %v3428
      %3437 = vst [vmem:[#allocation3 + $0x30] sm:$0xff] %v3429
      %3438 = vst [vmem:[#allocation3 + $0x38] sm:$0xff] %v3430
      %v3439 = vld [vmem:[#allocation2] sm:$0xff]
      %v3440 = vld [vmem:[#allocation2 + $0x8] sm:$0xff]
      %v3441 = vld [vmem:[#allocation2 + $0x10] sm:$0xff]
      %v3442 = vld [vmem:[#allocation2 + $0x20] sm:$0xff]
      %v3443 = vld [vmem:[#allocation2 + $0x28] sm:$0xff]
      %v3444 = vld [vmem:[#allocation2 + $0x30] sm:$0xff]
      %v3445 = vld [vmem:[%s1035] ss:$8 sm:$0x3]
      %v3447 = vlaneseq
      %v3448 = vshrl.u32 %v3447, 7
      %v3449 = vsub.s32 0, %v3448
      %v3450 = vrot.slane %v3445, %v3449
      %v3451 = vlaneseq
      %v3452 = vshrl.u32 %v3451, 7
      %v3453 = vsub.s32 1, %v3452
      %v3454 = vrot.slane %v3445, %v3453
      %3455 = vrot.lane.b32.xlu0 %v3450, 113
      %v3456 = vpop.permute.xlu0 %3455
      %3457 = vrot.lane.b32.xlu0 %v3454, 113
      %v3458 = vpop.permute.xlu0 %3457
      %v3459 = vsel %vm1050, %v3456, %v3458
      %v3463 = vmul.f32 %v3439, %v3456
      %v3464 = vmul.f32 %v3440, %v3459
      %v3465 = vmul.f32 %v3441, %v3458
      %v3466 = vmul.f32 %v3442, %v3456
      %v3467 = vmul.f32 %v3443, %v3459
      %v3468 = vmul.f32 %v3444, %v3458
      %3475 = vrot.lane.b32.xlu0 %v3463, 15
      %v3476 = vpop.permute.xlu0 %3475
      %3477 = vrot.lane.b32.xlu0 %v3464, 15
      %v3478 = vpop.permute.xlu0 %3477
      %3479 = vrot.lane.b32.xlu0 %v3465, 15
      %v3480 = vpop.permute.xlu0 %3479
      %3481 = vrot.lane.b32.xlu0 %v3466, 15
      %v3482 = vpop.permute.xlu0 %3481
      %3483 = vrot.lane.b32.xlu0 %v3467, 15
      %v3484 = vpop.permute.xlu0 %3483
      %3485 = vrot.lane.b32.xlu0 %v3468, 15
      %v3486 = vpop.permute.xlu0 %3485
      %v3487 = vsel %vm1067, %v3476, %v3478
      %v3488 = vsel %vm1067, %v3478, %v3480
      %v3489 = vsel %vm1067, %v3482, %v3484
      %v3490 = vsel %vm1067, %v3484, %v3486
      %3495 = vst [vmem:[#allocation3 + $0x40] sm:$0xff] %v3487
      %3496 = vst [vmem:[#allocation3 + $0x48] sm:$0xff] %v3488
      %3497 = vst [vmem:[#allocation3 + $0x50] sm:$0xff] %v3489
      %3498 = vst [vmem:[#allocation3 + $0x58] sm:$0xff] %v3490
      %v3499 = vld [vmem:[#allocation2] sm:$0xff]
      %v3500 = vld [vmem:[#allocation2 + $0x8] sm:$0xff]
      %v3501 = vld [vmem:[#allocation2 + $0x10] sm:$0xff]
      %v3502 = vld [vmem:[#allocation2 + $0x20] sm:$0xff]
      %v3503 = vld [vmem:[#allocation2 + $0x28] sm:$0xff]
      %v3504 = vld [vmem:[#allocation2 + $0x30] sm:$0xff]
      %v3505 = vld [vmem:[%s1079] ss:$8 sm:$0x3]
      %v3507 = vlaneseq
      %v3508 = vshrl.u32 %v3507, 7
      %v3509 = vsub.s32 0, %v3508
      %v3510 = vrot.slane %v3505, %v3509
      %v3511 = vlaneseq
      %v3512 = vshrl.u32 %v3511, 7
      %v3513 = vsub.s32 1, %v3512
      %v3514 = vrot.slane %v3505, %v3513
      %3515 = vrot.lane.b32.xlu0 %v3510, 127
      %v3516 = vpop.permute.xlu0 %3515
      %3517 = vrot.lane.b32.xlu0 %v3514, 127
      %v3518 = vpop.permute.xlu0 %3517
      %v3519 = vsel %vm1094, %v3516, %v3518
      %v3523 = vmul.f32 %v3499, %v3516
      %v3524 = vmul.f32 %v3500, %v3519
      %v3525 = vmul.f32 %v3501, %v3518
      %v3526 = vmul.f32 %v3502, %v3516
      %v3527 = vmul.f32 %v3503, %v3519
      %v3528 = vmul.f32 %v3504, %v3518
      %3535 = vrot.lane.b32.xlu0 %v3523, 1
      %v3536 = vpop.permute.xlu0 %3535
      %3537 = vrot.lane.b32.xlu0 %v3524, 1
      %v3538 = vpop.permute.xlu0 %3537
      %3539 = vrot.lane.b32.xlu0 %v3525, 1
      %v3540 = vpop.permute.xlu0 %3539
      %3541 = vrot.lane.b32.xlu0 %v3526, 1
      %v3542 = vpop.permute.xlu0 %3541
      %3543 = vrot.lane.b32.xlu0 %v3527, 1
      %v3544 = vpop.permute.xlu0 %3543
      %3545 = vrot.lane.b32.xlu0 %v3528, 1
      %v3546 = vpop.permute.xlu0 %3545
      %v3547 = vsel %vm1111, %v3536, %v3538
      %v3548 = vsel %vm1111, %v3538, %v3540
      %v3549 = vsel %vm1111, %v3542, %v3544
      %v3550 = vsel %vm1111, %v3544, %v3546
      %3555 = vst [vmem:[#allocation3 + $0x60] sm:$0xff] %v3547
      %3556 = vst [vmem:[#allocation3 + $0x68] sm:$0xff] %v3548
      %3557 = vst [vmem:[#allocation3 + $0x70] sm:$0xff] %v3549
      %3558 = vst [vmem:[#allocation3 + $0x78] sm:$0xff] %v3550
      %v3559 = vld [vmem:[#allocation2 + $0x8] sm:$0xff]
      %v3560 = vld [vmem:[#allocation2 + $0x10] sm:$0xff]
      %v3561 = vld [vmem:[#allocation2 + $0x28] sm:$0xff]
      %v3562 = vld [vmem:[#allocation2 + $0x30] sm:$0xff]
      %3563 = vst [vmem:[#allocation3 + $0x80] sm:$0xff] %v3559
      %3564 = vst [vmem:[#allocation3 + $0x88] sm:$0xff] %v3560
      %3565 = vst [vmem:[#allocation3 + $0x90] sm:$0xff] %v3561
      %3566 = vst [vmem:[#allocation3 + $0x98] sm:$0xff] %v3562
      %v3567 = vld [vmem:[#allocation2 + $0x8] sm:$0xff]
      %v3568 = vld [vmem:[#allocation2 + $0x10] sm:$0xff]
      %v3569 = vld [vmem:[#allocation2 + $0x18] sm:$0xff]
      %v3570 = vld [vmem:[#allocation2 + $0x28] sm:$0xff]
      %v3571 = vld [vmem:[#allocation2 + $0x30] sm:$0xff]
      %v3572 = vld [vmem:[#allocation2 + $0x38] sm:$0xff]
      %v3573 = vld [vmem:[%s1129] ss:$8 sm:$0x3]
      %v3575 = vlaneseq
      %v3576 = vshrl.u32 %v3575, 7
      %v3577 = vsub.s32 0, %v3576
      %v3578 = vrot.slane %v3573, %v3577
      %v3579 = vlaneseq
      %v3580 = vshrl.u32 %v3579, 7
      %v3581 = vsub.s32 1, %v3580
      %v3582 = vrot.slane %v3573, %v3581
      %3583 = vrot.lane.b32.xlu0 %v3578, 1
      %v3584 = vpop.permute.xlu0 %3583
      %3585 = vrot.lane.b32.xlu0 %v3582, 1
      %v3586 = vpop.permute.xlu0 %3585
      %v3587 = vsel %vm1111, %v3584, %v3586
      %v3591 = vmul.f32 %v3567, %v3584
      %v3592 = vmul.f32 %v3568, %v3587
      %v3593 = vmul.f32 %v3569, %v3586
      %v3594 = vmul.f32 %v3570, %v3584
      %v3595 = vmul.f32 %v3571, %v3587
      %v3596 = vmul.f32 %v3572, %v3586
      %3603 = vrot.lane.b32.xlu0 %v3591, 127
      %v3604 = vpop.permute.xlu0 %3603
      %3605 = vrot.lane.b32.xlu0 %v3592, 127
      %v3606 = vpop.permute.xlu0 %3605
      %3607 = vrot.lane.b32.xlu0 %v3593, 127
      %v3608 = vpop.permute.xlu0 %3607
      %3609 = vrot.lane.b32.xlu0 %v3594, 127
      %v3610 = vpop.permute.xlu0 %3609
      %3611 = vrot.lane.b32.xlu0 %v3595, 127
      %v3612 = vpop.permute.xlu0 %3611
      %3613 = vrot.lane.b32.xlu0 %v3596, 127
      %v3614 = vpop.permute.xlu0 %3613
      %v3615 = vsel %vm1094, %v3604, %v3606
      %v3616 = vsel %vm1094, %v3606, %v3608
      %v3617 = vsel %vm1094, %v3610, %v3612
      %v3618 = vsel %vm1094, %v3612, %v3614
      %3623 = vst [vmem:[#allocation3 + $0xa0] sm:$0xff] %v3615
      %3624 = vst [vmem:[#allocation3 + $0xa8] sm:$0xff] %v3616
      %3625 = vst [vmem:[#allocation3 + $0xb0] sm:$0xff] %v3617
      %3626 = vst [vmem:[#allocation3 + $0xb8] sm:$0xff] %v3618
      %v3627 = vld [vmem:[#allocation2 + $0x8] sm:$0xff]
      %v3628 = vld [vmem:[#allocation2 + $0x10] sm:$0xff]
      %v3629 = vld [vmem:[#allocation2 + $0x18] sm:$0xff]
      %v3630 = vld [vmem:[#allocation2 + $0x28] sm:$0xff]
      %v3631 = vld [vmem:[#allocation2 + $0x30] sm:$0xff]
      %v3632 = vld [vmem:[#allocation2 + $0x38] sm:$0xff]
      %v3633 = vld [vmem:[%s1171] ss:$8 sm:$0x3]
      %v3635 = vlaneseq
      %v3636 = vshrl.u32 %v3635, 7
      %v3637 = vsub.s32 0, %v3636
      %v3638 = vrot.slane %v3633, %v3637
      %v3639 = vlaneseq
      %v3640 = vshrl.u32 %v3639, 7
      %v3641 = vsub.s32 1, %v3640
      %v3642 = vrot.slane %v3633, %v3641
      %3643 = vrot.lane.b32.xlu0 %v3638, 15
      %v3644 = vpop.permute.xlu0 %3643
      %3645 = vrot.lane.b32.xlu0 %v3642, 15
      %v3646 = vpop.permute.xlu0 %3645
      %v3647 = vsel %vm1067, %v3644, %v3646
      %v3651 = vmul.f32 %v3627, %v3644
      %v3652 = vmul.f32 %v3628, %v3647
      %v3653 = vmul.f32 %v3629, %v3646
      %v3654 = vmul.f32 %v3630, %v3644
      %v3655 = vmul.f32 %v3631, %v3647
      %v3656 = vmul.f32 %v3632, %v3646
      %3663 = vrot.lane.b32.xlu0 %v3651, 113
      %v3664 = vpop.permute.xlu0 %3663
      %3665 = vrot.lane.b32.xlu0 %v3652, 113
      %v3666 = vpop.permute.xlu0 %3665
      %3667 = vrot.lane.b32.xlu0 %v3653, 113
      %v3668 = vpop.permute.xlu0 %3667
      %3669 = vrot.lane.b32.xlu0 %v3654, 113
      %v3670 = vpop.permute.xlu0 %3669
      %3671 = vrot.lane.b32.xlu0 %v3655, 113
      %v3672 = vpop.permute.xlu0 %3671
      %3673 = vrot.lane.b32.xlu0 %v3656, 113
      %v3674 = vpop.permute.xlu0 %3673
      %v3675 = vsel %vm1050, %v3664, %v3666
      %v3676 = vsel %vm1050, %v3666, %v3668
      %v3677 = vsel %vm1050, %v3670, %v3672
      %v3678 = vsel %vm1050, %v3672, %v3674
      %3683 = vst [vmem:[#allocation3 + $0xc0] sm:$0xff] %v3675
      %3684 = vst [vmem:[#allocation3 + $0xc8] sm:$0xff] %v3676
      %3685 = vst [vmem:[#allocation3 + $0xd0] sm:$0xff] %v3677
      %3686 = vst [vmem:[#allocation3 + $0xd8] sm:$0xff] %v3678
      %v3687 = vld [vmem:[#allocation2 + $0x8] sm:$0xff]
      %v3688 = vld [vmem:[#allocation2 + $0x10] sm:$0xff]
      %v3689 = vld [vmem:[#allocation2 + $0x18] sm:$0xff]
      %v3690 = vld [vmem:[#allocation2 + $0x28] sm:$0xff]
      %v3691 = vld [vmem:[#allocation2 + $0x30] sm:$0xff]
      %v3692 = vld [vmem:[#allocation2 + $0x38] sm:$0xff]
      %3699 = vrot.lane.b32.xlu0 %v3687, 112
      %v3700 = vpop.permute.xlu0 %3699
      %3701 = vrot.lane.b32.xlu0 %v3688, 112
      %v3702 = vpop.permute.xlu0 %3701
      %3703 = vrot.lane.b32.xlu0 %v3689, 112
      %v3704 = vpop.permute.xlu0 %3703
      %3705 = vrot.lane.b32.xlu0 %v3690, 112
      %v3706 = vpop.permute.xlu0 %3705
      %3707 = vrot.lane.b32.xlu0 %v3691, 112
      %v3708 = vpop.permute.xlu0 %3707
      %3709 = vrot.lane.b32.xlu0 %v3692, 112
      %v3710 = vpop.permute.xlu0 %3709
      %v3711 = vsel %vm1222, %v3700, %v3702
      %v3712 = vsel %vm1222, %v3702, %v3704
      %v3713 = vsel %vm1222, %v3706, %v3708
      %v3714 = vsel %vm1222, %v3708, %v3710
      %3719 = vst [vmem:[#allocation3 + $0xe0] sm:$0xff] %v3711
      %3720 = vst [vmem:[#allocation3 + $0xe8] sm:$0xff] %v3712
      %3721 = vst [vmem:[#allocation3 + $0xf0] sm:$0xff] %v3713
      %3722 = vst [vmem:[#allocation3 + $0xf8] sm:$0xff] %v3714
      %v3723 = vld [vmem:[#allocation2 + $0x8] sm:$0xff]
      %v3724 = vld [vmem:[#allocation2 + $0x10] sm:$0xff]
      %v3725 = vld [vmem:[#allocation2 + $0x18] sm:$0xff]
      %v3726 = vld [vmem:[#allocation2 + $0x28] sm:$0xff]
      %v3727 = vld [vmem:[#allocation2 + $0x30] sm:$0xff]
      %v3728 = vld [vmem:[#allocation2 + $0x38] sm:$0xff]
      %v3729 = vld [vmem:[%s1234] ss:$8 sm:$0x3]
      %v3731 = vlaneseq
      %v3732 = vshrl.u32 %v3731, 7
      %v3733 = vsub.s32 0, %v3732
      %v3734 = vrot.slane %v3729, %v3733
      %v3735 = vlaneseq
      %v3736 = vshrl.u32 %v3735, 7
      %v3737 = vsub.s32 1, %v3736
      %v3738 = vrot.slane %v3729, %v3737
      %3739 = vrot.lane.b32.xlu0 %v3734, 17
      %v3740 = vpop.permute.xlu0 %3739
      %3741 = vrot.lane.b32.xlu0 %v3738, 17
      %v3742 = vpop.permute.xlu0 %3741
      %v3743 = vsel %vm1002, %v3740, %v3742
      %v3747 = vmul.f32 %v3723, %v3740
      %v3748 = vmul.f32 %v3724, %v3743
      %v3749 = vmul.f32 %v3725, %v3742
      %v3750 = vmul.f32 %v3726, %v3740
      %v3751 = vmul.f32 %v3727, %v3743
      %v3752 = vmul.f32 %v3728, %v3742
      %3759 = vrot.lane.b32.xlu0 %v3747, 111
      %v3760 = vpop.permute.xlu0 %3759
      %3761 = vrot.lane.b32.xlu0 %v3748, 111
      %v3762 = vpop.permute.xlu0 %3761
      %3763 = vrot.lane.b32.xlu0 %v3749, 111
      %v3764 = vpop.permute.xlu0 %3763
      %3765 = vrot.lane.b32.xlu0 %v3750, 111
      %v3766 = vpop.permute.xlu0 %3765
      %3767 = vrot.lane.b32.xlu0 %v3751, 111
      %v3768 = vpop.permute.xlu0 %3767
      %3769 = vrot.lane.b32.xlu0 %v3752, 111
      %v3770 = vpop.permute.xlu0 %3769
      %v3771 = vsel %vm985, %v3760, %v3762
      %v3772 = vsel %vm985, %v3762, %v3764
      %v3773 = vsel %vm985, %v3766, %v3768
      %v3774 = vsel %vm985, %v3768, %v3770
      %3779 = vst [vmem:[#allocation3 + $0x100] sm:$0xff] %v3771
      %3780 = vst [vmem:[#allocation3 + $0x108] sm:$0xff] %v3772
      %3781 = vst [vmem:[#allocation3 + $0x110] sm:$0xff] %v3773
      %3782 = vst [vmem:[#allocation3 + $0x118] sm:$0xff] %v3774
      %v3783 = vld [vmem:[%s31] sm:$0xff]
      %v3784 = vld [vmem:[%s31 + $0x8] sm:$0xff]
      %v3785 = vld [vmem:[#allocation3] sm:$0xff]
      %v3786 = vld [vmem:[#allocation3 + $0x8] sm:$0xff]
      %v3787 = vld [vmem:[#allocation3 + $0x10] sm:$0xff]
      %v3788 = vld [vmem:[#allocation3 + $0x18] sm:$0xff]
      %v3789 = vld [vmem:[#allocation3 + $0x20] sm:$0xff]
      %v3790 = vld [vmem:[#allocation3 + $0x28] sm:$0xff]
      %v3791 = vld [vmem:[#allocation3 + $0x30] sm:$0xff]
      %v3792 = vld [vmem:[#allocation3 + $0x38] sm:$0xff]
      %v3793 = vld [vmem:[#allocation3 + $0x40] sm:$0xff]
      %v3794 = vld [vmem:[#allocation3 + $0x48] sm:$0xff]
      %v3795 = vld [vmem:[#allocation3 + $0x50] sm:$0xff]
      %v3796 = vld [vmem:[#allocation3 + $0x58] sm:$0xff]
      %v3797 = vld [vmem:[#allocation3 + $0x60] sm:$0xff]
      %v3798 = vld [vmem:[#allocation3 + $0x68] sm:$0xff]
      %v3799 = vld [vmem:[#allocation3 + $0x70] sm:$0xff]
      %v3800 = vld [vmem:[#allocation3 + $0x78] sm:$0xff]
      %v3801 = vld [vmem:[#allocation3 + $0x80] sm:$0xff]
      %v3802 = vld [vmem:[#allocation3 + $0x88] sm:$0xff]
      %v3803 = vld [vmem:[#allocation3 + $0x90] sm:$0xff]
      %v3804 = vld [vmem:[#allocation3 + $0x98] sm:$0xff]
      %v3805 = vld [vmem:[#allocation3 + $0xa0] sm:$0xff]
      %v3806 = vld [vmem:[#allocation3 + $0xa8] sm:$0xff]
      %v3807 = vld [vmem:[#allocation3 + $0xb0] sm:$0xff]
      %v3808 = vld [vmem:[#allocation3 + $0xb8] sm:$0xff]
      %v3809 = vld [vmem:[#allocation3 + $0xc0] sm:$0xff]
      %v3810 = vld [vmem:[#allocation3 + $0xc8] sm:$0xff]
      %v3811 = vld [vmem:[#allocation3 + $0xd0] sm:$0xff]
      %v3812 = vld [vmem:[#allocation3 + $0xd8] sm:$0xff]
      %v3813 = vld [vmem:[#allocation3 + $0xe0] sm:$0xff]
      %v3814 = vld [vmem:[#allocation3 + $0xe8] sm:$0xff]
      %v3815 = vld [vmem:[#allocation3 + $0xf0] sm:$0xff]
      %v3816 = vld [vmem:[#allocation3 + $0xf8] sm:$0xff]
      %v3817 = vld [vmem:[#allocation3 + $0x100] sm:$0xff]
      %v3818 = vld [vmem:[#allocation3 + $0x108] sm:$0xff]
      %v3819 = vld [vmem:[#allocation3 + $0x110] sm:$0xff]
      %v3820 = vld [vmem:[#allocation3 + $0x118] sm:$0xff]
      %v3821 = vld [vmem:[%s33] sm:$0xff]
      %3823 = vset.pattern.permute.xlu0 0
      %3824 = vperm.xlu0 %3823, %v3821
      %v3825 = vpop.permute.xlu0 %3824
      %v3828 = vsel %vm1023, %v3784, 0
      %3830 = vmatprep.subr.mxu0 %v3816
      %3831 = vmatpush1.msra.mxu0 %v3815
      %3832 = vmatprep.subr.mxu0 %v3814
      %3833 = vmatpush1.msra.mxu0 %v3813
      %3834 = vmatprep.subr.mxu0 %v3812
      %3835 = vmatpush1.msra.mxu0 %v3811
      %3836 = vmatprep.subr.mxu0 %v3810
      %3837 = vmatpush1.msra.mxu0 %v3809
      %3838 = vmatprep.subr.mxu0 %v3808
      %3839 = vmatpush1.msra.mxu0 %v3807
      %3840 = vmatprep.subr.mxu0 %v3806
      %3841 = vmatpush1.msra.mxu0 %v3805
      %3842 = vmatprep.subr.mxu0 %v3804
      %3843 = vmatpush1.msra.mxu0 %v3803
      %3844 = vmatprep.subr.mxu0 %v3802
      %3845 = vmatpush1.msra.mxu0 %v3801
      %3846 = vmatprep.subr.mxu0 %v3800
      %3847 = vmatpush1.msra.mxu0 %v3799
      %3848 = vmatprep.subr.mxu0 %v3798
      %3849 = vmatpush1.msra.mxu0 %v3797
      %3850 = vmatprep.subr.mxu0 %v3796
      %3851 = vmatpush1.msra.mxu0 %v3795
      %3852 = vmatprep.subr.mxu0 %v3794
      %3853 = vmatpush1.msra.mxu0 %v3793
      %3854 = vmatprep.subr.mxu0 %v3792
      %3855 = vmatpush1.msra.mxu0 %v3791
      %3856 = vmatprep.subr.mxu0 %v3790
      %3857 = vmatpush1.msra.mxu0 %v3789
      %3858 = vmatprep.subr.mxu0 %v3788
      %3859 = vmatpush1.msra.mxu0 %v3787
      %3860 = vmatprep.subr.mxu0 %v3786
      %3861 = vmatpush1.msra.mxu0 %v3785
      %3862 = vmatprep.subr.mxu0 0.0
      %3863 = vmatpush2.msra.mxu0 0.0
      %3864 = vmatprep.subr.mxu0 0.0
      %3865 = vmatpush2.msra.mxu0 0.0
      %3866 = vmatprep.subr.mxu0 0.0
      %3867 = vmatpush2.msra.mxu0 0.0
      %3868 = vmatprep.subr.mxu0 0.0
      %3869 = vmatpush2.msra.mxu0 0.0
      %3870 = vmatprep.subr.mxu0 0.0
      %3871 = vmatpush2.msra.mxu0 0.0
      %3872 = vmatprep.subr.mxu0 0.0
      %3873 = vmatpush2.msra.mxu0 0.0
      %3874 = vmatprep.subr.mxu0 0.0
      %3875 = vmatpush2.msra.mxu0 0.0
      %3876 = vmatprep.subr.mxu0 0.0
      %3877 = vmatpush2.msra.mxu0 0.0
      %3878 = vmatprep.subr.mxu0 0.0
      %3879 = vmatpush2.msra.mxu0 0.0
      %3880 = vmatprep.subr.mxu0 0.0
      %3881 = vmatpush2.msra.mxu0 0.0
      %3882 = vmatprep.subr.mxu0 0.0
      %3883 = vmatpush2.msra.mxu0 0.0
      %3884 = vmatprep.subr.mxu0 0.0
      %3885 = vmatpush2.msra.mxu0 0.0
      %3886 = vmatprep.subr.mxu0 0.0
      %3887 = vmatpush2.msra.mxu0 0.0
      %3888 = vmatprep.subr.mxu0 0.0
      %3889 = vmatpush2.msra.mxu0 0.0
      %3890 = vmatprep.subr.mxu0 %v3820
      %3891 = vmatpush2.msra.mxu0 %v3819
      %3892 = vmatprep.subr.mxu0 %v3818
      %3893 = vmatpush2.msra.mxu0 %v3817
      %3894 = vmatprep.mubr.f32.mxu0 %v3828
      %3895 = vmatmul.mubr.f32.gmra.mxu0 %v3783
      %v3896 = vpop.f32.mrf.mxu0
      %v3897 = vadd.f32 %v3825, %v3896
      %v3898 = vpop.f32.mrf.mxu0
      %v3899 = vadd.f32 %v3825, %v3898
      %3900 = vdwg.mxu0
      %3901 = vst.msk [vmem:[#allocation2 + $0x8] sm:$0xff] %vm1941, %v2100
      %3902 = vst.msk [vmem:[#allocation2 + $0x28] sm:$0xff] %vm1941, %v2105
      %3903 = vst.msk [vmem:[#allocation2 + $0x8] sm:$0xff] %vm2689, 0.0
      %3904 = vst.msk [vmem:[#allocation2 + $0x10] sm:$0xff] %vm1941, 0.0
      %3905 = vst.msk [vmem:[#allocation2 + $0x28] sm:$0xff] %vm2689, 0.0
      %3906 = vst.msk [vmem:[#allocation2 + $0x30] sm:$0xff] %vm1941, 0.0
      %v3907 = vld [vmem:[#allocation2] sm:$0xff]
      %v3908 = vld [vmem:[#allocation2 + $0x8] sm:$0xff]
      %v3909 = vld [vmem:[#allocation2 + $0x20] sm:$0xff]
      %v3910 = vld [vmem:[#allocation2 + $0x28] sm:$0xff]
      %v3911 = vld [vmem:[%s49] sm:$0x1]
      %v3912 = vlaneseq
      %v3913 = vshrl.u32 %v3912, 7
      %v3914 = vsub.s32 0, %v3913
      %v3915 = vrot.slane %v3911, %v3914
      %3917 = vrot.lane.b32.xlu0 %v3915, 119
      %v3918 = vpop.permute.xlu0 %3917
      %v3920 = vmul.f32 %v3907, %v3918
      %v3921 = vmul.f32 %v3908, %v3918
      %v3922 = vmul.f32 %v3909, %v3918
      %v3923 = vmul.f32 %v3910, %v3918
      %3928 = vrot.lane.b32.xlu0 %v3920, 9
      %v3929 = vpop.permute.xlu0 %3928
      %3930 = vrot.lane.b32.xlu0 %v3921, 9
      %v3931 = vpop.permute.xlu0 %3930
      %3932 = vrot.lane.b32.xlu0 %v3922, 9
      %v3933 = vpop.permute.xlu0 %3932
      %3934 = vrot.lane.b32.xlu0 %v3923, 9
      %v3935 = vpop.permute.xlu0 %3934
      %v3936 = vsel %vm1426, %v3929, %v3931
      %v3937 = vsel %vm1426, %v3933, %v3935
      %3940 = vst.msk [vmem:[#allocation3] sm:$0xff] %vm1941, %v3936
      %3941 = vst.msk [vmem:[#allocation3 + $0x10] sm:$0xff] %vm1941, %v3937
      %v3942 = vld [vmem:[#allocation2] sm:$0xff]
      %v3943 = vld [vmem:[#allocation2 + $0x8] sm:$0xff]
      %v3944 = vld [vmem:[#allocation2 + $0x20] sm:$0xff]
      %v3945 = vld [vmem:[#allocation2 + $0x28] sm:$0xff]
      %3950 = vrot.lane.b32.xlu0 %v3942, 8
      %v3951 = vpop.permute.xlu0 %3950
      %3952 = vrot.lane.b32.xlu0 %v3943, 8
      %v3953 = vpop.permute.xlu0 %3952
      %3954 = vrot.lane.b32.xlu0 %v3944, 8
      %v3955 = vpop.permute.xlu0 %3954
      %3956 = vrot.lane.b32.xlu0 %v3945, 8
      %v3957 = vpop.permute.xlu0 %3956
      %v3958 = vsel %vm1440, %v3951, %v3953
      %v3959 = vsel %vm1440, %v3955, %v3957
      %3962 = vst.msk [vmem:[#allocation3 + $0x20] sm:$0xff] %vm1941, %v3958
      %3963 = vst.msk [vmem:[#allocation3 + $0x30] sm:$0xff] %vm1941, %v3959
      %v3964 = vld [vmem:[#allocation2] sm:$0xff]
      %v3965 = vld [vmem:[#allocation2 + $0x8] sm:$0xff]
      %v3966 = vld [vmem:[#allocation2 + $0x20] sm:$0xff]
      %v3967 = vld [vmem:[#allocation2 + $0x28] sm:$0xff]
      %v3968 = vld [vmem:[%s49 + $0x2] sm:$0x1]
      %v3969 = vlaneseq
      %v3970 = vshrl.u32 %v3969, 7
      %v3971 = vsub.s32 0, %v3970
      %v3972 = vrot.slane %v3968, %v3971
      %3974 = vrot.lane.b32.xlu0 %v3972, 121
      %v3975 = vpop.permute.xlu0 %3974
      %v3977 = vmul.f32 %v3964, %v3975
      %v3978 = vmul.f32 %v3965, %v3975
      %v3979 = vmul.f32 %v3966, %v3975
      %v3980 = vmul.f32 %v3967, %v3975
      %3985 = vrot.lane.b32.xlu0 %v3977, 7
      %v3986 = vpop.permute.xlu0 %3985
      %3987 = vrot.lane.b32.xlu0 %v3978, 7
      %v3988 = vpop.permute.xlu0 %3987
      %3989 = vrot.lane.b32.xlu0 %v3979, 7
      %v3990 = vpop.permute.xlu0 %3989
      %3991 = vrot.lane.b32.xlu0 %v3980, 7
      %v3992 = vpop.permute.xlu0 %3991
      %v3993 = vsel %vm1464, %v3986, %v3988
      %v3994 = vsel %vm1464, %v3990, %v3992
      %3997 = vst.msk [vmem:[#allocation3 + $0x40] sm:$0xff] %vm1941, %v3993
      %3998 = vst.msk [vmem:[#allocation3 + $0x50] sm:$0xff] %vm1941, %v3994
      %v3999 = vld [vmem:[#allocation2] sm:$0xff]
      %v4000 = vld [vmem:[#allocation2 + $0x8] sm:$0xff]
      %v4001 = vld [vmem:[#allocation2 + $0x20] sm:$0xff]
      %v4002 = vld [vmem:[#allocation2 + $0x28] sm:$0xff]
      %v4003 = vld [vmem:[%s49 + $0x3] sm:$0x1]
      %v4004 = vlaneseq
      %v4005 = vshrl.u32 %v4004, 7
      %v4006 = vsub.s32 0, %v4005
      %v4007 = vrot.slane %v4003, %v4006
      %4009 = vrot.lane.b32.xlu0 %v4007, 127
      %v4010 = vpop.permute.xlu0 %4009
      %v4012 = vmul.f32 %v3999, %v4010
      %v4013 = vmul.f32 %v4000, %v4010
      %v4014 = vmul.f32 %v4001, %v4010
      %v4015 = vmul.f32 %v4002, %v4010
      %4020 = vrot.lane.b32.xlu0 %v4012, 1
      %v4021 = vpop.permute.xlu0 %4020
      %4022 = vrot.lane.b32.xlu0 %v4013, 1
      %v4023 = vpop.permute.xlu0 %4022
      %4024 = vrot.lane.b32.xlu0 %v4014, 1
      %v4025 = vpop.permute.xlu0 %4024
      %4026 = vrot.lane.b32.xlu0 %v4015, 1
      %v4027 = vpop.permute.xlu0 %4026
      %v4028 = vsel %vm1111, %v4021, %v4023
      %v4029 = vsel %vm1111, %v4025, %v4027
      %4032 = vst.msk [vmem:[#allocation3 + $0x60] sm:$0xff] %vm1941, %v4028
      %4033 = vst.msk [vmem:[#allocation3 + $0x70] sm:$0xff] %vm1941, %v4029
      %v4034 = vld [vmem:[#allocation2 + $0x8] sm:$0xff]
      %v4035 = vld [vmem:[#allocation2 + $0x28] sm:$0xff]
      %4036 = vst.msk [vmem:[#allocation3 + $0x80] sm:$0xff] %vm1941, %v4034
      %4037 = vst.msk [vmem:[#allocation3 + $0x90] sm:$0xff] %vm1941, %v4035
      %v4038 = vld [vmem:[#allocation2 + $0x8] sm:$0xff]
      %v4039 = vld [vmem:[#allocation2 + $0x28] sm:$0xff]
      %v4040 = vld [vmem:[%s49 + $0x5] sm:$0x1]
      %v4041 = vlaneseq
      %v4042 = vshrl.u32 %v4041, 7
      %v4043 = vsub.s32 0, %v4042
      %v4044 = vrot.slane %v4040, %v4043
      %4046 = vrot.lane.b32.xlu0 %v4044, 1
      %v4047 = vpop.permute.xlu0 %4046
      %v4049 = vmul.f32 %v4038, %v4047
      %v4050 = vmul.f32 %v4039, %v4047
      %4053 = vrot.lane.b32.xlu0 %v4049, 127
      %v4054 = vpop.permute.xlu0 %4053
      %4055 = vrot.lane.b32.xlu0 %v4050, 127
      %v4056 = vpop.permute.xlu0 %4055
      %4059 = vst.msk [vmem:[#allocation3 + $0xa0] sm:$0xff] %vm1941, %v4054
      %4060 = vst.msk [vmem:[#allocation3 + $0xb0] sm:$0xff] %vm1941, %v4056
      %v4061 = vld [vmem:[#allocation2 + $0x8] sm:$0xff]
      %v4062 = vld [vmem:[#allocation2 + $0x28] sm:$0xff]
      %v4063 = vld [vmem:[%s49 + $0x6] sm:$0x1]
      %v4064 = vlaneseq
      %v4065 = vshrl.u32 %v4064, 7
      %v4066 = vsub.s32 0, %v4065
      %v4067 = vrot.slane %v4063, %v4066
      %4069 = vrot.lane.b32.xlu0 %v4067, 7
      %v4070 = vpop.permute.xlu0 %4069
      %v4072 = vmul.f32 %v4061, %v4070
      %v4073 = vmul.f32 %v4062, %v4070
      %4076 = vrot.lane.b32.xlu0 %v4072, 121
      %v4077 = vpop.permute.xlu0 %4076
      %4078 = vrot.lane.b32.xlu0 %v4073, 121
      %v4079 = vpop.permute.xlu0 %4078
      %4082 = vst.msk [vmem:[#allocation3 + $0xc0] sm:$0xff] %vm1941, %v4077
      %4083 = vst.msk [vmem:[#allocation3 + $0xd0] sm:$0xff] %vm1941, %v4079
      %v4084 = vld [vmem:[#allocation2 + $0x8] sm:$0xff]
      %v4085 = vld [vmem:[#allocation2 + $0x28] sm:$0xff]
      %4088 = vrot.lane.b32.xlu0 %v4084, 120
      %v4089 = vpop.permute.xlu0 %4088
      %4090 = vrot.lane.b32.xlu0 %v4085, 120
      %v4091 = vpop.permute.xlu0 %4090
      %4094 = vst.msk [vmem:[#allocation3 + $0xe0] sm:$0xff] %vm1941, %v4089
      %4095 = vst.msk [vmem:[#allocation3 + $0xf0] sm:$0xff] %vm1941, %v4091
      %v4096 = vld [vmem:[#allocation2 + $0x8] sm:$0xff]
      %v4097 = vld [vmem:[#allocation2 + $0x28] sm:$0xff]
      %v4098 = vld [vmem:[%s49 + $0x8] sm:$0x1]
      %v4099 = vlaneseq
      %v4100 = vshrl.u32 %v4099, 7
      %v4101 = vsub.s32 0, %v4100
      %v4102 = vrot.slane %v4098, %v4101
      %4104 = vrot.lane.b32.xlu0 %v4102, 9
      %v4105 = vpop.permute.xlu0 %4104
      %v4107 = vmul.f32 %v4096, %v4105
      %v4108 = vmul.f32 %v4097, %v4105
      %4111 = vrot.lane.b32.xlu0 %v4107, 119
      %v4112 = vpop.permute.xlu0 %4111
      %4113 = vrot.lane.b32.xlu0 %v4108, 119
      %v4114 = vpop.permute.xlu0 %4113
      %4117 = vst.msk [vmem:[#allocation3 + $0x100] sm:$0xff] %vm1941, %v4112
      %4118 = vst.msk [vmem:[#allocation3 + $0x110] sm:$0xff] %vm1941, %v4114
      %v4119 = vld [vmem:[%s35] sm:$0xff]
      %v4120 = vld [vmem:[%s35 + $0x8] sm:$0xff]
      %v4121 = vld [vmem:[#allocation3] sm:$0xff]
      %v4122 = vld [vmem:[#allocation3 + $0x10] sm:$0xff]
      %v4123 = vld [vmem:[#allocation3 + $0x20] sm:$0xff]
      %v4124 = vld [vmem:[#allocation3 + $0x30] sm:$0xff]
      %v4125 = vld [vmem:[#allocation3 + $0x40] sm:$0xff]
      %v4126 = vld [vmem:[#allocation3 + $0x50] sm:$0xff]
      %v4127 = vld [vmem:[#allocation3 + $0x60] sm:$0xff]
      %v4128 = vld [vmem:[#allocation3 + $0x70] sm:$0xff]
      %v4129 = vld [vmem:[#allocation3 + $0x80] sm:$0xff]
      %v4130 = vld [vmem:[#allocation3 + $0x90] sm:$0xff]
      %v4131 = vld [vmem:[#allocation3 + $0xa0] sm:$0xff]
      %v4132 = vld [vmem:[#allocation3 + $0xb0] sm:$0xff]
      %v4133 = vld [vmem:[#allocation3 + $0xc0] sm:$0xff]
      %v4134 = vld [vmem:[#allocation3 + $0xd0] sm:$0xff]
      %v4135 = vld [vmem:[#allocation3 + $0xe0] sm:$0xff]
      %v4136 = vld [vmem:[#allocation3 + $0xf0] sm:$0xff]
      %v4137 = vld [vmem:[#allocation3 + $0x100] sm:$0xff]
      %v4138 = vld [vmem:[#allocation3 + $0x110] sm:$0xff]
      %v4139 = vld [vmem:[%s37] sm:$0xff]
      %4141 = vset.pattern.permute.xlu0 0
      %4142 = vperm.xlu0 %4141, %v4139
      %v4143 = vpop.permute.xlu0 %4142
      %v4146 = vsel %vm1023, %v4120, 0
      %4148 = vmatprep.subr.mxu0 0.0
      %4149 = vmatpush1.msra.mxu0 %v4136
      %4150 = vmatprep.subr.mxu0 0.0
      %4151 = vmatpush1.msra.mxu0 %v4135
      %4152 = vmatprep.subr.mxu0 0.0
      %4153 = vmatpush1.msra.mxu0 %v4134
      %4154 = vmatprep.subr.mxu0 0.0
      %4155 = vmatpush1.msra.mxu0 %v4133
      %4156 = vmatprep.subr.mxu0 0.0
      %4157 = vmatpush1.msra.mxu0 %v4132
      %4158 = vmatprep.subr.mxu0 0.0
      %4159 = vmatpush1.msra.mxu0 %v4131
      %4160 = vmatprep.subr.mxu0 0.0
      %4161 = vmatpush1.msra.mxu0 %v4130
      %4162 = vmatprep.subr.mxu0 0.0
      %4163 = vmatpush1.msra.mxu0 %v4129
      %4164 = vmatprep.subr.mxu0 0.0
      %4165 = vmatpush1.msra.mxu0 %v4128
      %4166 = vmatprep.subr.mxu0 0.0
      %4167 = vmatpush1.msra.mxu0 %v4127
      %4168 = vmatprep.subr.mxu0 0.0
      %4169 = vmatpush1.msra.mxu0 %v4126
      %4170 = vmatprep.subr.mxu0 0.0
      %4171 = vmatpush1.msra.mxu0 %v4125
      %4172 = vmatprep.subr.mxu0 0.0
      %4173 = vmatpush1.msra.mxu0 %v4124
      %4174 = vmatprep.subr.mxu0 0.0
      %4175 = vmatpush1.msra.mxu0 %v4123
      %4176 = vmatprep.subr.mxu0 0.0
      %4177 = vmatpush1.msra.mxu0 %v4122
      %4178 = vmatprep.subr.mxu0 0.0
      %4179 = vmatpush1.msra.mxu0 %v4121
      %4180 = vmatprep.subr.mxu0 0.0
      %4181 = vmatpush2.msra.mxu0 0.0
      %4182 = vmatprep.subr.mxu0 0.0
      %4183 = vmatpush2.msra.mxu0 0.0
      %4184 = vmatprep.subr.mxu0 0.0
      %4185 = vmatpush2.msra.mxu0 0.0
      %4186 = vmatprep.subr.mxu0 0.0
      %4187 = vmatpush2.msra.mxu0 0.0
      %4188 = vmatprep.subr.mxu0 0.0
      %4189 = vmatpush2.msra.mxu0 0.0
      %4190 = vmatprep.subr.mxu0 0.0
      %4191 = vmatpush2.msra.mxu0 0.0
      %4192 = vmatprep.subr.mxu0 0.0
      %4193 = vmatpush2.msra.mxu0 0.0
      %4194 = vmatprep.subr.mxu0 0.0
      %4195 = vmatpush2.msra.mxu0 0.0
      %4196 = vmatprep.subr.mxu0 0.0
      %4197 = vmatpush2.msra.mxu0 0.0
      %4198 = vmatprep.subr.mxu0 0.0
      %4199 = vmatpush2.msra.mxu0 0.0
      %4200 = vmatprep.subr.mxu0 0.0
      %4201 = vmatpush2.msra.mxu0 0.0
      %4202 = vmatprep.subr.mxu0 0.0
      %4203 = vmatpush2.msra.mxu0 0.0
      %4204 = vmatprep.subr.mxu0 0.0
      %4205 = vmatpush2.msra.mxu0 0.0
      %4206 = vmatprep.subr.mxu0 0.0
      %4207 = vmatpush2.msra.mxu0 0.0
      %4208 = vmatprep.subr.mxu0 0.0
      %4209 = vmatpush2.msra.mxu0 %v4138
      %4210 = vmatprep.subr.mxu0 0.0
      %4211 = vmatpush2.msra.mxu0 %v4137
      %4212 = vmatprep.mubr.f32.mxu0 %v4146
      %4213 = vmatmul.mubr.f32.gmra.mxu0 %v4119
      %v4214 = vpop.f32.mrf.mxu0
      %v4215 = vadd.f32 %v4143, %v4214
      %v4216 = vpop.f32.mrf.mxu0
      %4217 = vdwg.mxu0
      %v4218 = vld [vmem:[%s43] sm:$0xff]
      %v4219 = vld [vmem:[%s43 + $0x8] sm:$0xff]
      %v4220 = vld [vmem:[%s43 + $0x10] sm:$0xff]
      %v4221 = vld [vmem:[%s43 + $0x18] sm:$0xff]
      %v4222 = vld [vmem:[%s43 + $0x20] sm:$0xff]
      %v4223 = vld [vmem:[%s43 + $0x28] sm:$0xff]
      %v4224 = vld [vmem:[%s43 + $0x30] sm:$0xff]
      %v4225 = vld [vmem:[%s43 + $0x38] sm:$0xff]
      %v4226 = vld [vmem:[%s43 + $0x40] sm:$0xff]
      %v4227 = vld [vmem:[%s43 + $0x48] sm:$0xff]
      %v4228 = vld [vmem:[%s43 + $0x50] sm:$0xff]
      %v4229 = vld [vmem:[%s43 + $0x58] sm:$0xff]
      %v4230 = vld [vmem:[%s43 + $0x60] sm:$0xff]
      %v4231 = vld [vmem:[%s43 + $0x68] sm:$0xff]
      %v4232 = vld [vmem:[%s43 + $0x70] sm:$0xff]
      %v4233 = vld [vmem:[%s43 + $0x78] sm:$0xff]
      %v4234 = vld [vmem:[%s43 + $0x80] sm:$0xff]
      %v4235 = vld [vmem:[%s43 + $0x88] sm:$0xff]
      %v4236 = vld [vmem:[%s43 + $0x90] sm:$0xff]
      %v4237 = vld [vmem:[%s43 + $0x98] sm:$0xff]
      %v4238 = vld [vmem:[%s43 + $0xa0] sm:$0xff]
      %v4239 = vld [vmem:[%s43 + $0xa8] sm:$0xff]
      %v4240 = vld [vmem:[%s43 + $0xb0] sm:$0xff]
      %v4241 = vld [vmem:[%s43 + $0xb8] sm:$0xff]
      %v4242 = vld [vmem:[%s43 + $0xc0] sm:$0xff]
      %v4243 = vld [vmem:[%s43 + $0xc8] sm:$0xff]
      %v4244 = vld [vmem:[%s43 + $0xd0] sm:$0xff]
      %v4245 = vld [vmem:[%s43 + $0xd8] sm:$0xff]
      %v4246 = vld [vmem:[%s43 + $0xe0] sm:$0xff]
      %v4247 = vld [vmem:[%s43 + $0xe8] sm:$0xff]
      %v4248 = vld [vmem:[%s43 + $0xf0] sm:$0xff]
      %v4249 = vld [vmem:[%s43 + $0xf8] sm:$0xff]
      %4250 = vmatprep.subr.mxu0 0.0
      %4251 = vmatpush1.msra.mxu0 %v4233
      %4252 = vmatprep.subr.mxu0 0.0
      %4253 = vmatpush1.msra.mxu0 %v4232
      %4254 = vmatprep.subr.mxu0 0.0
      %4255 = vmatpush1.msra.mxu0 %v4231
      %4256 = vmatprep.subr.mxu0 0.0
      %4257 = vmatpush1.msra.mxu0 %v4230
      %4258 = vmatprep.subr.mxu0 0.0
      %4259 = vmatpush1.msra.mxu0 %v4229
      %4260 = vmatprep.subr.mxu0 0.0
      %4261 = vmatpush1.msra.mxu0 %v4228
      %4262 = vmatprep.subr.mxu0 0.0
      %4263 = vmatpush1.msra.mxu0 %v4227
      %4264 = vmatprep.subr.mxu0 0.0
      %4265 = vmatpush1.msra.mxu0 %v4226
      %4266 = vmatprep.subr.mxu0 0.0
      %4267 = vmatpush1.msra.mxu0 %v4225
      %4268 = vmatprep.subr.mxu0 0.0
      %4269 = vmatpush1.msra.mxu0 %v4224
      %4270 = vmatprep.subr.mxu0 0.0
      %4271 = vmatpush1.msra.mxu0 %v4223
      %4272 = vmatprep.subr.mxu0 0.0
      %4273 = vmatpush1.msra.mxu0 %v4222
      %4274 = vmatprep.subr.mxu0 0.0
      %4275 = vmatpush1.msra.mxu0 %v4221
      %4276 = vmatprep.subr.mxu0 0.0
      %4277 = vmatpush1.msra.mxu0 %v4220
      %4278 = vmatprep.subr.mxu0 0.0
      %4279 = vmatpush1.msra.mxu0 %v4219
      %4280 = vmatprep.subr.mxu0 0.0
      %4281 = vmatpush1.msra.mxu0 %v4218
      %4282 = vmatprep.subr.mxu0 0.0
      %4283 = vmatpush2.msra.mxu0 %v4249
      %4284 = vmatprep.subr.mxu0 0.0
      %4285 = vmatpush2.msra.mxu0 %v4248
      %4286 = vmatprep.subr.mxu0 0.0
      %4287 = vmatpush2.msra.mxu0 %v4247
      %4288 = vmatprep.subr.mxu0 0.0
      %4289 = vmatpush2.msra.mxu0 %v4246
      %4290 = vmatprep.subr.mxu0 0.0
      %4291 = vmatpush2.msra.mxu0 %v4245
      %4292 = vmatprep.subr.mxu0 0.0
      %4293 = vmatpush2.msra.mxu0 %v4244
      %4294 = vmatprep.subr.mxu0 0.0
      %4295 = vmatpush2.msra.mxu0 %v4243
      %4296 = vmatprep.subr.mxu0 0.0
      %4297 = vmatpush2.msra.mxu0 %v4242
      %4298 = vmatprep.subr.mxu0 0.0
      %4299 = vmatpush2.msra.mxu0 %v4241
      %4300 = vmatprep.subr.mxu0 0.0
      %4301 = vmatpush2.msra.mxu0 %v4240
      %4302 = vmatprep.subr.mxu0 0.0
      %4303 = vmatpush2.msra.mxu0 %v4239
      %4304 = vmatprep.subr.mxu0 0.0
      %4305 = vmatpush2.msra.mxu0 %v4238
      %4306 = vmatprep.subr.mxu0 0.0
      %4307 = vmatpush2.msra.mxu0 %v4237
      %4308 = vmatprep.subr.mxu0 0.0
      %4309 = vmatpush2.msra.mxu0 %v4236
      %4310 = vmatprep.subr.mxu0 0.0
      %4311 = vmatpush2.msra.mxu0 %v4235
      %4312 = vmatprep.subr.mxu0 0.0
      %4313 = vmatpush2.msra.mxu0 %v4234
      %4314 = vmatprep.mubr.f32.mxu0 %v2685
      %4315 = vmatmul.mubr.f32.gmra.mxu0 %v2683
      %v4316 = vpop.f32.mrf.mxu0
      %v4317 = vadd.f32 0.0, %v4316
      %v4318 = vpop.f32.mrf.mxu0
      %4319 = vdwg.mxu0
      %v4320 = vld [vmem:[%s45] sm:$0xff]
      %v4321 = vld [vmem:[%s45 + $0x8] sm:$0xff]
      %v4322 = vld [vmem:[%s45 + $0x10] sm:$0xff]
      %v4323 = vld [vmem:[%s45 + $0x18] sm:$0xff]
      %v4324 = vld [vmem:[%s45 + $0x20] sm:$0xff]
      %v4325 = vld [vmem:[%s45 + $0x28] sm:$0xff]
      %v4326 = vld [vmem:[%s45 + $0x30] sm:$0xff]
      %v4327 = vld [vmem:[%s45 + $0x38] sm:$0xff]
      %v4329 = vsel %vm1941, %v3018, 0
      %4331 = vmatprep.subr.mxu0 0.0
      %4332 = vmatpush1.msra.mxu0 0.0
      %4333 = vmatprep.subr.mxu0 0.0
      %4334 = vmatpush1.msra.mxu0 0.0
      %4335 = vmatprep.subr.mxu0 0.0
      %4336 = vmatpush1.msra.mxu0 0.0
      %4337 = vmatprep.subr.mxu0 0.0
      %4338 = vmatpush1.msra.mxu0 0.0
      %4339 = vmatprep.subr.mxu0 0.0
      %4340 = vmatpush1.msra.mxu0 0.0
      %4341 = vmatprep.subr.mxu0 0.0
      %4342 = vmatpush1.msra.mxu0 0.0
      %4343 = vmatprep.subr.mxu0 0.0
      %4344 = vmatpush1.msra.mxu0 0.0
      %4345 = vmatprep.subr.mxu0 0.0
      %4346 = vmatpush1.msra.mxu0 0.0
      %4347 = vmatprep.subr.mxu0 0.0
      %4348 = vmatpush1.msra.mxu0 %v4327
      %4349 = vmatprep.subr.mxu0 0.0
      %4350 = vmatpush1.msra.mxu0 %v4326
      %4351 = vmatprep.subr.mxu0 0.0
      %4352 = vmatpush1.msra.mxu0 %v4325
      %4353 = vmatprep.subr.mxu0 0.0
      %4354 = vmatpush1.msra.mxu0 %v4324
      %4355 = vmatprep.subr.mxu0 0.0
      %4356 = vmatpush1.msra.mxu0 %v4323
      %4357 = vmatprep.subr.mxu0 0.0
      %4358 = vmatpush1.msra.mxu0 %v4322
      %4359 = vmatprep.subr.mxu0 0.0
      %4360 = vmatpush1.msra.mxu0 %v4321
      %4361 = vmatprep.subr.mxu0 0.0
      %4362 = vmatpush1.msra.mxu0 %v4320
      %4363 = vmatprep.subr.mxu0 0.0
      %4364 = vmatpush2.msra.mxu0 0.0
      %4365 = vmatprep.subr.mxu0 0.0
      %4366 = vmatpush2.msra.mxu0 0.0
      %4367 = vmatprep.subr.mxu0 0.0
      %4368 = vmatpush2.msra.mxu0 0.0
      %4369 = vmatprep.subr.mxu0 0.0
      %4370 = vmatpush2.msra.mxu0 0.0
      %4371 = vmatprep.subr.mxu0 0.0
      %4372 = vmatpush2.msra.mxu0 0.0
      %4373 = vmatprep.subr.mxu0 0.0
      %4374 = vmatpush2.msra.mxu0 0.0
      %4375 = vmatprep.subr.mxu0 0.0
      %4376 = vmatpush2.msra.mxu0 0.0
      %4377 = vmatprep.subr.mxu0 0.0
      %4378 = vmatpush2.msra.mxu0 0.0
      %4379 = vmatprep.subr.mxu0 0.0
      %4380 = vmatpush2.msra.mxu0 0.0
      %4381 = vmatprep.subr.mxu0 0.0
      %4382 = vmatpush2.msra.mxu0 0.0
      %4383 = vmatprep.subr.mxu0 0.0
      %4384 = vmatpush2.msra.mxu0 0.0
      %4385 = vmatprep.subr.mxu0 0.0
      %4386 = vmatpush2.msra.mxu0 0.0
      %4387 = vmatprep.subr.mxu0 0.0
      %4388 = vmatpush2.msra.mxu0 0.0
      %4389 = vmatprep.subr.mxu0 0.0
      %4390 = vmatpush2.msra.mxu0 0.0
      %4391 = vmatprep.subr.mxu0 0.0
      %4392 = vmatpush2.msra.mxu0 0.0
      %4393 = vmatprep.subr.mxu0 0.0
      %4394 = vmatpush2.msra.mxu0 0.0
      %4395 = vmatprep.mubr.f32.mxu0 0.0
      %4396 = vmatmul.mubr.f32.gmra.mxu0 %v4329
      %v4397 = vpop.f32.mrf.mxu0
      %v4398 = vadd.f32 0.0, %v4397
      %v4399 = vpop.f32.mrf.mxu0
      %4400 = vdwg.mxu0
      %v4401 = vld [vmem:[%s53] sm:$0x1]
      %v4402 = vadd.f32 %v2677, %v3897
      %v4403 = vadd.f32 %v2679, %v3899
      %v4405 = vlaneseq
      %v4406 = vshrl.u32 %v4405, 7
      %v4407 = vsub.s32 0, %v4406
      %v4408 = vrot.slane %v4401, %v4407
      %4409 = vset.pattern.permute.xlu0 0
      %4410 = vperm.xlu0 %4409, %v4408
      %v4411 = vpop.permute.xlu0 %4410
      %v4413 = vmul.f32 %v4402, %v4411
      %v4414 = vmul.f32 %v4403, %v4411
      %v4415 = vadd.f32 %v3013, %v4317
      %v4416 = vadd.f32 %v4415, %v4215
      %4417 = vset.pattern.permute.xlu0 1
      %4418 = vperm.xlu0 %4417, %v4408
      %v4419 = vpop.permute.xlu0 %4418
      %v4421 = vmul.f32 %v4416, %v4419
      %v4422 = vadd.f32 %v3336, %v4398
      %4423 = vset.pattern.permute.xlu0 2
      %4424 = vperm.xlu0 %4423, %v4408
      %v4425 = vpop.permute.xlu0 %4424
      %v4427 = vmul.f32 %v4422, %v4425
      %4428 = vst [vmem:[%s949] sm:$0xff] %v4413
      %4429 = vst [vmem:[%s949 + $0x8] sm:$0xff] %v4414
      %4430 = vst.msk [vmem:[%s953] sm:$0xff] %vm1941, %v4421
      %4431 = vst.msk [vmem:[%s953] sm:$0xff] %vm2689, 0.0
      %4432 = vst.msk [vmem:[%s957] sm:$0xff] %vm1023, %v4427
      %4433 = vst.msk [vmem:[%s957] sm:$0xff] %vm3023, 0.0
      %p4434 = scmp.lt.s32.totalorder %s71, 1
      %s4435 = scalar_select %p4434, %s71, 1
      %s4436 = smul.addr %s4435, 2
      %s4437 = smul.addr %s4436, 8
      %s4438 = scalar_lea.vmem %s55, %s4437
      %p4439 = scmp.lt.s32.totalorder %s71, 1
      %s4440 = scalar_select %p4439, %s71, 1
      %s4441 = smul.addr %s4440, 8
      %s4442 = scalar_lea.vmem %s57, %s4441
      %p4443 = scmp.lt.s32.totalorder %s71, 1
      %s4444 = scalar_select %p4443, %s71, 1
      %s4445 = smul.addr %s4444, 8
      %s4446 = scalar_lea.vmem %s59, %s4445
      // Predicated region
      $region129: #{cross_convolutions_forward.1} parent=127 // pred_check
        %p4447 = pneg %p671
      $region130: #{cross_convolutions_forward.1} parent=127 // pred_check_branch
        %4449 = sbr.rel (%p4447) target = $region132
      $region131: #{cross_convolutions_forward.1} parent=127 // pred_region
        _
      $region132: #{cross_convolutions_forward.1} parent=127 // pred_fallthru
        _
      // Predicated region
      $region133: #{cross_convolutions_forward.1} parent=127 // pred_check
        %p4450 = pneg %p697
      $region134: #{cross_convolutions_forward.1} parent=127 // pred_check_branch
        %4452 = sbr.rel (%p4450) target = $region136
      $region135: #{cross_convolutions_forward.1} parent=127 // pred_region
        _
      $region136: #{cross_convolutions_forward.1} parent=127 // pred_fallthru
        _
      // Predicated region
      $region137: #{cross_convolutions_forward.1} parent=127 // pred_check
        %p4453 = pneg %p723
      $region138: #{cross_convolutions_forward.1} parent=127 // pred_check_branch
        %4455 = sbr.rel (%p4453) target = $region140
      $region139: #{cross_convolutions_forward.1} parent=127 // pred_region
        _
      $region140: #{cross_convolutions_forward.1} parent=127 // pred_fallthru
        _
    $region128: #{cross_convolutions_forward.1} parent=5 // pred_fallthru
      _
    %p4456 = scmp.le.s32.totalorder 2, %s66
    // Predicated region
    $region141: #{cross_convolutions_forward.1} parent=5 // pred_check
      %p4457 = pneg %p4456
    $region142: #{cross_convolutions_forward.1} parent=5 // pred_check_branch
      %4459 = sbr.rel (%p4457) target = $region144
    $region143: #{cross_convolutions_forward.1} parent=5 // pred_region
      %s4460 = ssub.s32 %s66, 2
      // Predicated region
      $region145: #{cross_convolutions_forward.1} parent=143 // pred_check
        %p4461 = pneg %p677
      $region146: #{cross_convolutions_forward.1} parent=143 // pred_check_branch
        %4463 = sbr.rel (%p4461) target = $region148
      $region147: #{cross_convolutions_forward.1} parent=143 // pred_region
        %p4464 = scmp.lt.s32.totalorder %s72, 1
        %s4465 = scalar_select %p4464, %s72, 1
        %s4466 = smul.addr %s4465, 2
        %s4467 = smul.addr %s4466, 8
        %s4468 = scalar_lea.vmem %s55, %s4467
      $region148: #{cross_convolutions_forward.1} parent=143 // pred_fallthru
        _
      // Predicated region
      $region149: #{cross_convolutions_forward.1} parent=143 // pred_check
        %p4469 = pneg %p703
      $region150: #{cross_convolutions_forward.1} parent=143 // pred_check_branch
        %4471 = sbr.rel (%p4469) target = $region152
      $region151: #{cross_convolutions_forward.1} parent=143 // pred_region
        %p4472 = scmp.lt.s32.totalorder %s72, 1
        %s4473 = scalar_select %p4472, %s72, 1
        %s4474 = smul.addr %s4473, 8
        %s4475 = scalar_lea.vmem %s57, %s4474
      $region152: #{cross_convolutions_forward.1} parent=143 // pred_fallthru
        _
      // Predicated region
      $region153: #{cross_convolutions_forward.1} parent=143 // pred_check
        %p4476 = pneg %p729
      $region154: #{cross_convolutions_forward.1} parent=143 // pred_check_branch
        %4478 = sbr.rel (%p4476) target = $region156
      $region155: #{cross_convolutions_forward.1} parent=143 // pred_region
        %p4479 = scmp.lt.s32.totalorder %s72, 1
        %s4480 = scalar_select %p4479, %s72, 1
        %s4481 = smul.addr %s4480, 8
        %s4482 = scalar_lea.vmem %s59, %s4481
      $region156: #{cross_convolutions_forward.1} parent=143 // pred_fallthru
        _
    $region144: #{cross_convolutions_forward.1} parent=5 // pred_fallthru
      _
  $region6: #{cross_convolutions_forward.1} parent=0 // loop_footer
    %s70 = sadd.s32 1, %s66
  $region7: #{cross_convolutions_forward.1} parent=0 // loop_footer_branch
    %65 = sbr.rel target = $region3
  $region8: #{cross_convolutions_forward.1} parent=0 // loop_exit
    _

</llo_original>
